<compile_context>
chip_gen: v7x
topology: tpu7x:2x2x1
jax: 0.10.0
libtpu: 0.0.40
codegen_flags: <defaults>
</compile_context>

<pallas_src>
import functools

import jax
import jax.numpy as jnp
from jax.experimental import pallas as pl
from jax.experimental.pallas import tpu as pltpu

# ----------------------------- model config ---------------------------------
VOCAB_SIZE = 128      # synthetic vocab
EMBED_DIM = 200       # matches nn.Embedding(vocab_size, 200)
EMBED_PAD = 256       # zero-padded embedding width (MXU K alignment)
N_HIDDEN = 128        # small hidden size (module default 256)
N_LAYERS = 2          # small layer count (module default 4)
BATCH = 8
SEQ_LEN = 8


# ----------------------------- fused kernel ---------------------------------
def _wordlstm_kernel(T, B,
                     ids_ref,          # SMEM (B*T,) int32, batch-major (b*T + t)
                     emb_ref,          # VMEM (V, 1, Ep)
                     wih0_ref,         # VMEM (Ep, 4H)
                     wih_rest_ref,     # VMEM (L-1, H, 4H)
                     whh_ref,          # VMEM (L, H, 4H)
                     b_ref,            # VMEM (L, 1, 4H)  (b_ih + b_hh)
                     h0_ref, c0_ref,   # VMEM (L, B, H)
                     fcw_ref,          # VMEM (H, V)
                     fcb_ref,          # VMEM (1, V)
                     logits_ref,       # VMEM (B*T, V)   batch-major rows
                     hT_ref, cT_ref):  # VMEM (L, B, H)
    L, _, H = h0_ref.shape

    # ---- embedding gather straight into time-major layout -------------------
    x_t_blocks = []
    for t in range(T):
        rows = []
        for b in range(B):
            tok = ids_ref[b * T + t]          # scalar read from SMEM
            rows.append(emb_ref[tok])         # (1, Ep) dynamic-row load from VMEM
        x_t_blocks.append(jnp.concatenate(rows, axis=0))    # (B, Ep)
    x = jnp.concatenate(x_t_blocks, axis=0)                 # (T*B, Ep), time-major

    # ---- stacked LSTM layers -------------------------------------------------
    ys_last = None
    for l in range(L):
        wih = wih0_ref[...] if l == 0 else wih_rest_ref[l - 1]
        whh = whh_ref[l]                       # (H, 4H)
        bias = b_ref[l]                        # (1, 4H)

        # Batched input projection for the whole sequence: one MXU matmul with
        # M = T*B instead of T small matmuls inside the serial recurrence.
        z = jnp.dot(x, wih, preferred_element_type=jnp.float32) + bias  # (T*B, 4H)

        h = h0_ref[l]                          # (B, H)
        c = c0_ref[l]
        ys = []
        for t in range(T):                     # fully unrolled serial recurrence
            gates = z[t * B:(t + 1) * B, :] + jnp.dot(
                h, whh, preferred_element_type=jnp.float32)             # (B, 4H)
            i_g = jax.nn.sigmoid(gates[:, 0 * H:1 * H])   # PyTorch gate order i,f,g,o
            f_g = jax.nn.sigmoid(gates[:, 1 * H:2 * H])
            g_g = jnp.tanh(gates[:, 2 * H:3 * H])
            o_g = jax.nn.sigmoid(gates[:, 3 * H:4 * H])
            c = f_g * c + i_g * g_g
            h = o_g * jnp.tanh(c)
            ys.append(h)

        hT_ref[l] = h
        cT_ref[l] = c
        # TODO(synk): nn.LSTM inter-layer dropout and nn.Dropout are training-only
        # stochastic ops; treated as identity (eval mode) here.
        x = jnp.concatenate(ys, axis=0)        # (T*B, H), input to the next layer
        ys_last = ys

    # ---- reorder last-layer output to batch-major (b*T + t) rows, then FC ----
    per_batch = []
    for b in range(B):
        per_batch.append(jnp.concatenate(
            [ys_last[t][b:b + 1, :] for t in range(T)], axis=0))        # (T, H)
    y_bm = jnp.concatenate(per_batch, axis=0)  # (B*T, H) == out.reshape(-1, H)

    logits_ref[...] = (jnp.dot(y_bm, fcw_ref[...],
                               preferred_element_type=jnp.float32)
                       + fcb_ref[...])


# ----------------------------- wrapper ---------------------------------------
def word_lstm_forward(params, x_ids, hidden):
    """Reproduces WordLSTM.forward (eval mode: dropout == identity).

    x_ids : (B, T) int32 token ids (batch_first, like the PyTorch module)
    hidden: tuple of (n_layers, B, H) float32 (h0, c0)
    returns (logits (B*T, vocab), (hT, cT) each (n_layers, B, H))
    """
    h0, c0 = hidden
    B, T = x_ids.shape
    L, _, H = h0.shape
    V, E = params["emb"].shape
    Ep = EMBED_PAD

    # Zero-pad the embedding width: padded emb columns and wih0 rows are zero,
    # so the math is unchanged but the layer-0 matmul K is 128-aligned.
    emb_p = jnp.pad(params["emb"], ((0, 0), (0, Ep - E))).reshape(V, 1, Ep)
    wih0_p = jnp.pad(params["wih0"], ((0, Ep - E), (0, 0)))         # (Ep, 4H)
    ids_flat = x_ids.reshape(-1).astype(jnp.int32)                  # (B*T,)

    grid_spec = pltpu.PrefetchScalarGridSpec(
        num_scalar_prefetch=1,            # ids -> SMEM
        grid=(1,),                        # everything resident; single step
        in_specs=[
            pl.BlockSpec((V, 1, Ep), lambda i, ids: (0, 0, 0)),      # emb
            pl.BlockSpec((Ep, 4 * H), lambda i, ids: (0, 0)),        # wih layer 0
            pl.BlockSpec((L - 1, H, 4 * H), lambda i, ids: (0, 0, 0)),  # wih rest
            pl.BlockSpec((L, H, 4 * H), lambda i, ids: (0, 0, 0)),   # whh
            pl.BlockSpec((L, 1, 4 * H), lambda i, ids: (0, 0, 0)),   # bias
            pl.BlockSpec((L, B, H), lambda i, ids: (0, 0, 0)),       # h0
            pl.BlockSpec((L, B, H), lambda i, ids: (0, 0, 0)),       # c0
            pl.BlockSpec((H, V), lambda i, ids: (0, 0)),             # fc_w
            pl.BlockSpec((1, V), lambda i, ids: (0, 0)),             # fc_b
        ],
        out_specs=(
            pl.BlockSpec((B * T, V), lambda i, ids: (0, 0)),
            pl.BlockSpec((L, B, H), lambda i, ids: (0, 0, 0)),
            pl.BlockSpec((L, B, H), lambda i, ids: (0, 0, 0)),
        ),
    )

    logits, hT, cT = pl.pallas_call(
        functools.partial(_wordlstm_kernel, T, B),
        grid_spec=grid_spec,
        out_shape=(
            jax.ShapeDtypeStruct((B * T, V), jnp.float32),
            jax.ShapeDtypeStruct((L, B, H), jnp.float32),
            jax.ShapeDtypeStruct((L, B, H), jnp.float32),
        ),
        compiler_params=pltpu.CompilerParams(
            dimension_semantics=("arbitrary",)),
    )(ids_flat, emb_p, wih0_p, params["wih_rest"], params["whh"], params["b"],
      h0, c0, params["fc_w"], params["fc_b"])
    return logits, (hT, cT)


# ----------------------------- pure-JAX reference -----------------------------
def word_lstm_reference(params, x_ids, hidden):
    """Non-Pallas reference of the same forward, for verification."""
    h_all, c_all = hidden
    L, _, H = h_all.shape
    emb = jnp.take(params["emb"], x_ids, axis=0)      # (B, T, E)
    x = jnp.transpose(emb, (1, 0, 2))                 # (T, B, E)
    h_fin, c_fin = [], []
    for l in range(L):
        wih = params["wih0"] if l == 0 else params["wih_rest"][l - 1]
        whh = params["whh"][l]
        bias = params["b"][l]
        h, c = h_all[l], c_all[l]
        ys = []
        for t in range(x.shape[0]):
            gates = x[t] @ wih + h @ whh + bias
            i_g = jax.nn.sigmoid(gates[:, :H])
            f_g = jax.nn.sigmoid(gates[:, H:2 * H])
            g_g = jnp.tanh(gates[:, 2 * H:3 * H])
            o_g = jax.nn.sigmoid(gates[:, 3 * H:])
            c = f_g * c + i_g * g_g
            h = o_g * jnp.tanh(c)
            ys.append(h)
        x = jnp.stack(ys, axis=0)
        h_fin.append(h)
        c_fin.append(c)
    out = jnp.transpose(x, (1, 0, 2)).reshape(-1, H)
    logits = out @ params["fc_w"] + params["fc_b"]
    return logits, (jnp.stack(h_fin), jnp.stack(c_fin))


# ----------------------------- parameter init --------------------------------
def init_params(key):
    keys = jax.random.split(key, 3 + 4 * N_LAYERS)
    k_emb, k_fcw, k_fcb = keys[0], keys[1], keys[2]
    params = {}
    params["emb"] = jax.random.normal(k_emb, (VOCAB_SIZE, EMBED_DIM),
                                      dtype=jnp.float32)
    bound = 1.0 / float(N_HIDDEN) ** 0.5
    wih_list, whh_list, b_list = [], [], []
    for l in range(N_LAYERS):
        din = EMBED_DIM if l == 0 else N_HIDDEN
        kw1, kw2, kb1, kb2 = keys[3 + 4 * l: 3 + 4 * (l + 1)]
        # Stored pre-transposed relative to PyTorch: (D_in, 4H) and (H, 4H).
        wih_list.append(jax.random.uniform(kw1, (din, 4 * N_HIDDEN),
                                           minval=-bound, maxval=bound,
                                           dtype=jnp.float32))
        whh_list.append(jax.random.uniform(kw2, (N_HIDDEN, 4 * N_HIDDEN),
                                           minval=-bound, maxval=bound,
                                           dtype=jnp.float32))
        b_ih = jax.random.uniform(kb1, (4 * N_HIDDEN,), minval=-bound,
                                  maxval=bound, dtype=jnp.float32)
        b_hh = jax.random.uniform(kb2, (4 * N_HIDDEN,), minval=-bound,
                                  maxval=bound, dtype=jnp.float32)
        b_list.append((b_ih + b_hh).reshape(1, 4 * N_HIDDEN))
    params["wih0"] = wih_list[0]                              # (E, 4H)
    params["wih_rest"] = jnp.stack(wih_list[1:], axis=0)      # (L-1, H, 4H)
    params["whh"] = jnp.stack(whh_list, axis=0)               # (L, H, 4H)
    params["b"] = jnp.stack(b_list, axis=0)                   # (L, 1, 4H)
    params["fc_w"] = jax.random.uniform(k_fcw, (N_HIDDEN, VOCAB_SIZE),
                                        minval=-bound, maxval=bound,
                                        dtype=jnp.float32)
    params["fc_b"] = jax.random.uniform(k_fcb, (1, VOCAB_SIZE),
                                        minval=-bound, maxval=bound,
                                        dtype=jnp.float32)
    return params


def init_hidden(batch_size):
    return (jnp.zeros((N_LAYERS, batch_size, N_HIDDEN), jnp.float32),
            jnp.zeros((N_LAYERS, batch_size, N_HIDDEN), jnp.float32))


# ----------------------------- main -------------------------------------------
if __name__ == "__main__":
    key = jax.random.PRNGKey(0)
    k_params, k_ids = jax.random.split(key)
    params = init_params(k_params)
    x_ids = jax.random.randint(k_ids, (BATCH, SEQ_LEN), 0, VOCAB_SIZE,
                               dtype=jnp.int32)
    hidden = init_hidden(BATCH)

    fwd = jax.jit(word_lstm_forward)
    logits, (hT, cT) = fwd(params, x_ids, hidden)
    jax.block_until_ready((logits, hT, cT))

    assert logits.shape == (BATCH * SEQ_LEN, VOCAB_SIZE)
    assert hT.shape == (N_LAYERS, BATCH, N_HIDDEN)
    assert cT.shape == (N_LAYERS, BATCH, N_HIDDEN)

    ref_logits, (ref_h, ref_c) = word_lstm_reference(params, x_ids, hidden)
    assert jnp.allclose(logits, ref_logits, rtol=1e-2, atol=1e-2)
    assert jnp.allclose(hT, ref_h, rtol=1e-2, atol=1e-2)
    assert jnp.allclose(cT, ref_c, rtol=1e-2, atol=1e-2)

    print("KERNEL_OK")
</pallas_src>

<mosaic_0001>
module attributes {stable_mosaic.version = 11 : i64} {
  func.func @_wordlstm_kernel(%arg0: i32, %arg1: memref<64xi32, #tpu.memory_space<smem>>, %arg2: memref<128x1x256xf32, #tpu.memory_space<vmem>>, %arg3: memref<256x512xf32, #tpu.memory_space<vmem>>, %arg4: memref<1x128x512xf32, #tpu.memory_space<vmem>>, %arg5: memref<2x128x512xf32, #tpu.memory_space<vmem>>, %arg6: memref<2x1x512xf32, #tpu.memory_space<vmem>>, %arg7: memref<2x8x128xf32, #tpu.memory_space<vmem>>, %arg8: memref<2x8x128xf32, #tpu.memory_space<vmem>>, %arg9: memref<128x128xf32, #tpu.memory_space<vmem>>, %arg10: memref<1x128xf32, #tpu.memory_space<vmem>>, %arg11: memref<64x128xf32, #tpu.memory_space<vmem>>, %arg12: memref<2x8x128xf32, #tpu.memory_space<vmem>>, %arg13: memref<2x8x128xf32, #tpu.memory_space<vmem>>) attributes {dimension_semantics = [#tpu.dimension_semantics<arbitrary>], iteration_bounds = array<i64: 1>, scalar_prefetch = 1 : i64, scratch_operands = 0 : i64, tpu.core_type = #tpu.core_type<tc>, window_params = [{pipeline_mode = #tpu.pipeline_mode<synchronous>, transform_indices = @transform_0, window_bounds = array<i64: 128, 1, 256>}, {pipeline_mode = #tpu.pipeline_mode<synchronous>, transform_indices = @transform_1, window_bounds = array<i64: 256, 512>}, {pipeline_mode = #tpu.pipeline_mode<synchronous>, transform_indices = @transform_2, window_bounds = array<i64: 1, 128, 512>}, {pipeline_mode = #tpu.pipeline_mode<synchronous>, transform_indices = @transform_3, window_bounds = array<i64: 2, 128, 512>}, {pipeline_mode = #tpu.pipeline_mode<synchronous>, transform_indices = @transform_4, window_bounds = array<i64: 2, 1, 512>}, {pipeline_mode = #tpu.pipeline_mode<synchronous>, transform_indices = @transform_5, window_bounds = array<i64: 2, 8, 128>}, {pipeline_mode = #tpu.pipeline_mode<synchronous>, transform_indices = @transform_6, window_bounds = array<i64: 2, 8, 128>}, {pipeline_mode = #tpu.pipeline_mode<synchronous>, transform_indices = @transform_7, window_bounds = array<i64: 128, 128>}, {pipeline_mode = #tpu.pipeline_mode<synchronous>, transform_indices = @transform_8, window_bounds = array<i64: 1, 128>}, {pipeline_mode = #tpu.pipeline_mode<synchronous>, transform_indices = @transform_9, window_bounds = array<i64: 64, 128>}, {pipeline_mode = #tpu.pipeline_mode<synchronous>, transform_indices = @transform_10, window_bounds = array<i64: 2, 8, 128>}, {pipeline_mode = #tpu.pipeline_mode<synchronous>, transform_indices = @transform_11, window_bounds = array<i64: 2, 8, 128>}]} {
    %c0 = arith.constant 0 : index
    %0 = memref.load %arg1[%c0] : memref<64xi32, #tpu.memory_space<smem>>
    %1 = arith.index_cast %0 : i32 to index
    %c0_0 = arith.constant 0 : index
    %c0_1 = arith.constant 0 : index
    %2 = vector.load %arg2[%1, %c0_0, %c0_1] : memref<128x1x256xf32, #tpu.memory_space<vmem>>, vector<1x1x256xf32>
    %3 = vector.shape_cast %2 : vector<1x1x256xf32> to vector<1x256xf32>
    %c8 = arith.constant 8 : index
    %4 = memref.load %arg1[%c8] : memref<64xi32, #tpu.memory_space<smem>>
    %5 = arith.index_cast %4 : i32 to index
    %c0_2 = arith.constant 0 : index
    %c0_3 = arith.constant 0 : index
    %6 = vector.load %arg2[%5, %c0_2, %c0_3] : memref<128x1x256xf32, #tpu.memory_space<vmem>>, vector<1x1x256xf32>
    %7 = vector.shape_cast %6 : vector<1x1x256xf32> to vector<1x256xf32>
    %c16 = arith.constant 16 : index
    %8 = memref.load %arg1[%c16] : memref<64xi32, #tpu.memory_space<smem>>
    %9 = arith.index_cast %8 : i32 to index
    %c0_4 = arith.constant 0 : index
    %c0_5 = arith.constant 0 : index
    %10 = vector.load %arg2[%9, %c0_4, %c0_5] : memref<128x1x256xf32, #tpu.memory_space<vmem>>, vector<1x1x256xf32>
    %11 = vector.shape_cast %10 : vector<1x1x256xf32> to vector<1x256xf32>
    %c24 = arith.constant 24 : index
    %12 = memref.load %arg1[%c24] : memref<64xi32, #tpu.memory_space<smem>>
    %13 = arith.index_cast %12 : i32 to index
    %c0_6 = arith.constant 0 : index
    %c0_7 = arith.constant 0 : index
    %14 = vector.load %arg2[%13, %c0_6, %c0_7] : memref<128x1x256xf32, #tpu.memory_space<vmem>>, vector<1x1x256xf32>
    %15 = vector.shape_cast %14 : vector<1x1x256xf32> to vector<1x256xf32>
    %c32 = arith.constant 32 : index
    %16 = memref.load %arg1[%c32] : memref<64xi32, #tpu.memory_space<smem>>
    %17 = arith.index_cast %16 : i32 to index
    %c0_8 = arith.constant 0 : index
    %c0_9 = arith.constant 0 : index
    %18 = vector.load %arg2[%17, %c0_8, %c0_9] : memref<128x1x256xf32, #tpu.memory_space<vmem>>, vector<1x1x256xf32>
    %19 = vector.shape_cast %18 : vector<1x1x256xf32> to vector<1x256xf32>
    %c40 = arith.constant 40 : index
    %20 = memref.load %arg1[%c40] : memref<64xi32, #tpu.memory_space<smem>>
    %21 = arith.index_cast %20 : i32 to index
    %c0_10 = arith.constant 0 : index
    %c0_11 = arith.constant 0 : index
    %22 = vector.load %arg2[%21, %c0_10, %c0_11] : memref<128x1x256xf32, #tpu.memory_space<vmem>>, vector<1x1x256xf32>
    %23 = vector.shape_cast %22 : vector<1x1x256xf32> to vector<1x256xf32>
    %c48 = arith.constant 48 : index
    %24 = memref.load %arg1[%c48] : memref<64xi32, #tpu.memory_space<smem>>
    %25 = arith.index_cast %24 : i32 to index
    %c0_12 = arith.constant 0 : index
    %c0_13 = arith.constant 0 : index
    %26 = vector.load %arg2[%25, %c0_12, %c0_13] : memref<128x1x256xf32, #tpu.memory_space<vmem>>, vector<1x1x256xf32>
    %27 = vector.shape_cast %26 : vector<1x1x256xf32> to vector<1x256xf32>
    %c56 = arith.constant 56 : index
    %28 = memref.load %arg1[%c56] : memref<64xi32, #tpu.memory_space<smem>>
    %29 = arith.index_cast %28 : i32 to index
    %c0_14 = arith.constant 0 : index
    %c0_15 = arith.constant 0 : index
    %30 = vector.load %arg2[%29, %c0_14, %c0_15] : memref<128x1x256xf32, #tpu.memory_space<vmem>>, vector<1x1x256xf32>
    %31 = vector.shape_cast %30 : vector<1x1x256xf32> to vector<1x256xf32>
    %32 = tpu.concatenate %3, %7, %11, %15, %19, %23, %27, %31 in 0 : vector<1x256xf32>, vector<1x256xf32>, vector<1x256xf32>, vector<1x256xf32>, vector<1x256xf32>, vector<1x256xf32>, vector<1x256xf32>, vector<1x256xf32> -> vector<8x256xf32>
    %c1 = arith.constant 1 : index
    %33 = memref.load %arg1[%c1] : memref<64xi32, #tpu.memory_space<smem>>
    %34 = arith.index_cast %33 : i32 to index
    %c0_16 = arith.constant 0 : index
    %c0_17 = arith.constant 0 : index
    %35 = vector.load %arg2[%34, %c0_16, %c0_17] : memref<128x1x256xf32, #tpu.memory_space<vmem>>, vector<1x1x256xf32>
    %36 = vector.shape_cast %35 : vector<1x1x256xf32> to vector<1x256xf32>
    %c9 = arith.constant 9 : index
    %37 = memref.load %arg1[%c9] : memref<64xi32, #tpu.memory_space<smem>>
    %38 = arith.index_cast %37 : i32 to index
    %c0_18 = arith.constant 0 : index
    %c0_19 = arith.constant 0 : index
    %39 = vector.load %arg2[%38, %c0_18, %c0_19] : memref<128x1x256xf32, #tpu.memory_space<vmem>>, vector<1x1x256xf32>
    %40 = vector.shape_cast %39 : vector<1x1x256xf32> to vector<1x256xf32>
    %c17 = arith.constant 17 : index
    %41 = memref.load %arg1[%c17] : memref<64xi32, #tpu.memory_space<smem>>
    %42 = arith.index_cast %41 : i32 to index
    %c0_20 = arith.constant 0 : index
    %c0_21 = arith.constant 0 : index
    %43 = vector.load %arg2[%42, %c0_20, %c0_21] : memref<128x1x256xf32, #tpu.memory_space<vmem>>, vector<1x1x256xf32>
    %44 = vector.shape_cast %43 : vector<1x1x256xf32> to vector<1x256xf32>
    %c25 = arith.constant 25 : index
    %45 = memref.load %arg1[%c25] : memref<64xi32, #tpu.memory_space<smem>>
    %46 = arith.index_cast %45 : i32 to index
    %c0_22 = arith.constant 0 : index
    %c0_23 = arith.constant 0 : index
    %47 = vector.load %arg2[%46, %c0_22, %c0_23] : memref<128x1x256xf32, #tpu.memory_space<vmem>>, vector<1x1x256xf32>
    %48 = vector.shape_cast %47 : vector<1x1x256xf32> to vector<1x256xf32>
    %c33 = arith.constant 33 : index
    %49 = memref.load %arg1[%c33] : memref<64xi32, #tpu.memory_space<smem>>
    %50 = arith.index_cast %49 : i32 to index
    %c0_24 = arith.constant 0 : index
    %c0_25 = arith.constant 0 : index
    %51 = vector.load %arg2[%50, %c0_24, %c0_25] : memref<128x1x256xf32, #tpu.memory_space<vmem>>, vector<1x1x256xf32>
    %52 = vector.shape_cast %51 : vector<1x1x256xf32> to vector<1x256xf32>
    %c41 = arith.constant 41 : index
    %53 = memref.load %arg1[%c41] : memref<64xi32, #tpu.memory_space<smem>>
    %54 = arith.index_cast %53 : i32 to index
    %c0_26 = arith.constant 0 : index
    %c0_27 = arith.constant 0 : index
    %55 = vector.load %arg2[%54, %c0_26, %c0_27] : memref<128x1x256xf32, #tpu.memory_space<vmem>>, vector<1x1x256xf32>
    %56 = vector.shape_cast %55 : vector<1x1x256xf32> to vector<1x256xf32>
    %c49 = arith.constant 49 : index
    %57 = memref.load %arg1[%c49] : memref<64xi32, #tpu.memory_space<smem>>
    %58 = arith.index_cast %57 : i32 to index
    %c0_28 = arith.constant 0 : index
    %c0_29 = arith.constant 0 : index
    %59 = vector.load %arg2[%58, %c0_28, %c0_29] : memref<128x1x256xf32, #tpu.memory_space<vmem>>, vector<1x1x256xf32>
    %60 = vector.shape_cast %59 : vector<1x1x256xf32> to vector<1x256xf32>
    %c57 = arith.constant 57 : index
    %61 = memref.load %arg1[%c57] : memref<64xi32, #tpu.memory_space<smem>>
    %62 = arith.index_cast %61 : i32 to index
    %c0_30 = arith.constant 0 : index
    %c0_31 = arith.constant 0 : index
    %63 = vector.load %arg2[%62, %c0_30, %c0_31] : memref<128x1x256xf32, #tpu.memory_space<vmem>>, vector<1x1x256xf32>
    %64 = vector.shape_cast %63 : vector<1x1x256xf32> to vector<1x256xf32>
    %65 = tpu.concatenate %36, %40, %44, %48, %52, %56, %60, %64 in 0 : vector<1x256xf32>, vector<1x256xf32>, vector<1x256xf32>, vector<1x256xf32>, vector<1x256xf32>, vector<1x256xf32>, vector<1x256xf32>, vector<1x256xf32> -> vector<8x256xf32>
    %c2 = arith.constant 2 : index
    %66 = memref.load %arg1[%c2] : memref<64xi32, #tpu.memory_space<smem>>
    %67 = arith.index_cast %66 : i32 to index
    %c0_32 = arith.constant 0 : index
    %c0_33 = arith.constant 0 : index
    %68 = vector.load %arg2[%67, %c0_32, %c0_33] : memref<128x1x256xf32, #tpu.memory_space<vmem>>, vector<1x1x256xf32>
    %69 = vector.shape_cast %68 : vector<1x1x256xf32> to vector<1x256xf32>
    %c10 = arith.constant 10 : index
    %70 = memref.load %arg1[%c10] : memref<64xi32, #tpu.memory_space<smem>>
    %71 = arith.index_cast %70 : i32 to index
    %c0_34 = arith.constant 0 : index
    %c0_35 = arith.constant 0 : index
    %72 = vector.load %arg2[%71, %c0_34, %c0_35] : memref<128x1x256xf32, #tpu.memory_space<vmem>>, vector<1x1x256xf32>
    %73 = vector.shape_cast %72 : vector<1x1x256xf32> to vector<1x256xf32>
    %c18 = arith.constant 18 : index
    %74 = memref.load %arg1[%c18] : memref<64xi32, #tpu.memory_space<smem>>
    %75 = arith.index_cast %74 : i32 to index
    %c0_36 = arith.constant 0 : index
    %c0_37 = arith.constant 0 : index
    %76 = vector.load %arg2[%75, %c0_36, %c0_37] : memref<128x1x256xf32, #tpu.memory_space<vmem>>, vector<1x1x256xf32>
    %77 = vector.shape_cast %76 : vector<1x1x256xf32> to vector<1x256xf32>
    %c26 = arith.constant 26 : index
    %78 = memref.load %arg1[%c26] : memref<64xi32, #tpu.memory_space<smem>>
    %79 = arith.index_cast %78 : i32 to index
    %c0_38 = arith.constant 0 : index
    %c0_39 = arith.constant 0 : index
    %80 = vector.load %arg2[%79, %c0_38, %c0_39] : memref<128x1x256xf32, #tpu.memory_space<vmem>>, vector<1x1x256xf32>
    %81 = vector.shape_cast %80 : vector<1x1x256xf32> to vector<1x256xf32>
    %c34 = arith.constant 34 : index
    %82 = memref.load %arg1[%c34] : memref<64xi32, #tpu.memory_space<smem>>
    %83 = arith.index_cast %82 : i32 to index
    %c0_40 = arith.constant 0 : index
    %c0_41 = arith.constant 0 : index
    %84 = vector.load %arg2[%83, %c0_40, %c0_41] : memref<128x1x256xf32, #tpu.memory_space<vmem>>, vector<1x1x256xf32>
    %85 = vector.shape_cast %84 : vector<1x1x256xf32> to vector<1x256xf32>
    %c42 = arith.constant 42 : index
    %86 = memref.load %arg1[%c42] : memref<64xi32, #tpu.memory_space<smem>>
    %87 = arith.index_cast %86 : i32 to index
    %c0_42 = arith.constant 0 : index
    %c0_43 = arith.constant 0 : index
    %88 = vector.load %arg2[%87, %c0_42, %c0_43] : memref<128x1x256xf32, #tpu.memory_space<vmem>>, vector<1x1x256xf32>
    %89 = vector.shape_cast %88 : vector<1x1x256xf32> to vector<1x256xf32>
    %c50 = arith.constant 50 : index
    %90 = memref.load %arg1[%c50] : memref<64xi32, #tpu.memory_space<smem>>
    %91 = arith.index_cast %90 : i32 to index
    %c0_44 = arith.constant 0 : index
    %c0_45 = arith.constant 0 : index
    %92 = vector.load %arg2[%91, %c0_44, %c0_45] : memref<128x1x256xf32, #tpu.memory_space<vmem>>, vector<1x1x256xf32>
    %93 = vector.shape_cast %92 : vector<1x1x256xf32> to vector<1x256xf32>
    %c58 = arith.constant 58 : index
    %94 = memref.load %arg1[%c58] : memref<64xi32, #tpu.memory_space<smem>>
    %95 = arith.index_cast %94 : i32 to index
    %c0_46 = arith.constant 0 : index
    %c0_47 = arith.constant 0 : index
    %96 = vector.load %arg2[%95, %c0_46, %c0_47] : memref<128x1x256xf32, #tpu.memory_space<vmem>>, vector<1x1x256xf32>
    %97 = vector.shape_cast %96 : vector<1x1x256xf32> to vector<1x256xf32>
    %98 = tpu.concatenate %69, %73, %77, %81, %85, %89, %93, %97 in 0 : vector<1x256xf32>, vector<1x256xf32>, vector<1x256xf32>, vector<1x256xf32>, vector<1x256xf32>, vector<1x256xf32>, vector<1x256xf32>, vector<1x256xf32> -> vector<8x256xf32>
    %c3 = arith.constant 3 : index
    %99 = memref.load %arg1[%c3] : memref<64xi32, #tpu.memory_space<smem>>
    %100 = arith.index_cast %99 : i32 to index
    %c0_48 = arith.constant 0 : index
    %c0_49 = arith.constant 0 : index
    %101 = vector.load %arg2[%100, %c0_48, %c0_49] : memref<128x1x256xf32, #tpu.memory_space<vmem>>, vector<1x1x256xf32>
    %102 = vector.shape_cast %101 : vector<1x1x256xf32> to vector<1x256xf32>
    %c11 = arith.constant 11 : index
    %103 = memref.load %arg1[%c11] : memref<64xi32, #tpu.memory_space<smem>>
    %104 = arith.index_cast %103 : i32 to index
    %c0_50 = arith.constant 0 : index
    %c0_51 = arith.constant 0 : index
    %105 = vector.load %arg2[%104, %c0_50, %c0_51] : memref<128x1x256xf32, #tpu.memory_space<vmem>>, vector<1x1x256xf32>
    %106 = vector.shape_cast %105 : vector<1x1x256xf32> to vector<1x256xf32>
    %c19 = arith.constant 19 : index
    %107 = memref.load %arg1[%c19] : memref<64xi32, #tpu.memory_space<smem>>
    %108 = arith.index_cast %107 : i32 to index
    %c0_52 = arith.constant 0 : index
    %c0_53 = arith.constant 0 : index
    %109 = vector.load %arg2[%108, %c0_52, %c0_53] : memref<128x1x256xf32, #tpu.memory_space<vmem>>, vector<1x1x256xf32>
    %110 = vector.shape_cast %109 : vector<1x1x256xf32> to vector<1x256xf32>
    %c27 = arith.constant 27 : index
    %111 = memref.load %arg1[%c27] : memref<64xi32, #tpu.memory_space<smem>>
    %112 = arith.index_cast %111 : i32 to index
    %c0_54 = arith.constant 0 : index
    %c0_55 = arith.constant 0 : index
    %113 = vector.load %arg2[%112, %c0_54, %c0_55] : memref<128x1x256xf32, #tpu.memory_space<vmem>>, vector<1x1x256xf32>
    %114 = vector.shape_cast %113 : vector<1x1x256xf32> to vector<1x256xf32>
    %c35 = arith.constant 35 : index
    %115 = memref.load %arg1[%c35] : memref<64xi32, #tpu.memory_space<smem>>
    %116 = arith.index_cast %115 : i32 to index
    %c0_56 = arith.constant 0 : index
    %c0_57 = arith.constant 0 : index
    %117 = vector.load %arg2[%116, %c0_56, %c0_57] : memref<128x1x256xf32, #tpu.memory_space<vmem>>, vector<1x1x256xf32>
    %118 = vector.shape_cast %117 : vector<1x1x256xf32> to vector<1x256xf32>
    %c43 = arith.constant 43 : index
    %119 = memref.load %arg1[%c43] : memref<64xi32, #tpu.memory_space<smem>>
    %120 = arith.index_cast %119 : i32 to index
    %c0_58 = arith.constant 0 : index
    %c0_59 = arith.constant 0 : index
    %121 = vector.load %arg2[%120, %c0_58, %c0_59] : memref<128x1x256xf32, #tpu.memory_space<vmem>>, vector<1x1x256xf32>
    %122 = vector.shape_cast %121 : vector<1x1x256xf32> to vector<1x256xf32>
    %c51 = arith.constant 51 : index
    %123 = memref.load %arg1[%c51] : memref<64xi32, #tpu.memory_space<smem>>
    %124 = arith.index_cast %123 : i32 to index
    %c0_60 = arith.constant 0 : index
    %c0_61 = arith.constant 0 : index
    %125 = vector.load %arg2[%124, %c0_60, %c0_61] : memref<128x1x256xf32, #tpu.memory_space<vmem>>, vector<1x1x256xf32>
    %126 = vector.shape_cast %125 : vector<1x1x256xf32> to vector<1x256xf32>
    %c59 = arith.constant 59 : index
    %127 = memref.load %arg1[%c59] : memref<64xi32, #tpu.memory_space<smem>>
    %128 = arith.index_cast %127 : i32 to index
    %c0_62 = arith.constant 0 : index
    %c0_63 = arith.constant 0 : index
    %129 = vector.load %arg2[%128, %c0_62, %c0_63] : memref<128x1x256xf32, #tpu.memory_space<vmem>>, vector<1x1x256xf32>
    %130 = vector.shape_cast %129 : vector<1x1x256xf32> to vector<1x256xf32>
    %131 = tpu.concatenate %102, %106, %110, %114, %118, %122, %126, %130 in 0 : vector<1x256xf32>, vector<1x256xf32>, vector<1x256xf32>, vector<1x256xf32>, vector<1x256xf32>, vector<1x256xf32>, vector<1x256xf32>, vector<1x256xf32> -> vector<8x256xf32>
    %c4 = arith.constant 4 : index
    %132 = memref.load %arg1[%c4] : memref<64xi32, #tpu.memory_space<smem>>
    %133 = arith.index_cast %132 : i32 to index
    %c0_64 = arith.constant 0 : index
    %c0_65 = arith.constant 0 : index
    %134 = vector.load %arg2[%133, %c0_64, %c0_65] : memref<128x1x256xf32, #tpu.memory_space<vmem>>, vector<1x1x256xf32>
    %135 = vector.shape_cast %134 : vector<1x1x256xf32> to vector<1x256xf32>
    %c12 = arith.constant 12 : index
    %136 = memref.load %arg1[%c12] : memref<64xi32, #tpu.memory_space<smem>>
    %137 = arith.index_cast %136 : i32 to index
    %c0_66 = arith.constant 0 : index
    %c0_67 = arith.constant 0 : index
    %138 = vector.load %arg2[%137, %c0_66, %c0_67] : memref<128x1x256xf32, #tpu.memory_space<vmem>>, vector<1x1x256xf32>
    %139 = vector.shape_cast %138 : vector<1x1x256xf32> to vector<1x256xf32>
    %c20 = arith.constant 20 : index
    %140 = memref.load %arg1[%c20] : memref<64xi32, #tpu.memory_space<smem>>
    %141 = arith.index_cast %140 : i32 to index
    %c0_68 = arith.constant 0 : index
    %c0_69 = arith.constant 0 : index
    %142 = vector.load %arg2[%141, %c0_68, %c0_69] : memref<128x1x256xf32, #tpu.memory_space<vmem>>, vector<1x1x256xf32>
    %143 = vector.shape_cast %142 : vector<1x1x256xf32> to vector<1x256xf32>
    %c28 = arith.constant 28 : index
    %144 = memref.load %arg1[%c28] : memref<64xi32, #tpu.memory_space<smem>>
    %145 = arith.index_cast %144 : i32 to index
    %c0_70 = arith.constant 0 : index
    %c0_71 = arith.constant 0 : index
    %146 = vector.load %arg2[%145, %c0_70, %c0_71] : memref<128x1x256xf32, #tpu.memory_space<vmem>>, vector<1x1x256xf32>
    %147 = vector.shape_cast %146 : vector<1x1x256xf32> to vector<1x256xf32>
    %c36 = arith.constant 36 : index
    %148 = memref.load %arg1[%c36] : memref<64xi32, #tpu.memory_space<smem>>
    %149 = arith.index_cast %148 : i32 to index
    %c0_72 = arith.constant 0 : index
    %c0_73 = arith.constant 0 : index
    %150 = vector.load %arg2[%149, %c0_72, %c0_73] : memref<128x1x256xf32, #tpu.memory_space<vmem>>, vector<1x1x256xf32>
    %151 = vector.shape_cast %150 : vector<1x1x256xf32> to vector<1x256xf32>
    %c44 = arith.constant 44 : index
    %152 = memref.load %arg1[%c44] : memref<64xi32, #tpu.memory_space<smem>>
    %153 = arith.index_cast %152 : i32 to index
    %c0_74 = arith.constant 0 : index
    %c0_75 = arith.constant 0 : index
    %154 = vector.load %arg2[%153, %c0_74, %c0_75] : memref<128x1x256xf32, #tpu.memory_space<vmem>>, vector<1x1x256xf32>
    %155 = vector.shape_cast %154 : vector<1x1x256xf32> to vector<1x256xf32>
    %c52 = arith.constant 52 : index
    %156 = memref.load %arg1[%c52] : memref<64xi32, #tpu.memory_space<smem>>
    %157 = arith.index_cast %156 : i32 to index
    %c0_76 = arith.constant 0 : index
    %c0_77 = arith.constant 0 : index
    %158 = vector.load %arg2[%157, %c0_76, %c0_77] : memref<128x1x256xf32, #tpu.memory_space<vmem>>, vector<1x1x256xf32>
    %159 = vector.shape_cast %158 : vector<1x1x256xf32> to vector<1x256xf32>
    %c60 = arith.constant 60 : index
    %160 = memref.load %arg1[%c60] : memref<64xi32, #tpu.memory_space<smem>>
    %161 = arith.index_cast %160 : i32 to index
    %c0_78 = arith.constant 0 : index
    %c0_79 = arith.constant 0 : index
    %162 = vector.load %arg2[%161, %c0_78, %c0_79] : memref<128x1x256xf32, #tpu.memory_space<vmem>>, vector<1x1x256xf32>
    %163 = vector.shape_cast %162 : vector<1x1x256xf32> to vector<1x256xf32>
    %164 = tpu.concatenate %135, %139, %143, %147, %151, %155, %159, %163 in 0 : vector<1x256xf32>, vector<1x256xf32>, vector<1x256xf32>, vector<1x256xf32>, vector<1x256xf32>, vector<1x256xf32>, vector<1x256xf32>, vector<1x256xf32> -> vector<8x256xf32>
    %c5 = arith.constant 5 : index
    %165 = memref.load %arg1[%c5] : memref<64xi32, #tpu.memory_space<smem>>
    %166 = arith.index_cast %165 : i32 to index
    %c0_80 = arith.constant 0 : index
    %c0_81 = arith.constant 0 : index
    %167 = vector.load %arg2[%166, %c0_80, %c0_81] : memref<128x1x256xf32, #tpu.memory_space<vmem>>, vector<1x1x256xf32>
    %168 = vector.shape_cast %167 : vector<1x1x256xf32> to vector<1x256xf32>
    %c13 = arith.constant 13 : index
    %169 = memref.load %arg1[%c13] : memref<64xi32, #tpu.memory_space<smem>>
    %170 = arith.index_cast %169 : i32 to index
    %c0_82 = arith.constant 0 : index
    %c0_83 = arith.constant 0 : index
    %171 = vector.load %arg2[%170, %c0_82, %c0_83] : memref<128x1x256xf32, #tpu.memory_space<vmem>>, vector<1x1x256xf32>
    %172 = vector.shape_cast %171 : vector<1x1x256xf32> to vector<1x256xf32>
    %c21 = arith.constant 21 : index
    %173 = memref.load %arg1[%c21] : memref<64xi32, #tpu.memory_space<smem>>
    %174 = arith.index_cast %173 : i32 to index
    %c0_84 = arith.constant 0 : index
    %c0_85 = arith.constant 0 : index
    %175 = vector.load %arg2[%174, %c0_84, %c0_85] : memref<128x1x256xf32, #tpu.memory_space<vmem>>, vector<1x1x256xf32>
    %176 = vector.shape_cast %175 : vector<1x1x256xf32> to vector<1x256xf32>
    %c29 = arith.constant 29 : index
    %177 = memref.load %arg1[%c29] : memref<64xi32, #tpu.memory_space<smem>>
    %178 = arith.index_cast %177 : i32 to index
    %c0_86 = arith.constant 0 : index
    %c0_87 = arith.constant 0 : index
    %179 = vector.load %arg2[%178, %c0_86, %c0_87] : memref<128x1x256xf32, #tpu.memory_space<vmem>>, vector<1x1x256xf32>
    %180 = vector.shape_cast %179 : vector<1x1x256xf32> to vector<1x256xf32>
    %c37 = arith.constant 37 : index
    %181 = memref.load %arg1[%c37] : memref<64xi32, #tpu.memory_space<smem>>
    %182 = arith.index_cast %181 : i32 to index
    %c0_88 = arith.constant 0 : index
    %c0_89 = arith.constant 0 : index
    %183 = vector.load %arg2[%182, %c0_88, %c0_89] : memref<128x1x256xf32, #tpu.memory_space<vmem>>, vector<1x1x256xf32>
    %184 = vector.shape_cast %183 : vector<1x1x256xf32> to vector<1x256xf32>
    %c45 = arith.constant 45 : index
    %185 = memref.load %arg1[%c45] : memref<64xi32, #tpu.memory_space<smem>>
    %186 = arith.index_cast %185 : i32 to index
    %c0_90 = arith.constant 0 : index
    %c0_91 = arith.constant 0 : index
    %187 = vector.load %arg2[%186, %c0_90, %c0_91] : memref<128x1x256xf32, #tpu.memory_space<vmem>>, vector<1x1x256xf32>
    %188 = vector.shape_cast %187 : vector<1x1x256xf32> to vector<1x256xf32>
    %c53 = arith.constant 53 : index
    %189 = memref.load %arg1[%c53] : memref<64xi32, #tpu.memory_space<smem>>
    %190 = arith.index_cast %189 : i32 to index
    %c0_92 = arith.constant 0 : index
    %c0_93 = arith.constant 0 : index
    %191 = vector.load %arg2[%190, %c0_92, %c0_93] : memref<128x1x256xf32, #tpu.memory_space<vmem>>, vector<1x1x256xf32>
    %192 = vector.shape_cast %191 : vector<1x1x256xf32> to vector<1x256xf32>
    %c61 = arith.constant 61 : index
    %193 = memref.load %arg1[%c61] : memref<64xi32, #tpu.memory_space<smem>>
    %194 = arith.index_cast %193 : i32 to index
    %c0_94 = arith.constant 0 : index
    %c0_95 = arith.constant 0 : index
    %195 = vector.load %arg2[%194, %c0_94, %c0_95] : memref<128x1x256xf32, #tpu.memory_space<vmem>>, vector<1x1x256xf32>
    %196 = vector.shape_cast %195 : vector<1x1x256xf32> to vector<1x256xf32>
    %197 = tpu.concatenate %168, %172, %176, %180, %184, %188, %192, %196 in 0 : vector<1x256xf32>, vector<1x256xf32>, vector<1x256xf32>, vector<1x256xf32>, vector<1x256xf32>, vector<1x256xf32>, vector<1x256xf32>, vector<1x256xf32> -> vector<8x256xf32>
    %c6 = arith.constant 6 : index
    %198 = memref.load %arg1[%c6] : memref<64xi32, #tpu.memory_space<smem>>
    %199 = arith.index_cast %198 : i32 to index
    %c0_96 = arith.constant 0 : index
    %c0_97 = arith.constant 0 : index
    %200 = vector.load %arg2[%199, %c0_96, %c0_97] : memref<128x1x256xf32, #tpu.memory_space<vmem>>, vector<1x1x256xf32>
    %201 = vector.shape_cast %200 : vector<1x1x256xf32> to vector<1x256xf32>
    %c14 = arith.constant 14 : index
    %202 = memref.load %arg1[%c14] : memref<64xi32, #tpu.memory_space<smem>>
    %203 = arith.index_cast %202 : i32 to index
    %c0_98 = arith.constant 0 : index
    %c0_99 = arith.constant 0 : index
    %204 = vector.load %arg2[%203, %c0_98, %c0_99] : memref<128x1x256xf32, #tpu.memory_space<vmem>>, vector<1x1x256xf32>
    %205 = vector.shape_cast %204 : vector<1x1x256xf32> to vector<1x256xf32>
    %c22 = arith.constant 22 : index
    %206 = memref.load %arg1[%c22] : memref<64xi32, #tpu.memory_space<smem>>
    %207 = arith.index_cast %206 : i32 to index
    %c0_100 = arith.constant 0 : index
    %c0_101 = arith.constant 0 : index
    %208 = vector.load %arg2[%207, %c0_100, %c0_101] : memref<128x1x256xf32, #tpu.memory_space<vmem>>, vector<1x1x256xf32>
    %209 = vector.shape_cast %208 : vector<1x1x256xf32> to vector<1x256xf32>
    %c30 = arith.constant 30 : index
    %210 = memref.load %arg1[%c30] : memref<64xi32, #tpu.memory_space<smem>>
    %211 = arith.index_cast %210 : i32 to index
    %c0_102 = arith.constant 0 : index
    %c0_103 = arith.constant 0 : index
    %212 = vector.load %arg2[%211, %c0_102, %c0_103] : memref<128x1x256xf32, #tpu.memory_space<vmem>>, vector<1x1x256xf32>
    %213 = vector.shape_cast %212 : vector<1x1x256xf32> to vector<1x256xf32>
    %c38 = arith.constant 38 : index
    %214 = memref.load %arg1[%c38] : memref<64xi32, #tpu.memory_space<smem>>
    %215 = arith.index_cast %214 : i32 to index
    %c0_104 = arith.constant 0 : index
    %c0_105 = arith.constant 0 : index
    %216 = vector.load %arg2[%215, %c0_104, %c0_105] : memref<128x1x256xf32, #tpu.memory_space<vmem>>, vector<1x1x256xf32>
    %217 = vector.shape_cast %216 : vector<1x1x256xf32> to vector<1x256xf32>
    %c46 = arith.constant 46 : index
    %218 = memref.load %arg1[%c46] : memref<64xi32, #tpu.memory_space<smem>>
    %219 = arith.index_cast %218 : i32 to index
    %c0_106 = arith.constant 0 : index
    %c0_107 = arith.constant 0 : index
    %220 = vector.load %arg2[%219, %c0_106, %c0_107] : memref<128x1x256xf32, #tpu.memory_space<vmem>>, vector<1x1x256xf32>
    %221 = vector.shape_cast %220 : vector<1x1x256xf32> to vector<1x256xf32>
    %c54 = arith.constant 54 : index
    %222 = memref.load %arg1[%c54] : memref<64xi32, #tpu.memory_space<smem>>
    %223 = arith.index_cast %222 : i32 to index
    %c0_108 = arith.constant 0 : index
    %c0_109 = arith.constant 0 : index
    %224 = vector.load %arg2[%223, %c0_108, %c0_109] : memref<128x1x256xf32, #tpu.memory_space<vmem>>, vector<1x1x256xf32>
    %225 = vector.shape_cast %224 : vector<1x1x256xf32> to vector<1x256xf32>
    %c62 = arith.constant 62 : index
    %226 = memref.load %arg1[%c62] : memref<64xi32, #tpu.memory_space<smem>>
    %227 = arith.index_cast %226 : i32 to index
    %c0_110 = arith.constant 0 : index
    %c0_111 = arith.constant 0 : index
    %228 = vector.load %arg2[%227, %c0_110, %c0_111] : memref<128x1x256xf32, #tpu.memory_space<vmem>>, vector<1x1x256xf32>
    %229 = vector.shape_cast %228 : vector<1x1x256xf32> to vector<1x256xf32>
    %230 = tpu.concatenate %201, %205, %209, %213, %217, %221, %225, %229 in 0 : vector<1x256xf32>, vector<1x256xf32>, vector<1x256xf32>, vector<1x256xf32>, vector<1x256xf32>, vector<1x256xf32>, vector<1x256xf32>, vector<1x256xf32> -> vector<8x256xf32>
    %c7 = arith.constant 7 : index
    %231 = memref.load %arg1[%c7] : memref<64xi32, #tpu.memory_space<smem>>
    %232 = arith.index_cast %231 : i32 to index
    %c0_112 = arith.constant 0 : index
    %c0_113 = arith.constant 0 : index
    %233 = vector.load %arg2[%232, %c0_112, %c0_113] : memref<128x1x256xf32, #tpu.memory_space<vmem>>, vector<1x1x256xf32>
    %234 = vector.shape_cast %233 : vector<1x1x256xf32> to vector<1x256xf32>
    %c15 = arith.constant 15 : index
    %235 = memref.load %arg1[%c15] : memref<64xi32, #tpu.memory_space<smem>>
    %236 = arith.index_cast %235 : i32 to index
    %c0_114 = arith.constant 0 : index
    %c0_115 = arith.constant 0 : index
    %237 = vector.load %arg2[%236, %c0_114, %c0_115] : memref<128x1x256xf32, #tpu.memory_space<vmem>>, vector<1x1x256xf32>
    %238 = vector.shape_cast %237 : vector<1x1x256xf32> to vector<1x256xf32>
    %c23 = arith.constant 23 : index
    %239 = memref.load %arg1[%c23] : memref<64xi32, #tpu.memory_space<smem>>
    %240 = arith.index_cast %239 : i32 to index
    %c0_116 = arith.constant 0 : index
    %c0_117 = arith.constant 0 : index
    %241 = vector.load %arg2[%240, %c0_116, %c0_117] : memref<128x1x256xf32, #tpu.memory_space<vmem>>, vector<1x1x256xf32>
    %242 = vector.shape_cast %241 : vector<1x1x256xf32> to vector<1x256xf32>
    %c31 = arith.constant 31 : index
    %243 = memref.load %arg1[%c31] : memref<64xi32, #tpu.memory_space<smem>>
    %244 = arith.index_cast %243 : i32 to index
    %c0_118 = arith.constant 0 : index
    %c0_119 = arith.constant 0 : index
    %245 = vector.load %arg2[%244, %c0_118, %c0_119] : memref<128x1x256xf32, #tpu.memory_space<vmem>>, vector<1x1x256xf32>
    %246 = vector.shape_cast %245 : vector<1x1x256xf32> to vector<1x256xf32>
    %c39 = arith.constant 39 : index
    %247 = memref.load %arg1[%c39] : memref<64xi32, #tpu.memory_space<smem>>
    %248 = arith.index_cast %247 : i32 to index
    %c0_120 = arith.constant 0 : index
    %c0_121 = arith.constant 0 : index
    %249 = vector.load %arg2[%248, %c0_120, %c0_121] : memref<128x1x256xf32, #tpu.memory_space<vmem>>, vector<1x1x256xf32>
    %250 = vector.shape_cast %249 : vector<1x1x256xf32> to vector<1x256xf32>
    %c47 = arith.constant 47 : index
    %251 = memref.load %arg1[%c47] : memref<64xi32, #tpu.memory_space<smem>>
    %252 = arith.index_cast %251 : i32 to index
    %c0_122 = arith.constant 0 : index
    %c0_123 = arith.constant 0 : index
    %253 = vector.load %arg2[%252, %c0_122, %c0_123] : memref<128x1x256xf32, #tpu.memory_space<vmem>>, vector<1x1x256xf32>
    %254 = vector.shape_cast %253 : vector<1x1x256xf32> to vector<1x256xf32>
    %c55 = arith.constant 55 : index
    %255 = memref.load %arg1[%c55] : memref<64xi32, #tpu.memory_space<smem>>
    %256 = arith.index_cast %255 : i32 to index
    %c0_124 = arith.constant 0 : index
    %c0_125 = arith.constant 0 : index
    %257 = vector.load %arg2[%256, %c0_124, %c0_125] : memref<128x1x256xf32, #tpu.memory_space<vmem>>, vector<1x1x256xf32>
    %258 = vector.shape_cast %257 : vector<1x1x256xf32> to vector<1x256xf32>
    %c63 = arith.constant 63 : index
    %259 = memref.load %arg1[%c63] : memref<64xi32, #tpu.memory_space<smem>>
    %260 = arith.index_cast %259 : i32 to index
    %c0_126 = arith.constant 0 : index
    %c0_127 = arith.constant 0 : index
    %261 = vector.load %arg2[%260, %c0_126, %c0_127] : memref<128x1x256xf32, #tpu.memory_space<vmem>>, vector<1x1x256xf32>
    %262 = vector.shape_cast %261 : vector<1x1x256xf32> to vector<1x256xf32>
    %263 = tpu.concatenate %234, %238, %242, %246, %250, %254, %258, %262 in 0 : vector<1x256xf32>, vector<1x256xf32>, vector<1x256xf32>, vector<1x256xf32>, vector<1x256xf32>, vector<1x256xf32>, vector<1x256xf32>, vector<1x256xf32> -> vector<8x256xf32>
    %264 = tpu.concatenate %32, %65, %98, %131, %164, %197, %230, %263 in 0 : vector<8x256xf32>, vector<8x256xf32>, vector<8x256xf32>, vector<8x256xf32>, vector<8x256xf32>, vector<8x256xf32>, vector<8x256xf32>, vector<8x256xf32> -> vector<64x256xf32>
    %c0_128 = arith.constant 0 : index
    %c0_129 = arith.constant 0 : index
    %265 = vector.load %arg3[%c0_128, %c0_129] : memref<256x512xf32, #tpu.memory_space<vmem>>, vector<256x512xf32>
    %c0_130 = arith.constant 0 : index
    %c0_131 = arith.constant 0 : index
    %c0_132 = arith.constant 0 : index
    %266 = vector.load %arg5[%c0_130, %c0_131, %c0_132] : memref<2x128x512xf32, #tpu.memory_space<vmem>>, vector<1x128x512xf32>
    %267 = vector.shape_cast %266 : vector<1x128x512xf32> to vector<128x512xf32>
    %c0_133 = arith.constant 0 : index
    %c0_134 = arith.constant 0 : index
    %c0_135 = arith.constant 0 : index
    %268 = vector.load %arg6[%c0_133, %c0_134, %c0_135] : memref<2x1x512xf32, #tpu.memory_space<vmem>>, vector<1x1x512xf32>
    %269 = vector.shape_cast %268 : vector<1x1x512xf32> to vector<1x512xf32>
    %cst = arith.constant dense<0.000000e+00> : vector<64x512xf32>
    %270 = tpu.matmul %264, %265, %cst {dimension_numbers = #tpu.dot_dimension_numbers<[1], [0], [0], [1], [0, 0, 1, 1], [], []>} : vector<64x256xf32>, vector<256x512xf32>, vector<64x512xf32> -> vector<64x512xf32>
    %271 = vector.broadcast %269 : vector<1x512xf32> to vector<64x512xf32>
    %272 = arith.addf %270, %271 : vector<64x512xf32>
    %c0_136 = arith.constant 0 : index
    %c0_137 = arith.constant 0 : index
    %c0_138 = arith.constant 0 : index
    %273 = vector.load %arg7[%c0_136, %c0_137, %c0_138] : memref<2x8x128xf32, #tpu.memory_space<vmem>>, vector<1x8x128xf32>
    %274 = vector.shape_cast %273 : vector<1x8x128xf32> to vector<8x128xf32>
    %c0_139 = arith.constant 0 : index
    %c0_140 = arith.constant 0 : index
    %c0_141 = arith.constant 0 : index
    %275 = vector.load %arg8[%c0_139, %c0_140, %c0_141] : memref<2x8x128xf32, #tpu.memory_space<vmem>>, vector<1x8x128xf32>
    %276 = vector.shape_cast %275 : vector<1x8x128xf32> to vector<8x128xf32>
    %277 = vector.extract_strided_slice %272 {offsets = [0, 0], sizes = [8, 512], strides = [1, 1]} : vector<64x512xf32> to vector<8x512xf32>
    %cst_142 = arith.constant dense<0.000000e+00> : vector<8x512xf32>
    %278 = tpu.matmul %274, %267, %cst_142 {dimension_numbers = #tpu.dot_dimension_numbers<[1], [0], [0], [1], [0, 0, 1, 1], [], []>} : vector<8x128xf32>, vector<128x512xf32>, vector<8x512xf32> -> vector<8x512xf32>
    %279 = arith.addf %277, %278 : vector<8x512xf32>
    %280 = vector.extract_strided_slice %279 {offsets = [0, 0], sizes = [8, 128], strides = [1, 1]} : vector<8x512xf32> to vector<8x128xf32>
    %281 = arith.negf %280 : vector<8x128xf32>
    %282 = math.exp %281 : vector<8x128xf32>
    %cst_143 = arith.constant 1.000000e+00 : f32
    %283 = vector.broadcast %cst_143 : f32 to vector<8x128xf32>
    %284 = arith.addf %283, %282 : vector<8x128xf32>
    %285 = arith.divf %283, %284 : vector<8x128xf32>
    %286 = vector.extract_strided_slice %279 {offsets = [0, 128], sizes = [8, 128], strides = [1, 1]} : vector<8x512xf32> to vector<8x128xf32>
    %287 = arith.negf %286 : vector<8x128xf32>
    %288 = math.exp %287 : vector<8x128xf32>
    %cst_144 = arith.constant 1.000000e+00 : f32
    %289 = vector.broadcast %cst_144 : f32 to vector<8x128xf32>
    %290 = arith.addf %289, %288 : vector<8x128xf32>
    %291 = arith.divf %289, %290 : vector<8x128xf32>
    %292 = vector.extract_strided_slice %279 {offsets = [0, 256], sizes = [8, 128], strides = [1, 1]} : vector<8x512xf32> to vector<8x128xf32>
    %293 = math.tanh %292 : vector<8x128xf32>
    %294 = vector.extract_strided_slice %279 {offsets = [0, 384], sizes = [8, 128], strides = [1, 1]} : vector<8x512xf32> to vector<8x128xf32>
    %295 = arith.negf %294 : vector<8x128xf32>
    %296 = math.exp %295 : vector<8x128xf32>
    %cst_145 = arith.constant 1.000000e+00 : f32
    %297 = vector.broadcast %cst_145 : f32 to vector<8x128xf32>
    %298 = arith.addf %297, %296 : vector<8x128xf32>
    %299 = arith.divf %297, %298 : vector<8x128xf32>
    %300 = arith.mulf %291, %276 : vector<8x128xf32>
    %301 = arith.mulf %285, %293 : vector<8x128xf32>
    %302 = arith.addf %300, %301 : vector<8x128xf32>
    %303 = math.tanh %302 : vector<8x128xf32>
    %304 = arith.mulf %299, %303 : vector<8x128xf32>
    %305 = vector.extract_strided_slice %272 {offsets = [8, 0], sizes = [8, 512], strides = [1, 1]} : vector<64x512xf32> to vector<8x512xf32>
    %cst_146 = arith.constant dense<0.000000e+00> : vector<8x512xf32>
    %306 = tpu.matmul %304, %267, %cst_146 {dimension_numbers = #tpu.dot_dimension_numbers<[1], [0], [0], [1], [0, 0, 1, 1], [], []>} : vector<8x128xf32>, vector<128x512xf32>, vector<8x512xf32> -> vector<8x512xf32>
    %307 = arith.addf %305, %306 : vector<8x512xf32>
    %308 = vector.extract_strided_slice %307 {offsets = [0, 0], sizes = [8, 128], strides = [1, 1]} : vector<8x512xf32> to vector<8x128xf32>
    %309 = arith.negf %308 : vector<8x128xf32>
    %310 = math.exp %309 : vector<8x128xf32>
    %cst_147 = arith.constant 1.000000e+00 : f32
    %311 = vector.broadcast %cst_147 : f32 to vector<8x128xf32>
    %312 = arith.addf %311, %310 : vector<8x128xf32>
    %313 = arith.divf %311, %312 : vector<8x128xf32>
    %314 = vector.extract_strided_slice %307 {offsets = [0, 128], sizes = [8, 128], strides = [1, 1]} : vector<8x512xf32> to vector<8x128xf32>
    %315 = arith.negf %314 : vector<8x128xf32>
    %316 = math.exp %315 : vector<8x128xf32>
    %cst_148 = arith.constant 1.000000e+00 : f32
    %317 = vector.broadcast %cst_148 : f32 to vector<8x128xf32>
    %318 = arith.addf %317, %316 : vector<8x128xf32>
    %319 = arith.divf %317, %318 : vector<8x128xf32>
    %320 = vector.extract_strided_slice %307 {offsets = [0, 256], sizes = [8, 128], strides = [1, 1]} : vector<8x512xf32> to vector<8x128xf32>
    %321 = math.tanh %320 : vector<8x128xf32>
    %322 = vector.extract_strided_slice %307 {offsets = [0, 384], sizes = [8, 128], strides = [1, 1]} : vector<8x512xf32> to vector<8x128xf32>
    %323 = arith.negf %322 : vector<8x128xf32>
    %324 = math.exp %323 : vector<8x128xf32>
    %cst_149 = arith.constant 1.000000e+00 : f32
    %325 = vector.broadcast %cst_149 : f32 to vector<8x128xf32>
    %326 = arith.addf %325, %324 : vector<8x128xf32>
    %327 = arith.divf %325, %326 : vector<8x128xf32>
    %328 = arith.mulf %319, %302 : vector<8x128xf32>
    %329 = arith.mulf %313, %321 : vector<8x128xf32>
    %330 = arith.addf %328, %329 : vector<8x128xf32>
    %331 = math.tanh %330 : vector<8x128xf32>
    %332 = arith.mulf %327, %331 : vector<8x128xf32>
    %333 = vector.extract_strided_slice %272 {offsets = [16, 0], sizes = [8, 512], strides = [1, 1]} : vector<64x512xf32> to vector<8x512xf32>
    %cst_150 = arith.constant dense<0.000000e+00> : vector<8x512xf32>
    %334 = tpu.matmul %332, %267, %cst_150 {dimension_numbers = #tpu.dot_dimension_numbers<[1], [0], [0], [1], [0, 0, 1, 1], [], []>} : vector<8x128xf32>, vector<128x512xf32>, vector<8x512xf32> -> vector<8x512xf32>
    %335 = arith.addf %333, %334 : vector<8x512xf32>
    %336 = vector.extract_strided_slice %335 {offsets = [0, 0], sizes = [8, 128], strides = [1, 1]} : vector<8x512xf32> to vector<8x128xf32>
    %337 = arith.negf %336 : vector<8x128xf32>
    %338 = math.exp %337 : vector<8x128xf32>
    %cst_151 = arith.constant 1.000000e+00 : f32
    %339 = vector.broadcast %cst_151 : f32 to vector<8x128xf32>
    %340 = arith.addf %339, %338 : vector<8x128xf32>
    %341 = arith.divf %339, %340 : vector<8x128xf32>
    %342 = vector.extract_strided_slice %335 {offsets = [0, 128], sizes = [8, 128], strides = [1, 1]} : vector<8x512xf32> to vector<8x128xf32>
    %343 = arith.negf %342 : vector<8x128xf32>
    %344 = math.exp %343 : vector<8x128xf32>
    %cst_152 = arith.constant 1.000000e+00 : f32
    %345 = vector.broadcast %cst_152 : f32 to vector<8x128xf32>
    %346 = arith.addf %345, %344 : vector<8x128xf32>
    %347 = arith.divf %345, %346 : vector<8x128xf32>
    %348 = vector.extract_strided_slice %335 {offsets = [0, 256], sizes = [8, 128], strides = [1, 1]} : vector<8x512xf32> to vector<8x128xf32>
    %349 = math.tanh %348 : vector<8x128xf32>
    %350 = vector.extract_strided_slice %335 {offsets = [0, 384], sizes = [8, 128], strides = [1, 1]} : vector<8x512xf32> to vector<8x128xf32>
    %351 = arith.negf %350 : vector<8x128xf32>
    %352 = math.exp %351 : vector<8x128xf32>
    %cst_153 = arith.constant 1.000000e+00 : f32
    %353 = vector.broadcast %cst_153 : f32 to vector<8x128xf32>
    %354 = arith.addf %353, %352 : vector<8x128xf32>
    %355 = arith.divf %353, %354 : vector<8x128xf32>
    %356 = arith.mulf %347, %330 : vector<8x128xf32>
    %357 = arith.mulf %341, %349 : vector<8x128xf32>
    %358 = arith.addf %356, %357 : vector<8x128xf32>
    %359 = math.tanh %358 : vector<8x128xf32>
    %360 = arith.mulf %355, %359 : vector<8x128xf32>
    %361 = vector.extract_strided_slice %272 {offsets = [24, 0], sizes = [8, 512], strides = [1, 1]} : vector<64x512xf32> to vector<8x512xf32>
    %cst_154 = arith.constant dense<0.000000e+00> : vector<8x512xf32>
    %362 = tpu.matmul %360, %267, %cst_154 {dimension_numbers = #tpu.dot_dimension_numbers<[1], [0], [0], [1], [0, 0, 1, 1], [], []>} : vector<8x128xf32>, vector<128x512xf32>, vector<8x512xf32> -> vector<8x512xf32>
    %363 = arith.addf %361, %362 : vector<8x512xf32>
    %364 = vector.extract_strided_slice %363 {offsets = [0, 0], sizes = [8, 128], strides = [1, 1]} : vector<8x512xf32> to vector<8x128xf32>
    %365 = arith.negf %364 : vector<8x128xf32>
    %366 = math.exp %365 : vector<8x128xf32>
    %cst_155 = arith.constant 1.000000e+00 : f32
    %367 = vector.broadcast %cst_155 : f32 to vector<8x128xf32>
    %368 = arith.addf %367, %366 : vector<8x128xf32>
    %369 = arith.divf %367, %368 : vector<8x128xf32>
    %370 = vector.extract_strided_slice %363 {offsets = [0, 128], sizes = [8, 128], strides = [1, 1]} : vector<8x512xf32> to vector<8x128xf32>
    %371 = arith.negf %370 : vector<8x128xf32>
    %372 = math.exp %371 : vector<8x128xf32>
    %cst_156 = arith.constant 1.000000e+00 : f32
    %373 = vector.broadcast %cst_156 : f32 to vector<8x128xf32>
    %374 = arith.addf %373, %372 : vector<8x128xf32>
    %375 = arith.divf %373, %374 : vector<8x128xf32>
    %376 = vector.extract_strided_slice %363 {offsets = [0, 256], sizes = [8, 128], strides = [1, 1]} : vector<8x512xf32> to vector<8x128xf32>
    %377 = math.tanh %376 : vector<8x128xf32>
    %378 = vector.extract_strided_slice %363 {offsets = [0, 384], sizes = [8, 128], strides = [1, 1]} : vector<8x512xf32> to vector<8x128xf32>
    %379 = arith.negf %378 : vector<8x128xf32>
    %380 = math.exp %379 : vector<8x128xf32>
    %cst_157 = arith.constant 1.000000e+00 : f32
    %381 = vector.broadcast %cst_157 : f32 to vector<8x128xf32>
    %382 = arith.addf %381, %380 : vector<8x128xf32>
    %383 = arith.divf %381, %382 : vector<8x128xf32>
    %384 = arith.mulf %375, %358 : vector<8x128xf32>
    %385 = arith.mulf %369, %377 : vector<8x128xf32>
    %386 = arith.addf %384, %385 : vector<8x128xf32>
    %387 = math.tanh %386 : vector<8x128xf32>
    %388 = arith.mulf %383, %387 : vector<8x128xf32>
    %389 = vector.extract_strided_slice %272 {offsets = [32, 0], sizes = [8, 512], strides = [1, 1]} : vector<64x512xf32> to vector<8x512xf32>
    %cst_158 = arith.constant dense<0.000000e+00> : vector<8x512xf32>
    %390 = tpu.matmul %388, %267, %cst_158 {dimension_numbers = #tpu.dot_dimension_numbers<[1], [0], [0], [1], [0, 0, 1, 1], [], []>} : vector<8x128xf32>, vector<128x512xf32>, vector<8x512xf32> -> vector<8x512xf32>
    %391 = arith.addf %389, %390 : vector<8x512xf32>
    %392 = vector.extract_strided_slice %391 {offsets = [0, 0], sizes = [8, 128], strides = [1, 1]} : vector<8x512xf32> to vector<8x128xf32>
    %393 = arith.negf %392 : vector<8x128xf32>
    %394 = math.exp %393 : vector<8x128xf32>
    %cst_159 = arith.constant 1.000000e+00 : f32
    %395 = vector.broadcast %cst_159 : f32 to vector<8x128xf32>
    %396 = arith.addf %395, %394 : vector<8x128xf32>
    %397 = arith.divf %395, %396 : vector<8x128xf32>
    %398 = vector.extract_strided_slice %391 {offsets = [0, 128], sizes = [8, 128], strides = [1, 1]} : vector<8x512xf32> to vector<8x128xf32>
    %399 = arith.negf %398 : vector<8x128xf32>
    %400 = math.exp %399 : vector<8x128xf32>
    %cst_160 = arith.constant 1.000000e+00 : f32
    %401 = vector.broadcast %cst_160 : f32 to vector<8x128xf32>
    %402 = arith.addf %401, %400 : vector<8x128xf32>
    %403 = arith.divf %401, %402 : vector<8x128xf32>
    %404 = vector.extract_strided_slice %391 {offsets = [0, 256], sizes = [8, 128], strides = [1, 1]} : vector<8x512xf32> to vector<8x128xf32>
    %405 = math.tanh %404 : vector<8x128xf32>
    %406 = vector.extract_strided_slice %391 {offsets = [0, 384], sizes = [8, 128], strides = [1, 1]} : vector<8x512xf32> to vector<8x128xf32>
    %407 = arith.negf %406 : vector<8x128xf32>
    %408 = math.exp %407 : vector<8x128xf32>
    %cst_161 = arith.constant 1.000000e+00 : f32
    %409 = vector.broadcast %cst_161 : f32 to vector<8x128xf32>
    %410 = arith.addf %409, %408 : vector<8x128xf32>
    %411 = arith.divf %409, %410 : vector<8x128xf32>
    %412 = arith.mulf %403, %386 : vector<8x128xf32>
    %413 = arith.mulf %397, %405 : vector<8x128xf32>
    %414 = arith.addf %412, %413 : vector<8x128xf32>
    %415 = math.tanh %414 : vector<8x128xf32>
    %416 = arith.mulf %411, %415 : vector<8x128xf32>
    %417 = vector.extract_strided_slice %272 {offsets = [40, 0], sizes = [8, 512], strides = [1, 1]} : vector<64x512xf32> to vector<8x512xf32>
    %cst_162 = arith.constant dense<0.000000e+00> : vector<8x512xf32>
    %418 = tpu.matmul %416, %267, %cst_162 {dimension_numbers = #tpu.dot_dimension_numbers<[1], [0], [0], [1], [0, 0, 1, 1], [], []>} : vector<8x128xf32>, vector<128x512xf32>, vector<8x512xf32> -> vector<8x512xf32>
    %419 = arith.addf %417, %418 : vector<8x512xf32>
    %420 = vector.extract_strided_slice %419 {offsets = [0, 0], sizes = [8, 128], strides = [1, 1]} : vector<8x512xf32> to vector<8x128xf32>
    %421 = arith.negf %420 : vector<8x128xf32>
    %422 = math.exp %421 : vector<8x128xf32>
    %cst_163 = arith.constant 1.000000e+00 : f32
    %423 = vector.broadcast %cst_163 : f32 to vector<8x128xf32>
    %424 = arith.addf %423, %422 : vector<8x128xf32>
    %425 = arith.divf %423, %424 : vector<8x128xf32>
    %426 = vector.extract_strided_slice %419 {offsets = [0, 128], sizes = [8, 128], strides = [1, 1]} : vector<8x512xf32> to vector<8x128xf32>
    %427 = arith.negf %426 : vector<8x128xf32>
    %428 = math.exp %427 : vector<8x128xf32>
    %cst_164 = arith.constant 1.000000e+00 : f32
    %429 = vector.broadcast %cst_164 : f32 to vector<8x128xf32>
    %430 = arith.addf %429, %428 : vector<8x128xf32>
    %431 = arith.divf %429, %430 : vector<8x128xf32>
    %432 = vector.extract_strided_slice %419 {offsets = [0, 256], sizes = [8, 128], strides = [1, 1]} : vector<8x512xf32> to vector<8x128xf32>
    %433 = math.tanh %432 : vector<8x128xf32>
    %434 = vector.extract_strided_slice %419 {offsets = [0, 384], sizes = [8, 128], strides = [1, 1]} : vector<8x512xf32> to vector<8x128xf32>
    %435 = arith.negf %434 : vector<8x128xf32>
    %436 = math.exp %435 : vector<8x128xf32>
    %cst_165 = arith.constant 1.000000e+00 : f32
    %437 = vector.broadcast %cst_165 : f32 to vector<8x128xf32>
    %438 = arith.addf %437, %436 : vector<8x128xf32>
    %439 = arith.divf %437, %438 : vector<8x128xf32>
    %440 = arith.mulf %431, %414 : vector<8x128xf32>
    %441 = arith.mulf %425, %433 : vector<8x128xf32>
    %442 = arith.addf %440, %441 : vector<8x128xf32>
    %443 = math.tanh %442 : vector<8x128xf32>
    %444 = arith.mulf %439, %443 : vector<8x128xf32>
    %445 = vector.extract_strided_slice %272 {offsets = [48, 0], sizes = [8, 512], strides = [1, 1]} : vector<64x512xf32> to vector<8x512xf32>
    %cst_166 = arith.constant dense<0.000000e+00> : vector<8x512xf32>
    %446 = tpu.matmul %444, %267, %cst_166 {dimension_numbers = #tpu.dot_dimension_numbers<[1], [0], [0], [1], [0, 0, 1, 1], [], []>} : vector<8x128xf32>, vector<128x512xf32>, vector<8x512xf32> -> vector<8x512xf32>
    %447 = arith.addf %445, %446 : vector<8x512xf32>
    %448 = vector.extract_strided_slice %447 {offsets = [0, 0], sizes = [8, 128], strides = [1, 1]} : vector<8x512xf32> to vector<8x128xf32>
    %449 = arith.negf %448 : vector<8x128xf32>
    %450 = math.exp %449 : vector<8x128xf32>
    %cst_167 = arith.constant 1.000000e+00 : f32
    %451 = vector.broadcast %cst_167 : f32 to vector<8x128xf32>
    %452 = arith.addf %451, %450 : vector<8x128xf32>
    %453 = arith.divf %451, %452 : vector<8x128xf32>
    %454 = vector.extract_strided_slice %447 {offsets = [0, 128], sizes = [8, 128], strides = [1, 1]} : vector<8x512xf32> to vector<8x128xf32>
    %455 = arith.negf %454 : vector<8x128xf32>
    %456 = math.exp %455 : vector<8x128xf32>
    %cst_168 = arith.constant 1.000000e+00 : f32
    %457 = vector.broadcast %cst_168 : f32 to vector<8x128xf32>
    %458 = arith.addf %457, %456 : vector<8x128xf32>
    %459 = arith.divf %457, %458 : vector<8x128xf32>
    %460 = vector.extract_strided_slice %447 {offsets = [0, 256], sizes = [8, 128], strides = [1, 1]} : vector<8x512xf32> to vector<8x128xf32>
    %461 = math.tanh %460 : vector<8x128xf32>
    %462 = vector.extract_strided_slice %447 {offsets = [0, 384], sizes = [8, 128], strides = [1, 1]} : vector<8x512xf32> to vector<8x128xf32>
    %463 = arith.negf %462 : vector<8x128xf32>
    %464 = math.exp %463 : vector<8x128xf32>
    %cst_169 = arith.constant 1.000000e+00 : f32
    %465 = vector.broadcast %cst_169 : f32 to vector<8x128xf32>
    %466 = arith.addf %465, %464 : vector<8x128xf32>
    %467 = arith.divf %465, %466 : vector<8x128xf32>
    %468 = arith.mulf %459, %442 : vector<8x128xf32>
    %469 = arith.mulf %453, %461 : vector<8x128xf32>
    %470 = arith.addf %468, %469 : vector<8x128xf32>
    %471 = math.tanh %470 : vector<8x128xf32>
    %472 = arith.mulf %467, %471 : vector<8x128xf32>
    %473 = vector.extract_strided_slice %272 {offsets = [56, 0], sizes = [8, 512], strides = [1, 1]} : vector<64x512xf32> to vector<8x512xf32>
    %cst_170 = arith.constant dense<0.000000e+00> : vector<8x512xf32>
    %474 = tpu.matmul %472, %267, %cst_170 {dimension_numbers = #tpu.dot_dimension_numbers<[1], [0], [0], [1], [0, 0, 1, 1], [], []>} : vector<8x128xf32>, vector<128x512xf32>, vector<8x512xf32> -> vector<8x512xf32>
    %475 = arith.addf %473, %474 : vector<8x512xf32>
    %476 = vector.extract_strided_slice %475 {offsets = [0, 0], sizes = [8, 128], strides = [1, 1]} : vector<8x512xf32> to vector<8x128xf32>
    %477 = arith.negf %476 : vector<8x128xf32>
    %478 = math.exp %477 : vector<8x128xf32>
    %cst_171 = arith.constant 1.000000e+00 : f32
    %479 = vector.broadcast %cst_171 : f32 to vector<8x128xf32>
    %480 = arith.addf %479, %478 : vector<8x128xf32>
    %481 = arith.divf %479, %480 : vector<8x128xf32>
    %482 = vector.extract_strided_slice %475 {offsets = [0, 128], sizes = [8, 128], strides = [1, 1]} : vector<8x512xf32> to vector<8x128xf32>
    %483 = arith.negf %482 : vector<8x128xf32>
    %484 = math.exp %483 : vector<8x128xf32>
    %cst_172 = arith.constant 1.000000e+00 : f32
    %485 = vector.broadcast %cst_172 : f32 to vector<8x128xf32>
    %486 = arith.addf %485, %484 : vector<8x128xf32>
    %487 = arith.divf %485, %486 : vector<8x128xf32>
    %488 = vector.extract_strided_slice %475 {offsets = [0, 256], sizes = [8, 128], strides = [1, 1]} : vector<8x512xf32> to vector<8x128xf32>
    %489 = math.tanh %488 : vector<8x128xf32>
    %490 = vector.extract_strided_slice %475 {offsets = [0, 384], sizes = [8, 128], strides = [1, 1]} : vector<8x512xf32> to vector<8x128xf32>
    %491 = arith.negf %490 : vector<8x128xf32>
    %492 = math.exp %491 : vector<8x128xf32>
    %cst_173 = arith.constant 1.000000e+00 : f32
    %493 = vector.broadcast %cst_173 : f32 to vector<8x128xf32>
    %494 = arith.addf %493, %492 : vector<8x128xf32>
    %495 = arith.divf %493, %494 : vector<8x128xf32>
    %496 = arith.mulf %487, %470 : vector<8x128xf32>
    %497 = arith.mulf %481, %489 : vector<8x128xf32>
    %498 = arith.addf %496, %497 : vector<8x128xf32>
    %499 = math.tanh %498 : vector<8x128xf32>
    %500 = arith.mulf %495, %499 : vector<8x128xf32>
    %c0_174 = arith.constant 0 : index
    %c0_175 = arith.constant 0 : index
    %c0_176 = arith.constant 0 : index
    %501 = vector.load %arg12[%c0_174, %c0_175, %c0_176] : memref<2x8x128xf32, #tpu.memory_space<vmem>>, vector<1x8x128xf32>
    %502 = vector.shape_cast %501 : vector<1x8x128xf32> to vector<8x128xf32>
    %503 = vector.shape_cast %500 : vector<8x128xf32> to vector<1x8x128xf32>
    tpu.vector_store %arg12[%c0_174, %c0_175, %c0_176], %503 {strides = array<i32>} : memref<2x8x128xf32, #tpu.memory_space<vmem>>, vector<1x8x128xf32>,
    %c0_177 = arith.constant 0 : index
    %c0_178 = arith.constant 0 : index
    %c0_179 = arith.constant 0 : index
    %504 = vector.load %arg13[%c0_177, %c0_178, %c0_179] : memref<2x8x128xf32, #tpu.memory_space<vmem>>, vector<1x8x128xf32>
    %505 = vector.shape_cast %504 : vector<1x8x128xf32> to vector<8x128xf32>
    %506 = vector.shape_cast %498 : vector<8x128xf32> to vector<1x8x128xf32>
    tpu.vector_store %arg13[%c0_177, %c0_178, %c0_179], %506 {strides = array<i32>} : memref<2x8x128xf32, #tpu.memory_space<vmem>>, vector<1x8x128xf32>,
    %507 = tpu.concatenate %304, %332, %360, %388, %416, %444, %472, %500 in 0 : vector<8x128xf32>, vector<8x128xf32>, vector<8x128xf32>, vector<8x128xf32>, vector<8x128xf32>, vector<8x128xf32>, vector<8x128xf32>, vector<8x128xf32> -> vector<64x128xf32>
    %c0_180 = arith.constant 0 : index
    %c0_181 = arith.constant 0 : index
    %c0_182 = arith.constant 0 : index
    %508 = vector.load %arg4[%c0_180, %c0_181, %c0_182] : memref<1x128x512xf32, #tpu.memory_space<vmem>>, vector<1x128x512xf32>
    %509 = vector.shape_cast %508 : vector<1x128x512xf32> to vector<128x512xf32>
    %c1_183 = arith.constant 1 : index
    %c0_184 = arith.constant 0 : index
    %c0_185 = arith.constant 0 : index
    %510 = vector.load %arg5[%c1_183, %c0_184, %c0_185] : memref<2x128x512xf32, #tpu.memory_space<vmem>>, vector<1x128x512xf32>
    %511 = vector.shape_cast %510 : vector<1x128x512xf32> to vector<128x512xf32>
    %c1_186 = arith.constant 1 : index
    %c0_187 = arith.constant 0 : index
    %c0_188 = arith.constant 0 : index
    %512 = vector.load %arg6[%c1_186, %c0_187, %c0_188] : memref<2x1x512xf32, #tpu.memory_space<vmem>>, vector<1x1x512xf32>
    %513 = vector.shape_cast %512 : vector<1x1x512xf32> to vector<1x512xf32>
    %cst_189 = arith.constant dense<0.000000e+00> : vector<64x512xf32>
    %514 = tpu.matmul %507, %509, %cst_189 {dimension_numbers = #tpu.dot_dimension_numbers<[1], [0], [0], [1], [0, 0, 1, 1], [], []>} : vector<64x128xf32>, vector<128x512xf32>, vector<64x512xf32> -> vector<64x512xf32>
    %515 = vector.broadcast %513 : vector<1x512xf32> to vector<64x512xf32>
    %516 = arith.addf %514, %515 : vector<64x512xf32>
    %c1_190 = arith.constant 1 : index
    %c0_191 = arith.constant 0 : index
    %c0_192 = arith.constant 0 : index
    %517 = vector.load %arg7[%c1_190, %c0_191, %c0_192] : memref<2x8x128xf32, #tpu.memory_space<vmem>>, vector<1x8x128xf32>
    %518 = vector.shape_cast %517 : vector<1x8x128xf32> to vector<8x128xf32>
    %c1_193 = arith.constant 1 : index
    %c0_194 = arith.constant 0 : index
    %c0_195 = arith.constant 0 : index
    %519 = vector.load %arg8[%c1_193, %c0_194, %c0_195] : memref<2x8x128xf32, #tpu.memory_space<vmem>>, vector<1x8x128xf32>
    %520 = vector.shape_cast %519 : vector<1x8x128xf32> to vector<8x128xf32>
    %521 = vector.extract_strided_slice %516 {offsets = [0, 0], sizes = [8, 512], strides = [1, 1]} : vector<64x512xf32> to vector<8x512xf32>
    %cst_196 = arith.constant dense<0.000000e+00> : vector<8x512xf32>
    %522 = tpu.matmul %518, %511, %cst_196 {dimension_numbers = #tpu.dot_dimension_numbers<[1], [0], [0], [1], [0, 0, 1, 1], [], []>} : vector<8x128xf32>, vector<128x512xf32>, vector<8x512xf32> -> vector<8x512xf32>
    %523 = arith.addf %521, %522 : vector<8x512xf32>
    %524 = vector.extract_strided_slice %523 {offsets = [0, 0], sizes = [8, 128], strides = [1, 1]} : vector<8x512xf32> to vector<8x128xf32>
    %525 = arith.negf %524 : vector<8x128xf32>
    %526 = math.exp %525 : vector<8x128xf32>
    %cst_197 = arith.constant 1.000000e+00 : f32
    %527 = vector.broadcast %cst_197 : f32 to vector<8x128xf32>
    %528 = arith.addf %527, %526 : vector<8x128xf32>
    %529 = arith.divf %527, %528 : vector<8x128xf32>
    %530 = vector.extract_strided_slice %523 {offsets = [0, 128], sizes = [8, 128], strides = [1, 1]} : vector<8x512xf32> to vector<8x128xf32>
    %531 = arith.negf %530 : vector<8x128xf32>
    %532 = math.exp %531 : vector<8x128xf32>
    %cst_198 = arith.constant 1.000000e+00 : f32
    %533 = vector.broadcast %cst_198 : f32 to vector<8x128xf32>
    %534 = arith.addf %533, %532 : vector<8x128xf32>
    %535 = arith.divf %533, %534 : vector<8x128xf32>
    %536 = vector.extract_strided_slice %523 {offsets = [0, 256], sizes = [8, 128], strides = [1, 1]} : vector<8x512xf32> to vector<8x128xf32>
    %537 = math.tanh %536 : vector<8x128xf32>
    %538 = vector.extract_strided_slice %523 {offsets = [0, 384], sizes = [8, 128], strides = [1, 1]} : vector<8x512xf32> to vector<8x128xf32>
    %539 = arith.negf %538 : vector<8x128xf32>
    %540 = math.exp %539 : vector<8x128xf32>
    %cst_199 = arith.constant 1.000000e+00 : f32
    %541 = vector.broadcast %cst_199 : f32 to vector<8x128xf32>
    %542 = arith.addf %541, %540 : vector<8x128xf32>
    %543 = arith.divf %541, %542 : vector<8x128xf32>
    %544 = arith.mulf %535, %520 : vector<8x128xf32>
    %545 = arith.mulf %529, %537 : vector<8x128xf32>
    %546 = arith.addf %544, %545 : vector<8x128xf32>
    %547 = math.tanh %546 : vector<8x128xf32>
    %548 = arith.mulf %543, %547 : vector<8x128xf32>
    %549 = vector.extract_strided_slice %516 {offsets = [8, 0], sizes = [8, 512], strides = [1, 1]} : vector<64x512xf32> to vector<8x512xf32>
    %cst_200 = arith.constant dense<0.000000e+00> : vector<8x512xf32>
    %550 = tpu.matmul %548, %511, %cst_200 {dimension_numbers = #tpu.dot_dimension_numbers<[1], [0], [0], [1], [0, 0, 1, 1], [], []>} : vector<8x128xf32>, vector<128x512xf32>, vector<8x512xf32> -> vector<8x512xf32>
    %551 = arith.addf %549, %550 : vector<8x512xf32>
    %552 = vector.extract_strided_slice %551 {offsets = [0, 0], sizes = [8, 128], strides = [1, 1]} : vector<8x512xf32> to vector<8x128xf32>
    %553 = arith.negf %552 : vector<8x128xf32>
    %554 = math.exp %553 : vector<8x128xf32>
    %cst_201 = arith.constant 1.000000e+00 : f32
    %555 = vector.broadcast %cst_201 : f32 to vector<8x128xf32>
    %556 = arith.addf %555, %554 : vector<8x128xf32>
    %557 = arith.divf %555, %556 : vector<8x128xf32>
    %558 = vector.extract_strided_slice %551 {offsets = [0, 128], sizes = [8, 128], strides = [1, 1]} : vector<8x512xf32> to vector<8x128xf32>
    %559 = arith.negf %558 : vector<8x128xf32>
    %560 = math.exp %559 : vector<8x128xf32>
    %cst_202 = arith.constant 1.000000e+00 : f32
    %561 = vector.broadcast %cst_202 : f32 to vector<8x128xf32>
    %562 = arith.addf %561, %560 : vector<8x128xf32>
    %563 = arith.divf %561, %562 : vector<8x128xf32>
    %564 = vector.extract_strided_slice %551 {offsets = [0, 256], sizes = [8, 128], strides = [1, 1]} : vector<8x512xf32> to vector<8x128xf32>
    %565 = math.tanh %564 : vector<8x128xf32>
    %566 = vector.extract_strided_slice %551 {offsets = [0, 384], sizes = [8, 128], strides = [1, 1]} : vector<8x512xf32> to vector<8x128xf32>
    %567 = arith.negf %566 : vector<8x128xf32>
    %568 = math.exp %567 : vector<8x128xf32>
    %cst_203 = arith.constant 1.000000e+00 : f32
    %569 = vector.broadcast %cst_203 : f32 to vector<8x128xf32>
    %570 = arith.addf %569, %568 : vector<8x128xf32>
    %571 = arith.divf %569, %570 : vector<8x128xf32>
    %572 = arith.mulf %563, %546 : vector<8x128xf32>
    %573 = arith.mulf %557, %565 : vector<8x128xf32>
    %574 = arith.addf %572, %573 : vector<8x128xf32>
    %575 = math.tanh %574 : vector<8x128xf32>
    %576 = arith.mulf %571, %575 : vector<8x128xf32>
    %577 = vector.extract_strided_slice %516 {offsets = [16, 0], sizes = [8, 512], strides = [1, 1]} : vector<64x512xf32> to vector<8x512xf32>
    %cst_204 = arith.constant dense<0.000000e+00> : vector<8x512xf32>
    %578 = tpu.matmul %576, %511, %cst_204 {dimension_numbers = #tpu.dot_dimension_numbers<[1], [0], [0], [1], [0, 0, 1, 1], [], []>} : vector<8x128xf32>, vector<128x512xf32>, vector<8x512xf32> -> vector<8x512xf32>
    %579 = arith.addf %577, %578 : vector<8x512xf32>
    %580 = vector.extract_strided_slice %579 {offsets = [0, 0], sizes = [8, 128], strides = [1, 1]} : vector<8x512xf32> to vector<8x128xf32>
    %581 = arith.negf %580 : vector<8x128xf32>
    %582 = math.exp %581 : vector<8x128xf32>
    %cst_205 = arith.constant 1.000000e+00 : f32
    %583 = vector.broadcast %cst_205 : f32 to vector<8x128xf32>
    %584 = arith.addf %583, %582 : vector<8x128xf32>
    %585 = arith.divf %583, %584 : vector<8x128xf32>
    %586 = vector.extract_strided_slice %579 {offsets = [0, 128], sizes = [8, 128], strides = [1, 1]} : vector<8x512xf32> to vector<8x128xf32>
    %587 = arith.negf %586 : vector<8x128xf32>
    %588 = math.exp %587 : vector<8x128xf32>
    %cst_206 = arith.constant 1.000000e+00 : f32
    %589 = vector.broadcast %cst_206 : f32 to vector<8x128xf32>
    %590 = arith.addf %589, %588 : vector<8x128xf32>
    %591 = arith.divf %589, %590 : vector<8x128xf32>
    %592 = vector.extract_strided_slice %579 {offsets = [0, 256], sizes = [8, 128], strides = [1, 1]} : vector<8x512xf32> to vector<8x128xf32>
    %593 = math.tanh %592 : vector<8x128xf32>
    %594 = vector.extract_strided_slice %579 {offsets = [0, 384], sizes = [8, 128], strides = [1, 1]} : vector<8x512xf32> to vector<8x128xf32>
    %595 = arith.negf %594 : vector<8x128xf32>
    %596 = math.exp %595 : vector<8x128xf32>
    %cst_207 = arith.constant 1.000000e+00 : f32
    %597 = vector.broadcast %cst_207 : f32 to vector<8x128xf32>
    %598 = arith.addf %597, %596 : vector<8x128xf32>
    %599 = arith.divf %597, %598 : vector<8x128xf32>
    %600 = arith.mulf %591, %574 : vector<8x128xf32>
    %601 = arith.mulf %585, %593 : vector<8x128xf32>
    %602 = arith.addf %600, %601 : vector<8x128xf32>
    %603 = math.tanh %602 : vector<8x128xf32>
    %604 = arith.mulf %599, %603 : vector<8x128xf32>
    %605 = vector.extract_strided_slice %516 {offsets = [24, 0], sizes = [8, 512], strides = [1, 1]} : vector<64x512xf32> to vector<8x512xf32>
    %cst_208 = arith.constant dense<0.000000e+00> : vector<8x512xf32>
    %606 = tpu.matmul %604, %511, %cst_208 {dimension_numbers = #tpu.dot_dimension_numbers<[1], [0], [0], [1], [0, 0, 1, 1], [], []>} : vector<8x128xf32>, vector<128x512xf32>, vector<8x512xf32> -> vector<8x512xf32>
    %607 = arith.addf %605, %606 : vector<8x512xf32>
    %608 = vector.extract_strided_slice %607 {offsets = [0, 0], sizes = [8, 128], strides = [1, 1]} : vector<8x512xf32> to vector<8x128xf32>
    %609 = arith.negf %608 : vector<8x128xf32>
    %610 = math.exp %609 : vector<8x128xf32>
    %cst_209 = arith.constant 1.000000e+00 : f32
    %611 = vector.broadcast %cst_209 : f32 to vector<8x128xf32>
    %612 = arith.addf %611, %610 : vector<8x128xf32>
    %613 = arith.divf %611, %612 : vector<8x128xf32>
    %614 = vector.extract_strided_slice %607 {offsets = [0, 128], sizes = [8, 128], strides = [1, 1]} : vector<8x512xf32> to vector<8x128xf32>
    %615 = arith.negf %614 : vector<8x128xf32>
    %616 = math.exp %615 : vector<8x128xf32>
    %cst_210 = arith.constant 1.000000e+00 : f32
    %617 = vector.broadcast %cst_210 : f32 to vector<8x128xf32>
    %618 = arith.addf %617, %616 : vector<8x128xf32>
    %619 = arith.divf %617, %618 : vector<8x128xf32>
    %620 = vector.extract_strided_slice %607 {offsets = [0, 256], sizes = [8, 128], strides = [1, 1]} : vector<8x512xf32> to vector<8x128xf32>
    %621 = math.tanh %620 : vector<8x128xf32>
    %622 = vector.extract_strided_slice %607 {offsets = [0, 384], sizes = [8, 128], strides = [1, 1]} : vector<8x512xf32> to vector<8x128xf32>
    %623 = arith.negf %622 : vector<8x128xf32>
    %624 = math.exp %623 : vector<8x128xf32>
    %cst_211 = arith.constant 1.000000e+00 : f32
    %625 = vector.broadcast %cst_211 : f32 to vector<8x128xf32>
    %626 = arith.addf %625, %624 : vector<8x128xf32>
    %627 = arith.divf %625, %626 : vector<8x128xf32>
    %628 = arith.mulf %619, %602 : vector<8x128xf32>
    %629 = arith.mulf %613, %621 : vector<8x128xf32>
    %630 = arith.addf %628, %629 : vector<8x128xf32>
    %631 = math.tanh %630 : vector<8x128xf32>
    %632 = arith.mulf %627, %631 : vector<8x128xf32>
    %633 = vector.extract_strided_slice %516 {offsets = [32, 0], sizes = [8, 512], strides = [1, 1]} : vector<64x512xf32> to vector<8x512xf32>
    %cst_212 = arith.constant dense<0.000000e+00> : vector<8x512xf32>
    %634 = tpu.matmul %632, %511, %cst_212 {dimension_numbers = #tpu.dot_dimension_numbers<[1], [0], [0], [1], [0, 0, 1, 1], [], []>} : vector<8x128xf32>, vector<128x512xf32>, vector<8x512xf32> -> vector<8x512xf32>
    %635 = arith.addf %633, %634 : vector<8x512xf32>
    %636 = vector.extract_strided_slice %635 {offsets = [0, 0], sizes = [8, 128], strides = [1, 1]} : vector<8x512xf32> to vector<8x128xf32>
    %637 = arith.negf %636 : vector<8x128xf32>
    %638 = math.exp %637 : vector<8x128xf32>
    %cst_213 = arith.constant 1.000000e+00 : f32
    %639 = vector.broadcast %cst_213 : f32 to vector<8x128xf32>
    %640 = arith.addf %639, %638 : vector<8x128xf32>
    %641 = arith.divf %639, %640 : vector<8x128xf32>
    %642 = vector.extract_strided_slice %635 {offsets = [0, 128], sizes = [8, 128], strides = [1, 1]} : vector<8x512xf32> to vector<8x128xf32>
    %643 = arith.negf %642 : vector<8x128xf32>
    %644 = math.exp %643 : vector<8x128xf32>
    %cst_214 = arith.constant 1.000000e+00 : f32
    %645 = vector.broadcast %cst_214 : f32 to vector<8x128xf32>
    %646 = arith.addf %645, %644 : vector<8x128xf32>
    %647 = arith.divf %645, %646 : vector<8x128xf32>
    %648 = vector.extract_strided_slice %635 {offsets = [0, 256], sizes = [8, 128], strides = [1, 1]} : vector<8x512xf32> to vector<8x128xf32>
    %649 = math.tanh %648 : vector<8x128xf32>
    %650 = vector.extract_strided_slice %635 {offsets = [0, 384], sizes = [8, 128], strides = [1, 1]} : vector<8x512xf32> to vector<8x128xf32>
    %651 = arith.negf %650 : vector<8x128xf32>
    %652 = math.exp %651 : vector<8x128xf32>
    %cst_215 = arith.constant 1.000000e+00 : f32
    %653 = vector.broadcast %cst_215 : f32 to vector<8x128xf32>
    %654 = arith.addf %653, %652 : vector<8x128xf32>
    %655 = arith.divf %653, %654 : vector<8x128xf32>
    %656 = arith.mulf %647, %630 : vector<8x128xf32>
    %657 = arith.mulf %641, %649 : vector<8x128xf32>
    %658 = arith.addf %656, %657 : vector<8x128xf32>
    %659 = math.tanh %658 : vector<8x128xf32>
    %660 = arith.mulf %655, %659 : vector<8x128xf32>
    %661 = vector.extract_strided_slice %516 {offsets = [40, 0], sizes = [8, 512], strides = [1, 1]} : vector<64x512xf32> to vector<8x512xf32>
    %cst_216 = arith.constant dense<0.000000e+00> : vector<8x512xf32>
    %662 = tpu.matmul %660, %511, %cst_216 {dimension_numbers = #tpu.dot_dimension_numbers<[1], [0], [0], [1], [0, 0, 1, 1], [], []>} : vector<8x128xf32>, vector<128x512xf32>, vector<8x512xf32> -> vector<8x512xf32>
    %663 = arith.addf %661, %662 : vector<8x512xf32>
    %664 = vector.extract_strided_slice %663 {offsets = [0, 0], sizes = [8, 128], strides = [1, 1]} : vector<8x512xf32> to vector<8x128xf32>
    %665 = arith.negf %664 : vector<8x128xf32>
    %666 = math.exp %665 : vector<8x128xf32>
    %cst_217 = arith.constant 1.000000e+00 : f32
    %667 = vector.broadcast %cst_217 : f32 to vector<8x128xf32>
    %668 = arith.addf %667, %666 : vector<8x128xf32>
    %669 = arith.divf %667, %668 : vector<8x128xf32>
    %670 = vector.extract_strided_slice %663 {offsets = [0, 128], sizes = [8, 128], strides = [1, 1]} : vector<8x512xf32> to vector<8x128xf32>
    %671 = arith.negf %670 : vector<8x128xf32>
    %672 = math.exp %671 : vector<8x128xf32>
    %cst_218 = arith.constant 1.000000e+00 : f32
    %673 = vector.broadcast %cst_218 : f32 to vector<8x128xf32>
    %674 = arith.addf %673, %672 : vector<8x128xf32>
    %675 = arith.divf %673, %674 : vector<8x128xf32>
    %676 = vector.extract_strided_slice %663 {offsets = [0, 256], sizes = [8, 128], strides = [1, 1]} : vector<8x512xf32> to vector<8x128xf32>
    %677 = math.tanh %676 : vector<8x128xf32>
    %678 = vector.extract_strided_slice %663 {offsets = [0, 384], sizes = [8, 128], strides = [1, 1]} : vector<8x512xf32> to vector<8x128xf32>
    %679 = arith.negf %678 : vector<8x128xf32>
    %680 = math.exp %679 : vector<8x128xf32>
    %cst_219 = arith.constant 1.000000e+00 : f32
    %681 = vector.broadcast %cst_219 : f32 to vector<8x128xf32>
    %682 = arith.addf %681, %680 : vector<8x128xf32>
    %683 = arith.divf %681, %682 : vector<8x128xf32>
    %684 = arith.mulf %675, %658 : vector<8x128xf32>
    %685 = arith.mulf %669, %677 : vector<8x128xf32>
    %686 = arith.addf %684, %685 : vector<8x128xf32>
    %687 = math.tanh %686 : vector<8x128xf32>
    %688 = arith.mulf %683, %687 : vector<8x128xf32>
    %689 = vector.extract_strided_slice %516 {offsets = [48, 0], sizes = [8, 512], strides = [1, 1]} : vector<64x512xf32> to vector<8x512xf32>
    %cst_220 = arith.constant dense<0.000000e+00> : vector<8x512xf32>
    %690 = tpu.matmul %688, %511, %cst_220 {dimension_numbers = #tpu.dot_dimension_numbers<[1], [0], [0], [1], [0, 0, 1, 1], [], []>} : vector<8x128xf32>, vector<128x512xf32>, vector<8x512xf32> -> vector<8x512xf32>
    %691 = arith.addf %689, %690 : vector<8x512xf32>
    %692 = vector.extract_strided_slice %691 {offsets = [0, 0], sizes = [8, 128], strides = [1, 1]} : vector<8x512xf32> to vector<8x128xf32>
    %693 = arith.negf %692 : vector<8x128xf32>
    %694 = math.exp %693 : vector<8x128xf32>
    %cst_221 = arith.constant 1.000000e+00 : f32
    %695 = vector.broadcast %cst_221 : f32 to vector<8x128xf32>
    %696 = arith.addf %695, %694 : vector<8x128xf32>
    %697 = arith.divf %695, %696 : vector<8x128xf32>
    %698 = vector.extract_strided_slice %691 {offsets = [0, 128], sizes = [8, 128], strides = [1, 1]} : vector<8x512xf32> to vector<8x128xf32>
    %699 = arith.negf %698 : vector<8x128xf32>
    %700 = math.exp %699 : vector<8x128xf32>
    %cst_222 = arith.constant 1.000000e+00 : f32
    %701 = vector.broadcast %cst_222 : f32 to vector<8x128xf32>
    %702 = arith.addf %701, %700 : vector<8x128xf32>
    %703 = arith.divf %701, %702 : vector<8x128xf32>
    %704 = vector.extract_strided_slice %691 {offsets = [0, 256], sizes = [8, 128], strides = [1, 1]} : vector<8x512xf32> to vector<8x128xf32>
    %705 = math.tanh %704 : vector<8x128xf32>
    %706 = vector.extract_strided_slice %691 {offsets = [0, 384], sizes = [8, 128], strides = [1, 1]} : vector<8x512xf32> to vector<8x128xf32>
    %707 = arith.negf %706 : vector<8x128xf32>
    %708 = math.exp %707 : vector<8x128xf32>
    %cst_223 = arith.constant 1.000000e+00 : f32
    %709 = vector.broadcast %cst_223 : f32 to vector<8x128xf32>
    %710 = arith.addf %709, %708 : vector<8x128xf32>
    %711 = arith.divf %709, %710 : vector<8x128xf32>
    %712 = arith.mulf %703, %686 : vector<8x128xf32>
    %713 = arith.mulf %697, %705 : vector<8x128xf32>
    %714 = arith.addf %712, %713 : vector<8x128xf32>
    %715 = math.tanh %714 : vector<8x128xf32>
    %716 = arith.mulf %711, %715 : vector<8x128xf32>
    %717 = vector.extract_strided_slice %516 {offsets = [56, 0], sizes = [8, 512], strides = [1, 1]} : vector<64x512xf32> to vector<8x512xf32>
    %cst_224 = arith.constant dense<0.000000e+00> : vector<8x512xf32>
    %718 = tpu.matmul %716, %511, %cst_224 {dimension_numbers = #tpu.dot_dimension_numbers<[1], [0], [0], [1], [0, 0, 1, 1], [], []>} : vector<8x128xf32>, vector<128x512xf32>, vector<8x512xf32> -> vector<8x512xf32>
    %719 = arith.addf %717, %718 : vector<8x512xf32>
    %720 = vector.extract_strided_slice %719 {offsets = [0, 0], sizes = [8, 128], strides = [1, 1]} : vector<8x512xf32> to vector<8x128xf32>
    %721 = arith.negf %720 : vector<8x128xf32>
    %722 = math.exp %721 : vector<8x128xf32>
    %cst_225 = arith.constant 1.000000e+00 : f32
    %723 = vector.broadcast %cst_225 : f32 to vector<8x128xf32>
    %724 = arith.addf %723, %722 : vector<8x128xf32>
    %725 = arith.divf %723, %724 : vector<8x128xf32>
    %726 = vector.extract_strided_slice %719 {offsets = [0, 128], sizes = [8, 128], strides = [1, 1]} : vector<8x512xf32> to vector<8x128xf32>
    %727 = arith.negf %726 : vector<8x128xf32>
    %728 = math.exp %727 : vector<8x128xf32>
    %cst_226 = arith.constant 1.000000e+00 : f32
    %729 = vector.broadcast %cst_226 : f32 to vector<8x128xf32>
    %730 = arith.addf %729, %728 : vector<8x128xf32>
    %731 = arith.divf %729, %730 : vector<8x128xf32>
    %732 = vector.extract_strided_slice %719 {offsets = [0, 256], sizes = [8, 128], strides = [1, 1]} : vector<8x512xf32> to vector<8x128xf32>
    %733 = math.tanh %732 : vector<8x128xf32>
    %734 = vector.extract_strided_slice %719 {offsets = [0, 384], sizes = [8, 128], strides = [1, 1]} : vector<8x512xf32> to vector<8x128xf32>
    %735 = arith.negf %734 : vector<8x128xf32>
    %736 = math.exp %735 : vector<8x128xf32>
    %cst_227 = arith.constant 1.000000e+00 : f32
    %737 = vector.broadcast %cst_227 : f32 to vector<8x128xf32>
    %738 = arith.addf %737, %736 : vector<8x128xf32>
    %739 = arith.divf %737, %738 : vector<8x128xf32>
    %740 = arith.mulf %731, %714 : vector<8x128xf32>
    %741 = arith.mulf %725, %733 : vector<8x128xf32>
    %742 = arith.addf %740, %741 : vector<8x128xf32>
    %743 = math.tanh %742 : vector<8x128xf32>
    %744 = arith.mulf %739, %743 : vector<8x128xf32>
    %c1_228 = arith.constant 1 : index
    %c0_229 = arith.constant 0 : index
    %c0_230 = arith.constant 0 : index
    %745 = vector.load %arg12[%c1_228, %c0_229, %c0_230] : memref<2x8x128xf32, #tpu.memory_space<vmem>>, vector<1x8x128xf32>
    %746 = vector.shape_cast %745 : vector<1x8x128xf32> to vector<8x128xf32>
    %747 = vector.shape_cast %744 : vector<8x128xf32> to vector<1x8x128xf32>
    tpu.vector_store %arg12[%c1_228, %c0_229, %c0_230], %747 {strides = array<i32>} : memref<2x8x128xf32, #tpu.memory_space<vmem>>, vector<1x8x128xf32>,
    %c1_231 = arith.constant 1 : index
    %c0_232 = arith.constant 0 : index
    %c0_233 = arith.constant 0 : index
    %748 = vector.load %arg13[%c1_231, %c0_232, %c0_233] : memref<2x8x128xf32, #tpu.memory_space<vmem>>, vector<1x8x128xf32>
    %749 = vector.shape_cast %748 : vector<1x8x128xf32> to vector<8x128xf32>
    %750 = vector.shape_cast %742 : vector<8x128xf32> to vector<1x8x128xf32>
    tpu.vector_store %arg13[%c1_231, %c0_232, %c0_233], %750 {strides = array<i32>} : memref<2x8x128xf32, #tpu.memory_space<vmem>>, vector<1x8x128xf32>,
    %751 = vector.extract_strided_slice %548 {offsets = [0, 0], sizes = [1, 128], strides = [1, 1]} : vector<8x128xf32> to vector<1x128xf32>
    %752 = vector.extract_strided_slice %576 {offsets = [0, 0], sizes = [1, 128], strides = [1, 1]} : vector<8x128xf32> to vector<1x128xf32>
    %753 = vector.extract_strided_slice %604 {offsets = [0, 0], sizes = [1, 128], strides = [1, 1]} : vector<8x128xf32> to vector<1x128xf32>
    %754 = vector.extract_strided_slice %632 {offsets = [0, 0], sizes = [1, 128], strides = [1, 1]} : vector<8x128xf32> to vector<1x128xf32>
    %755 = vector.extract_strided_slice %660 {offsets = [0, 0], sizes = [1, 128], strides = [1, 1]} : vector<8x128xf32> to vector<1x128xf32>
    %756 = vector.extract_strided_slice %688 {offsets = [0, 0], sizes = [1, 128], strides = [1, 1]} : vector<8x128xf32> to vector<1x128xf32>
    %757 = vector.extract_strided_slice %716 {offsets = [0, 0], sizes = [1, 128], strides = [1, 1]} : vector<8x128xf32> to vector<1x128xf32>
    %758 = vector.extract_strided_slice %744 {offsets = [0, 0], sizes = [1, 128], strides = [1, 1]} : vector<8x128xf32> to vector<1x128xf32>
    %759 = tpu.concatenate %751, %752, %753, %754, %755, %756, %757, %758 in 0 : vector<1x128xf32>, vector<1x128xf32>, vector<1x128xf32>, vector<1x128xf32>, vector<1x128xf32>, vector<1x128xf32>, vector<1x128xf32>, vector<1x128xf32> -> vector<8x128xf32>
    %760 = vector.extract_strided_slice %548 {offsets = [1, 0], sizes = [1, 128], strides = [1, 1]} : vector<8x128xf32> to vector<1x128xf32>
    %761 = vector.extract_strided_slice %576 {offsets = [1, 0], sizes = [1, 128], strides = [1, 1]} : vector<8x128xf32> to vector<1x128xf32>
    %762 = vector.extract_strided_slice %604 {offsets = [1, 0], sizes = [1, 128], strides = [1, 1]} : vector<8x128xf32> to vector<1x128xf32>
    %763 = vector.extract_strided_slice %632 {offsets = [1, 0], sizes = [1, 128], strides = [1, 1]} : vector<8x128xf32> to vector<1x128xf32>
    %764 = vector.extract_strided_slice %660 {offsets = [1, 0], sizes = [1, 128], strides = [1, 1]} : vector<8x128xf32> to vector<1x128xf32>
    %765 = vector.extract_strided_slice %688 {offsets = [1, 0], sizes = [1, 128], strides = [1, 1]} : vector<8x128xf32> to vector<1x128xf32>
    %766 = vector.extract_strided_slice %716 {offsets = [1, 0], sizes = [1, 128], strides = [1, 1]} : vector<8x128xf32> to vector<1x128xf32>
    %767 = vector.extract_strided_slice %744 {offsets = [1, 0], sizes = [1, 128], strides = [1, 1]} : vector<8x128xf32> to vector<1x128xf32>
    %768 = tpu.concatenate %760, %761, %762, %763, %764, %765, %766, %767 in 0 : vector<1x128xf32>, vector<1x128xf32>, vector<1x128xf32>, vector<1x128xf32>, vector<1x128xf32>, vector<1x128xf32>, vector<1x128xf32>, vector<1x128xf32> -> vector<8x128xf32>
    %769 = vector.extract_strided_slice %548 {offsets = [2, 0], sizes = [1, 128], strides = [1, 1]} : vector<8x128xf32> to vector<1x128xf32>
    %770 = vector.extract_strided_slice %576 {offsets = [2, 0], sizes = [1, 128], strides = [1, 1]} : vector<8x128xf32> to vector<1x128xf32>
    %771 = vector.extract_strided_slice %604 {offsets = [2, 0], sizes = [1, 128], strides = [1, 1]} : vector<8x128xf32> to vector<1x128xf32>
    %772 = vector.extract_strided_slice %632 {offsets = [2, 0], sizes = [1, 128], strides = [1, 1]} : vector<8x128xf32> to vector<1x128xf32>
    %773 = vector.extract_strided_slice %660 {offsets = [2, 0], sizes = [1, 128], strides = [1, 1]} : vector<8x128xf32> to vector<1x128xf32>
    %774 = vector.extract_strided_slice %688 {offsets = [2, 0], sizes = [1, 128], strides = [1, 1]} : vector<8x128xf32> to vector<1x128xf32>
    %775 = vector.extract_strided_slice %716 {offsets = [2, 0], sizes = [1, 128], strides = [1, 1]} : vector<8x128xf32> to vector<1x128xf32>
    %776 = vector.extract_strided_slice %744 {offsets = [2, 0], sizes = [1, 128], strides = [1, 1]} : vector<8x128xf32> to vector<1x128xf32>
    %777 = tpu.concatenate %769, %770, %771, %772, %773, %774, %775, %776 in 0 : vector<1x128xf32>, vector<1x128xf32>, vector<1x128xf32>, vector<1x128xf32>, vector<1x128xf32>, vector<1x128xf32>, vector<1x128xf32>, vector<1x128xf32> -> vector<8x128xf32>
    %778 = vector.extract_strided_slice %548 {offsets = [3, 0], sizes = [1, 128], strides = [1, 1]} : vector<8x128xf32> to vector<1x128xf32>
    %779 = vector.extract_strided_slice %576 {offsets = [3, 0], sizes = [1, 128], strides = [1, 1]} : vector<8x128xf32> to vector<1x128xf32>
    %780 = vector.extract_strided_slice %604 {offsets = [3, 0], sizes = [1, 128], strides = [1, 1]} : vector<8x128xf32> to vector<1x128xf32>
    %781 = vector.extract_strided_slice %632 {offsets = [3, 0], sizes = [1, 128], strides = [1, 1]} : vector<8x128xf32> to vector<1x128xf32>
    %782 = vector.extract_strided_slice %660 {offsets = [3, 0], sizes = [1, 128], strides = [1, 1]} : vector<8x128xf32> to vector<1x128xf32>
    %783 = vector.extract_strided_slice %688 {offsets = [3, 0], sizes = [1, 128], strides = [1, 1]} : vector<8x128xf32> to vector<1x128xf32>
    %784 = vector.extract_strided_slice %716 {offsets = [3, 0], sizes = [1, 128], strides = [1, 1]} : vector<8x128xf32> to vector<1x128xf32>
    %785 = vector.extract_strided_slice %744 {offsets = [3, 0], sizes = [1, 128], strides = [1, 1]} : vector<8x128xf32> to vector<1x128xf32>
    %786 = tpu.concatenate %778, %779, %780, %781, %782, %783, %784, %785 in 0 : vector<1x128xf32>, vector<1x128xf32>, vector<1x128xf32>, vector<1x128xf32>, vector<1x128xf32>, vector<1x128xf32>, vector<1x128xf32>, vector<1x128xf32> -> vector<8x128xf32>
    %787 = vector.extract_strided_slice %548 {offsets = [4, 0], sizes = [1, 128], strides = [1, 1]} : vector<8x128xf32> to vector<1x128xf32>
    %788 = vector.extract_strided_slice %576 {offsets = [4, 0], sizes = [1, 128], strides = [1, 1]} : vector<8x128xf32> to vector<1x128xf32>
    %789 = vector.extract_strided_slice %604 {offsets = [4, 0], sizes = [1, 128], strides = [1, 1]} : vector<8x128xf32> to vector<1x128xf32>
    %790 = vector.extract_strided_slice %632 {offsets = [4, 0], sizes = [1, 128], strides = [1, 1]} : vector<8x128xf32> to vector<1x128xf32>
    %791 = vector.extract_strided_slice %660 {offsets = [4, 0], sizes = [1, 128], strides = [1, 1]} : vector<8x128xf32> to vector<1x128xf32>
    %792 = vector.extract_strided_slice %688 {offsets = [4, 0], sizes = [1, 128], strides = [1, 1]} : vector<8x128xf32> to vector<1x128xf32>
    %793 = vector.extract_strided_slice %716 {offsets = [4, 0], sizes = [1, 128], strides = [1, 1]} : vector<8x128xf32> to vector<1x128xf32>
    %794 = vector.extract_strided_slice %744 {offsets = [4, 0], sizes = [1, 128], strides = [1, 1]} : vector<8x128xf32> to vector<1x128xf32>
    %795 = tpu.concatenate %787, %788, %789, %790, %791, %792, %793, %794 in 0 : vector<1x128xf32>, vector<1x128xf32>, vector<1x128xf32>, vector<1x128xf32>, vector<1x128xf32>, vector<1x128xf32>, vector<1x128xf32>, vector<1x128xf32> -> vector<8x128xf32>
    %796 = vector.extract_strided_slice %548 {offsets = [5, 0], sizes = [1, 128], strides = [1, 1]} : vector<8x128xf32> to vector<1x128xf32>
    %797 = vector.extract_strided_slice %576 {offsets = [5, 0], sizes = [1, 128], strides = [1, 1]} : vector<8x128xf32> to vector<1x128xf32>
    %798 = vector.extract_strided_slice %604 {offsets = [5, 0], sizes = [1, 128], strides = [1, 1]} : vector<8x128xf32> to vector<1x128xf32>
    %799 = vector.extract_strided_slice %632 {offsets = [5, 0], sizes = [1, 128], strides = [1, 1]} : vector<8x128xf32> to vector<1x128xf32>
    %800 = vector.extract_strided_slice %660 {offsets = [5, 0], sizes = [1, 128], strides = [1, 1]} : vector<8x128xf32> to vector<1x128xf32>
    %801 = vector.extract_strided_slice %688 {offsets = [5, 0], sizes = [1, 128], strides = [1, 1]} : vector<8x128xf32> to vector<1x128xf32>
    %802 = vector.extract_strided_slice %716 {offsets = [5, 0], sizes = [1, 128], strides = [1, 1]} : vector<8x128xf32> to vector<1x128xf32>
    %803 = vector.extract_strided_slice %744 {offsets = [5, 0], sizes = [1, 128], strides = [1, 1]} : vector<8x128xf32> to vector<1x128xf32>
    %804 = tpu.concatenate %796, %797, %798, %799, %800, %801, %802, %803 in 0 : vector<1x128xf32>, vector<1x128xf32>, vector<1x128xf32>, vector<1x128xf32>, vector<1x128xf32>, vector<1x128xf32>, vector<1x128xf32>, vector<1x128xf32> -> vector<8x128xf32>
    %805 = vector.extract_strided_slice %548 {offsets = [6, 0], sizes = [1, 128], strides = [1, 1]} : vector<8x128xf32> to vector<1x128xf32>
    %806 = vector.extract_strided_slice %576 {offsets = [6, 0], sizes = [1, 128], strides = [1, 1]} : vector<8x128xf32> to vector<1x128xf32>
    %807 = vector.extract_strided_slice %604 {offsets = [6, 0], sizes = [1, 128], strides = [1, 1]} : vector<8x128xf32> to vector<1x128xf32>
    %808 = vector.extract_strided_slice %632 {offsets = [6, 0], sizes = [1, 128], strides = [1, 1]} : vector<8x128xf32> to vector<1x128xf32>
    %809 = vector.extract_strided_slice %660 {offsets = [6, 0], sizes = [1, 128], strides = [1, 1]} : vector<8x128xf32> to vector<1x128xf32>
    %810 = vector.extract_strided_slice %688 {offsets = [6, 0], sizes = [1, 128], strides = [1, 1]} : vector<8x128xf32> to vector<1x128xf32>
    %811 = vector.extract_strided_slice %716 {offsets = [6, 0], sizes = [1, 128], strides = [1, 1]} : vector<8x128xf32> to vector<1x128xf32>
    %812 = vector.extract_strided_slice %744 {offsets = [6, 0], sizes = [1, 128], strides = [1, 1]} : vector<8x128xf32> to vector<1x128xf32>
    %813 = tpu.concatenate %805, %806, %807, %808, %809, %810, %811, %812 in 0 : vector<1x128xf32>, vector<1x128xf32>, vector<1x128xf32>, vector<1x128xf32>, vector<1x128xf32>, vector<1x128xf32>, vector<1x128xf32>, vector<1x128xf32> -> vector<8x128xf32>
    %814 = vector.extract_strided_slice %548 {offsets = [7, 0], sizes = [1, 128], strides = [1, 1]} : vector<8x128xf32> to vector<1x128xf32>
    %815 = vector.extract_strided_slice %576 {offsets = [7, 0], sizes = [1, 128], strides = [1, 1]} : vector<8x128xf32> to vector<1x128xf32>
    %816 = vector.extract_strided_slice %604 {offsets = [7, 0], sizes = [1, 128], strides = [1, 1]} : vector<8x128xf32> to vector<1x128xf32>
    %817 = vector.extract_strided_slice %632 {offsets = [7, 0], sizes = [1, 128], strides = [1, 1]} : vector<8x128xf32> to vector<1x128xf32>
    %818 = vector.extract_strided_slice %660 {offsets = [7, 0], sizes = [1, 128], strides = [1, 1]} : vector<8x128xf32> to vector<1x128xf32>
    %819 = vector.extract_strided_slice %688 {offsets = [7, 0], sizes = [1, 128], strides = [1, 1]} : vector<8x128xf32> to vector<1x128xf32>
    %820 = vector.extract_strided_slice %716 {offsets = [7, 0], sizes = [1, 128], strides = [1, 1]} : vector<8x128xf32> to vector<1x128xf32>
    %821 = vector.extract_strided_slice %744 {offsets = [7, 0], sizes = [1, 128], strides = [1, 1]} : vector<8x128xf32> to vector<1x128xf32>
    %822 = tpu.concatenate %814, %815, %816, %817, %818, %819, %820, %821 in 0 : vector<1x128xf32>, vector<1x128xf32>, vector<1x128xf32>, vector<1x128xf32>, vector<1x128xf32>, vector<1x128xf32>, vector<1x128xf32>, vector<1x128xf32> -> vector<8x128xf32>
    %823 = tpu.concatenate %759, %768, %777, %786, %795, %804, %813, %822 in 0 : vector<8x128xf32>, vector<8x128xf32>, vector<8x128xf32>, vector<8x128xf32>, vector<8x128xf32>, vector<8x128xf32>, vector<8x128xf32>, vector<8x128xf32> -> vector<64x128xf32>
    %c0_234 = arith.constant 0 : index
    %c0_235 = arith.constant 0 : index
    %824 = vector.load %arg9[%c0_234, %c0_235] : memref<128x128xf32, #tpu.memory_space<vmem>>, vector<128x128xf32>
    %cst_236 = arith.constant dense<0.000000e+00> : vector<64x128xf32>
    %825 = tpu.matmul %823, %824, %cst_236 {dimension_numbers = #tpu.dot_dimension_numbers<[1], [0], [0], [1], [0, 0, 1, 1], [], []>} : vector<64x128xf32>, vector<128x128xf32>, vector<64x128xf32> -> vector<64x128xf32>
    %c0_237 = arith.constant 0 : index
    %c0_238 = arith.constant 0 : index
    %826 = vector.load %arg10[%c0_237, %c0_238] : memref<1x128xf32, #tpu.memory_space<vmem>>, vector<1x128xf32>
    %827 = vector.broadcast %826 : vector<1x128xf32> to vector<64x128xf32>
    %828 = arith.addf %825, %827 : vector<64x128xf32>
    %c0_239 = arith.constant 0 : index
    %c0_240 = arith.constant 0 : index
    %829 = vector.load %arg11[%c0_239, %c0_240] : memref<64x128xf32, #tpu.memory_space<vmem>>, vector<64x128xf32>
    tpu.vector_store %arg11[%c0_239, %c0_240], %828 {strides = array<i32>} : memref<64x128xf32, #tpu.memory_space<vmem>>, vector<64x128xf32>,
    return
  }
  func.func @transform_0(%arg0: i32, %arg1: memref<64xi32, #tpu.memory_space<smem>>) -> (i32, i32, i32) {
    %c0_i32 = arith.constant 0 : i32
    %c0_i32_0 = arith.constant 0 : i32
    %c0_i32_1 = arith.constant 0 : i32
    %c0_i32_2 = arith.constant 0 : i32
    return %c0_i32, %c0_i32_0, %c0_i32_1 : i32, i32, i32
  }
  func.func @transform_1(%arg0: i32, %arg1: memref<64xi32, #tpu.memory_space<smem>>) -> (i32, i32) {
    %c0_i32 = arith.constant 0 : i32
    %c0_i32_0 = arith.constant 0 : i32
    %c0_i32_1 = arith.constant 0 : i32
    return %c0_i32, %c0_i32_0 : i32, i32
  }
  func.func @transform_2(%arg0: i32, %arg1: memref<64xi32, #tpu.memory_space<smem>>) -> (i32, i32, i32) {
    %c0_i32 = arith.constant 0 : i32
    %c0_i32_0 = arith.constant 0 : i32
    %c0_i32_1 = arith.constant 0 : i32
    %c0_i32_2 = arith.constant 0 : i32
    return %c0_i32, %c0_i32_0, %c0_i32_1 : i32, i32, i32
  }
  func.func @transform_3(%arg0: i32, %arg1: memref<64xi32, #tpu.memory_space<smem>>) -> (i32, i32, i32) {
    %c0_i32 = arith.constant 0 : i32
    %c0_i32_0 = arith.constant 0 : i32
    %c0_i32_1 = arith.constant 0 : i32
    %c0_i32_2 = arith.constant 0 : i32
    return %c0_i32, %c0_i32_0, %c0_i32_1 : i32, i32, i32
  }
  func.func @transform_4(%arg0: i32, %arg1: memref<64xi32, #tpu.memory_space<smem>>) -> (i32, i32, i32) {
    %c0_i32 = arith.constant 0 : i32
    %c0_i32_0 = arith.constant 0 : i32
    %c0_i32_1 = arith.constant 0 : i32
    %c0_i32_2 = arith.constant 0 : i32
    return %c0_i32, %c0_i32_0, %c0_i32_1 : i32, i32, i32
  }
  func.func @transform_5(%arg0: i32, %arg1: memref<64xi32, #tpu.memory_space<smem>>) -> (i32, i32, i32) {
    %c0_i32 = arith.constant 0 : i32
    %c0_i32_0 = arith.constant 0 : i32
    %c0_i32_1 = arith.constant 0 : i32
    %c0_i32_2 = arith.constant 0 : i32
    return %c0_i32, %c0_i32_0, %c0_i32_1 : i32, i32, i32
  }
  func.func @transform_6(%arg0: i32, %arg1: memref<64xi32, #tpu.memory_space<smem>>) -> (i32, i32, i32) {
    %c0_i32 = arith.constant 0 : i32
    %c0_i32_0 = arith.constant 0 : i32
    %c0_i32_1 = arith.constant 0 : i32
    %c0_i32_2 = arith.constant 0 : i32
    return %c0_i32, %c0_i32_0, %c0_i32_1 : i32, i32, i32
  }
  func.func @transform_7(%arg0: i32, %arg1: memref<64xi32, #tpu.memory_space<smem>>) -> (i32, i32) {
    %c0_i32 = arith.constant 0 : i32
    %c0_i32_0 = arith.constant 0 : i32
    %c0_i32_1 = arith.constant 0 : i32
    return %c0_i32, %c0_i32_0 : i32, i32
  }
  func.func @transform_8(%arg0: i32, %arg1: memref<64xi32, #tpu.memory_space<smem>>) -> (i32, i32) {
    %c0_i32 = arith.constant 0 : i32
    %c0_i32_0 = arith.constant 0 : i32
    %c0_i32_1 = arith.constant 0 : i32
    return %c0_i32, %c0_i32_0 : i32, i32
  }
  func.func @transform_9(%arg0: i32, %arg1: memref<64xi32, #tpu.memory_space<smem>>) -> (i32, i32) {
    %c0_i32 = arith.constant 0 : i32
    %c0_i32_0 = arith.constant 0 : i32
    %c0_i32_1 = arith.constant 0 : i32
    return %c0_i32, %c0_i32_0 : i32, i32
  }
  func.func @transform_10(%arg0: i32, %arg1: memref<64xi32, #tpu.memory_space<smem>>) -> (i32, i32, i32) {
    %c0_i32 = arith.constant 0 : i32
    %c0_i32_0 = arith.constant 0 : i32
    %c0_i32_1 = arith.constant 0 : i32
    %c0_i32_2 = arith.constant 0 : i32
    return %c0_i32, %c0_i32_0, %c0_i32_1 : i32, i32, i32
  }
  func.func @transform_11(%arg0: i32, %arg1: memref<64xi32, #tpu.memory_space<smem>>) -> (i32, i32, i32) {
    %c0_i32 = arith.constant 0 : i32
    %c0_i32_0 = arith.constant 0 : i32
    %c0_i32_1 = arith.constant 0 : i32
    %c0_i32_2 = arith.constant 0 : i32
    return %c0_i32, %c0_i32_0, %c0_i32_1 : i32, i32, i32
  }
}

</mosaic_0001>

<llo_original>
// kernel: word_lstm_forward.1
$region0: #{word_lstm_forward.1}
  #allocation0 [shape = 'u32[]', space=smem, size = 0x4, offset = 0x4, fixed_abs, tag = 'smem constant byte address 0x4 - core index']
  #allocation1 [shape = 'u32[144,128]{1,0:T(1,128)}', space=vmem, size = 0x12000, scoped, tag = 'internal scratch']
  #allocation2 [shape = 's32[1]{0}', space=sflag, size = 0x4, scoped, tag = 'scoped memory for word_lstm_forward.1']
  #allocation3 [shape = 'u8[512]{0}', space=smem, size = 0x200, scoped, tag = 'prefetched SMEM operand 0']
  %s0 = inlined_call_operand.vmem [shape: s32[64], index: 0, kind: input, shape index: {}]
  %s1 = inlined_call_operand.vmem [shape: f32[128,1,256], index: 1, kind: input, shape index: {}]
  %s2 = inlined_call_operand.vmem [shape: f32[256,512], index: 2, kind: input, shape index: {}]
  %s3 = inlined_call_operand.vmem [shape: f32[1,128,512], index: 3, kind: input, shape index: {}]
  %s4 = inlined_call_operand.vmem [shape: f32[2,128,512], index: 4, kind: input, shape index: {}]
  %s5 = inlined_call_operand.vmem [shape: f32[2,1,512], index: 5, kind: input, shape index: {}]
  %s6 = inlined_call_operand.vmem [shape: f32[2,8,128], index: 6, kind: input, shape index: {}]
  %s7 = inlined_call_operand.vmem [shape: f32[2,8,128], index: 7, kind: input, shape index: {}]
  %s8 = inlined_call_operand.vmem [shape: f32[128,128], index: 8, kind: input, shape index: {}]
  %s9 = inlined_call_operand.vmem [shape: f32[1,128], index: 9, kind: input, shape index: {}]
  %s10 = inlined_call_operand.hbm [shape: f32[64,128], index: 10, kind: output, shape index: {0}]
  %s11 = inlined_call_operand.hbm [shape: f32[2,8,128], index: 11, kind: output, shape index: {1}]
  %s12 = inlined_call_operand.hbm [shape: f32[2,8,128], index: 12, kind: output, shape index: {2}]
  %13 = xla_tuple %s10, %s11, %s12
  %s14 = sld [smem:[#allocation0]]
  $region62: #{word_lstm_forward.1} parent=0
    _
  %s16 = ssub.s32 1, %s14
  %s17 = scalar_select 0, %s16, %s14
  %s18 = sshll.u32 %s0, 4
  %s19 = int_to_ptr.vmem [resolvable:$true] %s18
  %21 = dma.vmem_to_smem %s19, 16, [#allocation3], [#allocation2]
  %22 = dma.done [#allocation2], 16
  %23 = sfence
  $region1: #{word_lstm_forward.1} parent=0
    #allocation4 [shape = 'u8[32768]{0}', space=vmem, size = 0x8000, scoped, tag = 'output window, operand 0, single buffered']
    #allocation5 [shape = 's32[1]{0}', space=sflag, size = 0x4, scoped, tag = 'scoped memory for word_lstm_forward.1']
    #allocation6 [shape = 'u8[8192]{0}', space=vmem, size = 0x2000, scoped, tag = 'output window, operand 1, single buffered']
    #allocation7 [shape = 's32[1]{0}', space=sflag, size = 0x4, scoped, tag = 'scoped memory for word_lstm_forward.1']
    #allocation8 [shape = 'u8[8192]{0}', space=vmem, size = 0x2000, scoped, tag = 'output window, operand 2, single buffered']
    %24 = vsyncpa [#allocation5], 0
    %25 = vsyncpa [#allocation7], 0
    // Predicated region
    $region2: #{word_lstm_forward.1} parent=1 // pred_check
      _
    $region3: #{word_lstm_forward.1} parent=1 // pred_check_branch
      %27 = sbr.rel (0) target = $region5
    $region4: #{word_lstm_forward.1} parent=1 // pred_region
      _
    $region5: #{word_lstm_forward.1} parent=1 // pred_fallthru
      _
    // Predicated region
    $region6: #{word_lstm_forward.1} parent=1 // pred_check
      _
    $region7: #{word_lstm_forward.1} parent=1 // pred_check_branch
      %29 = sbr.rel (0) target = $region9
    $region8: #{word_lstm_forward.1} parent=1 // pred_region
      _
    $region9: #{word_lstm_forward.1} parent=1 // pred_fallthru
      _
    // Predicated region
    $region10: #{word_lstm_forward.1} parent=1 // pred_check
      _
    $region11: #{word_lstm_forward.1} parent=1 // pred_check_branch
      %31 = sbr.rel (0) target = $region13
    $region12: #{word_lstm_forward.1} parent=1 // pred_region
      _
    $region13: #{word_lstm_forward.1} parent=1 // pred_fallthru
      _
    // Predicated region
    $region14: #{word_lstm_forward.1} parent=1 // pred_check
      _
    $region15: #{word_lstm_forward.1} parent=1 // pred_check_branch
      %33 = sbr.rel (0) target = $region17
    $region16: #{word_lstm_forward.1} parent=1 // pred_region
      _
    $region17: #{word_lstm_forward.1} parent=1 // pred_fallthru
      _
    // Predicated region
    $region18: #{word_lstm_forward.1} parent=1 // pred_check
      _
    $region19: #{word_lstm_forward.1} parent=1 // pred_check_branch
      %35 = sbr.rel (0) target = $region21
    $region20: #{word_lstm_forward.1} parent=1 // pred_region
      _
    $region21: #{word_lstm_forward.1} parent=1 // pred_fallthru
      _
    // Predicated region
    $region22: #{word_lstm_forward.1} parent=1 // pred_check
      _
    $region23: #{word_lstm_forward.1} parent=1 // pred_check_branch
      %37 = sbr.rel (0) target = $region25
    $region24: #{word_lstm_forward.1} parent=1 // pred_region
      _
    $region25: #{word_lstm_forward.1} parent=1 // pred_fallthru
      _
    // Predicated region
    $region26: #{word_lstm_forward.1} parent=1 // pred_check
      _
    $region27: #{word_lstm_forward.1} parent=1 // pred_check_branch
      %39 = sbr.rel (0) target = $region29
    $region28: #{word_lstm_forward.1} parent=1 // pred_region
      _
    $region29: #{word_lstm_forward.1} parent=1 // pred_fallthru
      _
    // Predicated region
    $region30: #{word_lstm_forward.1} parent=1 // pred_check
      _
    $region31: #{word_lstm_forward.1} parent=1 // pred_check_branch
      %41 = sbr.rel (0) target = $region33
    $region32: #{word_lstm_forward.1} parent=1 // pred_region
      _
    $region33: #{word_lstm_forward.1} parent=1 // pred_fallthru
      _
    // Predicated region
    $region34: #{word_lstm_forward.1} parent=1 // pred_check
      _
    $region35: #{word_lstm_forward.1} parent=1 // pred_check_branch
      %43 = sbr.rel (0) target = $region37
    $region36: #{word_lstm_forward.1} parent=1 // pred_region
      _
    $region37: #{word_lstm_forward.1} parent=1 // pred_fallthru
      _
    %s44 = sld [smem:[#allocation3]]
    %s45 = smul.u32 %s44, 2
    %s46 = scalar_lea.vmem %s1, %s45
    %v47 = vld [vmem:[%s46] sm:$0x3]
    %s48 = sld [smem:[#allocation3 + $0x8]]
    %s49 = smul.u32 %s48, 2
    %s50 = scalar_lea.vmem %s1, %s49
    %v51 = vld [vmem:[%s50] sm:$0x3]
    %s52 = sld [smem:[#allocation3 + $0x10]]
    %s53 = smul.u32 %s52, 2
    %s54 = scalar_lea.vmem %s1, %s53
    %v55 = vld [vmem:[%s54] sm:$0x3]
    %s56 = sld [smem:[#allocation3 + $0x18]]
    %s57 = smul.u32 %s56, 2
    %s58 = scalar_lea.vmem %s1, %s57
    %v59 = vld [vmem:[%s58] sm:$0x3]
    %s60 = sld [smem:[#allocation3 + $0x20]]
    %s61 = smul.u32 %s60, 2
    %s62 = scalar_lea.vmem %s1, %s61
    %v63 = vld [vmem:[%s62] sm:$0x3]
    %s64 = sld [smem:[#allocation3 + $0x28]]
    %s65 = smul.u32 %s64, 2
    %s66 = scalar_lea.vmem %s1, %s65
    %v67 = vld [vmem:[%s66] sm:$0x3]
    %s68 = sld [smem:[#allocation3 + $0x30]]
    %s69 = smul.u32 %s68, 2
    %s70 = scalar_lea.vmem %s1, %s69
    %v71 = vld [vmem:[%s70] sm:$0x3]
    %s72 = sld [smem:[#allocation3 + $0x38]]
    %s73 = smul.u32 %s72, 2
    %s74 = scalar_lea.vmem %s1, %s73
    %v75 = vld [vmem:[%s74] sm:$0x3]
    %v77 = vlaneseq
    %v78 = vshrl.u32 %v77, 7
    %v79 = vsub.s32 0, %v78
    %v80 = vrot.slane %v47, %v79
    %v81 = vlaneseq
    %v82 = vshrl.u32 %v81, 7
    %v83 = vsub.s32 1, %v82
    %v84 = vrot.slane %v47, %v83
    %v88 = vlaneseq
    %v89 = vshrl.u32 %v88, 7
    %v90 = vsub.s32 0, %v89
    %v91 = vrot.slane %v51, %v90
    %v92 = vlaneseq
    %v93 = vshrl.u32 %v92, 7
    %v94 = vsub.s32 1, %v93
    %v95 = vrot.slane %v51, %v94
    %v99 = vlaneseq
    %v100 = vshrl.u32 %v99, 7
    %v101 = vsub.s32 0, %v100
    %v102 = vrot.slane %v55, %v101
    %v103 = vlaneseq
    %v104 = vshrl.u32 %v103, 7
    %v105 = vsub.s32 1, %v104
    %v106 = vrot.slane %v55, %v105
    %v110 = vlaneseq
    %v111 = vshrl.u32 %v110, 7
    %v112 = vsub.s32 0, %v111
    %v113 = vrot.slane %v59, %v112
    %v114 = vlaneseq
    %v115 = vshrl.u32 %v114, 7
    %v116 = vsub.s32 1, %v115
    %v117 = vrot.slane %v59, %v116
    %v121 = vlaneseq
    %v122 = vshrl.u32 %v121, 7
    %v123 = vsub.s32 0, %v122
    %v124 = vrot.slane %v63, %v123
    %v125 = vlaneseq
    %v126 = vshrl.u32 %v125, 7
    %v127 = vsub.s32 1, %v126
    %v128 = vrot.slane %v63, %v127
    %v132 = vlaneseq
    %v133 = vshrl.u32 %v132, 7
    %v134 = vsub.s32 0, %v133
    %v135 = vrot.slane %v67, %v134
    %v136 = vlaneseq
    %v137 = vshrl.u32 %v136, 7
    %v138 = vsub.s32 1, %v137
    %v139 = vrot.slane %v67, %v138
    %v143 = vlaneseq
    %v144 = vshrl.u32 %v143, 7
    %v145 = vsub.s32 0, %v144
    %v146 = vrot.slane %v71, %v145
    %v147 = vlaneseq
    %v148 = vshrl.u32 %v147, 7
    %v149 = vsub.s32 1, %v148
    %v150 = vrot.slane %v71, %v149
    %v154 = vlaneseq
    %v155 = vshrl.u32 %v154, 7
    %v156 = vsub.s32 0, %v155
    %v157 = vrot.slane %v75, %v156
    %v158 = vlaneseq
    %v159 = vshrl.u32 %v158, 7
    %v160 = vsub.s32 1, %v159
    %v161 = vrot.slane %v75, %v160
    %vm164 = vcmask 1040384
    %v165 = vsel %vm164, %v80, %v91
    %v166 = vsel %vm164, %v84, %v95
    %vm167 = vcmask 1041408
    %v168 = vsel %vm167, %v165, %v102
    %v169 = vsel %vm167, %v166, %v106
    %vm170 = vcmask 1042432
    %v171 = vsel %vm170, %v168, %v113
    %v172 = vsel %vm170, %v169, %v117
    %vm173 = vcmask 1043456
    %v174 = vsel %vm173, %v171, %v124
    %v175 = vsel %vm173, %v172, %v128
    %vm176 = vcmask 1044480
    %v177 = vsel %vm176, %v174, %v135
    %v178 = vsel %vm176, %v175, %v139
    %vm179 = vcmask 1045504
    %v180 = vsel %vm179, %v177, %v146
    %v181 = vsel %vm179, %v178, %v150
    %vm182 = vcmask 1046528
    %v183 = vsel %vm182, %v180, %v157
    %v184 = vsel %vm182, %v181, %v161
    %s185 = sld [smem:[#allocation3 + $0x1]]
    %s186 = smul.u32 %s185, 2
    %s187 = scalar_lea.vmem %s1, %s186
    %v188 = vld [vmem:[%s187] sm:$0x3]
    %s189 = sld [smem:[#allocation3 + $0x9]]
    %s190 = smul.u32 %s189, 2
    %s191 = scalar_lea.vmem %s1, %s190
    %v192 = vld [vmem:[%s191] sm:$0x3]
    %s193 = sld [smem:[#allocation3 + $0x11]]
    %s194 = smul.u32 %s193, 2
    %s195 = scalar_lea.vmem %s1, %s194
    %v196 = vld [vmem:[%s195] sm:$0x3]
    %s197 = sld [smem:[#allocation3 + $0x19]]
    %s198 = smul.u32 %s197, 2
    %s199 = scalar_lea.vmem %s1, %s198
    %v200 = vld [vmem:[%s199] sm:$0x3]
    %s201 = sld [smem:[#allocation3 + $0x21]]
    %s202 = smul.u32 %s201, 2
    %s203 = scalar_lea.vmem %s1, %s202
    %v204 = vld [vmem:[%s203] sm:$0x3]
    %s205 = sld [smem:[#allocation3 + $0x29]]
    %s206 = smul.u32 %s205, 2
    %s207 = scalar_lea.vmem %s1, %s206
    %v208 = vld [vmem:[%s207] sm:$0x3]
    %s209 = sld [smem:[#allocation3 + $0x31]]
    %s210 = smul.u32 %s209, 2
    %s211 = scalar_lea.vmem %s1, %s210
    %v212 = vld [vmem:[%s211] sm:$0x3]
    %s213 = sld [smem:[#allocation3 + $0x39]]
    %s214 = smul.u32 %s213, 2
    %s215 = scalar_lea.vmem %s1, %s214
    %v216 = vld [vmem:[%s215] sm:$0x3]
    %v218 = vlaneseq
    %v219 = vshrl.u32 %v218, 7
    %v220 = vsub.s32 0, %v219
    %v221 = vrot.slane %v188, %v220
    %v222 = vlaneseq
    %v223 = vshrl.u32 %v222, 7
    %v224 = vsub.s32 1, %v223
    %v225 = vrot.slane %v188, %v224
    %v229 = vlaneseq
    %v230 = vshrl.u32 %v229, 7
    %v231 = vsub.s32 0, %v230
    %v232 = vrot.slane %v192, %v231
    %v233 = vlaneseq
    %v234 = vshrl.u32 %v233, 7
    %v235 = vsub.s32 1, %v234
    %v236 = vrot.slane %v192, %v235
    %v240 = vlaneseq
    %v241 = vshrl.u32 %v240, 7
    %v242 = vsub.s32 0, %v241
    %v243 = vrot.slane %v196, %v242
    %v244 = vlaneseq
    %v245 = vshrl.u32 %v244, 7
    %v246 = vsub.s32 1, %v245
    %v247 = vrot.slane %v196, %v246
    %v251 = vlaneseq
    %v252 = vshrl.u32 %v251, 7
    %v253 = vsub.s32 0, %v252
    %v254 = vrot.slane %v200, %v253
    %v255 = vlaneseq
    %v256 = vshrl.u32 %v255, 7
    %v257 = vsub.s32 1, %v256
    %v258 = vrot.slane %v200, %v257
    %v262 = vlaneseq
    %v263 = vshrl.u32 %v262, 7
    %v264 = vsub.s32 0, %v263
    %v265 = vrot.slane %v204, %v264
    %v266 = vlaneseq
    %v267 = vshrl.u32 %v266, 7
    %v268 = vsub.s32 1, %v267
    %v269 = vrot.slane %v204, %v268
    %v273 = vlaneseq
    %v274 = vshrl.u32 %v273, 7
    %v275 = vsub.s32 0, %v274
    %v276 = vrot.slane %v208, %v275
    %v277 = vlaneseq
    %v278 = vshrl.u32 %v277, 7
    %v279 = vsub.s32 1, %v278
    %v280 = vrot.slane %v208, %v279
    %v284 = vlaneseq
    %v285 = vshrl.u32 %v284, 7
    %v286 = vsub.s32 0, %v285
    %v287 = vrot.slane %v212, %v286
    %v288 = vlaneseq
    %v289 = vshrl.u32 %v288, 7
    %v290 = vsub.s32 1, %v289
    %v291 = vrot.slane %v212, %v290
    %v295 = vlaneseq
    %v296 = vshrl.u32 %v295, 7
    %v297 = vsub.s32 0, %v296
    %v298 = vrot.slane %v216, %v297
    %v299 = vlaneseq
    %v300 = vshrl.u32 %v299, 7
    %v301 = vsub.s32 1, %v300
    %v302 = vrot.slane %v216, %v301
    %v305 = vsel %vm164, %v221, %v232
    %v306 = vsel %vm164, %v225, %v236
    %v307 = vsel %vm167, %v305, %v243
    %v308 = vsel %vm167, %v306, %v247
    %v309 = vsel %vm170, %v307, %v254
    %v310 = vsel %vm170, %v308, %v258
    %v311 = vsel %vm173, %v309, %v265
    %v312 = vsel %vm173, %v310, %v269
    %v313 = vsel %vm176, %v311, %v276
    %v314 = vsel %vm176, %v312, %v280
    %v315 = vsel %vm179, %v313, %v287
    %v316 = vsel %vm179, %v314, %v291
    %v317 = vsel %vm182, %v315, %v298
    %v318 = vsel %vm182, %v316, %v302
    %s319 = sld [smem:[#allocation3 + $0x2]]
    %s320 = smul.u32 %s319, 2
    %s321 = scalar_lea.vmem %s1, %s320
    %v322 = vld [vmem:[%s321] sm:$0x3]
    %s323 = sld [smem:[#allocation3 + $0xa]]
    %s324 = smul.u32 %s323, 2
    %s325 = scalar_lea.vmem %s1, %s324
    %v326 = vld [vmem:[%s325] sm:$0x3]
    %s327 = sld [smem:[#allocation3 + $0x12]]
    %s328 = smul.u32 %s327, 2
    %s329 = scalar_lea.vmem %s1, %s328
    %v330 = vld [vmem:[%s329] sm:$0x3]
    %s331 = sld [smem:[#allocation3 + $0x1a]]
    %s332 = smul.u32 %s331, 2
    %s333 = scalar_lea.vmem %s1, %s332
    %v334 = vld [vmem:[%s333] sm:$0x3]
    %s335 = sld [smem:[#allocation3 + $0x22]]
    %s336 = smul.u32 %s335, 2
    %s337 = scalar_lea.vmem %s1, %s336
    %v338 = vld [vmem:[%s337] sm:$0x3]
    %s339 = sld [smem:[#allocation3 + $0x2a]]
    %s340 = smul.u32 %s339, 2
    %s341 = scalar_lea.vmem %s1, %s340
    %v342 = vld [vmem:[%s341] sm:$0x3]
    %s343 = sld [smem:[#allocation3 + $0x32]]
    %s344 = smul.u32 %s343, 2
    %s345 = scalar_lea.vmem %s1, %s344
    %v346 = vld [vmem:[%s345] sm:$0x3]
    %s347 = sld [smem:[#allocation3 + $0x3a]]
    %s348 = smul.u32 %s347, 2
    %s349 = scalar_lea.vmem %s1, %s348
    %v350 = vld [vmem:[%s349] sm:$0x3]
    %v352 = vlaneseq
    %v353 = vshrl.u32 %v352, 7
    %v354 = vsub.s32 0, %v353
    %v355 = vrot.slane %v322, %v354
    %v356 = vlaneseq
    %v357 = vshrl.u32 %v356, 7
    %v358 = vsub.s32 1, %v357
    %v359 = vrot.slane %v322, %v358
    %v363 = vlaneseq
    %v364 = vshrl.u32 %v363, 7
    %v365 = vsub.s32 0, %v364
    %v366 = vrot.slane %v326, %v365
    %v367 = vlaneseq
    %v368 = vshrl.u32 %v367, 7
    %v369 = vsub.s32 1, %v368
    %v370 = vrot.slane %v326, %v369
    %v374 = vlaneseq
    %v375 = vshrl.u32 %v374, 7
    %v376 = vsub.s32 0, %v375
    %v377 = vrot.slane %v330, %v376
    %v378 = vlaneseq
    %v379 = vshrl.u32 %v378, 7
    %v380 = vsub.s32 1, %v379
    %v381 = vrot.slane %v330, %v380
    %v385 = vlaneseq
    %v386 = vshrl.u32 %v385, 7
    %v387 = vsub.s32 0, %v386
    %v388 = vrot.slane %v334, %v387
    %v389 = vlaneseq
    %v390 = vshrl.u32 %v389, 7
    %v391 = vsub.s32 1, %v390
    %v392 = vrot.slane %v334, %v391
    %v396 = vlaneseq
    %v397 = vshrl.u32 %v396, 7
    %v398 = vsub.s32 0, %v397
    %v399 = vrot.slane %v338, %v398
    %v400 = vlaneseq
    %v401 = vshrl.u32 %v400, 7
    %v402 = vsub.s32 1, %v401
    %v403 = vrot.slane %v338, %v402
    %v407 = vlaneseq
    %v408 = vshrl.u32 %v407, 7
    %v409 = vsub.s32 0, %v408
    %v410 = vrot.slane %v342, %v409
    %v411 = vlaneseq
    %v412 = vshrl.u32 %v411, 7
    %v413 = vsub.s32 1, %v412
    %v414 = vrot.slane %v342, %v413
    %v418 = vlaneseq
    %v419 = vshrl.u32 %v418, 7
    %v420 = vsub.s32 0, %v419
    %v421 = vrot.slane %v346, %v420
    %v422 = vlaneseq
    %v423 = vshrl.u32 %v422, 7
    %v424 = vsub.s32 1, %v423
    %v425 = vrot.slane %v346, %v424
    %v429 = vlaneseq
    %v430 = vshrl.u32 %v429, 7
    %v431 = vsub.s32 0, %v430
    %v432 = vrot.slane %v350, %v431
    %v433 = vlaneseq
    %v434 = vshrl.u32 %v433, 7
    %v435 = vsub.s32 1, %v434
    %v436 = vrot.slane %v350, %v435
    %v439 = vsel %vm164, %v355, %v366
    %v440 = vsel %vm164, %v359, %v370
    %v441 = vsel %vm167, %v439, %v377
    %v442 = vsel %vm167, %v440, %v381
    %v443 = vsel %vm170, %v441, %v388
    %v444 = vsel %vm170, %v442, %v392
    %v445 = vsel %vm173, %v443, %v399
    %v446 = vsel %vm173, %v444, %v403
    %v447 = vsel %vm176, %v445, %v410
    %v448 = vsel %vm176, %v446, %v414
    %v449 = vsel %vm179, %v447, %v421
    %v450 = vsel %vm179, %v448, %v425
    %v451 = vsel %vm182, %v449, %v432
    %v452 = vsel %vm182, %v450, %v436
    %s453 = sld [smem:[#allocation3 + $0x3]]
    %s454 = smul.u32 %s453, 2
    %s455 = scalar_lea.vmem %s1, %s454
    %v456 = vld [vmem:[%s455] sm:$0x3]
    %s457 = sld [smem:[#allocation3 + $0xb]]
    %s458 = smul.u32 %s457, 2
    %s459 = scalar_lea.vmem %s1, %s458
    %v460 = vld [vmem:[%s459] sm:$0x3]
    %s461 = sld [smem:[#allocation3 + $0x13]]
    %s462 = smul.u32 %s461, 2
    %s463 = scalar_lea.vmem %s1, %s462
    %v464 = vld [vmem:[%s463] sm:$0x3]
    %s465 = sld [smem:[#allocation3 + $0x1b]]
    %s466 = smul.u32 %s465, 2
    %s467 = scalar_lea.vmem %s1, %s466
    %v468 = vld [vmem:[%s467] sm:$0x3]
    %s469 = sld [smem:[#allocation3 + $0x23]]
    %s470 = smul.u32 %s469, 2
    %s471 = scalar_lea.vmem %s1, %s470
    %v472 = vld [vmem:[%s471] sm:$0x3]
    %s473 = sld [smem:[#allocation3 + $0x2b]]
    %s474 = smul.u32 %s473, 2
    %s475 = scalar_lea.vmem %s1, %s474
    %v476 = vld [vmem:[%s475] sm:$0x3]
    %s477 = sld [smem:[#allocation3 + $0x33]]
    %s478 = smul.u32 %s477, 2
    %s479 = scalar_lea.vmem %s1, %s478
    %v480 = vld [vmem:[%s479] sm:$0x3]
    %s481 = sld [smem:[#allocation3 + $0x3b]]
    %s482 = smul.u32 %s481, 2
    %s483 = scalar_lea.vmem %s1, %s482
    %v484 = vld [vmem:[%s483] sm:$0x3]
    %v486 = vlaneseq
    %v487 = vshrl.u32 %v486, 7
    %v488 = vsub.s32 0, %v487
    %v489 = vrot.slane %v456, %v488
    %v490 = vlaneseq
    %v491 = vshrl.u32 %v490, 7
    %v492 = vsub.s32 1, %v491
    %v493 = vrot.slane %v456, %v492
    %v497 = vlaneseq
    %v498 = vshrl.u32 %v497, 7
    %v499 = vsub.s32 0, %v498
    %v500 = vrot.slane %v460, %v499
    %v501 = vlaneseq
    %v502 = vshrl.u32 %v501, 7
    %v503 = vsub.s32 1, %v502
    %v504 = vrot.slane %v460, %v503
    %v508 = vlaneseq
    %v509 = vshrl.u32 %v508, 7
    %v510 = vsub.s32 0, %v509
    %v511 = vrot.slane %v464, %v510
    %v512 = vlaneseq
    %v513 = vshrl.u32 %v512, 7
    %v514 = vsub.s32 1, %v513
    %v515 = vrot.slane %v464, %v514
    %v519 = vlaneseq
    %v520 = vshrl.u32 %v519, 7
    %v521 = vsub.s32 0, %v520
    %v522 = vrot.slane %v468, %v521
    %v523 = vlaneseq
    %v524 = vshrl.u32 %v523, 7
    %v525 = vsub.s32 1, %v524
    %v526 = vrot.slane %v468, %v525
    %v530 = vlaneseq
    %v531 = vshrl.u32 %v530, 7
    %v532 = vsub.s32 0, %v531
    %v533 = vrot.slane %v472, %v532
    %v534 = vlaneseq
    %v535 = vshrl.u32 %v534, 7
    %v536 = vsub.s32 1, %v535
    %v537 = vrot.slane %v472, %v536
    %v541 = vlaneseq
    %v542 = vshrl.u32 %v541, 7
    %v543 = vsub.s32 0, %v542
    %v544 = vrot.slane %v476, %v543
    %v545 = vlaneseq
    %v546 = vshrl.u32 %v545, 7
    %v547 = vsub.s32 1, %v546
    %v548 = vrot.slane %v476, %v547
    %v552 = vlaneseq
    %v553 = vshrl.u32 %v552, 7
    %v554 = vsub.s32 0, %v553
    %v555 = vrot.slane %v480, %v554
    %v556 = vlaneseq
    %v557 = vshrl.u32 %v556, 7
    %v558 = vsub.s32 1, %v557
    %v559 = vrot.slane %v480, %v558
    %v563 = vlaneseq
    %v564 = vshrl.u32 %v563, 7
    %v565 = vsub.s32 0, %v564
    %v566 = vrot.slane %v484, %v565
    %v567 = vlaneseq
    %v568 = vshrl.u32 %v567, 7
    %v569 = vsub.s32 1, %v568
    %v570 = vrot.slane %v484, %v569
    %v573 = vsel %vm164, %v489, %v500
    %v574 = vsel %vm164, %v493, %v504
    %v575 = vsel %vm167, %v573, %v511
    %v576 = vsel %vm167, %v574, %v515
    %v577 = vsel %vm170, %v575, %v522
    %v578 = vsel %vm170, %v576, %v526
    %v579 = vsel %vm173, %v577, %v533
    %v580 = vsel %vm173, %v578, %v537
    %v581 = vsel %vm176, %v579, %v544
    %v582 = vsel %vm176, %v580, %v548
    %v583 = vsel %vm179, %v581, %v555
    %v584 = vsel %vm179, %v582, %v559
    %v585 = vsel %vm182, %v583, %v566
    %v586 = vsel %vm182, %v584, %v570
    %s587 = sld [smem:[#allocation3 + $0x4]]
    %s588 = smul.u32 %s587, 2
    %s589 = scalar_lea.vmem %s1, %s588
    %v590 = vld [vmem:[%s589] sm:$0x3]
    %s591 = sld [smem:[#allocation3 + $0xc]]
    %s592 = smul.u32 %s591, 2
    %s593 = scalar_lea.vmem %s1, %s592
    %v594 = vld [vmem:[%s593] sm:$0x3]
    %s595 = sld [smem:[#allocation3 + $0x14]]
    %s596 = smul.u32 %s595, 2
    %s597 = scalar_lea.vmem %s1, %s596
    %v598 = vld [vmem:[%s597] sm:$0x3]
    %s599 = sld [smem:[#allocation3 + $0x1c]]
    %s600 = smul.u32 %s599, 2
    %s601 = scalar_lea.vmem %s1, %s600
    %v602 = vld [vmem:[%s601] sm:$0x3]
    %s603 = sld [smem:[#allocation3 + $0x24]]
    %s604 = smul.u32 %s603, 2
    %s605 = scalar_lea.vmem %s1, %s604
    %v606 = vld [vmem:[%s605] sm:$0x3]
    %s607 = sld [smem:[#allocation3 + $0x2c]]
    %s608 = smul.u32 %s607, 2
    %s609 = scalar_lea.vmem %s1, %s608
    %v610 = vld [vmem:[%s609] sm:$0x3]
    %s611 = sld [smem:[#allocation3 + $0x34]]
    %s612 = smul.u32 %s611, 2
    %s613 = scalar_lea.vmem %s1, %s612
    %v614 = vld [vmem:[%s613] sm:$0x3]
    %s615 = sld [smem:[#allocation3 + $0x3c]]
    %s616 = smul.u32 %s615, 2
    %s617 = scalar_lea.vmem %s1, %s616
    %v618 = vld [vmem:[%s617] sm:$0x3]
    %v620 = vlaneseq
    %v621 = vshrl.u32 %v620, 7
    %v622 = vsub.s32 0, %v621
    %v623 = vrot.slane %v590, %v622
    %v624 = vlaneseq
    %v625 = vshrl.u32 %v624, 7
    %v626 = vsub.s32 1, %v625
    %v627 = vrot.slane %v590, %v626
    %v631 = vlaneseq
    %v632 = vshrl.u32 %v631, 7
    %v633 = vsub.s32 0, %v632
    %v634 = vrot.slane %v594, %v633
    %v635 = vlaneseq
    %v636 = vshrl.u32 %v635, 7
    %v637 = vsub.s32 1, %v636
    %v638 = vrot.slane %v594, %v637
    %v642 = vlaneseq
    %v643 = vshrl.u32 %v642, 7
    %v644 = vsub.s32 0, %v643
    %v645 = vrot.slane %v598, %v644
    %v646 = vlaneseq
    %v647 = vshrl.u32 %v646, 7
    %v648 = vsub.s32 1, %v647
    %v649 = vrot.slane %v598, %v648
    %v653 = vlaneseq
    %v654 = vshrl.u32 %v653, 7
    %v655 = vsub.s32 0, %v654
    %v656 = vrot.slane %v602, %v655
    %v657 = vlaneseq
    %v658 = vshrl.u32 %v657, 7
    %v659 = vsub.s32 1, %v658
    %v660 = vrot.slane %v602, %v659
    %v664 = vlaneseq
    %v665 = vshrl.u32 %v664, 7
    %v666 = vsub.s32 0, %v665
    %v667 = vrot.slane %v606, %v666
    %v668 = vlaneseq
    %v669 = vshrl.u32 %v668, 7
    %v670 = vsub.s32 1, %v669
    %v671 = vrot.slane %v606, %v670
    %v675 = vlaneseq
    %v676 = vshrl.u32 %v675, 7
    %v677 = vsub.s32 0, %v676
    %v678 = vrot.slane %v610, %v677
    %v679 = vlaneseq
    %v680 = vshrl.u32 %v679, 7
    %v681 = vsub.s32 1, %v680
    %v682 = vrot.slane %v610, %v681
    %v686 = vlaneseq
    %v687 = vshrl.u32 %v686, 7
    %v688 = vsub.s32 0, %v687
    %v689 = vrot.slane %v614, %v688
    %v690 = vlaneseq
    %v691 = vshrl.u32 %v690, 7
    %v692 = vsub.s32 1, %v691
    %v693 = vrot.slane %v614, %v692
    %v697 = vlaneseq
    %v698 = vshrl.u32 %v697, 7
    %v699 = vsub.s32 0, %v698
    %v700 = vrot.slane %v618, %v699
    %v701 = vlaneseq
    %v702 = vshrl.u32 %v701, 7
    %v703 = vsub.s32 1, %v702
    %v704 = vrot.slane %v618, %v703
    %v707 = vsel %vm164, %v623, %v634
    %v708 = vsel %vm164, %v627, %v638
    %v709 = vsel %vm167, %v707, %v645
    %v710 = vsel %vm167, %v708, %v649
    %v711 = vsel %vm170, %v709, %v656
    %v712 = vsel %vm170, %v710, %v660
    %v713 = vsel %vm173, %v711, %v667
    %v714 = vsel %vm173, %v712, %v671
    %v715 = vsel %vm176, %v713, %v678
    %v716 = vsel %vm176, %v714, %v682
    %v717 = vsel %vm179, %v715, %v689
    %v718 = vsel %vm179, %v716, %v693
    %v719 = vsel %vm182, %v717, %v700
    %v720 = vsel %vm182, %v718, %v704
    %s721 = sld [smem:[#allocation3 + $0x5]]
    %s722 = smul.u32 %s721, 2
    %s723 = scalar_lea.vmem %s1, %s722
    %v724 = vld [vmem:[%s723] sm:$0x3]
    %s725 = sld [smem:[#allocation3 + $0xd]]
    %s726 = smul.u32 %s725, 2
    %s727 = scalar_lea.vmem %s1, %s726
    %v728 = vld [vmem:[%s727] sm:$0x3]
    %s729 = sld [smem:[#allocation3 + $0x15]]
    %s730 = smul.u32 %s729, 2
    %s731 = scalar_lea.vmem %s1, %s730
    %v732 = vld [vmem:[%s731] sm:$0x3]
    %s733 = sld [smem:[#allocation3 + $0x1d]]
    %s734 = smul.u32 %s733, 2
    %s735 = scalar_lea.vmem %s1, %s734
    %v736 = vld [vmem:[%s735] sm:$0x3]
    %s737 = sld [smem:[#allocation3 + $0x25]]
    %s738 = smul.u32 %s737, 2
    %s739 = scalar_lea.vmem %s1, %s738
    %v740 = vld [vmem:[%s739] sm:$0x3]
    %s741 = sld [smem:[#allocation3 + $0x2d]]
    %s742 = smul.u32 %s741, 2
    %s743 = scalar_lea.vmem %s1, %s742
    %v744 = vld [vmem:[%s743] sm:$0x3]
    %s745 = sld [smem:[#allocation3 + $0x35]]
    %s746 = smul.u32 %s745, 2
    %s747 = scalar_lea.vmem %s1, %s746
    %v748 = vld [vmem:[%s747] sm:$0x3]
    %s749 = sld [smem:[#allocation3 + $0x3d]]
    %s750 = smul.u32 %s749, 2
    %s751 = scalar_lea.vmem %s1, %s750
    %v752 = vld [vmem:[%s751] sm:$0x3]
    %v754 = vlaneseq
    %v755 = vshrl.u32 %v754, 7
    %v756 = vsub.s32 0, %v755
    %v757 = vrot.slane %v724, %v756
    %v758 = vlaneseq
    %v759 = vshrl.u32 %v758, 7
    %v760 = vsub.s32 1, %v759
    %v761 = vrot.slane %v724, %v760
    %v765 = vlaneseq
    %v766 = vshrl.u32 %v765, 7
    %v767 = vsub.s32 0, %v766
    %v768 = vrot.slane %v728, %v767
    %v769 = vlaneseq
    %v770 = vshrl.u32 %v769, 7
    %v771 = vsub.s32 1, %v770
    %v772 = vrot.slane %v728, %v771
    %v776 = vlaneseq
    %v777 = vshrl.u32 %v776, 7
    %v778 = vsub.s32 0, %v777
    %v779 = vrot.slane %v732, %v778
    %v780 = vlaneseq
    %v781 = vshrl.u32 %v780, 7
    %v782 = vsub.s32 1, %v781
    %v783 = vrot.slane %v732, %v782
    %v787 = vlaneseq
    %v788 = vshrl.u32 %v787, 7
    %v789 = vsub.s32 0, %v788
    %v790 = vrot.slane %v736, %v789
    %v791 = vlaneseq
    %v792 = vshrl.u32 %v791, 7
    %v793 = vsub.s32 1, %v792
    %v794 = vrot.slane %v736, %v793
    %v798 = vlaneseq
    %v799 = vshrl.u32 %v798, 7
    %v800 = vsub.s32 0, %v799
    %v801 = vrot.slane %v740, %v800
    %v802 = vlaneseq
    %v803 = vshrl.u32 %v802, 7
    %v804 = vsub.s32 1, %v803
    %v805 = vrot.slane %v740, %v804
    %v809 = vlaneseq
    %v810 = vshrl.u32 %v809, 7
    %v811 = vsub.s32 0, %v810
    %v812 = vrot.slane %v744, %v811
    %v813 = vlaneseq
    %v814 = vshrl.u32 %v813, 7
    %v815 = vsub.s32 1, %v814
    %v816 = vrot.slane %v744, %v815
    %v820 = vlaneseq
    %v821 = vshrl.u32 %v820, 7
    %v822 = vsub.s32 0, %v821
    %v823 = vrot.slane %v748, %v822
    %v824 = vlaneseq
    %v825 = vshrl.u32 %v824, 7
    %v826 = vsub.s32 1, %v825
    %v827 = vrot.slane %v748, %v826
    %v831 = vlaneseq
    %v832 = vshrl.u32 %v831, 7
    %v833 = vsub.s32 0, %v832
    %v834 = vrot.slane %v752, %v833
    %v835 = vlaneseq
    %v836 = vshrl.u32 %v835, 7
    %v837 = vsub.s32 1, %v836
    %v838 = vrot.slane %v752, %v837
    %v841 = vsel %vm164, %v757, %v768
    %v842 = vsel %vm164, %v761, %v772
    %v843 = vsel %vm167, %v841, %v779
    %v844 = vsel %vm167, %v842, %v783
    %v845 = vsel %vm170, %v843, %v790
    %v846 = vsel %vm170, %v844, %v794
    %v847 = vsel %vm173, %v845, %v801
    %v848 = vsel %vm173, %v846, %v805
    %v849 = vsel %vm176, %v847, %v812
    %v850 = vsel %vm176, %v848, %v816
    %v851 = vsel %vm179, %v849, %v823
    %v852 = vsel %vm179, %v850, %v827
    %v853 = vsel %vm182, %v851, %v834
    %v854 = vsel %vm182, %v852, %v838
    %s855 = sld [smem:[#allocation3 + $0x6]]
    %s856 = smul.u32 %s855, 2
    %s857 = scalar_lea.vmem %s1, %s856
    %v858 = vld [vmem:[%s857] sm:$0x3]
    %s859 = sld [smem:[#allocation3 + $0xe]]
    %s860 = smul.u32 %s859, 2
    %s861 = scalar_lea.vmem %s1, %s860
    %v862 = vld [vmem:[%s861] sm:$0x3]
    %s863 = sld [smem:[#allocation3 + $0x16]]
    %s864 = smul.u32 %s863, 2
    %s865 = scalar_lea.vmem %s1, %s864
    %v866 = vld [vmem:[%s865] sm:$0x3]
    %s867 = sld [smem:[#allocation3 + $0x1e]]
    %s868 = smul.u32 %s867, 2
    %s869 = scalar_lea.vmem %s1, %s868
    %v870 = vld [vmem:[%s869] sm:$0x3]
    %s871 = sld [smem:[#allocation3 + $0x26]]
    %s872 = smul.u32 %s871, 2
    %s873 = scalar_lea.vmem %s1, %s872
    %v874 = vld [vmem:[%s873] sm:$0x3]
    %s875 = sld [smem:[#allocation3 + $0x2e]]
    %s876 = smul.u32 %s875, 2
    %s877 = scalar_lea.vmem %s1, %s876
    %v878 = vld [vmem:[%s877] sm:$0x3]
    %s879 = sld [smem:[#allocation3 + $0x36]]
    %s880 = smul.u32 %s879, 2
    %s881 = scalar_lea.vmem %s1, %s880
    %v882 = vld [vmem:[%s881] sm:$0x3]
    %s883 = sld [smem:[#allocation3 + $0x3e]]
    %s884 = smul.u32 %s883, 2
    %s885 = scalar_lea.vmem %s1, %s884
    %v886 = vld [vmem:[%s885] sm:$0x3]
    %v888 = vlaneseq
    %v889 = vshrl.u32 %v888, 7
    %v890 = vsub.s32 0, %v889
    %v891 = vrot.slane %v858, %v890
    %v892 = vlaneseq
    %v893 = vshrl.u32 %v892, 7
    %v894 = vsub.s32 1, %v893
    %v895 = vrot.slane %v858, %v894
    %v899 = vlaneseq
    %v900 = vshrl.u32 %v899, 7
    %v901 = vsub.s32 0, %v900
    %v902 = vrot.slane %v862, %v901
    %v903 = vlaneseq
    %v904 = vshrl.u32 %v903, 7
    %v905 = vsub.s32 1, %v904
    %v906 = vrot.slane %v862, %v905
    %v910 = vlaneseq
    %v911 = vshrl.u32 %v910, 7
    %v912 = vsub.s32 0, %v911
    %v913 = vrot.slane %v866, %v912
    %v914 = vlaneseq
    %v915 = vshrl.u32 %v914, 7
    %v916 = vsub.s32 1, %v915
    %v917 = vrot.slane %v866, %v916
    %v921 = vlaneseq
    %v922 = vshrl.u32 %v921, 7
    %v923 = vsub.s32 0, %v922
    %v924 = vrot.slane %v870, %v923
    %v925 = vlaneseq
    %v926 = vshrl.u32 %v925, 7
    %v927 = vsub.s32 1, %v926
    %v928 = vrot.slane %v870, %v927
    %v932 = vlaneseq
    %v933 = vshrl.u32 %v932, 7
    %v934 = vsub.s32 0, %v933
    %v935 = vrot.slane %v874, %v934
    %v936 = vlaneseq
    %v937 = vshrl.u32 %v936, 7
    %v938 = vsub.s32 1, %v937
    %v939 = vrot.slane %v874, %v938
    %v943 = vlaneseq
    %v944 = vshrl.u32 %v943, 7
    %v945 = vsub.s32 0, %v944
    %v946 = vrot.slane %v878, %v945
    %v947 = vlaneseq
    %v948 = vshrl.u32 %v947, 7
    %v949 = vsub.s32 1, %v948
    %v950 = vrot.slane %v878, %v949
    %v954 = vlaneseq
    %v955 = vshrl.u32 %v954, 7
    %v956 = vsub.s32 0, %v955
    %v957 = vrot.slane %v882, %v956
    %v958 = vlaneseq
    %v959 = vshrl.u32 %v958, 7
    %v960 = vsub.s32 1, %v959
    %v961 = vrot.slane %v882, %v960
    %v965 = vlaneseq
    %v966 = vshrl.u32 %v965, 7
    %v967 = vsub.s32 0, %v966
    %v968 = vrot.slane %v886, %v967
    %v969 = vlaneseq
    %v970 = vshrl.u32 %v969, 7
    %v971 = vsub.s32 1, %v970
    %v972 = vrot.slane %v886, %v971
    %v975 = vsel %vm164, %v891, %v902
    %v976 = vsel %vm164, %v895, %v906
    %v977 = vsel %vm167, %v975, %v913
    %v978 = vsel %vm167, %v976, %v917
    %v979 = vsel %vm170, %v977, %v924
    %v980 = vsel %vm170, %v978, %v928
    %v981 = vsel %vm173, %v979, %v935
    %v982 = vsel %vm173, %v980, %v939
    %v983 = vsel %vm176, %v981, %v946
    %v984 = vsel %vm176, %v982, %v950
    %v985 = vsel %vm179, %v983, %v957
    %v986 = vsel %vm179, %v984, %v961
    %v987 = vsel %vm182, %v985, %v968
    %v988 = vsel %vm182, %v986, %v972
    %s989 = sld [smem:[#allocation3 + $0x7]]
    %s990 = smul.u32 %s989, 2
    %s991 = scalar_lea.vmem %s1, %s990
    %v992 = vld [vmem:[%s991] sm:$0x3]
    %s993 = sld [smem:[#allocation3 + $0xf]]
    %s994 = smul.u32 %s993, 2
    %s995 = scalar_lea.vmem %s1, %s994
    %v996 = vld [vmem:[%s995] sm:$0x3]
    %s997 = sld [smem:[#allocation3 + $0x17]]
    %s998 = smul.u32 %s997, 2
    %s999 = scalar_lea.vmem %s1, %s998
    %v1000 = vld [vmem:[%s999] sm:$0x3]
    %s1001 = sld [smem:[#allocation3 + $0x1f]]
    %s1002 = smul.u32 %s1001, 2
    %s1003 = scalar_lea.vmem %s1, %s1002
    %v1004 = vld [vmem:[%s1003] sm:$0x3]
    %s1005 = sld [smem:[#allocation3 + $0x27]]
    %s1006 = smul.u32 %s1005, 2
    %s1007 = scalar_lea.vmem %s1, %s1006
    %v1008 = vld [vmem:[%s1007] sm:$0x3]
    %s1009 = sld [smem:[#allocation3 + $0x2f]]
    %s1010 = smul.u32 %s1009, 2
    %s1011 = scalar_lea.vmem %s1, %s1010
    %v1012 = vld [vmem:[%s1011] sm:$0x3]
    %s1013 = sld [smem:[#allocation3 + $0x37]]
    %s1014 = smul.u32 %s1013, 2
    %s1015 = scalar_lea.vmem %s1, %s1014
    %v1016 = vld [vmem:[%s1015] sm:$0x3]
    %s1017 = sld [smem:[#allocation3 + $0x3f]]
    %s1018 = smul.u32 %s1017, 2
    %s1019 = scalar_lea.vmem %s1, %s1018
    %v1020 = vld [vmem:[%s1019] sm:$0x3]
    %v1022 = vlaneseq
    %v1023 = vshrl.u32 %v1022, 7
    %v1024 = vsub.s32 0, %v1023
    %v1025 = vrot.slane %v992, %v1024
    %v1026 = vlaneseq
    %v1027 = vshrl.u32 %v1026, 7
    %v1028 = vsub.s32 1, %v1027
    %v1029 = vrot.slane %v992, %v1028
    %v1033 = vlaneseq
    %v1034 = vshrl.u32 %v1033, 7
    %v1035 = vsub.s32 0, %v1034
    %v1036 = vrot.slane %v996, %v1035
    %v1037 = vlaneseq
    %v1038 = vshrl.u32 %v1037, 7
    %v1039 = vsub.s32 1, %v1038
    %v1040 = vrot.slane %v996, %v1039
    %v1044 = vlaneseq
    %v1045 = vshrl.u32 %v1044, 7
    %v1046 = vsub.s32 0, %v1045
    %v1047 = vrot.slane %v1000, %v1046
    %v1048 = vlaneseq
    %v1049 = vshrl.u32 %v1048, 7
    %v1050 = vsub.s32 1, %v1049
    %v1051 = vrot.slane %v1000, %v1050
    %v1055 = vlaneseq
    %v1056 = vshrl.u32 %v1055, 7
    %v1057 = vsub.s32 0, %v1056
    %v1058 = vrot.slane %v1004, %v1057
    %v1059 = vlaneseq
    %v1060 = vshrl.u32 %v1059, 7
    %v1061 = vsub.s32 1, %v1060
    %v1062 = vrot.slane %v1004, %v1061
    %v1066 = vlaneseq
    %v1067 = vshrl.u32 %v1066, 7
    %v1068 = vsub.s32 0, %v1067
    %v1069 = vrot.slane %v1008, %v1068
    %v1070 = vlaneseq
    %v1071 = vshrl.u32 %v1070, 7
    %v1072 = vsub.s32 1, %v1071
    %v1073 = vrot.slane %v1008, %v1072
    %v1077 = vlaneseq
    %v1078 = vshrl.u32 %v1077, 7
    %v1079 = vsub.s32 0, %v1078
    %v1080 = vrot.slane %v1012, %v1079
    %v1081 = vlaneseq
    %v1082 = vshrl.u32 %v1081, 7
    %v1083 = vsub.s32 1, %v1082
    %v1084 = vrot.slane %v1012, %v1083
    %v1088 = vlaneseq
    %v1089 = vshrl.u32 %v1088, 7
    %v1090 = vsub.s32 0, %v1089
    %v1091 = vrot.slane %v1016, %v1090
    %v1092 = vlaneseq
    %v1093 = vshrl.u32 %v1092, 7
    %v1094 = vsub.s32 1, %v1093
    %v1095 = vrot.slane %v1016, %v1094
    %v1099 = vlaneseq
    %v1100 = vshrl.u32 %v1099, 7
    %v1101 = vsub.s32 0, %v1100
    %v1102 = vrot.slane %v1020, %v1101
    %v1103 = vlaneseq
    %v1104 = vshrl.u32 %v1103, 7
    %v1105 = vsub.s32 1, %v1104
    %v1106 = vrot.slane %v1020, %v1105
    %v1109 = vsel %vm164, %v1025, %v1036
    %v1110 = vsel %vm164, %v1029, %v1040
    %v1111 = vsel %vm167, %v1109, %v1047
    %v1112 = vsel %vm167, %v1110, %v1051
    %v1113 = vsel %vm170, %v1111, %v1058
    %v1114 = vsel %vm170, %v1112, %v1062
    %v1115 = vsel %vm173, %v1113, %v1069
    %v1116 = vsel %vm173, %v1114, %v1073
    %v1117 = vsel %vm176, %v1115, %v1080
    %v1118 = vsel %vm176, %v1116, %v1084
    %v1119 = vsel %vm179, %v1117, %v1091
    %v1120 = vsel %vm179, %v1118, %v1095
    %v1121 = vsel %vm182, %v1119, %v1102
    %v1122 = vsel %vm182, %v1120, %v1106
    %v1123 = vld [vmem:[%s2] sm:$0xff]
    %v1124 = vld [vmem:[%s2 + $0x8] sm:$0xff]
    %v1125 = vld [vmem:[%s2 + $0x10] sm:$0xff]
    %v1126 = vld [vmem:[%s2 + $0x18] sm:$0xff]
    %v1127 = vld [vmem:[%s2 + $0x20] sm:$0xff]
    %v1128 = vld [vmem:[%s2 + $0x28] sm:$0xff]
    %v1129 = vld [vmem:[%s2 + $0x30] sm:$0xff]
    %v1130 = vld [vmem:[%s2 + $0x38] sm:$0xff]
    %v1131 = vld [vmem:[%s2 + $0x40] sm:$0xff]
    %v1132 = vld [vmem:[%s2 + $0x48] sm:$0xff]
    %v1133 = vld [vmem:[%s2 + $0x50] sm:$0xff]
    %v1134 = vld [vmem:[%s2 + $0x58] sm:$0xff]
    %v1135 = vld [vmem:[%s2 + $0x60] sm:$0xff]
    %v1136 = vld [vmem:[%s2 + $0x68] sm:$0xff]
    %v1137 = vld [vmem:[%s2 + $0x70] sm:$0xff]
    %v1138 = vld [vmem:[%s2 + $0x78] sm:$0xff]
    %v1139 = vld [vmem:[%s2 + $0x80] sm:$0xff]
    %v1140 = vld [vmem:[%s2 + $0x88] sm:$0xff]
    %v1141 = vld [vmem:[%s2 + $0x90] sm:$0xff]
    %v1142 = vld [vmem:[%s2 + $0x98] sm:$0xff]
    %v1143 = vld [vmem:[%s2 + $0xa0] sm:$0xff]
    %v1144 = vld [vmem:[%s2 + $0xa8] sm:$0xff]
    %v1145 = vld [vmem:[%s2 + $0xb0] sm:$0xff]
    %v1146 = vld [vmem:[%s2 + $0xb8] sm:$0xff]
    %v1147 = vld [vmem:[%s2 + $0xc0] sm:$0xff]
    %v1148 = vld [vmem:[%s2 + $0xc8] sm:$0xff]
    %v1149 = vld [vmem:[%s2 + $0xd0] sm:$0xff]
    %v1150 = vld [vmem:[%s2 + $0xd8] sm:$0xff]
    %v1151 = vld [vmem:[%s2 + $0xe0] sm:$0xff]
    %v1152 = vld [vmem:[%s2 + $0xe8] sm:$0xff]
    %v1153 = vld [vmem:[%s2 + $0xf0] sm:$0xff]
    %v1154 = vld [vmem:[%s2 + $0xf8] sm:$0xff]
    %v1155 = vld [vmem:[%s2 + $0x100] sm:$0xff]
    %v1156 = vld [vmem:[%s2 + $0x108] sm:$0xff]
    %v1157 = vld [vmem:[%s2 + $0x110] sm:$0xff]
    %v1158 = vld [vmem:[%s2 + $0x118] sm:$0xff]
    %v1159 = vld [vmem:[%s2 + $0x120] sm:$0xff]
    %v1160 = vld [vmem:[%s2 + $0x128] sm:$0xff]
    %v1161 = vld [vmem:[%s2 + $0x130] sm:$0xff]
    %v1162 = vld [vmem:[%s2 + $0x138] sm:$0xff]
    %v1163 = vld [vmem:[%s2 + $0x140] sm:$0xff]
    %v1164 = vld [vmem:[%s2 + $0x148] sm:$0xff]
    %v1165 = vld [vmem:[%s2 + $0x150] sm:$0xff]
    %v1166 = vld [vmem:[%s2 + $0x158] sm:$0xff]
    %v1167 = vld [vmem:[%s2 + $0x160] sm:$0xff]
    %v1168 = vld [vmem:[%s2 + $0x168] sm:$0xff]
    %v1169 = vld [vmem:[%s2 + $0x170] sm:$0xff]
    %v1170 = vld [vmem:[%s2 + $0x178] sm:$0xff]
    %v1171 = vld [vmem:[%s2 + $0x180] sm:$0xff]
    %v1172 = vld [vmem:[%s2 + $0x188] sm:$0xff]
    %v1173 = vld [vmem:[%s2 + $0x190] sm:$0xff]
    %v1174 = vld [vmem:[%s2 + $0x198] sm:$0xff]
    %v1175 = vld [vmem:[%s2 + $0x1a0] sm:$0xff]
    %v1176 = vld [vmem:[%s2 + $0x1a8] sm:$0xff]
    %v1177 = vld [vmem:[%s2 + $0x1b0] sm:$0xff]
    %v1178 = vld [vmem:[%s2 + $0x1b8] sm:$0xff]
    %v1179 = vld [vmem:[%s2 + $0x1c0] sm:$0xff]
    %v1180 = vld [vmem:[%s2 + $0x1c8] sm:$0xff]
    %v1181 = vld [vmem:[%s2 + $0x1d0] sm:$0xff]
    %v1182 = vld [vmem:[%s2 + $0x1d8] sm:$0xff]
    %v1183 = vld [vmem:[%s2 + $0x1e0] sm:$0xff]
    %v1184 = vld [vmem:[%s2 + $0x1e8] sm:$0xff]
    %v1185 = vld [vmem:[%s2 + $0x1f0] sm:$0xff]
    %v1186 = vld [vmem:[%s2 + $0x1f8] sm:$0xff]
    %v1187 = vld [vmem:[%s2 + $0x200] sm:$0xff]
    %v1188 = vld [vmem:[%s2 + $0x208] sm:$0xff]
    %v1189 = vld [vmem:[%s2 + $0x210] sm:$0xff]
    %v1190 = vld [vmem:[%s2 + $0x218] sm:$0xff]
    %v1191 = vld [vmem:[%s2 + $0x220] sm:$0xff]
    %v1192 = vld [vmem:[%s2 + $0x228] sm:$0xff]
    %v1193 = vld [vmem:[%s2 + $0x230] sm:$0xff]
    %v1194 = vld [vmem:[%s2 + $0x238] sm:$0xff]
    %v1195 = vld [vmem:[%s2 + $0x240] sm:$0xff]
    %v1196 = vld [vmem:[%s2 + $0x248] sm:$0xff]
    %v1197 = vld [vmem:[%s2 + $0x250] sm:$0xff]
    %v1198 = vld [vmem:[%s2 + $0x258] sm:$0xff]
    %v1199 = vld [vmem:[%s2 + $0x260] sm:$0xff]
    %v1200 = vld [vmem:[%s2 + $0x268] sm:$0xff]
    %v1201 = vld [vmem:[%s2 + $0x270] sm:$0xff]
    %v1202 = vld [vmem:[%s2 + $0x278] sm:$0xff]
    %v1203 = vld [vmem:[%s2 + $0x280] sm:$0xff]
    %v1204 = vld [vmem:[%s2 + $0x288] sm:$0xff]
    %v1205 = vld [vmem:[%s2 + $0x290] sm:$0xff]
    %v1206 = vld [vmem:[%s2 + $0x298] sm:$0xff]
    %v1207 = vld [vmem:[%s2 + $0x2a0] sm:$0xff]
    %v1208 = vld [vmem:[%s2 + $0x2a8] sm:$0xff]
    %v1209 = vld [vmem:[%s2 + $0x2b0] sm:$0xff]
    %v1210 = vld [vmem:[%s2 + $0x2b8] sm:$0xff]
    %v1211 = vld [vmem:[%s2 + $0x2c0] sm:$0xff]
    %v1212 = vld [vmem:[%s2 + $0x2c8] sm:$0xff]
    %v1213 = vld [vmem:[%s2 + $0x2d0] sm:$0xff]
    %v1214 = vld [vmem:[%s2 + $0x2d8] sm:$0xff]
    %v1215 = vld [vmem:[%s2 + $0x2e0] sm:$0xff]
    %v1216 = vld [vmem:[%s2 + $0x2e8] sm:$0xff]
    %v1217 = vld [vmem:[%s2 + $0x2f0] sm:$0xff]
    %v1218 = vld [vmem:[%s2 + $0x2f8] sm:$0xff]
    %v1219 = vld [vmem:[%s2 + $0x300] sm:$0xff]
    %v1220 = vld [vmem:[%s2 + $0x308] sm:$0xff]
    %v1221 = vld [vmem:[%s2 + $0x310] sm:$0xff]
    %v1222 = vld [vmem:[%s2 + $0x318] sm:$0xff]
    %v1223 = vld [vmem:[%s2 + $0x320] sm:$0xff]
    %v1224 = vld [vmem:[%s2 + $0x328] sm:$0xff]
    %v1225 = vld [vmem:[%s2 + $0x330] sm:$0xff]
    %v1226 = vld [vmem:[%s2 + $0x338] sm:$0xff]
    %v1227 = vld [vmem:[%s2 + $0x340] sm:$0xff]
    %v1228 = vld [vmem:[%s2 + $0x348] sm:$0xff]
    %v1229 = vld [vmem:[%s2 + $0x350] sm:$0xff]
    %v1230 = vld [vmem:[%s2 + $0x358] sm:$0xff]
    %v1231 = vld [vmem:[%s2 + $0x360] sm:$0xff]
    %v1232 = vld [vmem:[%s2 + $0x368] sm:$0xff]
    %v1233 = vld [vmem:[%s2 + $0x370] sm:$0xff]
    %v1234 = vld [vmem:[%s2 + $0x378] sm:$0xff]
    %v1235 = vld [vmem:[%s2 + $0x380] sm:$0xff]
    %v1236 = vld [vmem:[%s2 + $0x388] sm:$0xff]
    %v1237 = vld [vmem:[%s2 + $0x390] sm:$0xff]
    %v1238 = vld [vmem:[%s2 + $0x398] sm:$0xff]
    %v1239 = vld [vmem:[%s2 + $0x3a0] sm:$0xff]
    %v1240 = vld [vmem:[%s2 + $0x3a8] sm:$0xff]
    %v1241 = vld [vmem:[%s2 + $0x3b0] sm:$0xff]
    %v1242 = vld [vmem:[%s2 + $0x3b8] sm:$0xff]
    %v1243 = vld [vmem:[%s2 + $0x3c0] sm:$0xff]
    %v1244 = vld [vmem:[%s2 + $0x3c8] sm:$0xff]
    %v1245 = vld [vmem:[%s2 + $0x3d0] sm:$0xff]
    %v1246 = vld [vmem:[%s2 + $0x3d8] sm:$0xff]
    %v1247 = vld [vmem:[%s2 + $0x3e0] sm:$0xff]
    %v1248 = vld [vmem:[%s2 + $0x3e8] sm:$0xff]
    %v1249 = vld [vmem:[%s2 + $0x3f0] sm:$0xff]
    %v1250 = vld [vmem:[%s2 + $0x3f8] sm:$0xff]
    %v1251 = vld [vmem:[%s4] sm:$0xff]
    %v1252 = vld [vmem:[%s4 + $0x8] sm:$0xff]
    %v1253 = vld [vmem:[%s4 + $0x10] sm:$0xff]
    %v1254 = vld [vmem:[%s4 + $0x18] sm:$0xff]
    %v1255 = vld [vmem:[%s4 + $0x20] sm:$0xff]
    %v1256 = vld [vmem:[%s4 + $0x28] sm:$0xff]
    %v1257 = vld [vmem:[%s4 + $0x30] sm:$0xff]
    %v1258 = vld [vmem:[%s4 + $0x38] sm:$0xff]
    %v1259 = vld [vmem:[%s4 + $0x40] sm:$0xff]
    %v1260 = vld [vmem:[%s4 + $0x48] sm:$0xff]
    %v1261 = vld [vmem:[%s4 + $0x50] sm:$0xff]
    %v1262 = vld [vmem:[%s4 + $0x58] sm:$0xff]
    %v1263 = vld [vmem:[%s4 + $0x60] sm:$0xff]
    %v1264 = vld [vmem:[%s4 + $0x68] sm:$0xff]
    %v1265 = vld [vmem:[%s4 + $0x70] sm:$0xff]
    %v1266 = vld [vmem:[%s4 + $0x78] sm:$0xff]
    %v1267 = vld [vmem:[%s4 + $0x80] sm:$0xff]
    %v1268 = vld [vmem:[%s4 + $0x88] sm:$0xff]
    %v1269 = vld [vmem:[%s4 + $0x90] sm:$0xff]
    %v1270 = vld [vmem:[%s4 + $0x98] sm:$0xff]
    %v1271 = vld [vmem:[%s4 + $0xa0] sm:$0xff]
    %v1272 = vld [vmem:[%s4 + $0xa8] sm:$0xff]
    %v1273 = vld [vmem:[%s4 + $0xb0] sm:$0xff]
    %v1274 = vld [vmem:[%s4 + $0xb8] sm:$0xff]
    %v1275 = vld [vmem:[%s4 + $0xc0] sm:$0xff]
    %v1276 = vld [vmem:[%s4 + $0xc8] sm:$0xff]
    %v1277 = vld [vmem:[%s4 + $0xd0] sm:$0xff]
    %v1278 = vld [vmem:[%s4 + $0xd8] sm:$0xff]
    %v1279 = vld [vmem:[%s4 + $0xe0] sm:$0xff]
    %v1280 = vld [vmem:[%s4 + $0xe8] sm:$0xff]
    %v1281 = vld [vmem:[%s4 + $0xf0] sm:$0xff]
    %v1282 = vld [vmem:[%s4 + $0xf8] sm:$0xff]
    %v1283 = vld [vmem:[%s4 + $0x100] sm:$0xff]
    %v1284 = vld [vmem:[%s4 + $0x108] sm:$0xff]
    %v1285 = vld [vmem:[%s4 + $0x110] sm:$0xff]
    %v1286 = vld [vmem:[%s4 + $0x118] sm:$0xff]
    %v1287 = vld [vmem:[%s4 + $0x120] sm:$0xff]
    %v1288 = vld [vmem:[%s4 + $0x128] sm:$0xff]
    %v1289 = vld [vmem:[%s4 + $0x130] sm:$0xff]
    %v1290 = vld [vmem:[%s4 + $0x138] sm:$0xff]
    %v1291 = vld [vmem:[%s4 + $0x140] sm:$0xff]
    %v1292 = vld [vmem:[%s4 + $0x148] sm:$0xff]
    %v1293 = vld [vmem:[%s4 + $0x150] sm:$0xff]
    %v1294 = vld [vmem:[%s4 + $0x158] sm:$0xff]
    %v1295 = vld [vmem:[%s4 + $0x160] sm:$0xff]
    %v1296 = vld [vmem:[%s4 + $0x168] sm:$0xff]
    %v1297 = vld [vmem:[%s4 + $0x170] sm:$0xff]
    %v1298 = vld [vmem:[%s4 + $0x178] sm:$0xff]
    %v1299 = vld [vmem:[%s4 + $0x180] sm:$0xff]
    %v1300 = vld [vmem:[%s4 + $0x188] sm:$0xff]
    %v1301 = vld [vmem:[%s4 + $0x190] sm:$0xff]
    %v1302 = vld [vmem:[%s4 + $0x198] sm:$0xff]
    %v1303 = vld [vmem:[%s4 + $0x1a0] sm:$0xff]
    %v1304 = vld [vmem:[%s4 + $0x1a8] sm:$0xff]
    %v1305 = vld [vmem:[%s4 + $0x1b0] sm:$0xff]
    %v1306 = vld [vmem:[%s4 + $0x1b8] sm:$0xff]
    %v1307 = vld [vmem:[%s4 + $0x1c0] sm:$0xff]
    %v1308 = vld [vmem:[%s4 + $0x1c8] sm:$0xff]
    %v1309 = vld [vmem:[%s4 + $0x1d0] sm:$0xff]
    %v1310 = vld [vmem:[%s4 + $0x1d8] sm:$0xff]
    %v1311 = vld [vmem:[%s4 + $0x1e0] sm:$0xff]
    %v1312 = vld [vmem:[%s4 + $0x1e8] sm:$0xff]
    %v1313 = vld [vmem:[%s4 + $0x1f0] sm:$0xff]
    %v1314 = vld [vmem:[%s4 + $0x1f8] sm:$0xff]
    %v1315 = vld [vmem:[%s5] sm:$0xf]
    %v1317 = vlaneseq
    %v1318 = vshrl.u32 %v1317, 7
    %v1319 = vsub.s32 0, %v1318
    %v1320 = vrot.slane %v1315, %v1319
    %v1321 = vlaneseq
    %v1322 = vshrl.u32 %v1321, 7
    %v1323 = vsub.s32 1, %v1322
    %v1324 = vrot.slane %v1315, %v1323
    %v1325 = vlaneseq
    %v1326 = vshrl.u32 %v1325, 7
    %v1327 = vsub.s32 2, %v1326
    %v1328 = vrot.slane %v1315, %v1327
    %v1329 = vlaneseq
    %v1330 = vshrl.u32 %v1329, 7
    %v1331 = vsub.s32 3, %v1330
    %v1332 = vrot.slane %v1315, %v1331
    %1337 = vmatprep.subr.mxu0 %v1124
    %1338 = vmatpush1.msra.mxu0 %v1123
    %1339 = vmatprep.subr.mxu0 %v1128
    %1340 = vmatpush1.msra.mxu0 %v1127
    %1341 = vmatprep.subr.mxu0 %v1132
    %1342 = vmatpush1.msra.mxu0 %v1131
    %1343 = vmatprep.subr.mxu0 %v1136
    %1344 = vmatpush1.msra.mxu0 %v1135
    %1345 = vmatprep.subr.mxu0 %v1140
    %1346 = vmatpush1.msra.mxu0 %v1139
    %1347 = vmatprep.subr.mxu0 %v1144
    %1348 = vmatpush1.msra.mxu0 %v1143
    %1349 = vmatprep.subr.mxu0 %v1148
    %1350 = vmatpush1.msra.mxu0 %v1147
    %1351 = vmatprep.subr.mxu0 %v1152
    %1352 = vmatpush1.msra.mxu0 %v1151
    %1353 = vmatprep.subr.mxu0 %v1156
    %1354 = vmatpush1.msra.mxu0 %v1155
    %1355 = vmatprep.subr.mxu0 %v1160
    %1356 = vmatpush1.msra.mxu0 %v1159
    %1357 = vmatprep.subr.mxu0 %v1164
    %1358 = vmatpush1.msra.mxu0 %v1163
    %1359 = vmatprep.subr.mxu0 %v1168
    %1360 = vmatpush1.msra.mxu0 %v1167
    %1361 = vmatprep.subr.mxu0 %v1172
    %1362 = vmatpush1.msra.mxu0 %v1171
    %1363 = vmatprep.subr.mxu0 %v1176
    %1364 = vmatpush1.msra.mxu0 %v1175
    %1365 = vmatprep.subr.mxu0 %v1180
    %1366 = vmatpush1.msra.mxu0 %v1179
    %1367 = vmatprep.subr.mxu0 %v1184
    %1368 = vmatpush1.msra.mxu0 %v1183
    %1369 = vmatprep.subr.mxu0 %v1188
    %1370 = vmatpush1.msra.mxu0 %v1187
    %1371 = vmatprep.subr.mxu0 %v1192
    %1372 = vmatpush1.msra.mxu0 %v1191
    %1373 = vmatprep.subr.mxu0 %v1196
    %1374 = vmatpush1.msra.mxu0 %v1195
    %1375 = vmatprep.subr.mxu0 %v1200
    %1376 = vmatpush1.msra.mxu0 %v1199
    %1377 = vmatprep.subr.mxu0 %v1204
    %1378 = vmatpush1.msra.mxu0 %v1203
    %1379 = vmatprep.subr.mxu0 %v1208
    %1380 = vmatpush1.msra.mxu0 %v1207
    %1381 = vmatprep.subr.mxu0 %v1212
    %1382 = vmatpush1.msra.mxu0 %v1211
    %1383 = vmatprep.subr.mxu0 %v1216
    %1384 = vmatpush1.msra.mxu0 %v1215
    %1385 = vmatprep.subr.mxu0 %v1220
    %1386 = vmatpush1.msra.mxu0 %v1219
    %1387 = vmatprep.subr.mxu0 %v1224
    %1388 = vmatpush1.msra.mxu0 %v1223
    %1389 = vmatprep.subr.mxu0 %v1228
    %1390 = vmatpush1.msra.mxu0 %v1227
    %1391 = vmatprep.subr.mxu0 %v1232
    %1392 = vmatpush1.msra.mxu0 %v1231
    %1393 = vmatprep.subr.mxu0 %v1236
    %1394 = vmatpush1.msra.mxu0 %v1235
    %1395 = vmatprep.subr.mxu0 %v1240
    %1396 = vmatpush1.msra.mxu0 %v1239
    %1397 = vmatprep.subr.mxu0 %v1244
    %1398 = vmatpush1.msra.mxu0 %v1243
    %1399 = vmatprep.subr.mxu0 %v1248
    %1400 = vmatpush1.msra.mxu0 %v1247
    %1401 = vmatprep.mubr.f32.mxu0 %v184
    %1402 = vmatmul.mubr.f32.gmra.mrb[0].mxu0 %v183
    %v1403 = vpop.f32.mrb[0].mxu0
    %v1404 = vadd.f32 %v1320, %v1403
    %v1405 = vpop.f32.mrb[0].mxu0
    %v1406 = vadd.f32 %v1324, %v1405
    %1407 = vmatprep.mubr.f32.mxu0 %v318
    %1408 = vmatmul.mubr.f32.gmra.mrb[0].mxu0 %v317
    %v1409 = vpop.f32.mrb[0].mxu0
    %v1410 = vadd.f32 %v1320, %v1409
    %v1411 = vpop.f32.mrb[0].mxu0
    %v1412 = vadd.f32 %v1324, %v1411
    %1413 = vmatprep.mubr.f32.mxu0 %v452
    %1414 = vmatmul.mubr.f32.gmra.mrb[0].mxu0 %v451
    %v1415 = vpop.f32.mrb[0].mxu0
    %v1416 = vadd.f32 %v1320, %v1415
    %v1417 = vpop.f32.mrb[0].mxu0
    %v1418 = vadd.f32 %v1324, %v1417
    %1419 = vmatprep.mubr.f32.mxu0 %v586
    %1420 = vmatmul.mubr.f32.gmra.mrb[0].mxu0 %v585
    %v1421 = vpop.f32.mrb[0].mxu0
    %v1422 = vadd.f32 %v1320, %v1421
    %v1423 = vpop.f32.mrb[0].mxu0
    %v1424 = vadd.f32 %v1324, %v1423
    %1425 = vmatprep.mubr.f32.mxu0 %v720
    %1426 = vmatmul.mubr.f32.gmra.mrb[0].mxu0 %v719
    %v1427 = vpop.f32.mrb[0].mxu0
    %v1428 = vadd.f32 %v1320, %v1427
    %v1429 = vpop.f32.mrb[0].mxu0
    %v1430 = vadd.f32 %v1324, %v1429
    %1431 = vmatprep.mubr.f32.mxu0 %v854
    %1432 = vmatmul.mubr.f32.gmra.mrb[0].mxu0 %v853
    %v1433 = vpop.f32.mrb[0].mxu0
    %v1434 = vadd.f32 %v1320, %v1433
    %v1435 = vpop.f32.mrb[0].mxu0
    %v1436 = vadd.f32 %v1324, %v1435
    %1437 = vmatprep.mubr.f32.mxu0 %v988
    %1438 = vmatmul.mubr.f32.gmra.mrb[0].mxu0 %v987
    %v1439 = vpop.f32.mrb[0].mxu0
    %v1440 = vadd.f32 %v1320, %v1439
    %v1441 = vpop.f32.mrb[0].mxu0
    %v1442 = vadd.f32 %v1324, %v1441
    %1443 = vmatprep.mubr.f32.mxu0 %v1122
    %1444 = vmatmul.mubr.f32.gmra.mrb[0].mxu0 %v1121
    %v1445 = vpop.f32.mrb[0].mxu0
    %v1446 = vadd.f32 %v1320, %v1445
    %v1447 = vpop.f32.mrb[0].mxu0
    %v1448 = vadd.f32 %v1324, %v1447
    %1449 = vdwg.mxu0
    %1450 = vmatprep.subr.mxu0 %v1126
    %1451 = vmatpush1.msra.mxu0 %v1125
    %1452 = vmatprep.subr.mxu0 %v1130
    %1453 = vmatpush1.msra.mxu0 %v1129
    %1454 = vmatprep.subr.mxu0 %v1134
    %1455 = vmatpush1.msra.mxu0 %v1133
    %1456 = vmatprep.subr.mxu0 %v1138
    %1457 = vmatpush1.msra.mxu0 %v1137
    %1458 = vmatprep.subr.mxu0 %v1142
    %1459 = vmatpush1.msra.mxu0 %v1141
    %1460 = vmatprep.subr.mxu0 %v1146
    %1461 = vmatpush1.msra.mxu0 %v1145
    %1462 = vmatprep.subr.mxu0 %v1150
    %1463 = vmatpush1.msra.mxu0 %v1149
    %1464 = vmatprep.subr.mxu0 %v1154
    %1465 = vmatpush1.msra.mxu0 %v1153
    %1466 = vmatprep.subr.mxu0 %v1158
    %1467 = vmatpush1.msra.mxu0 %v1157
    %1468 = vmatprep.subr.mxu0 %v1162
    %1469 = vmatpush1.msra.mxu0 %v1161
    %1470 = vmatprep.subr.mxu0 %v1166
    %1471 = vmatpush1.msra.mxu0 %v1165
    %1472 = vmatprep.subr.mxu0 %v1170
    %1473 = vmatpush1.msra.mxu0 %v1169
    %1474 = vmatprep.subr.mxu0 %v1174
    %1475 = vmatpush1.msra.mxu0 %v1173
    %1476 = vmatprep.subr.mxu0 %v1178
    %1477 = vmatpush1.msra.mxu0 %v1177
    %1478 = vmatprep.subr.mxu0 %v1182
    %1479 = vmatpush1.msra.mxu0 %v1181
    %1480 = vmatprep.subr.mxu0 %v1186
    %1481 = vmatpush1.msra.mxu0 %v1185
    %1482 = vmatprep.subr.mxu0 %v1190
    %1483 = vmatpush1.msra.mxu0 %v1189
    %1484 = vmatprep.subr.mxu0 %v1194
    %1485 = vmatpush1.msra.mxu0 %v1193
    %1486 = vmatprep.subr.mxu0 %v1198
    %1487 = vmatpush1.msra.mxu0 %v1197
    %1488 = vmatprep.subr.mxu0 %v1202
    %1489 = vmatpush1.msra.mxu0 %v1201
    %1490 = vmatprep.subr.mxu0 %v1206
    %1491 = vmatpush1.msra.mxu0 %v1205
    %1492 = vmatprep.subr.mxu0 %v1210
    %1493 = vmatpush1.msra.mxu0 %v1209
    %1494 = vmatprep.subr.mxu0 %v1214
    %1495 = vmatpush1.msra.mxu0 %v1213
    %1496 = vmatprep.subr.mxu0 %v1218
    %1497 = vmatpush1.msra.mxu0 %v1217
    %1498 = vmatprep.subr.mxu0 %v1222
    %1499 = vmatpush1.msra.mxu0 %v1221
    %1500 = vmatprep.subr.mxu0 %v1226
    %1501 = vmatpush1.msra.mxu0 %v1225
    %1502 = vmatprep.subr.mxu0 %v1230
    %1503 = vmatpush1.msra.mxu0 %v1229
    %1504 = vmatprep.subr.mxu0 %v1234
    %1505 = vmatpush1.msra.mxu0 %v1233
    %1506 = vmatprep.subr.mxu0 %v1238
    %1507 = vmatpush1.msra.mxu0 %v1237
    %1508 = vmatprep.subr.mxu0 %v1242
    %1509 = vmatpush1.msra.mxu0 %v1241
    %1510 = vmatprep.subr.mxu0 %v1246
    %1511 = vmatpush1.msra.mxu0 %v1245
    %1512 = vmatprep.subr.mxu0 %v1250
    %1513 = vmatpush1.msra.mxu0 %v1249
    %1514 = vmatprep.mubr.f32.mxu0 %v184
    %1515 = vmatmul.mubr.f32.gmra.mrb[0].mxu0 %v183
    %v1516 = vpop.f32.mrb[0].mxu0
    %v1517 = vadd.f32 %v1328, %v1516
    %v1518 = vpop.f32.mrb[0].mxu0
    %v1519 = vadd.f32 %v1332, %v1518
    %1520 = vmatprep.mubr.f32.mxu0 %v318
    %1521 = vmatmul.mubr.f32.gmra.mrb[0].mxu0 %v317
    %v1522 = vpop.f32.mrb[0].mxu0
    %v1523 = vadd.f32 %v1328, %v1522
    %v1524 = vpop.f32.mrb[0].mxu0
    %v1525 = vadd.f32 %v1332, %v1524
    %1526 = vmatprep.mubr.f32.mxu0 %v452
    %1527 = vmatmul.mubr.f32.gmra.mrb[0].mxu0 %v451
    %v1528 = vpop.f32.mrb[0].mxu0
    %v1529 = vadd.f32 %v1328, %v1528
    %v1530 = vpop.f32.mrb[0].mxu0
    %v1531 = vadd.f32 %v1332, %v1530
    %1532 = vmatprep.mubr.f32.mxu0 %v586
    %1533 = vmatmul.mubr.f32.gmra.mrb[0].mxu0 %v585
    %v1534 = vpop.f32.mrb[0].mxu0
    %v1535 = vadd.f32 %v1328, %v1534
    %v1536 = vpop.f32.mrb[0].mxu0
    %v1537 = vadd.f32 %v1332, %v1536
    %1538 = vmatprep.mubr.f32.mxu0 %v720
    %1539 = vmatmul.mubr.f32.gmra.mrb[0].mxu0 %v719
    %v1540 = vpop.f32.mrb[0].mxu0
    %v1541 = vadd.f32 %v1328, %v1540
    %v1542 = vpop.f32.mrb[0].mxu0
    %v1543 = vadd.f32 %v1332, %v1542
    %1544 = vmatprep.mubr.f32.mxu0 %v854
    %1545 = vmatmul.mubr.f32.gmra.mrb[0].mxu0 %v853
    %v1546 = vpop.f32.mrb[0].mxu0
    %v1547 = vadd.f32 %v1328, %v1546
    %v1548 = vpop.f32.mrb[0].mxu0
    %v1549 = vadd.f32 %v1332, %v1548
    %1550 = vmatprep.mubr.f32.mxu0 %v988
    %1551 = vmatmul.mubr.f32.gmra.mrb[0].mxu0 %v987
    %v1552 = vpop.f32.mrb[0].mxu0
    %v1553 = vadd.f32 %v1328, %v1552
    %v1554 = vpop.f32.mrb[0].mxu0
    %v1555 = vadd.f32 %v1332, %v1554
    %1556 = vmatprep.mubr.f32.mxu0 %v1122
    %1557 = vmatmul.mubr.f32.gmra.mrb[0].mxu0 %v1121
    %v1558 = vpop.f32.mrb[0].mxu0
    %v1559 = vadd.f32 %v1328, %v1558
    %v1560 = vpop.f32.mrb[0].mxu0
    %v1561 = vadd.f32 %v1332, %v1560
    %1562 = vdwg.mxu0
    %v1563 = vld [vmem:[%s6] sm:$0xff]
    %v1564 = vld [vmem:[%s7] sm:$0xff]
    %1565 = vmatprep.subr.mxu0 %v1252
    %1566 = vmatpush1.msra.mxu0 %v1251
    %1567 = vmatprep.subr.mxu0 %v1256
    %1568 = vmatpush1.msra.mxu0 %v1255
    %1569 = vmatprep.subr.mxu0 %v1260
    %1570 = vmatpush1.msra.mxu0 %v1259
    %1571 = vmatprep.subr.mxu0 %v1264
    %1572 = vmatpush1.msra.mxu0 %v1263
    %1573 = vmatprep.subr.mxu0 %v1268
    %1574 = vmatpush1.msra.mxu0 %v1267
    %1575 = vmatprep.subr.mxu0 %v1272
    %1576 = vmatpush1.msra.mxu0 %v1271
    %1577 = vmatprep.subr.mxu0 %v1276
    %1578 = vmatpush1.msra.mxu0 %v1275
    %1579 = vmatprep.subr.mxu0 %v1280
    %1580 = vmatpush1.msra.mxu0 %v1279
    %1581 = vmatprep.subr.mxu0 %v1284
    %1582 = vmatpush1.msra.mxu0 %v1283
    %1583 = vmatprep.subr.mxu0 %v1288
    %1584 = vmatpush1.msra.mxu0 %v1287
    %1585 = vmatprep.subr.mxu0 %v1292
    %1586 = vmatpush1.msra.mxu0 %v1291
    %1587 = vmatprep.subr.mxu0 %v1296
    %1588 = vmatpush1.msra.mxu0 %v1295
    %1589 = vmatprep.subr.mxu0 %v1300
    %1590 = vmatpush1.msra.mxu0 %v1299
    %1591 = vmatprep.subr.mxu0 %v1304
    %1592 = vmatpush1.msra.mxu0 %v1303
    %1593 = vmatprep.subr.mxu0 %v1308
    %1594 = vmatpush1.msra.mxu0 %v1307
    %1595 = vmatprep.subr.mxu0 %v1312
    %1596 = vmatpush1.msra.mxu0 %v1311
    %1597 = vmatprep.subr.mxu0 0.0
    %1598 = vmatpush1.msra.mxu0 0.0
    %1599 = vmatprep.subr.mxu0 0.0
    %1600 = vmatpush1.msra.mxu0 0.0
    %1601 = vmatprep.subr.mxu0 0.0
    %1602 = vmatpush1.msra.mxu0 0.0
    %1603 = vmatprep.subr.mxu0 0.0
    %1604 = vmatpush1.msra.mxu0 0.0
    %1605 = vmatprep.subr.mxu0 0.0
    %1606 = vmatpush1.msra.mxu0 0.0
    %1607 = vmatprep.subr.mxu0 0.0
    %1608 = vmatpush1.msra.mxu0 0.0
    %1609 = vmatprep.subr.mxu0 0.0
    %1610 = vmatpush1.msra.mxu0 0.0
    %1611 = vmatprep.subr.mxu0 0.0
    %1612 = vmatpush1.msra.mxu0 0.0
    %1613 = vmatprep.subr.mxu0 0.0
    %1614 = vmatpush1.msra.mxu0 0.0
    %1615 = vmatprep.subr.mxu0 0.0
    %1616 = vmatpush1.msra.mxu0 0.0
    %1617 = vmatprep.subr.mxu0 0.0
    %1618 = vmatpush1.msra.mxu0 0.0
    %1619 = vmatprep.subr.mxu0 0.0
    %1620 = vmatpush1.msra.mxu0 0.0
    %1621 = vmatprep.subr.mxu0 0.0
    %1622 = vmatpush1.msra.mxu0 0.0
    %1623 = vmatprep.subr.mxu0 0.0
    %1624 = vmatpush1.msra.mxu0 0.0
    %1625 = vmatprep.subr.mxu0 0.0
    %1626 = vmatpush1.msra.mxu0 0.0
    %1627 = vmatprep.subr.mxu0 0.0
    %1628 = vmatpush1.msra.mxu0 0.0
    %1629 = vmatprep.mubr.f32.mxu0 0.0
    %1630 = vmatmul.mubr.f32.gmra.mrb[0].mxu0 %v1563
    %v1631 = vpop.f32.mrb[0].mxu0
    %v1632 = vadd.f32 0.0, %v1631
    %v1633 = vpop.f32.mrb[0].mxu0
    %v1634 = vadd.f32 0.0, %v1633
    %1635 = vdwg.mxu0
    %1636 = vmatprep.subr.mxu0 %v1254
    %1637 = vmatpush1.msra.mxu0 %v1253
    %1638 = vmatprep.subr.mxu0 %v1258
    %1639 = vmatpush1.msra.mxu0 %v1257
    %1640 = vmatprep.subr.mxu0 %v1262
    %1641 = vmatpush1.msra.mxu0 %v1261
    %1642 = vmatprep.subr.mxu0 %v1266
    %1643 = vmatpush1.msra.mxu0 %v1265
    %1644 = vmatprep.subr.mxu0 %v1270
    %1645 = vmatpush1.msra.mxu0 %v1269
    %1646 = vmatprep.subr.mxu0 %v1274
    %1647 = vmatpush1.msra.mxu0 %v1273
    %1648 = vmatprep.subr.mxu0 %v1278
    %1649 = vmatpush1.msra.mxu0 %v1277
    %1650 = vmatprep.subr.mxu0 %v1282
    %1651 = vmatpush1.msra.mxu0 %v1281
    %1652 = vmatprep.subr.mxu0 %v1286
    %1653 = vmatpush1.msra.mxu0 %v1285
    %1654 = vmatprep.subr.mxu0 %v1290
    %1655 = vmatpush1.msra.mxu0 %v1289
    %1656 = vmatprep.subr.mxu0 %v1294
    %1657 = vmatpush1.msra.mxu0 %v1293
    %1658 = vmatprep.subr.mxu0 %v1298
    %1659 = vmatpush1.msra.mxu0 %v1297
    %1660 = vmatprep.subr.mxu0 %v1302
    %1661 = vmatpush1.msra.mxu0 %v1301
    %1662 = vmatprep.subr.mxu0 %v1306
    %1663 = vmatpush1.msra.mxu0 %v1305
    %1664 = vmatprep.subr.mxu0 %v1310
    %1665 = vmatpush1.msra.mxu0 %v1309
    %1666 = vmatprep.subr.mxu0 %v1314
    %1667 = vmatpush1.msra.mxu0 %v1313
    %1668 = vmatprep.subr.mxu0 0.0
    %1669 = vmatpush1.msra.mxu0 0.0
    %1670 = vmatprep.subr.mxu0 0.0
    %1671 = vmatpush1.msra.mxu0 0.0
    %1672 = vmatprep.subr.mxu0 0.0
    %1673 = vmatpush1.msra.mxu0 0.0
    %1674 = vmatprep.subr.mxu0 0.0
    %1675 = vmatpush1.msra.mxu0 0.0
    %1676 = vmatprep.subr.mxu0 0.0
    %1677 = vmatpush1.msra.mxu0 0.0
    %1678 = vmatprep.subr.mxu0 0.0
    %1679 = vmatpush1.msra.mxu0 0.0
    %1680 = vmatprep.subr.mxu0 0.0
    %1681 = vmatpush1.msra.mxu0 0.0
    %1682 = vmatprep.subr.mxu0 0.0
    %1683 = vmatpush1.msra.mxu0 0.0
    %1684 = vmatprep.subr.mxu0 0.0
    %1685 = vmatpush1.msra.mxu0 0.0
    %1686 = vmatprep.subr.mxu0 0.0
    %1687 = vmatpush1.msra.mxu0 0.0
    %1688 = vmatprep.subr.mxu0 0.0
    %1689 = vmatpush1.msra.mxu0 0.0
    %1690 = vmatprep.subr.mxu0 0.0
    %1691 = vmatpush1.msra.mxu0 0.0
    %1692 = vmatprep.subr.mxu0 0.0
    %1693 = vmatpush1.msra.mxu0 0.0
    %1694 = vmatprep.subr.mxu0 0.0
    %1695 = vmatpush1.msra.mxu0 0.0
    %1696 = vmatprep.subr.mxu0 0.0
    %1697 = vmatpush1.msra.mxu0 0.0
    %1698 = vmatprep.subr.mxu0 0.0
    %1699 = vmatpush1.msra.mxu0 0.0
    %1700 = vmatprep.mubr.f32.mxu0 0.0
    %1701 = vmatmul.mubr.f32.gmra.mrb[0].mxu0 %v1563
    %v1702 = vpop.f32.mrb[0].mxu0
    %v1703 = vadd.f32 0.0, %v1702
    %v1704 = vpop.f32.mrb[0].mxu0
    %v1705 = vadd.f32 0.0, %v1704
    %1706 = vdwg.mxu0
    %v1707 = vadd.f32 %v1404, %v1632
    %v1708 = vadd.f32 %v1406, %v1634
    %v1709 = vadd.f32 %v1517, %v1703
    %v1710 = vadd.f32 %v1519, %v1705
    %v1711 = vxor.u32 %v1707, 2147483648
    %v1712 = vmul.f32 %v1711, 1.442695
    %v1713 = vpow.pop %v1712
    %v1714 = vadd.f32 %v1713, 1.0
    %v1715 = vrcp.pop %v1714
    %v1716 = vmul.f32 1.0, %v1715
    %v1717 = vxor.u32 %v1708, 2147483648
    %v1718 = vmul.f32 %v1717, 1.442695
    %v1719 = vpow.pop %v1718
    %v1720 = vadd.f32 %v1719, 1.0
    %v1721 = vrcp.pop %v1720
    %v1722 = vmul.f32 1.0, %v1721
    %v1723 = vtanh.pop %v1709
    %v1724 = vxor.u32 %v1710, 2147483648
    %v1725 = vmul.f32 %v1724, 1.442695
    %v1726 = vpow.pop %v1725
    %v1727 = vadd.f32 %v1726, 1.0
    %v1728 = vrcp.pop %v1727
    %v1729 = vmul.f32 1.0, %v1728
    %v1730 = vmul.f32 %v1722, %v1564
    %v1731 = vmul.f32 %v1716, %v1723
    %v1732 = vadd.f32 %v1730, %v1731
    %v1733 = vtanh.pop %v1732
    %v1734 = vmul.f32 %v1729, %v1733
    %1735 = vmatprep.subr.mxu0 %v1252
    %1736 = vmatpush1.msra.mxu0 %v1251
    %1737 = vmatprep.subr.mxu0 %v1256
    %1738 = vmatpush1.msra.mxu0 %v1255
    %1739 = vmatprep.subr.mxu0 %v1260
    %1740 = vmatpush1.msra.mxu0 %v1259
    %1741 = vmatprep.subr.mxu0 %v1264
    %1742 = vmatpush1.msra.mxu0 %v1263
    %1743 = vmatprep.subr.mxu0 %v1268
    %1744 = vmatpush1.msra.mxu0 %v1267
    %1745 = vmatprep.subr.mxu0 %v1272
    %1746 = vmatpush1.msra.mxu0 %v1271
    %1747 = vmatprep.subr.mxu0 %v1276
    %1748 = vmatpush1.msra.mxu0 %v1275
    %1749 = vmatprep.subr.mxu0 %v1280
    %1750 = vmatpush1.msra.mxu0 %v1279
    %1751 = vmatprep.subr.mxu0 %v1284
    %1752 = vmatpush1.msra.mxu0 %v1283
    %1753 = vmatprep.subr.mxu0 %v1288
    %1754 = vmatpush1.msra.mxu0 %v1287
    %1755 = vmatprep.subr.mxu0 %v1292
    %1756 = vmatpush1.msra.mxu0 %v1291
    %1757 = vmatprep.subr.mxu0 %v1296
    %1758 = vmatpush1.msra.mxu0 %v1295
    %1759 = vmatprep.subr.mxu0 %v1300
    %1760 = vmatpush1.msra.mxu0 %v1299
    %1761 = vmatprep.subr.mxu0 %v1304
    %1762 = vmatpush1.msra.mxu0 %v1303
    %1763 = vmatprep.subr.mxu0 %v1308
    %1764 = vmatpush1.msra.mxu0 %v1307
    %1765 = vmatprep.subr.mxu0 %v1312
    %1766 = vmatpush1.msra.mxu0 %v1311
    %1767 = vmatprep.subr.mxu0 0.0
    %1768 = vmatpush1.msra.mxu0 0.0
    %1769 = vmatprep.subr.mxu0 0.0
    %1770 = vmatpush1.msra.mxu0 0.0
    %1771 = vmatprep.subr.mxu0 0.0
    %1772 = vmatpush1.msra.mxu0 0.0
    %1773 = vmatprep.subr.mxu0 0.0
    %1774 = vmatpush1.msra.mxu0 0.0
    %1775 = vmatprep.subr.mxu0 0.0
    %1776 = vmatpush1.msra.mxu0 0.0
    %1777 = vmatprep.subr.mxu0 0.0
    %1778 = vmatpush1.msra.mxu0 0.0
    %1779 = vmatprep.subr.mxu0 0.0
    %1780 = vmatpush1.msra.mxu0 0.0
    %1781 = vmatprep.subr.mxu0 0.0
    %1782 = vmatpush1.msra.mxu0 0.0
    %1783 = vmatprep.subr.mxu0 0.0
    %1784 = vmatpush1.msra.mxu0 0.0
    %1785 = vmatprep.subr.mxu0 0.0
    %1786 = vmatpush1.msra.mxu0 0.0
    %1787 = vmatprep.subr.mxu0 0.0
    %1788 = vmatpush1.msra.mxu0 0.0
    %1789 = vmatprep.subr.mxu0 0.0
    %1790 = vmatpush1.msra.mxu0 0.0
    %1791 = vmatprep.subr.mxu0 0.0
    %1792 = vmatpush1.msra.mxu0 0.0
    %1793 = vmatprep.subr.mxu0 0.0
    %1794 = vmatpush1.msra.mxu0 0.0
    %1795 = vmatprep.subr.mxu0 0.0
    %1796 = vmatpush1.msra.mxu0 0.0
    %1797 = vmatprep.subr.mxu0 0.0
    %1798 = vmatpush1.msra.mxu0 0.0
    %1799 = vmatprep.mubr.f32.mxu0 0.0
    %1800 = vmatmul.mubr.f32.gmra.mrb[0].mxu0 %v1734
    %v1801 = vpop.f32.mrb[0].mxu0
    %v1802 = vadd.f32 0.0, %v1801
    %v1803 = vpop.f32.mrb[0].mxu0
    %v1804 = vadd.f32 0.0, %v1803
    %1805 = vdwg.mxu0
    %1806 = vmatprep.subr.mxu0 %v1254
    %1807 = vmatpush1.msra.mxu0 %v1253
    %1808 = vmatprep.subr.mxu0 %v1258
    %1809 = vmatpush1.msra.mxu0 %v1257
    %1810 = vmatprep.subr.mxu0 %v1262
    %1811 = vmatpush1.msra.mxu0 %v1261
    %1812 = vmatprep.subr.mxu0 %v1266
    %1813 = vmatpush1.msra.mxu0 %v1265
    %1814 = vmatprep.subr.mxu0 %v1270
    %1815 = vmatpush1.msra.mxu0 %v1269
    %1816 = vmatprep.subr.mxu0 %v1274
    %1817 = vmatpush1.msra.mxu0 %v1273
    %1818 = vmatprep.subr.mxu0 %v1278
    %1819 = vmatpush1.msra.mxu0 %v1277
    %1820 = vmatprep.subr.mxu0 %v1282
    %1821 = vmatpush1.msra.mxu0 %v1281
    %1822 = vmatprep.subr.mxu0 %v1286
    %1823 = vmatpush1.msra.mxu0 %v1285
    %1824 = vmatprep.subr.mxu0 %v1290
    %1825 = vmatpush1.msra.mxu0 %v1289
    %1826 = vmatprep.subr.mxu0 %v1294
    %1827 = vmatpush1.msra.mxu0 %v1293
    %1828 = vmatprep.subr.mxu0 %v1298
    %1829 = vmatpush1.msra.mxu0 %v1297
    %1830 = vmatprep.subr.mxu0 %v1302
    %1831 = vmatpush1.msra.mxu0 %v1301
    %1832 = vmatprep.subr.mxu0 %v1306
    %1833 = vmatpush1.msra.mxu0 %v1305
    %1834 = vmatprep.subr.mxu0 %v1310
    %1835 = vmatpush1.msra.mxu0 %v1309
    %1836 = vmatprep.subr.mxu0 %v1314
    %1837 = vmatpush1.msra.mxu0 %v1313
    %1838 = vmatprep.subr.mxu0 0.0
    %1839 = vmatpush1.msra.mxu0 0.0
    %1840 = vmatprep.subr.mxu0 0.0
    %1841 = vmatpush1.msra.mxu0 0.0
    %1842 = vmatprep.subr.mxu0 0.0
    %1843 = vmatpush1.msra.mxu0 0.0
    %1844 = vmatprep.subr.mxu0 0.0
    %1845 = vmatpush1.msra.mxu0 0.0
    %1846 = vmatprep.subr.mxu0 0.0
    %1847 = vmatpush1.msra.mxu0 0.0
    %1848 = vmatprep.subr.mxu0 0.0
    %1849 = vmatpush1.msra.mxu0 0.0
    %1850 = vmatprep.subr.mxu0 0.0
    %1851 = vmatpush1.msra.mxu0 0.0
    %1852 = vmatprep.subr.mxu0 0.0
    %1853 = vmatpush1.msra.mxu0 0.0
    %1854 = vmatprep.subr.mxu0 0.0
    %1855 = vmatpush1.msra.mxu0 0.0
    %1856 = vmatprep.subr.mxu0 0.0
    %1857 = vmatpush1.msra.mxu0 0.0
    %1858 = vmatprep.subr.mxu0 0.0
    %1859 = vmatpush1.msra.mxu0 0.0
    %1860 = vmatprep.subr.mxu0 0.0
    %1861 = vmatpush1.msra.mxu0 0.0
    %1862 = vmatprep.subr.mxu0 0.0
    %1863 = vmatpush1.msra.mxu0 0.0
    %1864 = vmatprep.subr.mxu0 0.0
    %1865 = vmatpush1.msra.mxu0 0.0
    %1866 = vmatprep.subr.mxu0 0.0
    %1867 = vmatpush1.msra.mxu0 0.0
    %1868 = vmatprep.subr.mxu0 0.0
    %1869 = vmatpush1.msra.mxu0 0.0
    %1870 = vmatprep.mubr.f32.mxu0 0.0
    %1871 = vmatmul.mubr.f32.gmra.mrb[0].mxu0 %v1734
    %v1872 = vpop.f32.mrb[0].mxu0
    %v1873 = vadd.f32 0.0, %v1872
    %v1874 = vpop.f32.mrb[0].mxu0
    %v1875 = vadd.f32 0.0, %v1874
    %1876 = vdwg.mxu0
    %v1877 = vadd.f32 %v1410, %v1802
    %v1878 = vadd.f32 %v1412, %v1804
    %v1879 = vadd.f32 %v1523, %v1873
    %v1880 = vadd.f32 %v1525, %v1875
    %v1881 = vxor.u32 %v1877, 2147483648
    %v1882 = vmul.f32 %v1881, 1.442695
    %v1883 = vpow.pop %v1882
    %v1884 = vadd.f32 %v1883, 1.0
    %v1885 = vrcp.pop %v1884
    %v1886 = vmul.f32 1.0, %v1885
    %v1887 = vxor.u32 %v1878, 2147483648
    %v1888 = vmul.f32 %v1887, 1.442695
    %v1889 = vpow.pop %v1888
    %v1890 = vadd.f32 %v1889, 1.0
    %v1891 = vrcp.pop %v1890
    %v1892 = vmul.f32 1.0, %v1891
    %v1893 = vtanh.pop %v1879
    %v1894 = vxor.u32 %v1880, 2147483648
    %v1895 = vmul.f32 %v1894, 1.442695
    %v1896 = vpow.pop %v1895
    %v1897 = vadd.f32 %v1896, 1.0
    %v1898 = vrcp.pop %v1897
    %v1899 = vmul.f32 1.0, %v1898
    %v1900 = vmul.f32 %v1892, %v1732
    %v1901 = vmul.f32 %v1886, %v1893
    %v1902 = vadd.f32 %v1900, %v1901
    %v1903 = vtanh.pop %v1902
    %v1904 = vmul.f32 %v1899, %v1903
    %1905 = vmatprep.subr.mxu0 %v1252
    %1906 = vmatpush1.msra.mxu0 %v1251
    %1907 = vmatprep.subr.mxu0 %v1256
    %1908 = vmatpush1.msra.mxu0 %v1255
    %1909 = vmatprep.subr.mxu0 %v1260
    %1910 = vmatpush1.msra.mxu0 %v1259
    %1911 = vmatprep.subr.mxu0 %v1264
    %1912 = vmatpush1.msra.mxu0 %v1263
    %1913 = vmatprep.subr.mxu0 %v1268
    %1914 = vmatpush1.msra.mxu0 %v1267
    %1915 = vmatprep.subr.mxu0 %v1272
    %1916 = vmatpush1.msra.mxu0 %v1271
    %1917 = vmatprep.subr.mxu0 %v1276
    %1918 = vmatpush1.msra.mxu0 %v1275
    %1919 = vmatprep.subr.mxu0 %v1280
    %1920 = vmatpush1.msra.mxu0 %v1279
    %1921 = vmatprep.subr.mxu0 %v1284
    %1922 = vmatpush1.msra.mxu0 %v1283
    %1923 = vmatprep.subr.mxu0 %v1288
    %1924 = vmatpush1.msra.mxu0 %v1287
    %1925 = vmatprep.subr.mxu0 %v1292
    %1926 = vmatpush1.msra.mxu0 %v1291
    %1927 = vmatprep.subr.mxu0 %v1296
    %1928 = vmatpush1.msra.mxu0 %v1295
    %1929 = vmatprep.subr.mxu0 %v1300
    %1930 = vmatpush1.msra.mxu0 %v1299
    %1931 = vmatprep.subr.mxu0 %v1304
    %1932 = vmatpush1.msra.mxu0 %v1303
    %1933 = vmatprep.subr.mxu0 %v1308
    %1934 = vmatpush1.msra.mxu0 %v1307
    %1935 = vmatprep.subr.mxu0 %v1312
    %1936 = vmatpush1.msra.mxu0 %v1311
    %1937 = vmatprep.subr.mxu0 0.0
    %1938 = vmatpush1.msra.mxu0 0.0
    %1939 = vmatprep.subr.mxu0 0.0
    %1940 = vmatpush1.msra.mxu0 0.0
    %1941 = vmatprep.subr.mxu0 0.0
    %1942 = vmatpush1.msra.mxu0 0.0
    %1943 = vmatprep.subr.mxu0 0.0
    %1944 = vmatpush1.msra.mxu0 0.0
    %1945 = vmatprep.subr.mxu0 0.0
    %1946 = vmatpush1.msra.mxu0 0.0
    %1947 = vmatprep.subr.mxu0 0.0
    %1948 = vmatpush1.msra.mxu0 0.0
    %1949 = vmatprep.subr.mxu0 0.0
    %1950 = vmatpush1.msra.mxu0 0.0
    %1951 = vmatprep.subr.mxu0 0.0
    %1952 = vmatpush1.msra.mxu0 0.0
    %1953 = vmatprep.subr.mxu0 0.0
    %1954 = vmatpush1.msra.mxu0 0.0
    %1955 = vmatprep.subr.mxu0 0.0
    %1956 = vmatpush1.msra.mxu0 0.0
    %1957 = vmatprep.subr.mxu0 0.0
    %1958 = vmatpush1.msra.mxu0 0.0
    %1959 = vmatprep.subr.mxu0 0.0
    %1960 = vmatpush1.msra.mxu0 0.0
    %1961 = vmatprep.subr.mxu0 0.0
    %1962 = vmatpush1.msra.mxu0 0.0
    %1963 = vmatprep.subr.mxu0 0.0
    %1964 = vmatpush1.msra.mxu0 0.0
    %1965 = vmatprep.subr.mxu0 0.0
    %1966 = vmatpush1.msra.mxu0 0.0
    %1967 = vmatprep.subr.mxu0 0.0
    %1968 = vmatpush1.msra.mxu0 0.0
    %1969 = vmatprep.mubr.f32.mxu0 0.0
    %1970 = vmatmul.mubr.f32.gmra.mrb[0].mxu0 %v1904
    %v1971 = vpop.f32.mrb[0].mxu0
    %v1972 = vadd.f32 0.0, %v1971
    %v1973 = vpop.f32.mrb[0].mxu0
    %v1974 = vadd.f32 0.0, %v1973
    %1975 = vdwg.mxu0
    %1976 = vmatprep.subr.mxu0 %v1254
    %1977 = vmatpush1.msra.mxu0 %v1253
    %1978 = vmatprep.subr.mxu0 %v1258
    %1979 = vmatpush1.msra.mxu0 %v1257
    %1980 = vmatprep.subr.mxu0 %v1262
    %1981 = vmatpush1.msra.mxu0 %v1261
    %1982 = vmatprep.subr.mxu0 %v1266
    %1983 = vmatpush1.msra.mxu0 %v1265
    %1984 = vmatprep.subr.mxu0 %v1270
    %1985 = vmatpush1.msra.mxu0 %v1269
    %1986 = vmatprep.subr.mxu0 %v1274
    %1987 = vmatpush1.msra.mxu0 %v1273
    %1988 = vmatprep.subr.mxu0 %v1278
    %1989 = vmatpush1.msra.mxu0 %v1277
    %1990 = vmatprep.subr.mxu0 %v1282
    %1991 = vmatpush1.msra.mxu0 %v1281
    %1992 = vmatprep.subr.mxu0 %v1286
    %1993 = vmatpush1.msra.mxu0 %v1285
    %1994 = vmatprep.subr.mxu0 %v1290
    %1995 = vmatpush1.msra.mxu0 %v1289
    %1996 = vmatprep.subr.mxu0 %v1294
    %1997 = vmatpush1.msra.mxu0 %v1293
    %1998 = vmatprep.subr.mxu0 %v1298
    %1999 = vmatpush1.msra.mxu0 %v1297
    %2000 = vmatprep.subr.mxu0 %v1302
    %2001 = vmatpush1.msra.mxu0 %v1301
    %2002 = vmatprep.subr.mxu0 %v1306
    %2003 = vmatpush1.msra.mxu0 %v1305
    %2004 = vmatprep.subr.mxu0 %v1310
    %2005 = vmatpush1.msra.mxu0 %v1309
    %2006 = vmatprep.subr.mxu0 %v1314
    %2007 = vmatpush1.msra.mxu0 %v1313
    %2008 = vmatprep.subr.mxu0 0.0
    %2009 = vmatpush1.msra.mxu0 0.0
    %2010 = vmatprep.subr.mxu0 0.0
    %2011 = vmatpush1.msra.mxu0 0.0
    %2012 = vmatprep.subr.mxu0 0.0
    %2013 = vmatpush1.msra.mxu0 0.0
    %2014 = vmatprep.subr.mxu0 0.0
    %2015 = vmatpush1.msra.mxu0 0.0
    %2016 = vmatprep.subr.mxu0 0.0
    %2017 = vmatpush1.msra.mxu0 0.0
    %2018 = vmatprep.subr.mxu0 0.0
    %2019 = vmatpush1.msra.mxu0 0.0
    %2020 = vmatprep.subr.mxu0 0.0
    %2021 = vmatpush1.msra.mxu0 0.0
    %2022 = vmatprep.subr.mxu0 0.0
    %2023 = vmatpush1.msra.mxu0 0.0
    %2024 = vmatprep.subr.mxu0 0.0
    %2025 = vmatpush1.msra.mxu0 0.0
    %2026 = vmatprep.subr.mxu0 0.0
    %2027 = vmatpush1.msra.mxu0 0.0
    %2028 = vmatprep.subr.mxu0 0.0
    %2029 = vmatpush1.msra.mxu0 0.0
    %2030 = vmatprep.subr.mxu0 0.0
    %2031 = vmatpush1.msra.mxu0 0.0
    %2032 = vmatprep.subr.mxu0 0.0
    %2033 = vmatpush1.msra.mxu0 0.0
    %2034 = vmatprep.subr.mxu0 0.0
    %2035 = vmatpush1.msra.mxu0 0.0
    %2036 = vmatprep.subr.mxu0 0.0
    %2037 = vmatpush1.msra.mxu0 0.0
    %2038 = vmatprep.subr.mxu0 0.0
    %2039 = vmatpush1.msra.mxu0 0.0
    %2040 = vmatprep.mubr.f32.mxu0 0.0
    %2041 = vmatmul.mubr.f32.gmra.mrb[0].mxu0 %v1904
    %v2042 = vpop.f32.mrb[0].mxu0
    %v2043 = vadd.f32 0.0, %v2042
    %v2044 = vpop.f32.mrb[0].mxu0
    %v2045 = vadd.f32 0.0, %v2044
    %2046 = vdwg.mxu0
    %v2047 = vadd.f32 %v1416, %v1972
    %v2048 = vadd.f32 %v1418, %v1974
    %v2049 = vadd.f32 %v1529, %v2043
    %v2050 = vadd.f32 %v1531, %v2045
    %v2051 = vxor.u32 %v2047, 2147483648
    %v2052 = vmul.f32 %v2051, 1.442695
    %v2053 = vpow.pop %v2052
    %v2054 = vadd.f32 %v2053, 1.0
    %v2055 = vrcp.pop %v2054
    %v2056 = vmul.f32 1.0, %v2055
    %v2057 = vxor.u32 %v2048, 2147483648
    %v2058 = vmul.f32 %v2057, 1.442695
    %v2059 = vpow.pop %v2058
    %v2060 = vadd.f32 %v2059, 1.0
    %v2061 = vrcp.pop %v2060
    %v2062 = vmul.f32 1.0, %v2061
    %v2063 = vtanh.pop %v2049
    %v2064 = vxor.u32 %v2050, 2147483648
    %v2065 = vmul.f32 %v2064, 1.442695
    %v2066 = vpow.pop %v2065
    %v2067 = vadd.f32 %v2066, 1.0
    %v2068 = vrcp.pop %v2067
    %v2069 = vmul.f32 1.0, %v2068
    %v2070 = vmul.f32 %v2062, %v1902
    %v2071 = vmul.f32 %v2056, %v2063
    %v2072 = vadd.f32 %v2070, %v2071
    %v2073 = vtanh.pop %v2072
    %v2074 = vmul.f32 %v2069, %v2073
    %2075 = vmatprep.subr.mxu0 %v1252
    %2076 = vmatpush1.msra.mxu0 %v1251
    %2077 = vmatprep.subr.mxu0 %v1256
    %2078 = vmatpush1.msra.mxu0 %v1255
    %2079 = vmatprep.subr.mxu0 %v1260
    %2080 = vmatpush1.msra.mxu0 %v1259
    %2081 = vmatprep.subr.mxu0 %v1264
    %2082 = vmatpush1.msra.mxu0 %v1263
    %2083 = vmatprep.subr.mxu0 %v1268
    %2084 = vmatpush1.msra.mxu0 %v1267
    %2085 = vmatprep.subr.mxu0 %v1272
    %2086 = vmatpush1.msra.mxu0 %v1271
    %2087 = vmatprep.subr.mxu0 %v1276
    %2088 = vmatpush1.msra.mxu0 %v1275
    %2089 = vmatprep.subr.mxu0 %v1280
    %2090 = vmatpush1.msra.mxu0 %v1279
    %2091 = vmatprep.subr.mxu0 %v1284
    %2092 = vmatpush1.msra.mxu0 %v1283
    %2093 = vmatprep.subr.mxu0 %v1288
    %2094 = vmatpush1.msra.mxu0 %v1287
    %2095 = vmatprep.subr.mxu0 %v1292
    %2096 = vmatpush1.msra.mxu0 %v1291
    %2097 = vmatprep.subr.mxu0 %v1296
    %2098 = vmatpush1.msra.mxu0 %v1295
    %2099 = vmatprep.subr.mxu0 %v1300
    %2100 = vmatpush1.msra.mxu0 %v1299
    %2101 = vmatprep.subr.mxu0 %v1304
    %2102 = vmatpush1.msra.mxu0 %v1303
    %2103 = vmatprep.subr.mxu0 %v1308
    %2104 = vmatpush1.msra.mxu0 %v1307
    %2105 = vmatprep.subr.mxu0 %v1312
    %2106 = vmatpush1.msra.mxu0 %v1311
    %2107 = vmatprep.subr.mxu0 0.0
    %2108 = vmatpush1.msra.mxu0 0.0
    %2109 = vmatprep.subr.mxu0 0.0
    %2110 = vmatpush1.msra.mxu0 0.0
    %2111 = vmatprep.subr.mxu0 0.0
    %2112 = vmatpush1.msra.mxu0 0.0
    %2113 = vmatprep.subr.mxu0 0.0
    %2114 = vmatpush1.msra.mxu0 0.0
    %2115 = vmatprep.subr.mxu0 0.0
    %2116 = vmatpush1.msra.mxu0 0.0
    %2117 = vmatprep.subr.mxu0 0.0
    %2118 = vmatpush1.msra.mxu0 0.0
    %2119 = vmatprep.subr.mxu0 0.0
    %2120 = vmatpush1.msra.mxu0 0.0
    %2121 = vmatprep.subr.mxu0 0.0
    %2122 = vmatpush1.msra.mxu0 0.0
    %2123 = vmatprep.subr.mxu0 0.0
    %2124 = vmatpush1.msra.mxu0 0.0
    %2125 = vmatprep.subr.mxu0 0.0
    %2126 = vmatpush1.msra.mxu0 0.0
    %2127 = vmatprep.subr.mxu0 0.0
    %2128 = vmatpush1.msra.mxu0 0.0
    %2129 = vmatprep.subr.mxu0 0.0
    %2130 = vmatpush1.msra.mxu0 0.0
    %2131 = vmatprep.subr.mxu0 0.0
    %2132 = vmatpush1.msra.mxu0 0.0
    %2133 = vmatprep.subr.mxu0 0.0
    %2134 = vmatpush1.msra.mxu0 0.0
    %2135 = vmatprep.subr.mxu0 0.0
    %2136 = vmatpush1.msra.mxu0 0.0
    %2137 = vmatprep.subr.mxu0 0.0
    %2138 = vmatpush1.msra.mxu0 0.0
    %2139 = vmatprep.mubr.f32.mxu0 0.0
    %2140 = vmatmul.mubr.f32.gmra.mrb[0].mxu0 %v2074
    %v2141 = vpop.f32.mrb[0].mxu0
    %v2142 = vadd.f32 0.0, %v2141
    %v2143 = vpop.f32.mrb[0].mxu0
    %v2144 = vadd.f32 0.0, %v2143
    %2145 = vdwg.mxu0
    %2146 = vmatprep.subr.mxu0 %v1254
    %2147 = vmatpush1.msra.mxu0 %v1253
    %2148 = vmatprep.subr.mxu0 %v1258
    %2149 = vmatpush1.msra.mxu0 %v1257
    %2150 = vmatprep.subr.mxu0 %v1262
    %2151 = vmatpush1.msra.mxu0 %v1261
    %2152 = vmatprep.subr.mxu0 %v1266
    %2153 = vmatpush1.msra.mxu0 %v1265
    %2154 = vmatprep.subr.mxu0 %v1270
    %2155 = vmatpush1.msra.mxu0 %v1269
    %2156 = vmatprep.subr.mxu0 %v1274
    %2157 = vmatpush1.msra.mxu0 %v1273
    %2158 = vmatprep.subr.mxu0 %v1278
    %2159 = vmatpush1.msra.mxu0 %v1277
    %2160 = vmatprep.subr.mxu0 %v1282
    %2161 = vmatpush1.msra.mxu0 %v1281
    %2162 = vmatprep.subr.mxu0 %v1286
    %2163 = vmatpush1.msra.mxu0 %v1285
    %2164 = vmatprep.subr.mxu0 %v1290
    %2165 = vmatpush1.msra.mxu0 %v1289
    %2166 = vmatprep.subr.mxu0 %v1294
    %2167 = vmatpush1.msra.mxu0 %v1293
    %2168 = vmatprep.subr.mxu0 %v1298
    %2169 = vmatpush1.msra.mxu0 %v1297
    %2170 = vmatprep.subr.mxu0 %v1302
    %2171 = vmatpush1.msra.mxu0 %v1301
    %2172 = vmatprep.subr.mxu0 %v1306
    %2173 = vmatpush1.msra.mxu0 %v1305
    %2174 = vmatprep.subr.mxu0 %v1310
    %2175 = vmatpush1.msra.mxu0 %v1309
    %2176 = vmatprep.subr.mxu0 %v1314
    %2177 = vmatpush1.msra.mxu0 %v1313
    %2178 = vmatprep.subr.mxu0 0.0
    %2179 = vmatpush1.msra.mxu0 0.0
    %2180 = vmatprep.subr.mxu0 0.0
    %2181 = vmatpush1.msra.mxu0 0.0
    %2182 = vmatprep.subr.mxu0 0.0
    %2183 = vmatpush1.msra.mxu0 0.0
    %2184 = vmatprep.subr.mxu0 0.0
    %2185 = vmatpush1.msra.mxu0 0.0
    %2186 = vmatprep.subr.mxu0 0.0
    %2187 = vmatpush1.msra.mxu0 0.0
    %2188 = vmatprep.subr.mxu0 0.0
    %2189 = vmatpush1.msra.mxu0 0.0
    %2190 = vmatprep.subr.mxu0 0.0
    %2191 = vmatpush1.msra.mxu0 0.0
    %2192 = vmatprep.subr.mxu0 0.0
    %2193 = vmatpush1.msra.mxu0 0.0
    %2194 = vmatprep.subr.mxu0 0.0
    %2195 = vmatpush1.msra.mxu0 0.0
    %2196 = vmatprep.subr.mxu0 0.0
    %2197 = vmatpush1.msra.mxu0 0.0
    %2198 = vmatprep.subr.mxu0 0.0
    %2199 = vmatpush1.msra.mxu0 0.0
    %2200 = vmatprep.subr.mxu0 0.0
    %2201 = vmatpush1.msra.mxu0 0.0
    %2202 = vmatprep.subr.mxu0 0.0
    %2203 = vmatpush1.msra.mxu0 0.0
    %2204 = vmatprep.subr.mxu0 0.0
    %2205 = vmatpush1.msra.mxu0 0.0
    %2206 = vmatprep.subr.mxu0 0.0
    %2207 = vmatpush1.msra.mxu0 0.0
    %2208 = vmatprep.subr.mxu0 0.0
    %2209 = vmatpush1.msra.mxu0 0.0
    %2210 = vmatprep.mubr.f32.mxu0 0.0
    %2211 = vmatmul.mubr.f32.gmra.mrb[0].mxu0 %v2074
    %v2212 = vpop.f32.mrb[0].mxu0
    %v2213 = vadd.f32 0.0, %v2212
    %v2214 = vpop.f32.mrb[0].mxu0
    %v2215 = vadd.f32 0.0, %v2214
    %2216 = vdwg.mxu0
    %v2217 = vadd.f32 %v1422, %v2142
    %v2218 = vadd.f32 %v1424, %v2144
    %v2219 = vadd.f32 %v1535, %v2213
    %v2220 = vadd.f32 %v1537, %v2215
    %v2221 = vxor.u32 %v2217, 2147483648
    %v2222 = vmul.f32 %v2221, 1.442695
    %v2223 = vpow.pop %v2222
    %v2224 = vadd.f32 %v2223, 1.0
    %v2225 = vrcp.pop %v2224
    %v2226 = vmul.f32 1.0, %v2225
    %v2227 = vxor.u32 %v2218, 2147483648
    %v2228 = vmul.f32 %v2227, 1.442695
    %v2229 = vpow.pop %v2228
    %v2230 = vadd.f32 %v2229, 1.0
    %v2231 = vrcp.pop %v2230
    %v2232 = vmul.f32 1.0, %v2231
    %v2233 = vtanh.pop %v2219
    %v2234 = vxor.u32 %v2220, 2147483648
    %v2235 = vmul.f32 %v2234, 1.442695
    %v2236 = vpow.pop %v2235
    %v2237 = vadd.f32 %v2236, 1.0
    %v2238 = vrcp.pop %v2237
    %v2239 = vmul.f32 1.0, %v2238
    %v2240 = vmul.f32 %v2232, %v2072
    %v2241 = vmul.f32 %v2226, %v2233
    %v2242 = vadd.f32 %v2240, %v2241
    %v2243 = vtanh.pop %v2242
    %v2244 = vmul.f32 %v2239, %v2243
    %2245 = vmatprep.subr.mxu0 %v1252
    %2246 = vmatpush1.msra.mxu0 %v1251
    %2247 = vmatprep.subr.mxu0 %v1256
    %2248 = vmatpush1.msra.mxu0 %v1255
    %2249 = vmatprep.subr.mxu0 %v1260
    %2250 = vmatpush1.msra.mxu0 %v1259
    %2251 = vmatprep.subr.mxu0 %v1264
    %2252 = vmatpush1.msra.mxu0 %v1263
    %2253 = vmatprep.subr.mxu0 %v1268
    %2254 = vmatpush1.msra.mxu0 %v1267
    %2255 = vmatprep.subr.mxu0 %v1272
    %2256 = vmatpush1.msra.mxu0 %v1271
    %2257 = vmatprep.subr.mxu0 %v1276
    %2258 = vmatpush1.msra.mxu0 %v1275
    %2259 = vmatprep.subr.mxu0 %v1280
    %2260 = vmatpush1.msra.mxu0 %v1279
    %2261 = vmatprep.subr.mxu0 %v1284
    %2262 = vmatpush1.msra.mxu0 %v1283
    %2263 = vmatprep.subr.mxu0 %v1288
    %2264 = vmatpush1.msra.mxu0 %v1287
    %2265 = vmatprep.subr.mxu0 %v1292
    %2266 = vmatpush1.msra.mxu0 %v1291
    %2267 = vmatprep.subr.mxu0 %v1296
    %2268 = vmatpush1.msra.mxu0 %v1295
    %2269 = vmatprep.subr.mxu0 %v1300
    %2270 = vmatpush1.msra.mxu0 %v1299
    %2271 = vmatprep.subr.mxu0 %v1304
    %2272 = vmatpush1.msra.mxu0 %v1303
    %2273 = vmatprep.subr.mxu0 %v1308
    %2274 = vmatpush1.msra.mxu0 %v1307
    %2275 = vmatprep.subr.mxu0 %v1312
    %2276 = vmatpush1.msra.mxu0 %v1311
    %2277 = vmatprep.subr.mxu0 0.0
    %2278 = vmatpush1.msra.mxu0 0.0
    %2279 = vmatprep.subr.mxu0 0.0
    %2280 = vmatpush1.msra.mxu0 0.0
    %2281 = vmatprep.subr.mxu0 0.0
    %2282 = vmatpush1.msra.mxu0 0.0
    %2283 = vmatprep.subr.mxu0 0.0
    %2284 = vmatpush1.msra.mxu0 0.0
    %2285 = vmatprep.subr.mxu0 0.0
    %2286 = vmatpush1.msra.mxu0 0.0
    %2287 = vmatprep.subr.mxu0 0.0
    %2288 = vmatpush1.msra.mxu0 0.0
    %2289 = vmatprep.subr.mxu0 0.0
    %2290 = vmatpush1.msra.mxu0 0.0
    %2291 = vmatprep.subr.mxu0 0.0
    %2292 = vmatpush1.msra.mxu0 0.0
    %2293 = vmatprep.subr.mxu0 0.0
    %2294 = vmatpush1.msra.mxu0 0.0
    %2295 = vmatprep.subr.mxu0 0.0
    %2296 = vmatpush1.msra.mxu0 0.0
    %2297 = vmatprep.subr.mxu0 0.0
    %2298 = vmatpush1.msra.mxu0 0.0
    %2299 = vmatprep.subr.mxu0 0.0
    %2300 = vmatpush1.msra.mxu0 0.0
    %2301 = vmatprep.subr.mxu0 0.0
    %2302 = vmatpush1.msra.mxu0 0.0
    %2303 = vmatprep.subr.mxu0 0.0
    %2304 = vmatpush1.msra.mxu0 0.0
    %2305 = vmatprep.subr.mxu0 0.0
    %2306 = vmatpush1.msra.mxu0 0.0
    %2307 = vmatprep.subr.mxu0 0.0
    %2308 = vmatpush1.msra.mxu0 0.0
    %2309 = vmatprep.mubr.f32.mxu0 0.0
    %2310 = vmatmul.mubr.f32.gmra.mrb[0].mxu0 %v2244
    %v2311 = vpop.f32.mrb[0].mxu0
    %v2312 = vadd.f32 0.0, %v2311
    %v2313 = vpop.f32.mrb[0].mxu0
    %v2314 = vadd.f32 0.0, %v2313
    %2315 = vdwg.mxu0
    %2316 = vmatprep.subr.mxu0 %v1254
    %2317 = vmatpush1.msra.mxu0 %v1253
    %2318 = vmatprep.subr.mxu0 %v1258
    %2319 = vmatpush1.msra.mxu0 %v1257
    %2320 = vmatprep.subr.mxu0 %v1262
    %2321 = vmatpush1.msra.mxu0 %v1261
    %2322 = vmatprep.subr.mxu0 %v1266
    %2323 = vmatpush1.msra.mxu0 %v1265
    %2324 = vmatprep.subr.mxu0 %v1270
    %2325 = vmatpush1.msra.mxu0 %v1269
    %2326 = vmatprep.subr.mxu0 %v1274
    %2327 = vmatpush1.msra.mxu0 %v1273
    %2328 = vmatprep.subr.mxu0 %v1278
    %2329 = vmatpush1.msra.mxu0 %v1277
    %2330 = vmatprep.subr.mxu0 %v1282
    %2331 = vmatpush1.msra.mxu0 %v1281
    %2332 = vmatprep.subr.mxu0 %v1286
    %2333 = vmatpush1.msra.mxu0 %v1285
    %2334 = vmatprep.subr.mxu0 %v1290
    %2335 = vmatpush1.msra.mxu0 %v1289
    %2336 = vmatprep.subr.mxu0 %v1294
    %2337 = vmatpush1.msra.mxu0 %v1293
    %2338 = vmatprep.subr.mxu0 %v1298
    %2339 = vmatpush1.msra.mxu0 %v1297
    %2340 = vmatprep.subr.mxu0 %v1302
    %2341 = vmatpush1.msra.mxu0 %v1301
    %2342 = vmatprep.subr.mxu0 %v1306
    %2343 = vmatpush1.msra.mxu0 %v1305
    %2344 = vmatprep.subr.mxu0 %v1310
    %2345 = vmatpush1.msra.mxu0 %v1309
    %2346 = vmatprep.subr.mxu0 %v1314
    %2347 = vmatpush1.msra.mxu0 %v1313
    %2348 = vmatprep.subr.mxu0 0.0
    %2349 = vmatpush1.msra.mxu0 0.0
    %2350 = vmatprep.subr.mxu0 0.0
    %2351 = vmatpush1.msra.mxu0 0.0
    %2352 = vmatprep.subr.mxu0 0.0
    %2353 = vmatpush1.msra.mxu0 0.0
    %2354 = vmatprep.subr.mxu0 0.0
    %2355 = vmatpush1.msra.mxu0 0.0
    %2356 = vmatprep.subr.mxu0 0.0
    %2357 = vmatpush1.msra.mxu0 0.0
    %2358 = vmatprep.subr.mxu0 0.0
    %2359 = vmatpush1.msra.mxu0 0.0
    %2360 = vmatprep.subr.mxu0 0.0
    %2361 = vmatpush1.msra.mxu0 0.0
    %2362 = vmatprep.subr.mxu0 0.0
    %2363 = vmatpush1.msra.mxu0 0.0
    %2364 = vmatprep.subr.mxu0 0.0
    %2365 = vmatpush1.msra.mxu0 0.0
    %2366 = vmatprep.subr.mxu0 0.0
    %2367 = vmatpush1.msra.mxu0 0.0
    %2368 = vmatprep.subr.mxu0 0.0
    %2369 = vmatpush1.msra.mxu0 0.0
    %2370 = vmatprep.subr.mxu0 0.0
    %2371 = vmatpush1.msra.mxu0 0.0
    %2372 = vmatprep.subr.mxu0 0.0
    %2373 = vmatpush1.msra.mxu0 0.0
    %2374 = vmatprep.subr.mxu0 0.0
    %2375 = vmatpush1.msra.mxu0 0.0
    %2376 = vmatprep.subr.mxu0 0.0
    %2377 = vmatpush1.msra.mxu0 0.0
    %2378 = vmatprep.subr.mxu0 0.0
    %2379 = vmatpush1.msra.mxu0 0.0
    %2380 = vmatprep.mubr.f32.mxu0 0.0
    %2381 = vmatmul.mubr.f32.gmra.mrb[0].mxu0 %v2244
    %v2382 = vpop.f32.mrb[0].mxu0
    %v2383 = vadd.f32 0.0, %v2382
    %v2384 = vpop.f32.mrb[0].mxu0
    %v2385 = vadd.f32 0.0, %v2384
    %2386 = vdwg.mxu0
    %v2387 = vadd.f32 %v1428, %v2312
    %v2388 = vadd.f32 %v1430, %v2314
    %v2389 = vadd.f32 %v1541, %v2383
    %v2390 = vadd.f32 %v1543, %v2385
    %v2391 = vxor.u32 %v2387, 2147483648
    %v2392 = vmul.f32 %v2391, 1.442695
    %v2393 = vpow.pop %v2392
    %v2394 = vadd.f32 %v2393, 1.0
    %v2395 = vrcp.pop %v2394
    %v2396 = vmul.f32 1.0, %v2395
    %v2397 = vxor.u32 %v2388, 2147483648
    %v2398 = vmul.f32 %v2397, 1.442695
    %v2399 = vpow.pop %v2398
    %v2400 = vadd.f32 %v2399, 1.0
    %v2401 = vrcp.pop %v2400
    %v2402 = vmul.f32 1.0, %v2401
    %v2403 = vtanh.pop %v2389
    %v2404 = vxor.u32 %v2390, 2147483648
    %v2405 = vmul.f32 %v2404, 1.442695
    %v2406 = vpow.pop %v2405
    %v2407 = vadd.f32 %v2406, 1.0
    %v2408 = vrcp.pop %v2407
    %v2409 = vmul.f32 1.0, %v2408
    %v2410 = vmul.f32 %v2402, %v2242
    %v2411 = vmul.f32 %v2396, %v2403
    %v2412 = vadd.f32 %v2410, %v2411
    %v2413 = vtanh.pop %v2412
    %v2414 = vmul.f32 %v2409, %v2413
    %2415 = vmatprep.subr.mxu0 %v1252
    %2416 = vmatpush1.msra.mxu0 %v1251
    %2417 = vmatprep.subr.mxu0 %v1256
    %2418 = vmatpush1.msra.mxu0 %v1255
    %2419 = vmatprep.subr.mxu0 %v1260
    %2420 = vmatpush1.msra.mxu0 %v1259
    %2421 = vmatprep.subr.mxu0 %v1264
    %2422 = vmatpush1.msra.mxu0 %v1263
    %2423 = vmatprep.subr.mxu0 %v1268
    %2424 = vmatpush1.msra.mxu0 %v1267
    %2425 = vmatprep.subr.mxu0 %v1272
    %2426 = vmatpush1.msra.mxu0 %v1271
    %2427 = vmatprep.subr.mxu0 %v1276
    %2428 = vmatpush1.msra.mxu0 %v1275
    %2429 = vmatprep.subr.mxu0 %v1280
    %2430 = vmatpush1.msra.mxu0 %v1279
    %2431 = vmatprep.subr.mxu0 %v1284
    %2432 = vmatpush1.msra.mxu0 %v1283
    %2433 = vmatprep.subr.mxu0 %v1288
    %2434 = vmatpush1.msra.mxu0 %v1287
    %2435 = vmatprep.subr.mxu0 %v1292
    %2436 = vmatpush1.msra.mxu0 %v1291
    %2437 = vmatprep.subr.mxu0 %v1296
    %2438 = vmatpush1.msra.mxu0 %v1295
    %2439 = vmatprep.subr.mxu0 %v1300
    %2440 = vmatpush1.msra.mxu0 %v1299
    %2441 = vmatprep.subr.mxu0 %v1304
    %2442 = vmatpush1.msra.mxu0 %v1303
    %2443 = vmatprep.subr.mxu0 %v1308
    %2444 = vmatpush1.msra.mxu0 %v1307
    %2445 = vmatprep.subr.mxu0 %v1312
    %2446 = vmatpush1.msra.mxu0 %v1311
    %2447 = vmatprep.subr.mxu0 0.0
    %2448 = vmatpush1.msra.mxu0 0.0
    %2449 = vmatprep.subr.mxu0 0.0
    %2450 = vmatpush1.msra.mxu0 0.0
    %2451 = vmatprep.subr.mxu0 0.0
    %2452 = vmatpush1.msra.mxu0 0.0
    %2453 = vmatprep.subr.mxu0 0.0
    %2454 = vmatpush1.msra.mxu0 0.0
    %2455 = vmatprep.subr.mxu0 0.0
    %2456 = vmatpush1.msra.mxu0 0.0
    %2457 = vmatprep.subr.mxu0 0.0
    %2458 = vmatpush1.msra.mxu0 0.0
    %2459 = vmatprep.subr.mxu0 0.0
    %2460 = vmatpush1.msra.mxu0 0.0
    %2461 = vmatprep.subr.mxu0 0.0
    %2462 = vmatpush1.msra.mxu0 0.0
    %2463 = vmatprep.subr.mxu0 0.0
    %2464 = vmatpush1.msra.mxu0 0.0
    %2465 = vmatprep.subr.mxu0 0.0
    %2466 = vmatpush1.msra.mxu0 0.0
    %2467 = vmatprep.subr.mxu0 0.0
    %2468 = vmatpush1.msra.mxu0 0.0
    %2469 = vmatprep.subr.mxu0 0.0
    %2470 = vmatpush1.msra.mxu0 0.0
    %2471 = vmatprep.subr.mxu0 0.0
    %2472 = vmatpush1.msra.mxu0 0.0
    %2473 = vmatprep.subr.mxu0 0.0
    %2474 = vmatpush1.msra.mxu0 0.0
    %2475 = vmatprep.subr.mxu0 0.0
    %2476 = vmatpush1.msra.mxu0 0.0
    %2477 = vmatprep.subr.mxu0 0.0
    %2478 = vmatpush1.msra.mxu0 0.0
    %2479 = vmatprep.mubr.f32.mxu0 0.0
    %2480 = vmatmul.mubr.f32.gmra.mrb[0].mxu0 %v2414
    %v2481 = vpop.f32.mrb[0].mxu0
    %v2482 = vadd.f32 0.0, %v2481
    %v2483 = vpop.f32.mrb[0].mxu0
    %v2484 = vadd.f32 0.0, %v2483
    %2485 = vdwg.mxu0
    %2486 = vmatprep.subr.mxu0 %v1254
    %2487 = vmatpush1.msra.mxu0 %v1253
    %2488 = vmatprep.subr.mxu0 %v1258
    %2489 = vmatpush1.msra.mxu0 %v1257
    %2490 = vmatprep.subr.mxu0 %v1262
    %2491 = vmatpush1.msra.mxu0 %v1261
    %2492 = vmatprep.subr.mxu0 %v1266
    %2493 = vmatpush1.msra.mxu0 %v1265
    %2494 = vmatprep.subr.mxu0 %v1270
    %2495 = vmatpush1.msra.mxu0 %v1269
    %2496 = vmatprep.subr.mxu0 %v1274
    %2497 = vmatpush1.msra.mxu0 %v1273
    %2498 = vmatprep.subr.mxu0 %v1278
    %2499 = vmatpush1.msra.mxu0 %v1277
    %2500 = vmatprep.subr.mxu0 %v1282
    %2501 = vmatpush1.msra.mxu0 %v1281
    %2502 = vmatprep.subr.mxu0 %v1286
    %2503 = vmatpush1.msra.mxu0 %v1285
    %2504 = vmatprep.subr.mxu0 %v1290
    %2505 = vmatpush1.msra.mxu0 %v1289
    %2506 = vmatprep.subr.mxu0 %v1294
    %2507 = vmatpush1.msra.mxu0 %v1293
    %2508 = vmatprep.subr.mxu0 %v1298
    %2509 = vmatpush1.msra.mxu0 %v1297
    %2510 = vmatprep.subr.mxu0 %v1302
    %2511 = vmatpush1.msra.mxu0 %v1301
    %2512 = vmatprep.subr.mxu0 %v1306
    %2513 = vmatpush1.msra.mxu0 %v1305
    %2514 = vmatprep.subr.mxu0 %v1310
    %2515 = vmatpush1.msra.mxu0 %v1309
    %2516 = vmatprep.subr.mxu0 %v1314
    %2517 = vmatpush1.msra.mxu0 %v1313
    %2518 = vmatprep.subr.mxu0 0.0
    %2519 = vmatpush1.msra.mxu0 0.0
    %2520 = vmatprep.subr.mxu0 0.0
    %2521 = vmatpush1.msra.mxu0 0.0
    %2522 = vmatprep.subr.mxu0 0.0
    %2523 = vmatpush1.msra.mxu0 0.0
    %2524 = vmatprep.subr.mxu0 0.0
    %2525 = vmatpush1.msra.mxu0 0.0
    %2526 = vmatprep.subr.mxu0 0.0
    %2527 = vmatpush1.msra.mxu0 0.0
    %2528 = vmatprep.subr.mxu0 0.0
    %2529 = vmatpush1.msra.mxu0 0.0
    %2530 = vmatprep.subr.mxu0 0.0
    %2531 = vmatpush1.msra.mxu0 0.0
    %2532 = vmatprep.subr.mxu0 0.0
    %2533 = vmatpush1.msra.mxu0 0.0
    %2534 = vmatprep.subr.mxu0 0.0
    %2535 = vmatpush1.msra.mxu0 0.0
    %2536 = vmatprep.subr.mxu0 0.0
    %2537 = vmatpush1.msra.mxu0 0.0
    %2538 = vmatprep.subr.mxu0 0.0
    %2539 = vmatpush1.msra.mxu0 0.0
    %2540 = vmatprep.subr.mxu0 0.0
    %2541 = vmatpush1.msra.mxu0 0.0
    %2542 = vmatprep.subr.mxu0 0.0
    %2543 = vmatpush1.msra.mxu0 0.0
    %2544 = vmatprep.subr.mxu0 0.0
    %2545 = vmatpush1.msra.mxu0 0.0
    %2546 = vmatprep.subr.mxu0 0.0
    %2547 = vmatpush1.msra.mxu0 0.0
    %2548 = vmatprep.subr.mxu0 0.0
    %2549 = vmatpush1.msra.mxu0 0.0
    %2550 = vmatprep.mubr.f32.mxu0 0.0
    %2551 = vmatmul.mubr.f32.gmra.mrb[0].mxu0 %v2414
    %v2552 = vpop.f32.mrb[0].mxu0
    %v2553 = vadd.f32 0.0, %v2552
    %v2554 = vpop.f32.mrb[0].mxu0
    %v2555 = vadd.f32 0.0, %v2554
    %2556 = vdwg.mxu0
    %v2557 = vadd.f32 %v1434, %v2482
    %v2558 = vadd.f32 %v1436, %v2484
    %v2559 = vadd.f32 %v1547, %v2553
    %v2560 = vadd.f32 %v1549, %v2555
    %v2561 = vxor.u32 %v2557, 2147483648
    %v2562 = vmul.f32 %v2561, 1.442695
    %v2563 = vpow.pop %v2562
    %v2564 = vadd.f32 %v2563, 1.0
    %v2565 = vrcp.pop %v2564
    %v2566 = vmul.f32 1.0, %v2565
    %v2567 = vxor.u32 %v2558, 2147483648
    %v2568 = vmul.f32 %v2567, 1.442695
    %v2569 = vpow.pop %v2568
    %v2570 = vadd.f32 %v2569, 1.0
    %v2571 = vrcp.pop %v2570
    %v2572 = vmul.f32 1.0, %v2571
    %v2573 = vtanh.pop %v2559
    %v2574 = vxor.u32 %v2560, 2147483648
    %v2575 = vmul.f32 %v2574, 1.442695
    %v2576 = vpow.pop %v2575
    %v2577 = vadd.f32 %v2576, 1.0
    %v2578 = vrcp.pop %v2577
    %v2579 = vmul.f32 1.0, %v2578
    %v2580 = vmul.f32 %v2572, %v2412
    %v2581 = vmul.f32 %v2566, %v2573
    %v2582 = vadd.f32 %v2580, %v2581
    %v2583 = vtanh.pop %v2582
    %v2584 = vmul.f32 %v2579, %v2583
    %2585 = vmatprep.subr.mxu0 %v1252
    %2586 = vmatpush1.msra.mxu0 %v1251
    %2587 = vmatprep.subr.mxu0 %v1256
    %2588 = vmatpush1.msra.mxu0 %v1255
    %2589 = vmatprep.subr.mxu0 %v1260
    %2590 = vmatpush1.msra.mxu0 %v1259
    %2591 = vmatprep.subr.mxu0 %v1264
    %2592 = vmatpush1.msra.mxu0 %v1263
    %2593 = vmatprep.subr.mxu0 %v1268
    %2594 = vmatpush1.msra.mxu0 %v1267
    %2595 = vmatprep.subr.mxu0 %v1272
    %2596 = vmatpush1.msra.mxu0 %v1271
    %2597 = vmatprep.subr.mxu0 %v1276
    %2598 = vmatpush1.msra.mxu0 %v1275
    %2599 = vmatprep.subr.mxu0 %v1280
    %2600 = vmatpush1.msra.mxu0 %v1279
    %2601 = vmatprep.subr.mxu0 %v1284
    %2602 = vmatpush1.msra.mxu0 %v1283
    %2603 = vmatprep.subr.mxu0 %v1288
    %2604 = vmatpush1.msra.mxu0 %v1287
    %2605 = vmatprep.subr.mxu0 %v1292
    %2606 = vmatpush1.msra.mxu0 %v1291
    %2607 = vmatprep.subr.mxu0 %v1296
    %2608 = vmatpush1.msra.mxu0 %v1295
    %2609 = vmatprep.subr.mxu0 %v1300
    %2610 = vmatpush1.msra.mxu0 %v1299
    %2611 = vmatprep.subr.mxu0 %v1304
    %2612 = vmatpush1.msra.mxu0 %v1303
    %2613 = vmatprep.subr.mxu0 %v1308
    %2614 = vmatpush1.msra.mxu0 %v1307
    %2615 = vmatprep.subr.mxu0 %v1312
    %2616 = vmatpush1.msra.mxu0 %v1311
    %2617 = vmatprep.subr.mxu0 0.0
    %2618 = vmatpush1.msra.mxu0 0.0
    %2619 = vmatprep.subr.mxu0 0.0
    %2620 = vmatpush1.msra.mxu0 0.0
    %2621 = vmatprep.subr.mxu0 0.0
    %2622 = vmatpush1.msra.mxu0 0.0
    %2623 = vmatprep.subr.mxu0 0.0
    %2624 = vmatpush1.msra.mxu0 0.0
    %2625 = vmatprep.subr.mxu0 0.0
    %2626 = vmatpush1.msra.mxu0 0.0
    %2627 = vmatprep.subr.mxu0 0.0
    %2628 = vmatpush1.msra.mxu0 0.0
    %2629 = vmatprep.subr.mxu0 0.0
    %2630 = vmatpush1.msra.mxu0 0.0
    %2631 = vmatprep.subr.mxu0 0.0
    %2632 = vmatpush1.msra.mxu0 0.0
    %2633 = vmatprep.subr.mxu0 0.0
    %2634 = vmatpush1.msra.mxu0 0.0
    %2635 = vmatprep.subr.mxu0 0.0
    %2636 = vmatpush1.msra.mxu0 0.0
    %2637 = vmatprep.subr.mxu0 0.0
    %2638 = vmatpush1.msra.mxu0 0.0
    %2639 = vmatprep.subr.mxu0 0.0
    %2640 = vmatpush1.msra.mxu0 0.0
    %2641 = vmatprep.subr.mxu0 0.0
    %2642 = vmatpush1.msra.mxu0 0.0
    %2643 = vmatprep.subr.mxu0 0.0
    %2644 = vmatpush1.msra.mxu0 0.0
    %2645 = vmatprep.subr.mxu0 0.0
    %2646 = vmatpush1.msra.mxu0 0.0
    %2647 = vmatprep.subr.mxu0 0.0
    %2648 = vmatpush1.msra.mxu0 0.0
    %2649 = vmatprep.mubr.f32.mxu0 0.0
    %2650 = vmatmul.mubr.f32.gmra.mrb[0].mxu0 %v2584
    %v2651 = vpop.f32.mrb[0].mxu0
    %v2652 = vadd.f32 0.0, %v2651
    %v2653 = vpop.f32.mrb[0].mxu0
    %v2654 = vadd.f32 0.0, %v2653
    %2655 = vdwg.mxu0
    %2656 = vmatprep.subr.mxu0 %v1254
    %2657 = vmatpush1.msra.mxu0 %v1253
    %2658 = vmatprep.subr.mxu0 %v1258
    %2659 = vmatpush1.msra.mxu0 %v1257
    %2660 = vmatprep.subr.mxu0 %v1262
    %2661 = vmatpush1.msra.mxu0 %v1261
    %2662 = vmatprep.subr.mxu0 %v1266
    %2663 = vmatpush1.msra.mxu0 %v1265
    %2664 = vmatprep.subr.mxu0 %v1270
    %2665 = vmatpush1.msra.mxu0 %v1269
    %2666 = vmatprep.subr.mxu0 %v1274
    %2667 = vmatpush1.msra.mxu0 %v1273
    %2668 = vmatprep.subr.mxu0 %v1278
    %2669 = vmatpush1.msra.mxu0 %v1277
    %2670 = vmatprep.subr.mxu0 %v1282
    %2671 = vmatpush1.msra.mxu0 %v1281
    %2672 = vmatprep.subr.mxu0 %v1286
    %2673 = vmatpush1.msra.mxu0 %v1285
    %2674 = vmatprep.subr.mxu0 %v1290
    %2675 = vmatpush1.msra.mxu0 %v1289
    %2676 = vmatprep.subr.mxu0 %v1294
    %2677 = vmatpush1.msra.mxu0 %v1293
    %2678 = vmatprep.subr.mxu0 %v1298
    %2679 = vmatpush1.msra.mxu0 %v1297
    %2680 = vmatprep.subr.mxu0 %v1302
    %2681 = vmatpush1.msra.mxu0 %v1301
    %2682 = vmatprep.subr.mxu0 %v1306
    %2683 = vmatpush1.msra.mxu0 %v1305
    %2684 = vmatprep.subr.mxu0 %v1310
    %2685 = vmatpush1.msra.mxu0 %v1309
    %2686 = vmatprep.subr.mxu0 %v1314
    %2687 = vmatpush1.msra.mxu0 %v1313
    %2688 = vmatprep.subr.mxu0 0.0
    %2689 = vmatpush1.msra.mxu0 0.0
    %2690 = vmatprep.subr.mxu0 0.0
    %2691 = vmatpush1.msra.mxu0 0.0
    %2692 = vmatprep.subr.mxu0 0.0
    %2693 = vmatpush1.msra.mxu0 0.0
    %2694 = vmatprep.subr.mxu0 0.0
    %2695 = vmatpush1.msra.mxu0 0.0
    %2696 = vmatprep.subr.mxu0 0.0
    %2697 = vmatpush1.msra.mxu0 0.0
    %2698 = vmatprep.subr.mxu0 0.0
    %2699 = vmatpush1.msra.mxu0 0.0
    %2700 = vmatprep.subr.mxu0 0.0
    %2701 = vmatpush1.msra.mxu0 0.0
    %2702 = vmatprep.subr.mxu0 0.0
    %2703 = vmatpush1.msra.mxu0 0.0
    %2704 = vmatprep.subr.mxu0 0.0
    %2705 = vmatpush1.msra.mxu0 0.0
    %2706 = vmatprep.subr.mxu0 0.0
    %2707 = vmatpush1.msra.mxu0 0.0
    %2708 = vmatprep.subr.mxu0 0.0
    %2709 = vmatpush1.msra.mxu0 0.0
    %2710 = vmatprep.subr.mxu0 0.0
    %2711 = vmatpush1.msra.mxu0 0.0
    %2712 = vmatprep.subr.mxu0 0.0
    %2713 = vmatpush1.msra.mxu0 0.0
    %2714 = vmatprep.subr.mxu0 0.0
    %2715 = vmatpush1.msra.mxu0 0.0
    %2716 = vmatprep.subr.mxu0 0.0
    %2717 = vmatpush1.msra.mxu0 0.0
    %2718 = vmatprep.subr.mxu0 0.0
    %2719 = vmatpush1.msra.mxu0 0.0
    %2720 = vmatprep.mubr.f32.mxu0 0.0
    %2721 = vmatmul.mubr.f32.gmra.mrb[0].mxu0 %v2584
    %v2722 = vpop.f32.mrb[0].mxu0
    %v2723 = vadd.f32 0.0, %v2722
    %v2724 = vpop.f32.mrb[0].mxu0
    %v2725 = vadd.f32 0.0, %v2724
    %2726 = vdwg.mxu0
    %v2727 = vadd.f32 %v1440, %v2652
    %v2728 = vadd.f32 %v1442, %v2654
    %v2729 = vadd.f32 %v1553, %v2723
    %v2730 = vadd.f32 %v1555, %v2725
    %v2731 = vxor.u32 %v2727, 2147483648
    %v2732 = vmul.f32 %v2731, 1.442695
    %v2733 = vpow.pop %v2732
    %v2734 = vadd.f32 %v2733, 1.0
    %v2735 = vrcp.pop %v2734
    %v2736 = vmul.f32 1.0, %v2735
    %v2737 = vxor.u32 %v2728, 2147483648
    %v2738 = vmul.f32 %v2737, 1.442695
    %v2739 = vpow.pop %v2738
    %v2740 = vadd.f32 %v2739, 1.0
    %v2741 = vrcp.pop %v2740
    %v2742 = vmul.f32 1.0, %v2741
    %v2743 = vtanh.pop %v2729
    %v2744 = vxor.u32 %v2730, 2147483648
    %v2745 = vmul.f32 %v2744, 1.442695
    %v2746 = vpow.pop %v2745
    %v2747 = vadd.f32 %v2746, 1.0
    %v2748 = vrcp.pop %v2747
    %v2749 = vmul.f32 1.0, %v2748
    %v2750 = vmul.f32 %v2742, %v2582
    %v2751 = vmul.f32 %v2736, %v2743
    %v2752 = vadd.f32 %v2750, %v2751
    %v2753 = vtanh.pop %v2752
    %v2754 = vmul.f32 %v2749, %v2753
    %2755 = vmatprep.subr.mxu0 %v1252
    %2756 = vmatpush1.msra.mxu0 %v1251
    %2757 = vmatprep.subr.mxu0 %v1256
    %2758 = vmatpush1.msra.mxu0 %v1255
    %2759 = vmatprep.subr.mxu0 %v1260
    %2760 = vmatpush1.msra.mxu0 %v1259
    %2761 = vmatprep.subr.mxu0 %v1264
    %2762 = vmatpush1.msra.mxu0 %v1263
    %2763 = vmatprep.subr.mxu0 %v1268
    %2764 = vmatpush1.msra.mxu0 %v1267
    %2765 = vmatprep.subr.mxu0 %v1272
    %2766 = vmatpush1.msra.mxu0 %v1271
    %2767 = vmatprep.subr.mxu0 %v1276
    %2768 = vmatpush1.msra.mxu0 %v1275
    %2769 = vmatprep.subr.mxu0 %v1280
    %2770 = vmatpush1.msra.mxu0 %v1279
    %2771 = vmatprep.subr.mxu0 %v1284
    %2772 = vmatpush1.msra.mxu0 %v1283
    %2773 = vmatprep.subr.mxu0 %v1288
    %2774 = vmatpush1.msra.mxu0 %v1287
    %2775 = vmatprep.subr.mxu0 %v1292
    %2776 = vmatpush1.msra.mxu0 %v1291
    %2777 = vmatprep.subr.mxu0 %v1296
    %2778 = vmatpush1.msra.mxu0 %v1295
    %2779 = vmatprep.subr.mxu0 %v1300
    %2780 = vmatpush1.msra.mxu0 %v1299
    %2781 = vmatprep.subr.mxu0 %v1304
    %2782 = vmatpush1.msra.mxu0 %v1303
    %2783 = vmatprep.subr.mxu0 %v1308
    %2784 = vmatpush1.msra.mxu0 %v1307
    %2785 = vmatprep.subr.mxu0 %v1312
    %2786 = vmatpush1.msra.mxu0 %v1311
    %2787 = vmatprep.subr.mxu0 0.0
    %2788 = vmatpush1.msra.mxu0 0.0
    %2789 = vmatprep.subr.mxu0 0.0
    %2790 = vmatpush1.msra.mxu0 0.0
    %2791 = vmatprep.subr.mxu0 0.0
    %2792 = vmatpush1.msra.mxu0 0.0
    %2793 = vmatprep.subr.mxu0 0.0
    %2794 = vmatpush1.msra.mxu0 0.0
    %2795 = vmatprep.subr.mxu0 0.0
    %2796 = vmatpush1.msra.mxu0 0.0
    %2797 = vmatprep.subr.mxu0 0.0
    %2798 = vmatpush1.msra.mxu0 0.0
    %2799 = vmatprep.subr.mxu0 0.0
    %2800 = vmatpush1.msra.mxu0 0.0
    %2801 = vmatprep.subr.mxu0 0.0
    %2802 = vmatpush1.msra.mxu0 0.0
    %2803 = vmatprep.subr.mxu0 0.0
    %2804 = vmatpush1.msra.mxu0 0.0
    %2805 = vmatprep.subr.mxu0 0.0
    %2806 = vmatpush1.msra.mxu0 0.0
    %2807 = vmatprep.subr.mxu0 0.0
    %2808 = vmatpush1.msra.mxu0 0.0
    %2809 = vmatprep.subr.mxu0 0.0
    %2810 = vmatpush1.msra.mxu0 0.0
    %2811 = vmatprep.subr.mxu0 0.0
    %2812 = vmatpush1.msra.mxu0 0.0
    %2813 = vmatprep.subr.mxu0 0.0
    %2814 = vmatpush1.msra.mxu0 0.0
    %2815 = vmatprep.subr.mxu0 0.0
    %2816 = vmatpush1.msra.mxu0 0.0
    %2817 = vmatprep.subr.mxu0 0.0
    %2818 = vmatpush1.msra.mxu0 0.0
    %2819 = vmatprep.mubr.f32.mxu0 0.0
    %2820 = vmatmul.mubr.f32.gmra.mrb[0].mxu0 %v2754
    %v2821 = vpop.f32.mrb[0].mxu0
    %v2822 = vadd.f32 0.0, %v2821
    %v2823 = vpop.f32.mrb[0].mxu0
    %v2824 = vadd.f32 0.0, %v2823
    %2825 = vdwg.mxu0
    %2826 = vmatprep.subr.mxu0 %v1254
    %2827 = vmatpush1.msra.mxu0 %v1253
    %2828 = vmatprep.subr.mxu0 %v1258
    %2829 = vmatpush1.msra.mxu0 %v1257
    %2830 = vmatprep.subr.mxu0 %v1262
    %2831 = vmatpush1.msra.mxu0 %v1261
    %2832 = vmatprep.subr.mxu0 %v1266
    %2833 = vmatpush1.msra.mxu0 %v1265
    %2834 = vmatprep.subr.mxu0 %v1270
    %2835 = vmatpush1.msra.mxu0 %v1269
    %2836 = vmatprep.subr.mxu0 %v1274
    %2837 = vmatpush1.msra.mxu0 %v1273
    %2838 = vmatprep.subr.mxu0 %v1278
    %2839 = vmatpush1.msra.mxu0 %v1277
    %2840 = vmatprep.subr.mxu0 %v1282
    %2841 = vmatpush1.msra.mxu0 %v1281
    %2842 = vmatprep.subr.mxu0 %v1286
    %2843 = vmatpush1.msra.mxu0 %v1285
    %2844 = vmatprep.subr.mxu0 %v1290
    %2845 = vmatpush1.msra.mxu0 %v1289
    %2846 = vmatprep.subr.mxu0 %v1294
    %2847 = vmatpush1.msra.mxu0 %v1293
    %2848 = vmatprep.subr.mxu0 %v1298
    %2849 = vmatpush1.msra.mxu0 %v1297
    %2850 = vmatprep.subr.mxu0 %v1302
    %2851 = vmatpush1.msra.mxu0 %v1301
    %2852 = vmatprep.subr.mxu0 %v1306
    %2853 = vmatpush1.msra.mxu0 %v1305
    %2854 = vmatprep.subr.mxu0 %v1310
    %2855 = vmatpush1.msra.mxu0 %v1309
    %2856 = vmatprep.subr.mxu0 %v1314
    %2857 = vmatpush1.msra.mxu0 %v1313
    %2858 = vmatprep.subr.mxu0 0.0
    %2859 = vmatpush1.msra.mxu0 0.0
    %2860 = vmatprep.subr.mxu0 0.0
    %2861 = vmatpush1.msra.mxu0 0.0
    %2862 = vmatprep.subr.mxu0 0.0
    %2863 = vmatpush1.msra.mxu0 0.0
    %2864 = vmatprep.subr.mxu0 0.0
    %2865 = vmatpush1.msra.mxu0 0.0
    %2866 = vmatprep.subr.mxu0 0.0
    %2867 = vmatpush1.msra.mxu0 0.0
    %2868 = vmatprep.subr.mxu0 0.0
    %2869 = vmatpush1.msra.mxu0 0.0
    %2870 = vmatprep.subr.mxu0 0.0
    %2871 = vmatpush1.msra.mxu0 0.0
    %2872 = vmatprep.subr.mxu0 0.0
    %2873 = vmatpush1.msra.mxu0 0.0
    %2874 = vmatprep.subr.mxu0 0.0
    %2875 = vmatpush1.msra.mxu0 0.0
    %2876 = vmatprep.subr.mxu0 0.0
    %2877 = vmatpush1.msra.mxu0 0.0
    %2878 = vmatprep.subr.mxu0 0.0
    %2879 = vmatpush1.msra.mxu0 0.0
    %2880 = vmatprep.subr.mxu0 0.0
    %2881 = vmatpush1.msra.mxu0 0.0
    %2882 = vmatprep.subr.mxu0 0.0
    %2883 = vmatpush1.msra.mxu0 0.0
    %2884 = vmatprep.subr.mxu0 0.0
    %2885 = vmatpush1.msra.mxu0 0.0
    %2886 = vmatprep.subr.mxu0 0.0
    %2887 = vmatpush1.msra.mxu0 0.0
    %2888 = vmatprep.subr.mxu0 0.0
    %2889 = vmatpush1.msra.mxu0 0.0
    %2890 = vmatprep.mubr.f32.mxu0 0.0
    %2891 = vmatmul.mubr.f32.gmra.mrb[0].mxu0 %v2754
    %v2892 = vpop.f32.mrb[0].mxu0
    %v2893 = vadd.f32 0.0, %v2892
    %v2894 = vpop.f32.mrb[0].mxu0
    %v2895 = vadd.f32 0.0, %v2894
    %2896 = vdwg.mxu0
    %v2897 = vadd.f32 %v1446, %v2822
    %v2898 = vadd.f32 %v1448, %v2824
    %v2899 = vadd.f32 %v1559, %v2893
    %v2900 = vadd.f32 %v1561, %v2895
    %v2901 = vxor.u32 %v2897, 2147483648
    %v2902 = vmul.f32 %v2901, 1.442695
    %v2903 = vpow.pop %v2902
    %v2904 = vadd.f32 %v2903, 1.0
    %v2905 = vrcp.pop %v2904
    %v2906 = vmul.f32 1.0, %v2905
    %v2907 = vxor.u32 %v2898, 2147483648
    %v2908 = vmul.f32 %v2907, 1.442695
    %v2909 = vpow.pop %v2908
    %v2910 = vadd.f32 %v2909, 1.0
    %v2911 = vrcp.pop %v2910
    %v2912 = vmul.f32 1.0, %v2911
    %v2913 = vtanh.pop %v2899
    %v2914 = vxor.u32 %v2900, 2147483648
    %v2915 = vmul.f32 %v2914, 1.442695
    %v2916 = vpow.pop %v2915
    %v2917 = vadd.f32 %v2916, 1.0
    %v2918 = vrcp.pop %v2917
    %v2919 = vmul.f32 1.0, %v2918
    %v2920 = vmul.f32 %v2912, %v2752
    %v2921 = vmul.f32 %v2906, %v2913
    %v2922 = vadd.f32 %v2920, %v2921
    %v2923 = vtanh.pop %v2922
    %v2924 = vmul.f32 %v2919, %v2923
    %2925 = vst [vmem:[#allocation6] sm:$0xff] %v2924
    %2926 = vst [vmem:[#allocation8] sm:$0xff] %v2922
    %v2927 = vld [vmem:[%s3] sm:$0xff]
    %v2928 = vld [vmem:[%s3 + $0x8] sm:$0xff]
    %v2929 = vld [vmem:[%s3 + $0x10] sm:$0xff]
    %v2930 = vld [vmem:[%s3 + $0x18] sm:$0xff]
    %v2931 = vld [vmem:[%s3 + $0x20] sm:$0xff]
    %v2932 = vld [vmem:[%s3 + $0x28] sm:$0xff]
    %v2933 = vld [vmem:[%s3 + $0x30] sm:$0xff]
    %v2934 = vld [vmem:[%s3 + $0x38] sm:$0xff]
    %v2935 = vld [vmem:[%s3 + $0x40] sm:$0xff]
    %v2936 = vld [vmem:[%s3 + $0x48] sm:$0xff]
    %v2937 = vld [vmem:[%s3 + $0x50] sm:$0xff]
    %v2938 = vld [vmem:[%s3 + $0x58] sm:$0xff]
    %v2939 = vld [vmem:[%s3 + $0x60] sm:$0xff]
    %v2940 = vld [vmem:[%s3 + $0x68] sm:$0xff]
    %v2941 = vld [vmem:[%s3 + $0x70] sm:$0xff]
    %v2942 = vld [vmem:[%s3 + $0x78] sm:$0xff]
    %v2943 = vld [vmem:[%s3 + $0x80] sm:$0xff]
    %v2944 = vld [vmem:[%s3 + $0x88] sm:$0xff]
    %v2945 = vld [vmem:[%s3 + $0x90] sm:$0xff]
    %v2946 = vld [vmem:[%s3 + $0x98] sm:$0xff]
    %v2947 = vld [vmem:[%s3 + $0xa0] sm:$0xff]
    %v2948 = vld [vmem:[%s3 + $0xa8] sm:$0xff]
    %v2949 = vld [vmem:[%s3 + $0xb0] sm:$0xff]
    %v2950 = vld [vmem:[%s3 + $0xb8] sm:$0xff]
    %v2951 = vld [vmem:[%s3 + $0xc0] sm:$0xff]
    %v2952 = vld [vmem:[%s3 + $0xc8] sm:$0xff]
    %v2953 = vld [vmem:[%s3 + $0xd0] sm:$0xff]
    %v2954 = vld [vmem:[%s3 + $0xd8] sm:$0xff]
    %v2955 = vld [vmem:[%s3 + $0xe0] sm:$0xff]
    %v2956 = vld [vmem:[%s3 + $0xe8] sm:$0xff]
    %v2957 = vld [vmem:[%s3 + $0xf0] sm:$0xff]
    %v2958 = vld [vmem:[%s3 + $0xf8] sm:$0xff]
    %v2959 = vld [vmem:[%s3 + $0x100] sm:$0xff]
    %v2960 = vld [vmem:[%s3 + $0x108] sm:$0xff]
    %v2961 = vld [vmem:[%s3 + $0x110] sm:$0xff]
    %v2962 = vld [vmem:[%s3 + $0x118] sm:$0xff]
    %v2963 = vld [vmem:[%s3 + $0x120] sm:$0xff]
    %v2964 = vld [vmem:[%s3 + $0x128] sm:$0xff]
    %v2965 = vld [vmem:[%s3 + $0x130] sm:$0xff]
    %v2966 = vld [vmem:[%s3 + $0x138] sm:$0xff]
    %v2967 = vld [vmem:[%s3 + $0x140] sm:$0xff]
    %v2968 = vld [vmem:[%s3 + $0x148] sm:$0xff]
    %v2969 = vld [vmem:[%s3 + $0x150] sm:$0xff]
    %v2970 = vld [vmem:[%s3 + $0x158] sm:$0xff]
    %v2971 = vld [vmem:[%s3 + $0x160] sm:$0xff]
    %v2972 = vld [vmem:[%s3 + $0x168] sm:$0xff]
    %v2973 = vld [vmem:[%s3 + $0x170] sm:$0xff]
    %v2974 = vld [vmem:[%s3 + $0x178] sm:$0xff]
    %v2975 = vld [vmem:[%s3 + $0x180] sm:$0xff]
    %v2976 = vld [vmem:[%s3 + $0x188] sm:$0xff]
    %v2977 = vld [vmem:[%s3 + $0x190] sm:$0xff]
    %v2978 = vld [vmem:[%s3 + $0x198] sm:$0xff]
    %v2979 = vld [vmem:[%s3 + $0x1a0] sm:$0xff]
    %v2980 = vld [vmem:[%s3 + $0x1a8] sm:$0xff]
    %v2981 = vld [vmem:[%s3 + $0x1b0] sm:$0xff]
    %v2982 = vld [vmem:[%s3 + $0x1b8] sm:$0xff]
    %v2983 = vld [vmem:[%s3 + $0x1c0] sm:$0xff]
    %v2984 = vld [vmem:[%s3 + $0x1c8] sm:$0xff]
    %v2985 = vld [vmem:[%s3 + $0x1d0] sm:$0xff]
    %v2986 = vld [vmem:[%s3 + $0x1d8] sm:$0xff]
    %v2987 = vld [vmem:[%s3 + $0x1e0] sm:$0xff]
    %v2988 = vld [vmem:[%s3 + $0x1e8] sm:$0xff]
    %v2989 = vld [vmem:[%s3 + $0x1f0] sm:$0xff]
    %v2990 = vld [vmem:[%s3 + $0x1f8] sm:$0xff]
    %s2991 = scalar_lea.vmem %s4, 512
    %v2992 = vld [vmem:[%s2991] sm:$0xff]
    %v2993 = vld [vmem:[%s2991 + $0x8] sm:$0xff]
    %v2994 = vld [vmem:[%s2991 + $0x10] sm:$0xff]
    %v2995 = vld [vmem:[%s2991 + $0x18] sm:$0xff]
    %v2996 = vld [vmem:[%s2991 + $0x20] sm:$0xff]
    %v2997 = vld [vmem:[%s2991 + $0x28] sm:$0xff]
    %v2998 = vld [vmem:[%s2991 + $0x30] sm:$0xff]
    %v2999 = vld [vmem:[%s2991 + $0x38] sm:$0xff]
    %v3000 = vld [vmem:[%s2991 + $0x40] sm:$0xff]
    %v3001 = vld [vmem:[%s2991 + $0x48] sm:$0xff]
    %v3002 = vld [vmem:[%s2991 + $0x50] sm:$0xff]
    %v3003 = vld [vmem:[%s2991 + $0x58] sm:$0xff]
    %v3004 = vld [vmem:[%s2991 + $0x60] sm:$0xff]
    %v3005 = vld [vmem:[%s2991 + $0x68] sm:$0xff]
    %v3006 = vld [vmem:[%s2991 + $0x70] sm:$0xff]
    %v3007 = vld [vmem:[%s2991 + $0x78] sm:$0xff]
    %v3008 = vld [vmem:[%s2991 + $0x80] sm:$0xff]
    %v3009 = vld [vmem:[%s2991 + $0x88] sm:$0xff]
    %v3010 = vld [vmem:[%s2991 + $0x90] sm:$0xff]
    %v3011 = vld [vmem:[%s2991 + $0x98] sm:$0xff]
    %v3012 = vld [vmem:[%s2991 + $0xa0] sm:$0xff]
    %v3013 = vld [vmem:[%s2991 + $0xa8] sm:$0xff]
    %v3014 = vld [vmem:[%s2991 + $0xb0] sm:$0xff]
    %v3015 = vld [vmem:[%s2991 + $0xb8] sm:$0xff]
    %v3016 = vld [vmem:[%s2991 + $0xc0] sm:$0xff]
    %v3017 = vld [vmem:[%s2991 + $0xc8] sm:$0xff]
    %v3018 = vld [vmem:[%s2991 + $0xd0] sm:$0xff]
    %v3019 = vld [vmem:[%s2991 + $0xd8] sm:$0xff]
    %v3020 = vld [vmem:[%s2991 + $0xe0] sm:$0xff]
    %v3021 = vld [vmem:[%s2991 + $0xe8] sm:$0xff]
    %v3022 = vld [vmem:[%s2991 + $0xf0] sm:$0xff]
    %v3023 = vld [vmem:[%s2991 + $0xf8] sm:$0xff]
    %v3024 = vld [vmem:[%s2991 + $0x100] sm:$0xff]
    %v3025 = vld [vmem:[%s2991 + $0x108] sm:$0xff]
    %v3026 = vld [vmem:[%s2991 + $0x110] sm:$0xff]
    %v3027 = vld [vmem:[%s2991 + $0x118] sm:$0xff]
    %v3028 = vld [vmem:[%s2991 + $0x120] sm:$0xff]
    %v3029 = vld [vmem:[%s2991 + $0x128] sm:$0xff]
    %v3030 = vld [vmem:[%s2991 + $0x130] sm:$0xff]
    %v3031 = vld [vmem:[%s2991 + $0x138] sm:$0xff]
    %v3032 = vld [vmem:[%s2991 + $0x140] sm:$0xff]
    %v3033 = vld [vmem:[%s2991 + $0x148] sm:$0xff]
    %v3034 = vld [vmem:[%s2991 + $0x150] sm:$0xff]
    %v3035 = vld [vmem:[%s2991 + $0x158] sm:$0xff]
    %v3036 = vld [vmem:[%s2991 + $0x160] sm:$0xff]
    %v3037 = vld [vmem:[%s2991 + $0x168] sm:$0xff]
    %v3038 = vld [vmem:[%s2991 + $0x170] sm:$0xff]
    %v3039 = vld [vmem:[%s2991 + $0x178] sm:$0xff]
    %v3040 = vld [vmem:[%s2991 + $0x180] sm:$0xff]
    %v3041 = vld [vmem:[%s2991 + $0x188] sm:$0xff]
    %v3042 = vld [vmem:[%s2991 + $0x190] sm:$0xff]
    %v3043 = vld [vmem:[%s2991 + $0x198] sm:$0xff]
    %v3044 = vld [vmem:[%s2991 + $0x1a0] sm:$0xff]
    %v3045 = vld [vmem:[%s2991 + $0x1a8] sm:$0xff]
    %v3046 = vld [vmem:[%s2991 + $0x1b0] sm:$0xff]
    %v3047 = vld [vmem:[%s2991 + $0x1b8] sm:$0xff]
    %v3048 = vld [vmem:[%s2991 + $0x1c0] sm:$0xff]
    %v3049 = vld [vmem:[%s2991 + $0x1c8] sm:$0xff]
    %v3050 = vld [vmem:[%s2991 + $0x1d0] sm:$0xff]
    %v3051 = vld [vmem:[%s2991 + $0x1d8] sm:$0xff]
    %v3052 = vld [vmem:[%s2991 + $0x1e0] sm:$0xff]
    %v3053 = vld [vmem:[%s2991 + $0x1e8] sm:$0xff]
    %v3054 = vld [vmem:[%s2991 + $0x1f0] sm:$0xff]
    %v3055 = vld [vmem:[%s2991 + $0x1f8] sm:$0xff]
    %s3056 = scalar_lea.vmem %s5, 4
    %v3057 = vld [vmem:[%s3056] sm:$0xf]
    %v3059 = vlaneseq
    %v3060 = vshrl.u32 %v3059, 7
    %v3061 = vsub.s32 0, %v3060
    %v3062 = vrot.slane %v3057, %v3061
    %v3063 = vlaneseq
    %v3064 = vshrl.u32 %v3063, 7
    %v3065 = vsub.s32 1, %v3064
    %v3066 = vrot.slane %v3057, %v3065
    %v3067 = vlaneseq
    %v3068 = vshrl.u32 %v3067, 7
    %v3069 = vsub.s32 2, %v3068
    %v3070 = vrot.slane %v3057, %v3069
    %v3071 = vlaneseq
    %v3072 = vshrl.u32 %v3071, 7
    %v3073 = vsub.s32 3, %v3072
    %v3074 = vrot.slane %v3057, %v3073
    %3079 = vmatprep.subr.mxu0 %v2928
    %3080 = vmatpush1.msra.mxu0 %v2927
    %3081 = vmatprep.subr.mxu0 %v2932
    %3082 = vmatpush1.msra.mxu0 %v2931
    %3083 = vmatprep.subr.mxu0 %v2936
    %3084 = vmatpush1.msra.mxu0 %v2935
    %3085 = vmatprep.subr.mxu0 %v2940
    %3086 = vmatpush1.msra.mxu0 %v2939
    %3087 = vmatprep.subr.mxu0 %v2944
    %3088 = vmatpush1.msra.mxu0 %v2943
    %3089 = vmatprep.subr.mxu0 %v2948
    %3090 = vmatpush1.msra.mxu0 %v2947
    %3091 = vmatprep.subr.mxu0 %v2952
    %3092 = vmatpush1.msra.mxu0 %v2951
    %3093 = vmatprep.subr.mxu0 %v2956
    %3094 = vmatpush1.msra.mxu0 %v2955
    %3095 = vmatprep.subr.mxu0 %v2960
    %3096 = vmatpush1.msra.mxu0 %v2959
    %3097 = vmatprep.subr.mxu0 %v2964
    %3098 = vmatpush1.msra.mxu0 %v2963
    %3099 = vmatprep.subr.mxu0 %v2968
    %3100 = vmatpush1.msra.mxu0 %v2967
    %3101 = vmatprep.subr.mxu0 %v2972
    %3102 = vmatpush1.msra.mxu0 %v2971
    %3103 = vmatprep.subr.mxu0 %v2976
    %3104 = vmatpush1.msra.mxu0 %v2975
    %3105 = vmatprep.subr.mxu0 %v2980
    %3106 = vmatpush1.msra.mxu0 %v2979
    %3107 = vmatprep.subr.mxu0 %v2984
    %3108 = vmatpush1.msra.mxu0 %v2983
    %3109 = vmatprep.subr.mxu0 %v2988
    %3110 = vmatpush1.msra.mxu0 %v2987
    %3111 = vmatprep.subr.mxu0 0.0
    %3112 = vmatpush1.msra.mxu0 0.0
    %3113 = vmatprep.subr.mxu0 0.0
    %3114 = vmatpush1.msra.mxu0 0.0
    %3115 = vmatprep.subr.mxu0 0.0
    %3116 = vmatpush1.msra.mxu0 0.0
    %3117 = vmatprep.subr.mxu0 0.0
    %3118 = vmatpush1.msra.mxu0 0.0
    %3119 = vmatprep.subr.mxu0 0.0
    %3120 = vmatpush1.msra.mxu0 0.0
    %3121 = vmatprep.subr.mxu0 0.0
    %3122 = vmatpush1.msra.mxu0 0.0
    %3123 = vmatprep.subr.mxu0 0.0
    %3124 = vmatpush1.msra.mxu0 0.0
    %3125 = vmatprep.subr.mxu0 0.0
    %3126 = vmatpush1.msra.mxu0 0.0
    %3127 = vmatprep.subr.mxu0 0.0
    %3128 = vmatpush1.msra.mxu0 0.0
    %3129 = vmatprep.subr.mxu0 0.0
    %3130 = vmatpush1.msra.mxu0 0.0
    %3131 = vmatprep.subr.mxu0 0.0
    %3132 = vmatpush1.msra.mxu0 0.0
    %3133 = vmatprep.subr.mxu0 0.0
    %3134 = vmatpush1.msra.mxu0 0.0
    %3135 = vmatprep.subr.mxu0 0.0
    %3136 = vmatpush1.msra.mxu0 0.0
    %3137 = vmatprep.subr.mxu0 0.0
    %3138 = vmatpush1.msra.mxu0 0.0
    %3139 = vmatprep.subr.mxu0 0.0
    %3140 = vmatpush1.msra.mxu0 0.0
    %3141 = vmatprep.subr.mxu0 0.0
    %3142 = vmatpush1.msra.mxu0 0.0
    %3143 = vmatprep.mubr.f32.mxu0 0.0
    %3144 = vmatmul.mubr.f32.gmra.mrb[0].mxu0 %v1734
    %v3145 = vpop.f32.mrb[0].mxu0
    %v3146 = vadd.f32 %v3062, %v3145
    %v3147 = vpop.f32.mrb[0].mxu0
    %v3148 = vadd.f32 %v3066, %v3147
    %3149 = vmatprep.mubr.f32.mxu0 0.0
    %3150 = vmatmul.mubr.f32.gmra.mrb[0].mxu0 %v1904
    %v3151 = vpop.f32.mrb[0].mxu0
    %v3152 = vadd.f32 %v3062, %v3151
    %v3153 = vpop.f32.mrb[0].mxu0
    %v3154 = vadd.f32 %v3066, %v3153
    %3155 = vmatprep.mubr.f32.mxu0 0.0
    %3156 = vmatmul.mubr.f32.gmra.mrb[0].mxu0 %v2074
    %v3157 = vpop.f32.mrb[0].mxu0
    %v3158 = vadd.f32 %v3062, %v3157
    %v3159 = vpop.f32.mrb[0].mxu0
    %v3160 = vadd.f32 %v3066, %v3159
    %3161 = vmatprep.mubr.f32.mxu0 0.0
    %3162 = vmatmul.mubr.f32.gmra.mrb[0].mxu0 %v2244
    %v3163 = vpop.f32.mrb[0].mxu0
    %v3164 = vadd.f32 %v3062, %v3163
    %v3165 = vpop.f32.mrb[0].mxu0
    %v3166 = vadd.f32 %v3066, %v3165
    %3167 = vmatprep.mubr.f32.mxu0 0.0
    %3168 = vmatmul.mubr.f32.gmra.mrb[0].mxu0 %v2414
    %v3169 = vpop.f32.mrb[0].mxu0
    %v3170 = vadd.f32 %v3062, %v3169
    %v3171 = vpop.f32.mrb[0].mxu0
    %v3172 = vadd.f32 %v3066, %v3171
    %3173 = vmatprep.mubr.f32.mxu0 0.0
    %3174 = vmatmul.mubr.f32.gmra.mrb[0].mxu0 %v2584
    %v3175 = vpop.f32.mrb[0].mxu0
    %v3176 = vadd.f32 %v3062, %v3175
    %v3177 = vpop.f32.mrb[0].mxu0
    %v3178 = vadd.f32 %v3066, %v3177
    %3179 = vmatprep.mubr.f32.mxu0 0.0
    %3180 = vmatmul.mubr.f32.gmra.mrb[0].mxu0 %v2754
    %v3181 = vpop.f32.mrb[0].mxu0
    %v3182 = vadd.f32 %v3062, %v3181
    %v3183 = vpop.f32.mrb[0].mxu0
    %v3184 = vadd.f32 %v3066, %v3183
    %3185 = vmatprep.mubr.f32.mxu0 0.0
    %3186 = vmatmul.mubr.f32.gmra.mrb[0].mxu0 %v2924
    %v3187 = vpop.f32.mrb[0].mxu0
    %v3188 = vadd.f32 %v3062, %v3187
    %v3189 = vpop.f32.mrb[0].mxu0
    %v3190 = vadd.f32 %v3066, %v3189
    %3191 = vdwg.mxu0
    %3192 = vmatprep.subr.mxu0 %v2930
    %3193 = vmatpush1.msra.mxu0 %v2929
    %3194 = vmatprep.subr.mxu0 %v2934
    %3195 = vmatpush1.msra.mxu0 %v2933
    %3196 = vmatprep.subr.mxu0 %v2938
    %3197 = vmatpush1.msra.mxu0 %v2937
    %3198 = vmatprep.subr.mxu0 %v2942
    %3199 = vmatpush1.msra.mxu0 %v2941
    %3200 = vmatprep.subr.mxu0 %v2946
    %3201 = vmatpush1.msra.mxu0 %v2945
    %3202 = vmatprep.subr.mxu0 %v2950
    %3203 = vmatpush1.msra.mxu0 %v2949
    %3204 = vmatprep.subr.mxu0 %v2954
    %3205 = vmatpush1.msra.mxu0 %v2953
    %3206 = vmatprep.subr.mxu0 %v2958
    %3207 = vmatpush1.msra.mxu0 %v2957
    %3208 = vmatprep.subr.mxu0 %v2962
    %3209 = vmatpush1.msra.mxu0 %v2961
    %3210 = vmatprep.subr.mxu0 %v2966
    %3211 = vmatpush1.msra.mxu0 %v2965
    %3212 = vmatprep.subr.mxu0 %v2970
    %3213 = vmatpush1.msra.mxu0 %v2969
    %3214 = vmatprep.subr.mxu0 %v2974
    %3215 = vmatpush1.msra.mxu0 %v2973
    %3216 = vmatprep.subr.mxu0 %v2978
    %3217 = vmatpush1.msra.mxu0 %v2977
    %3218 = vmatprep.subr.mxu0 %v2982
    %3219 = vmatpush1.msra.mxu0 %v2981
    %3220 = vmatprep.subr.mxu0 %v2986
    %3221 = vmatpush1.msra.mxu0 %v2985
    %3222 = vmatprep.subr.mxu0 %v2990
    %3223 = vmatpush1.msra.mxu0 %v2989
    %3224 = vmatprep.subr.mxu0 0.0
    %3225 = vmatpush1.msra.mxu0 0.0
    %3226 = vmatprep.subr.mxu0 0.0
    %3227 = vmatpush1.msra.mxu0 0.0
    %3228 = vmatprep.subr.mxu0 0.0
    %3229 = vmatpush1.msra.mxu0 0.0
    %3230 = vmatprep.subr.mxu0 0.0
    %3231 = vmatpush1.msra.mxu0 0.0
    %3232 = vmatprep.subr.mxu0 0.0
    %3233 = vmatpush1.msra.mxu0 0.0
    %3234 = vmatprep.subr.mxu0 0.0
    %3235 = vmatpush1.msra.mxu0 0.0
    %3236 = vmatprep.subr.mxu0 0.0
    %3237 = vmatpush1.msra.mxu0 0.0
    %3238 = vmatprep.subr.mxu0 0.0
    %3239 = vmatpush1.msra.mxu0 0.0
    %3240 = vmatprep.subr.mxu0 0.0
    %3241 = vmatpush1.msra.mxu0 0.0
    %3242 = vmatprep.subr.mxu0 0.0
    %3243 = vmatpush1.msra.mxu0 0.0
    %3244 = vmatprep.subr.mxu0 0.0
    %3245 = vmatpush1.msra.mxu0 0.0
    %3246 = vmatprep.subr.mxu0 0.0
    %3247 = vmatpush1.msra.mxu0 0.0
    %3248 = vmatprep.subr.mxu0 0.0
    %3249 = vmatpush1.msra.mxu0 0.0
    %3250 = vmatprep.subr.mxu0 0.0
    %3251 = vmatpush1.msra.mxu0 0.0
    %3252 = vmatprep.subr.mxu0 0.0
    %3253 = vmatpush1.msra.mxu0 0.0
    %3254 = vmatprep.subr.mxu0 0.0
    %3255 = vmatpush1.msra.mxu0 0.0
    %3256 = vmatprep.mubr.f32.mxu0 0.0
    %3257 = vmatmul.mubr.f32.gmra.mrb[0].mxu0 %v1734
    %v3258 = vpop.f32.mrb[0].mxu0
    %v3259 = vadd.f32 %v3070, %v3258
    %v3260 = vpop.f32.mrb[0].mxu0
    %v3261 = vadd.f32 %v3074, %v3260
    %3262 = vmatprep.mubr.f32.mxu0 0.0
    %3263 = vmatmul.mubr.f32.gmra.mrb[0].mxu0 %v1904
    %v3264 = vpop.f32.mrb[0].mxu0
    %v3265 = vadd.f32 %v3070, %v3264
    %v3266 = vpop.f32.mrb[0].mxu0
    %v3267 = vadd.f32 %v3074, %v3266
    %3268 = vmatprep.mubr.f32.mxu0 0.0
    %3269 = vmatmul.mubr.f32.gmra.mrb[0].mxu0 %v2074
    %v3270 = vpop.f32.mrb[0].mxu0
    %v3271 = vadd.f32 %v3070, %v3270
    %v3272 = vpop.f32.mrb[0].mxu0
    %v3273 = vadd.f32 %v3074, %v3272
    %3274 = vmatprep.mubr.f32.mxu0 0.0
    %3275 = vmatmul.mubr.f32.gmra.mrb[0].mxu0 %v2244
    %v3276 = vpop.f32.mrb[0].mxu0
    %v3277 = vadd.f32 %v3070, %v3276
    %v3278 = vpop.f32.mrb[0].mxu0
    %v3279 = vadd.f32 %v3074, %v3278
    %3280 = vmatprep.mubr.f32.mxu0 0.0
    %3281 = vmatmul.mubr.f32.gmra.mrb[0].mxu0 %v2414
    %v3282 = vpop.f32.mrb[0].mxu0
    %v3283 = vadd.f32 %v3070, %v3282
    %v3284 = vpop.f32.mrb[0].mxu0
    %v3285 = vadd.f32 %v3074, %v3284
    %3286 = vmatprep.mubr.f32.mxu0 0.0
    %3287 = vmatmul.mubr.f32.gmra.mrb[0].mxu0 %v2584
    %v3288 = vpop.f32.mrb[0].mxu0
    %v3289 = vadd.f32 %v3070, %v3288
    %v3290 = vpop.f32.mrb[0].mxu0
    %v3291 = vadd.f32 %v3074, %v3290
    %3292 = vmatprep.mubr.f32.mxu0 0.0
    %3293 = vmatmul.mubr.f32.gmra.mrb[0].mxu0 %v2754
    %v3294 = vpop.f32.mrb[0].mxu0
    %v3295 = vadd.f32 %v3070, %v3294
    %v3296 = vpop.f32.mrb[0].mxu0
    %v3297 = vadd.f32 %v3074, %v3296
    %3298 = vmatprep.mubr.f32.mxu0 0.0
    %3299 = vmatmul.mubr.f32.gmra.mrb[0].mxu0 %v2924
    %v3300 = vpop.f32.mrb[0].mxu0
    %v3301 = vadd.f32 %v3070, %v3300
    %v3302 = vpop.f32.mrb[0].mxu0
    %v3303 = vadd.f32 %v3074, %v3302
    %3304 = vdwg.mxu0
    %s3305 = scalar_lea.vmem %s6, 8
    %v3306 = vld [vmem:[%s3305] sm:$0xff]
    %s3307 = scalar_lea.vmem %s7, 8
    %v3308 = vld [vmem:[%s3307] sm:$0xff]
    %3309 = vmatprep.subr.mxu0 %v2993
    %3310 = vmatpush1.msra.mxu0 %v2992
    %3311 = vmatprep.subr.mxu0 %v2997
    %3312 = vmatpush1.msra.mxu0 %v2996
    %3313 = vmatprep.subr.mxu0 %v3001
    %3314 = vmatpush1.msra.mxu0 %v3000
    %3315 = vmatprep.subr.mxu0 %v3005
    %3316 = vmatpush1.msra.mxu0 %v3004
    %3317 = vmatprep.subr.mxu0 %v3009
    %3318 = vmatpush1.msra.mxu0 %v3008
    %3319 = vmatprep.subr.mxu0 %v3013
    %3320 = vmatpush1.msra.mxu0 %v3012
    %3321 = vmatprep.subr.mxu0 %v3017
    %3322 = vmatpush1.msra.mxu0 %v3016
    %3323 = vmatprep.subr.mxu0 %v3021
    %3324 = vmatpush1.msra.mxu0 %v3020
    %3325 = vmatprep.subr.mxu0 %v3025
    %3326 = vmatpush1.msra.mxu0 %v3024
    %3327 = vmatprep.subr.mxu0 %v3029
    %3328 = vmatpush1.msra.mxu0 %v3028
    %3329 = vmatprep.subr.mxu0 %v3033
    %3330 = vmatpush1.msra.mxu0 %v3032
    %3331 = vmatprep.subr.mxu0 %v3037
    %3332 = vmatpush1.msra.mxu0 %v3036
    %3333 = vmatprep.subr.mxu0 %v3041
    %3334 = vmatpush1.msra.mxu0 %v3040
    %3335 = vmatprep.subr.mxu0 %v3045
    %3336 = vmatpush1.msra.mxu0 %v3044
    %3337 = vmatprep.subr.mxu0 %v3049
    %3338 = vmatpush1.msra.mxu0 %v3048
    %3339 = vmatprep.subr.mxu0 %v3053
    %3340 = vmatpush1.msra.mxu0 %v3052
    %3341 = vmatprep.subr.mxu0 0.0
    %3342 = vmatpush1.msra.mxu0 0.0
    %3343 = vmatprep.subr.mxu0 0.0
    %3344 = vmatpush1.msra.mxu0 0.0
    %3345 = vmatprep.subr.mxu0 0.0
    %3346 = vmatpush1.msra.mxu0 0.0
    %3347 = vmatprep.subr.mxu0 0.0
    %3348 = vmatpush1.msra.mxu0 0.0
    %3349 = vmatprep.subr.mxu0 0.0
    %3350 = vmatpush1.msra.mxu0 0.0
    %3351 = vmatprep.subr.mxu0 0.0
    %3352 = vmatpush1.msra.mxu0 0.0
    %3353 = vmatprep.subr.mxu0 0.0
    %3354 = vmatpush1.msra.mxu0 0.0
    %3355 = vmatprep.subr.mxu0 0.0
    %3356 = vmatpush1.msra.mxu0 0.0
    %3357 = vmatprep.subr.mxu0 0.0
    %3358 = vmatpush1.msra.mxu0 0.0
    %3359 = vmatprep.subr.mxu0 0.0
    %3360 = vmatpush1.msra.mxu0 0.0
    %3361 = vmatprep.subr.mxu0 0.0
    %3362 = vmatpush1.msra.mxu0 0.0
    %3363 = vmatprep.subr.mxu0 0.0
    %3364 = vmatpush1.msra.mxu0 0.0
    %3365 = vmatprep.subr.mxu0 0.0
    %3366 = vmatpush1.msra.mxu0 0.0
    %3367 = vmatprep.subr.mxu0 0.0
    %3368 = vmatpush1.msra.mxu0 0.0
    %3369 = vmatprep.subr.mxu0 0.0
    %3370 = vmatpush1.msra.mxu0 0.0
    %3371 = vmatprep.subr.mxu0 0.0
    %3372 = vmatpush1.msra.mxu0 0.0
    %3373 = vmatprep.mubr.f32.mxu0 0.0
    %3374 = vmatmul.mubr.f32.gmra.mrb[0].mxu0 %v3306
    %v3375 = vpop.f32.mrb[0].mxu0
    %v3376 = vadd.f32 0.0, %v3375
    %v3377 = vpop.f32.mrb[0].mxu0
    %v3378 = vadd.f32 0.0, %v3377
    %3379 = vdwg.mxu0
    %3380 = vmatprep.subr.mxu0 %v2995
    %3381 = vmatpush1.msra.mxu0 %v2994
    %3382 = vmatprep.subr.mxu0 %v2999
    %3383 = vmatpush1.msra.mxu0 %v2998
    %3384 = vmatprep.subr.mxu0 %v3003
    %3385 = vmatpush1.msra.mxu0 %v3002
    %3386 = vmatprep.subr.mxu0 %v3007
    %3387 = vmatpush1.msra.mxu0 %v3006
    %3388 = vmatprep.subr.mxu0 %v3011
    %3389 = vmatpush1.msra.mxu0 %v3010
    %3390 = vmatprep.subr.mxu0 %v3015
    %3391 = vmatpush1.msra.mxu0 %v3014
    %3392 = vmatprep.subr.mxu0 %v3019
    %3393 = vmatpush1.msra.mxu0 %v3018
    %3394 = vmatprep.subr.mxu0 %v3023
    %3395 = vmatpush1.msra.mxu0 %v3022
    %3396 = vmatprep.subr.mxu0 %v3027
    %3397 = vmatpush1.msra.mxu0 %v3026
    %3398 = vmatprep.subr.mxu0 %v3031
    %3399 = vmatpush1.msra.mxu0 %v3030
    %3400 = vmatprep.subr.mxu0 %v3035
    %3401 = vmatpush1.msra.mxu0 %v3034
    %3402 = vmatprep.subr.mxu0 %v3039
    %3403 = vmatpush1.msra.mxu0 %v3038
    %3404 = vmatprep.subr.mxu0 %v3043
    %3405 = vmatpush1.msra.mxu0 %v3042
    %3406 = vmatprep.subr.mxu0 %v3047
    %3407 = vmatpush1.msra.mxu0 %v3046
    %3408 = vmatprep.subr.mxu0 %v3051
    %3409 = vmatpush1.msra.mxu0 %v3050
    %3410 = vmatprep.subr.mxu0 %v3055
    %3411 = vmatpush1.msra.mxu0 %v3054
    %3412 = vmatprep.subr.mxu0 0.0
    %3413 = vmatpush1.msra.mxu0 0.0
    %3414 = vmatprep.subr.mxu0 0.0
    %3415 = vmatpush1.msra.mxu0 0.0
    %3416 = vmatprep.subr.mxu0 0.0
    %3417 = vmatpush1.msra.mxu0 0.0
    %3418 = vmatprep.subr.mxu0 0.0
    %3419 = vmatpush1.msra.mxu0 0.0
    %3420 = vmatprep.subr.mxu0 0.0
    %3421 = vmatpush1.msra.mxu0 0.0
    %3422 = vmatprep.subr.mxu0 0.0
    %3423 = vmatpush1.msra.mxu0 0.0
    %3424 = vmatprep.subr.mxu0 0.0
    %3425 = vmatpush1.msra.mxu0 0.0
    %3426 = vmatprep.subr.mxu0 0.0
    %3427 = vmatpush1.msra.mxu0 0.0
    %3428 = vmatprep.subr.mxu0 0.0
    %3429 = vmatpush1.msra.mxu0 0.0
    %3430 = vmatprep.subr.mxu0 0.0
    %3431 = vmatpush1.msra.mxu0 0.0
    %3432 = vmatprep.subr.mxu0 0.0
    %3433 = vmatpush1.msra.mxu0 0.0
    %3434 = vmatprep.subr.mxu0 0.0
    %3435 = vmatpush1.msra.mxu0 0.0
    %3436 = vmatprep.subr.mxu0 0.0
    %3437 = vmatpush1.msra.mxu0 0.0
    %3438 = vmatprep.subr.mxu0 0.0
    %3439 = vmatpush1.msra.mxu0 0.0
    %3440 = vmatprep.subr.mxu0 0.0
    %3441 = vmatpush1.msra.mxu0 0.0
    %3442 = vmatprep.subr.mxu0 0.0
    %3443 = vmatpush1.msra.mxu0 0.0
    %3444 = vmatprep.mubr.f32.mxu0 0.0
    %3445 = vmatmul.mubr.f32.gmra.mrb[0].mxu0 %v3306
    %v3446 = vpop.f32.mrb[0].mxu0
    %v3447 = vadd.f32 0.0, %v3446
    %v3448 = vpop.f32.mrb[0].mxu0
    %v3449 = vadd.f32 0.0, %v3448
    %3450 = vdwg.mxu0
    %v3451 = vadd.f32 %v3146, %v3376
    %v3452 = vadd.f32 %v3148, %v3378
    %v3453 = vadd.f32 %v3259, %v3447
    %v3454 = vadd.f32 %v3261, %v3449
    %v3455 = vxor.u32 %v3451, 2147483648
    %v3456 = vmul.f32 %v3455, 1.442695
    %v3457 = vpow.pop %v3456
    %v3458 = vadd.f32 %v3457, 1.0
    %v3459 = vrcp.pop %v3458
    %v3460 = vmul.f32 1.0, %v3459
    %v3461 = vxor.u32 %v3452, 2147483648
    %v3462 = vmul.f32 %v3461, 1.442695
    %v3463 = vpow.pop %v3462
    %v3464 = vadd.f32 %v3463, 1.0
    %v3465 = vrcp.pop %v3464
    %v3466 = vmul.f32 1.0, %v3465
    %v3467 = vtanh.pop %v3453
    %v3468 = vxor.u32 %v3454, 2147483648
    %v3469 = vmul.f32 %v3468, 1.442695
    %v3470 = vpow.pop %v3469
    %v3471 = vadd.f32 %v3470, 1.0
    %v3472 = vrcp.pop %v3471
    %v3473 = vmul.f32 1.0, %v3472
    %v3474 = vmul.f32 %v3466, %v3308
    %v3475 = vmul.f32 %v3460, %v3467
    %v3476 = vadd.f32 %v3474, %v3475
    %v3477 = vtanh.pop %v3476
    %v3478 = vmul.f32 %v3473, %v3477
    %3479 = vmatprep.subr.mxu0 %v2993
    %3480 = vmatpush1.msra.mxu0 %v2992
    %3481 = vmatprep.subr.mxu0 %v2997
    %3482 = vmatpush1.msra.mxu0 %v2996
    %3483 = vmatprep.subr.mxu0 %v3001
    %3484 = vmatpush1.msra.mxu0 %v3000
    %3485 = vmatprep.subr.mxu0 %v3005
    %3486 = vmatpush1.msra.mxu0 %v3004
    %3487 = vmatprep.subr.mxu0 %v3009
    %3488 = vmatpush1.msra.mxu0 %v3008
    %3489 = vmatprep.subr.mxu0 %v3013
    %3490 = vmatpush1.msra.mxu0 %v3012
    %3491 = vmatprep.subr.mxu0 %v3017
    %3492 = vmatpush1.msra.mxu0 %v3016
    %3493 = vmatprep.subr.mxu0 %v3021
    %3494 = vmatpush1.msra.mxu0 %v3020
    %3495 = vmatprep.subr.mxu0 %v3025
    %3496 = vmatpush1.msra.mxu0 %v3024
    %3497 = vmatprep.subr.mxu0 %v3029
    %3498 = vmatpush1.msra.mxu0 %v3028
    %3499 = vmatprep.subr.mxu0 %v3033
    %3500 = vmatpush1.msra.mxu0 %v3032
    %3501 = vmatprep.subr.mxu0 %v3037
    %3502 = vmatpush1.msra.mxu0 %v3036
    %3503 = vmatprep.subr.mxu0 %v3041
    %3504 = vmatpush1.msra.mxu0 %v3040
    %3505 = vmatprep.subr.mxu0 %v3045
    %3506 = vmatpush1.msra.mxu0 %v3044
    %3507 = vmatprep.subr.mxu0 %v3049
    %3508 = vmatpush1.msra.mxu0 %v3048
    %3509 = vmatprep.subr.mxu0 %v3053
    %3510 = vmatpush1.msra.mxu0 %v3052
    %3511 = vmatprep.subr.mxu0 0.0
    %3512 = vmatpush1.msra.mxu0 0.0
    %3513 = vmatprep.subr.mxu0 0.0
    %3514 = vmatpush1.msra.mxu0 0.0
    %3515 = vmatprep.subr.mxu0 0.0
    %3516 = vmatpush1.msra.mxu0 0.0
    %3517 = vmatprep.subr.mxu0 0.0
    %3518 = vmatpush1.msra.mxu0 0.0
    %3519 = vmatprep.subr.mxu0 0.0
    %3520 = vmatpush1.msra.mxu0 0.0
    %3521 = vmatprep.subr.mxu0 0.0
    %3522 = vmatpush1.msra.mxu0 0.0
    %3523 = vmatprep.subr.mxu0 0.0
    %3524 = vmatpush1.msra.mxu0 0.0
    %3525 = vmatprep.subr.mxu0 0.0
    %3526 = vmatpush1.msra.mxu0 0.0
    %3527 = vmatprep.subr.mxu0 0.0
    %3528 = vmatpush1.msra.mxu0 0.0
    %3529 = vmatprep.subr.mxu0 0.0
    %3530 = vmatpush1.msra.mxu0 0.0
    %3531 = vmatprep.subr.mxu0 0.0
    %3532 = vmatpush1.msra.mxu0 0.0
    %3533 = vmatprep.subr.mxu0 0.0
    %3534 = vmatpush1.msra.mxu0 0.0
    %3535 = vmatprep.subr.mxu0 0.0
    %3536 = vmatpush1.msra.mxu0 0.0
    %3537 = vmatprep.subr.mxu0 0.0
    %3538 = vmatpush1.msra.mxu0 0.0
    %3539 = vmatprep.subr.mxu0 0.0
    %3540 = vmatpush1.msra.mxu0 0.0
    %3541 = vmatprep.subr.mxu0 0.0
    %3542 = vmatpush1.msra.mxu0 0.0
    %3543 = vmatprep.mubr.f32.mxu0 0.0
    %3544 = vmatmul.mubr.f32.gmra.mrb[0].mxu0 %v3478
    %v3545 = vpop.f32.mrb[0].mxu0
    %v3546 = vadd.f32 0.0, %v3545
    %v3547 = vpop.f32.mrb[0].mxu0
    %v3548 = vadd.f32 0.0, %v3547
    %3549 = vdwg.mxu0
    %3550 = vmatprep.subr.mxu0 %v2995
    %3551 = vmatpush1.msra.mxu0 %v2994
    %3552 = vmatprep.subr.mxu0 %v2999
    %3553 = vmatpush1.msra.mxu0 %v2998
    %3554 = vmatprep.subr.mxu0 %v3003
    %3555 = vmatpush1.msra.mxu0 %v3002
    %3556 = vmatprep.subr.mxu0 %v3007
    %3557 = vmatpush1.msra.mxu0 %v3006
    %3558 = vmatprep.subr.mxu0 %v3011
    %3559 = vmatpush1.msra.mxu0 %v3010
    %3560 = vmatprep.subr.mxu0 %v3015
    %3561 = vmatpush1.msra.mxu0 %v3014
    %3562 = vmatprep.subr.mxu0 %v3019
    %3563 = vmatpush1.msra.mxu0 %v3018
    %3564 = vmatprep.subr.mxu0 %v3023
    %3565 = vmatpush1.msra.mxu0 %v3022
    %3566 = vmatprep.subr.mxu0 %v3027
    %3567 = vmatpush1.msra.mxu0 %v3026
    %3568 = vmatprep.subr.mxu0 %v3031
    %3569 = vmatpush1.msra.mxu0 %v3030
    %3570 = vmatprep.subr.mxu0 %v3035
    %3571 = vmatpush1.msra.mxu0 %v3034
    %3572 = vmatprep.subr.mxu0 %v3039
    %3573 = vmatpush1.msra.mxu0 %v3038
    %3574 = vmatprep.subr.mxu0 %v3043
    %3575 = vmatpush1.msra.mxu0 %v3042
    %3576 = vmatprep.subr.mxu0 %v3047
    %3577 = vmatpush1.msra.mxu0 %v3046
    %3578 = vmatprep.subr.mxu0 %v3051
    %3579 = vmatpush1.msra.mxu0 %v3050
    %3580 = vmatprep.subr.mxu0 %v3055
    %3581 = vmatpush1.msra.mxu0 %v3054
    %3582 = vmatprep.subr.mxu0 0.0
    %3583 = vmatpush1.msra.mxu0 0.0
    %3584 = vmatprep.subr.mxu0 0.0
    %3585 = vmatpush1.msra.mxu0 0.0
    %3586 = vmatprep.subr.mxu0 0.0
    %3587 = vmatpush1.msra.mxu0 0.0
    %3588 = vmatprep.subr.mxu0 0.0
    %3589 = vmatpush1.msra.mxu0 0.0
    %3590 = vmatprep.subr.mxu0 0.0
    %3591 = vmatpush1.msra.mxu0 0.0
    %3592 = vmatprep.subr.mxu0 0.0
    %3593 = vmatpush1.msra.mxu0 0.0
    %3594 = vmatprep.subr.mxu0 0.0
    %3595 = vmatpush1.msra.mxu0 0.0
    %3596 = vmatprep.subr.mxu0 0.0
    %3597 = vmatpush1.msra.mxu0 0.0
    %3598 = vmatprep.subr.mxu0 0.0
    %3599 = vmatpush1.msra.mxu0 0.0
    %3600 = vmatprep.subr.mxu0 0.0
    %3601 = vmatpush1.msra.mxu0 0.0
    %3602 = vmatprep.subr.mxu0 0.0
    %3603 = vmatpush1.msra.mxu0 0.0
    %3604 = vmatprep.subr.mxu0 0.0
    %3605 = vmatpush1.msra.mxu0 0.0
    %3606 = vmatprep.subr.mxu0 0.0
    %3607 = vmatpush1.msra.mxu0 0.0
    %3608 = vmatprep.subr.mxu0 0.0
    %3609 = vmatpush1.msra.mxu0 0.0
    %3610 = vmatprep.subr.mxu0 0.0
    %3611 = vmatpush1.msra.mxu0 0.0
    %3612 = vmatprep.subr.mxu0 0.0
    %3613 = vmatpush1.msra.mxu0 0.0
    %3614 = vmatprep.mubr.f32.mxu0 0.0
    %3615 = vmatmul.mubr.f32.gmra.mrb[0].mxu0 %v3478
    %v3616 = vpop.f32.mrb[0].mxu0
    %v3617 = vadd.f32 0.0, %v3616
    %v3618 = vpop.f32.mrb[0].mxu0
    %v3619 = vadd.f32 0.0, %v3618
    %3620 = vdwg.mxu0
    %v3621 = vadd.f32 %v3152, %v3546
    %v3622 = vadd.f32 %v3154, %v3548
    %v3623 = vadd.f32 %v3265, %v3617
    %v3624 = vadd.f32 %v3267, %v3619
    %v3625 = vxor.u32 %v3621, 2147483648
    %v3626 = vmul.f32 %v3625, 1.442695
    %v3627 = vpow.pop %v3626
    %v3628 = vadd.f32 %v3627, 1.0
    %v3629 = vrcp.pop %v3628
    %v3630 = vmul.f32 1.0, %v3629
    %v3631 = vxor.u32 %v3622, 2147483648
    %v3632 = vmul.f32 %v3631, 1.442695
    %v3633 = vpow.pop %v3632
    %v3634 = vadd.f32 %v3633, 1.0
    %v3635 = vrcp.pop %v3634
    %v3636 = vmul.f32 1.0, %v3635
    %v3637 = vtanh.pop %v3623
    %v3638 = vxor.u32 %v3624, 2147483648
    %v3639 = vmul.f32 %v3638, 1.442695
    %v3640 = vpow.pop %v3639
    %v3641 = vadd.f32 %v3640, 1.0
    %v3642 = vrcp.pop %v3641
    %v3643 = vmul.f32 1.0, %v3642
    %v3644 = vmul.f32 %v3636, %v3476
    %v3645 = vmul.f32 %v3630, %v3637
    %v3646 = vadd.f32 %v3644, %v3645
    %v3647 = vtanh.pop %v3646
    %v3648 = vmul.f32 %v3643, %v3647
    %3649 = vmatprep.subr.mxu0 %v2993
    %3650 = vmatpush1.msra.mxu0 %v2992
    %3651 = vmatprep.subr.mxu0 %v2997
    %3652 = vmatpush1.msra.mxu0 %v2996
    %3653 = vmatprep.subr.mxu0 %v3001
    %3654 = vmatpush1.msra.mxu0 %v3000
    %3655 = vmatprep.subr.mxu0 %v3005
    %3656 = vmatpush1.msra.mxu0 %v3004
    %3657 = vmatprep.subr.mxu0 %v3009
    %3658 = vmatpush1.msra.mxu0 %v3008
    %3659 = vmatprep.subr.mxu0 %v3013
    %3660 = vmatpush1.msra.mxu0 %v3012
    %3661 = vmatprep.subr.mxu0 %v3017
    %3662 = vmatpush1.msra.mxu0 %v3016
    %3663 = vmatprep.subr.mxu0 %v3021
    %3664 = vmatpush1.msra.mxu0 %v3020
    %3665 = vmatprep.subr.mxu0 %v3025
    %3666 = vmatpush1.msra.mxu0 %v3024
    %3667 = vmatprep.subr.mxu0 %v3029
    %3668 = vmatpush1.msra.mxu0 %v3028
    %3669 = vmatprep.subr.mxu0 %v3033
    %3670 = vmatpush1.msra.mxu0 %v3032
    %3671 = vmatprep.subr.mxu0 %v3037
    %3672 = vmatpush1.msra.mxu0 %v3036
    %3673 = vmatprep.subr.mxu0 %v3041
    %3674 = vmatpush1.msra.mxu0 %v3040
    %3675 = vmatprep.subr.mxu0 %v3045
    %3676 = vmatpush1.msra.mxu0 %v3044
    %3677 = vmatprep.subr.mxu0 %v3049
    %3678 = vmatpush1.msra.mxu0 %v3048
    %3679 = vmatprep.subr.mxu0 %v3053
    %3680 = vmatpush1.msra.mxu0 %v3052
    %3681 = vmatprep.subr.mxu0 0.0
    %3682 = vmatpush1.msra.mxu0 0.0
    %3683 = vmatprep.subr.mxu0 0.0
    %3684 = vmatpush1.msra.mxu0 0.0
    %3685 = vmatprep.subr.mxu0 0.0
    %3686 = vmatpush1.msra.mxu0 0.0
    %3687 = vmatprep.subr.mxu0 0.0
    %3688 = vmatpush1.msra.mxu0 0.0
    %3689 = vmatprep.subr.mxu0 0.0
    %3690 = vmatpush1.msra.mxu0 0.0
    %3691 = vmatprep.subr.mxu0 0.0
    %3692 = vmatpush1.msra.mxu0 0.0
    %3693 = vmatprep.subr.mxu0 0.0
    %3694 = vmatpush1.msra.mxu0 0.0
    %3695 = vmatprep.subr.mxu0 0.0
    %3696 = vmatpush1.msra.mxu0 0.0
    %3697 = vmatprep.subr.mxu0 0.0
    %3698 = vmatpush1.msra.mxu0 0.0
    %3699 = vmatprep.subr.mxu0 0.0
    %3700 = vmatpush1.msra.mxu0 0.0
    %3701 = vmatprep.subr.mxu0 0.0
    %3702 = vmatpush1.msra.mxu0 0.0
    %3703 = vmatprep.subr.mxu0 0.0
    %3704 = vmatpush1.msra.mxu0 0.0
    %3705 = vmatprep.subr.mxu0 0.0
    %3706 = vmatpush1.msra.mxu0 0.0
    %3707 = vmatprep.subr.mxu0 0.0
    %3708 = vmatpush1.msra.mxu0 0.0
    %3709 = vmatprep.subr.mxu0 0.0
    %3710 = vmatpush1.msra.mxu0 0.0
    %3711 = vmatprep.subr.mxu0 0.0
    %3712 = vmatpush1.msra.mxu0 0.0
    %3713 = vmatprep.mubr.f32.mxu0 0.0
    %3714 = vmatmul.mubr.f32.gmra.mrb[0].mxu0 %v3648
    %v3715 = vpop.f32.mrb[0].mxu0
    %v3716 = vadd.f32 0.0, %v3715
    %v3717 = vpop.f32.mrb[0].mxu0
    %v3718 = vadd.f32 0.0, %v3717
    %3719 = vdwg.mxu0
    %3720 = vmatprep.subr.mxu0 %v2995
    %3721 = vmatpush1.msra.mxu0 %v2994
    %3722 = vmatprep.subr.mxu0 %v2999
    %3723 = vmatpush1.msra.mxu0 %v2998
    %3724 = vmatprep.subr.mxu0 %v3003
    %3725 = vmatpush1.msra.mxu0 %v3002
    %3726 = vmatprep.subr.mxu0 %v3007
    %3727 = vmatpush1.msra.mxu0 %v3006
    %3728 = vmatprep.subr.mxu0 %v3011
    %3729 = vmatpush1.msra.mxu0 %v3010
    %3730 = vmatprep.subr.mxu0 %v3015
    %3731 = vmatpush1.msra.mxu0 %v3014
    %3732 = vmatprep.subr.mxu0 %v3019
    %3733 = vmatpush1.msra.mxu0 %v3018
    %3734 = vmatprep.subr.mxu0 %v3023
    %3735 = vmatpush1.msra.mxu0 %v3022
    %3736 = vmatprep.subr.mxu0 %v3027
    %3737 = vmatpush1.msra.mxu0 %v3026
    %3738 = vmatprep.subr.mxu0 %v3031
    %3739 = vmatpush1.msra.mxu0 %v3030
    %3740 = vmatprep.subr.mxu0 %v3035
    %3741 = vmatpush1.msra.mxu0 %v3034
    %3742 = vmatprep.subr.mxu0 %v3039
    %3743 = vmatpush1.msra.mxu0 %v3038
    %3744 = vmatprep.subr.mxu0 %v3043
    %3745 = vmatpush1.msra.mxu0 %v3042
    %3746 = vmatprep.subr.mxu0 %v3047
    %3747 = vmatpush1.msra.mxu0 %v3046
    %3748 = vmatprep.subr.mxu0 %v3051
    %3749 = vmatpush1.msra.mxu0 %v3050
    %3750 = vmatprep.subr.mxu0 %v3055
    %3751 = vmatpush1.msra.mxu0 %v3054
    %3752 = vmatprep.subr.mxu0 0.0
    %3753 = vmatpush1.msra.mxu0 0.0
    %3754 = vmatprep.subr.mxu0 0.0
    %3755 = vmatpush1.msra.mxu0 0.0
    %3756 = vmatprep.subr.mxu0 0.0
    %3757 = vmatpush1.msra.mxu0 0.0
    %3758 = vmatprep.subr.mxu0 0.0
    %3759 = vmatpush1.msra.mxu0 0.0
    %3760 = vmatprep.subr.mxu0 0.0
    %3761 = vmatpush1.msra.mxu0 0.0
    %3762 = vmatprep.subr.mxu0 0.0
    %3763 = vmatpush1.msra.mxu0 0.0
    %3764 = vmatprep.subr.mxu0 0.0
    %3765 = vmatpush1.msra.mxu0 0.0
    %3766 = vmatprep.subr.mxu0 0.0
    %3767 = vmatpush1.msra.mxu0 0.0
    %3768 = vmatprep.subr.mxu0 0.0
    %3769 = vmatpush1.msra.mxu0 0.0
    %3770 = vmatprep.subr.mxu0 0.0
    %3771 = vmatpush1.msra.mxu0 0.0
    %3772 = vmatprep.subr.mxu0 0.0
    %3773 = vmatpush1.msra.mxu0 0.0
    %3774 = vmatprep.subr.mxu0 0.0
    %3775 = vmatpush1.msra.mxu0 0.0
    %3776 = vmatprep.subr.mxu0 0.0
    %3777 = vmatpush1.msra.mxu0 0.0
    %3778 = vmatprep.subr.mxu0 0.0
    %3779 = vmatpush1.msra.mxu0 0.0
    %3780 = vmatprep.subr.mxu0 0.0
    %3781 = vmatpush1.msra.mxu0 0.0
    %3782 = vmatprep.subr.mxu0 0.0
    %3783 = vmatpush1.msra.mxu0 0.0
    %3784 = vmatprep.mubr.f32.mxu0 0.0
    %3785 = vmatmul.mubr.f32.gmra.mrb[0].mxu0 %v3648
    %v3786 = vpop.f32.mrb[0].mxu0
    %v3787 = vadd.f32 0.0, %v3786
    %v3788 = vpop.f32.mrb[0].mxu0
    %v3789 = vadd.f32 0.0, %v3788
    %3790 = vdwg.mxu0
    %v3791 = vadd.f32 %v3158, %v3716
    %v3792 = vadd.f32 %v3160, %v3718
    %v3793 = vadd.f32 %v3271, %v3787
    %v3794 = vadd.f32 %v3273, %v3789
    %v3795 = vxor.u32 %v3791, 2147483648
    %v3796 = vmul.f32 %v3795, 1.442695
    %v3797 = vpow.pop %v3796
    %v3798 = vadd.f32 %v3797, 1.0
    %v3799 = vrcp.pop %v3798
    %v3800 = vmul.f32 1.0, %v3799
    %v3801 = vxor.u32 %v3792, 2147483648
    %v3802 = vmul.f32 %v3801, 1.442695
    %v3803 = vpow.pop %v3802
    %v3804 = vadd.f32 %v3803, 1.0
    %v3805 = vrcp.pop %v3804
    %v3806 = vmul.f32 1.0, %v3805
    %v3807 = vtanh.pop %v3793
    %v3808 = vxor.u32 %v3794, 2147483648
    %v3809 = vmul.f32 %v3808, 1.442695
    %v3810 = vpow.pop %v3809
    %v3811 = vadd.f32 %v3810, 1.0
    %v3812 = vrcp.pop %v3811
    %v3813 = vmul.f32 1.0, %v3812
    %v3814 = vmul.f32 %v3806, %v3646
    %v3815 = vmul.f32 %v3800, %v3807
    %v3816 = vadd.f32 %v3814, %v3815
    %v3817 = vtanh.pop %v3816
    %v3818 = vmul.f32 %v3813, %v3817
    %3819 = vmatprep.subr.mxu0 %v2993
    %3820 = vmatpush1.msra.mxu0 %v2992
    %3821 = vmatprep.subr.mxu0 %v2997
    %3822 = vmatpush1.msra.mxu0 %v2996
    %3823 = vmatprep.subr.mxu0 %v3001
    %3824 = vmatpush1.msra.mxu0 %v3000
    %3825 = vmatprep.subr.mxu0 %v3005
    %3826 = vmatpush1.msra.mxu0 %v3004
    %3827 = vmatprep.subr.mxu0 %v3009
    %3828 = vmatpush1.msra.mxu0 %v3008
    %3829 = vmatprep.subr.mxu0 %v3013
    %3830 = vmatpush1.msra.mxu0 %v3012
    %3831 = vmatprep.subr.mxu0 %v3017
    %3832 = vmatpush1.msra.mxu0 %v3016
    %3833 = vmatprep.subr.mxu0 %v3021
    %3834 = vmatpush1.msra.mxu0 %v3020
    %3835 = vmatprep.subr.mxu0 %v3025
    %3836 = vmatpush1.msra.mxu0 %v3024
    %3837 = vmatprep.subr.mxu0 %v3029
    %3838 = vmatpush1.msra.mxu0 %v3028
    %3839 = vmatprep.subr.mxu0 %v3033
    %3840 = vmatpush1.msra.mxu0 %v3032
    %3841 = vmatprep.subr.mxu0 %v3037
    %3842 = vmatpush1.msra.mxu0 %v3036
    %3843 = vmatprep.subr.mxu0 %v3041
    %3844 = vmatpush1.msra.mxu0 %v3040
    %3845 = vmatprep.subr.mxu0 %v3045
    %3846 = vmatpush1.msra.mxu0 %v3044
    %3847 = vmatprep.subr.mxu0 %v3049
    %3848 = vmatpush1.msra.mxu0 %v3048
    %3849 = vmatprep.subr.mxu0 %v3053
    %3850 = vmatpush1.msra.mxu0 %v3052
    %3851 = vmatprep.subr.mxu0 0.0
    %3852 = vmatpush1.msra.mxu0 0.0
    %3853 = vmatprep.subr.mxu0 0.0
    %3854 = vmatpush1.msra.mxu0 0.0
    %3855 = vmatprep.subr.mxu0 0.0
    %3856 = vmatpush1.msra.mxu0 0.0
    %3857 = vmatprep.subr.mxu0 0.0
    %3858 = vmatpush1.msra.mxu0 0.0
    %3859 = vmatprep.subr.mxu0 0.0
    %3860 = vmatpush1.msra.mxu0 0.0
    %3861 = vmatprep.subr.mxu0 0.0
    %3862 = vmatpush1.msra.mxu0 0.0
    %3863 = vmatprep.subr.mxu0 0.0
    %3864 = vmatpush1.msra.mxu0 0.0
    %3865 = vmatprep.subr.mxu0 0.0
    %3866 = vmatpush1.msra.mxu0 0.0
    %3867 = vmatprep.subr.mxu0 0.0
    %3868 = vmatpush1.msra.mxu0 0.0
    %3869 = vmatprep.subr.mxu0 0.0
    %3870 = vmatpush1.msra.mxu0 0.0
    %3871 = vmatprep.subr.mxu0 0.0
    %3872 = vmatpush1.msra.mxu0 0.0
    %3873 = vmatprep.subr.mxu0 0.0
    %3874 = vmatpush1.msra.mxu0 0.0
    %3875 = vmatprep.subr.mxu0 0.0
    %3876 = vmatpush1.msra.mxu0 0.0
    %3877 = vmatprep.subr.mxu0 0.0
    %3878 = vmatpush1.msra.mxu0 0.0
    %3879 = vmatprep.subr.mxu0 0.0
    %3880 = vmatpush1.msra.mxu0 0.0
    %3881 = vmatprep.subr.mxu0 0.0
    %3882 = vmatpush1.msra.mxu0 0.0
    %3883 = vmatprep.mubr.f32.mxu0 0.0
    %3884 = vmatmul.mubr.f32.gmra.mrb[0].mxu0 %v3818
    %v3885 = vpop.f32.mrb[0].mxu0
    %v3886 = vadd.f32 0.0, %v3885
    %v3887 = vpop.f32.mrb[0].mxu0
    %v3888 = vadd.f32 0.0, %v3887
    %3889 = vdwg.mxu0
    %3890 = vmatprep.subr.mxu0 %v2995
    %3891 = vmatpush1.msra.mxu0 %v2994
    %3892 = vmatprep.subr.mxu0 %v2999
    %3893 = vmatpush1.msra.mxu0 %v2998
    %3894 = vmatprep.subr.mxu0 %v3003
    %3895 = vmatpush1.msra.mxu0 %v3002
    %3896 = vmatprep.subr.mxu0 %v3007
    %3897 = vmatpush1.msra.mxu0 %v3006
    %3898 = vmatprep.subr.mxu0 %v3011
    %3899 = vmatpush1.msra.mxu0 %v3010
    %3900 = vmatprep.subr.mxu0 %v3015
    %3901 = vmatpush1.msra.mxu0 %v3014
    %3902 = vmatprep.subr.mxu0 %v3019
    %3903 = vmatpush1.msra.mxu0 %v3018
    %3904 = vmatprep.subr.mxu0 %v3023
    %3905 = vmatpush1.msra.mxu0 %v3022
    %3906 = vmatprep.subr.mxu0 %v3027
    %3907 = vmatpush1.msra.mxu0 %v3026
    %3908 = vmatprep.subr.mxu0 %v3031
    %3909 = vmatpush1.msra.mxu0 %v3030
    %3910 = vmatprep.subr.mxu0 %v3035
    %3911 = vmatpush1.msra.mxu0 %v3034
    %3912 = vmatprep.subr.mxu0 %v3039
    %3913 = vmatpush1.msra.mxu0 %v3038
    %3914 = vmatprep.subr.mxu0 %v3043
    %3915 = vmatpush1.msra.mxu0 %v3042
    %3916 = vmatprep.subr.mxu0 %v3047
    %3917 = vmatpush1.msra.mxu0 %v3046
    %3918 = vmatprep.subr.mxu0 %v3051
    %3919 = vmatpush1.msra.mxu0 %v3050
    %3920 = vmatprep.subr.mxu0 %v3055
    %3921 = vmatpush1.msra.mxu0 %v3054
    %3922 = vmatprep.subr.mxu0 0.0
    %3923 = vmatpush1.msra.mxu0 0.0
    %3924 = vmatprep.subr.mxu0 0.0
    %3925 = vmatpush1.msra.mxu0 0.0
    %3926 = vmatprep.subr.mxu0 0.0
    %3927 = vmatpush1.msra.mxu0 0.0
    %3928 = vmatprep.subr.mxu0 0.0
    %3929 = vmatpush1.msra.mxu0 0.0
    %3930 = vmatprep.subr.mxu0 0.0
    %3931 = vmatpush1.msra.mxu0 0.0
    %3932 = vmatprep.subr.mxu0 0.0
    %3933 = vmatpush1.msra.mxu0 0.0
    %3934 = vmatprep.subr.mxu0 0.0
    %3935 = vmatpush1.msra.mxu0 0.0
    %3936 = vmatprep.subr.mxu0 0.0
    %3937 = vmatpush1.msra.mxu0 0.0
    %3938 = vmatprep.subr.mxu0 0.0
    %3939 = vmatpush1.msra.mxu0 0.0
    %3940 = vmatprep.subr.mxu0 0.0
    %3941 = vmatpush1.msra.mxu0 0.0
    %3942 = vmatprep.subr.mxu0 0.0
    %3943 = vmatpush1.msra.mxu0 0.0
    %3944 = vmatprep.subr.mxu0 0.0
    %3945 = vmatpush1.msra.mxu0 0.0
    %3946 = vmatprep.subr.mxu0 0.0
    %3947 = vmatpush1.msra.mxu0 0.0
    %3948 = vmatprep.subr.mxu0 0.0
    %3949 = vmatpush1.msra.mxu0 0.0
    %3950 = vmatprep.subr.mxu0 0.0
    %3951 = vmatpush1.msra.mxu0 0.0
    %3952 = vmatprep.subr.mxu0 0.0
    %3953 = vmatpush1.msra.mxu0 0.0
    %3954 = vmatprep.mubr.f32.mxu0 0.0
    %3955 = vmatmul.mubr.f32.gmra.mrb[0].mxu0 %v3818
    %v3956 = vpop.f32.mrb[0].mxu0
    %v3957 = vadd.f32 0.0, %v3956
    %v3958 = vpop.f32.mrb[0].mxu0
    %v3959 = vadd.f32 0.0, %v3958
    %3960 = vdwg.mxu0
    %v3961 = vadd.f32 %v3164, %v3886
    %v3962 = vadd.f32 %v3166, %v3888
    %v3963 = vadd.f32 %v3277, %v3957
    %v3964 = vadd.f32 %v3279, %v3959
    %v3965 = vxor.u32 %v3961, 2147483648
    %v3966 = vmul.f32 %v3965, 1.442695
    %v3967 = vpow.pop %v3966
    %v3968 = vadd.f32 %v3967, 1.0
    %v3969 = vrcp.pop %v3968
    %v3970 = vmul.f32 1.0, %v3969
    %v3971 = vxor.u32 %v3962, 2147483648
    %v3972 = vmul.f32 %v3971, 1.442695
    %v3973 = vpow.pop %v3972
    %v3974 = vadd.f32 %v3973, 1.0
    %v3975 = vrcp.pop %v3974
    %v3976 = vmul.f32 1.0, %v3975
    %v3977 = vtanh.pop %v3963
    %v3978 = vxor.u32 %v3964, 2147483648
    %v3979 = vmul.f32 %v3978, 1.442695
    %v3980 = vpow.pop %v3979
    %v3981 = vadd.f32 %v3980, 1.0
    %v3982 = vrcp.pop %v3981
    %v3983 = vmul.f32 1.0, %v3982
    %v3984 = vmul.f32 %v3976, %v3816
    %v3985 = vmul.f32 %v3970, %v3977
    %v3986 = vadd.f32 %v3984, %v3985
    %v3987 = vtanh.pop %v3986
    %v3988 = vmul.f32 %v3983, %v3987
    %3989 = vmatprep.subr.mxu0 %v2993
    %3990 = vmatpush1.msra.mxu0 %v2992
    %3991 = vmatprep.subr.mxu0 %v2997
    %3992 = vmatpush1.msra.mxu0 %v2996
    %3993 = vmatprep.subr.mxu0 %v3001
    %3994 = vmatpush1.msra.mxu0 %v3000
    %3995 = vmatprep.subr.mxu0 %v3005
    %3996 = vmatpush1.msra.mxu0 %v3004
    %3997 = vmatprep.subr.mxu0 %v3009
    %3998 = vmatpush1.msra.mxu0 %v3008
    %3999 = vmatprep.subr.mxu0 %v3013
    %4000 = vmatpush1.msra.mxu0 %v3012
    %4001 = vmatprep.subr.mxu0 %v3017
    %4002 = vmatpush1.msra.mxu0 %v3016
    %4003 = vmatprep.subr.mxu0 %v3021
    %4004 = vmatpush1.msra.mxu0 %v3020
    %4005 = vmatprep.subr.mxu0 %v3025
    %4006 = vmatpush1.msra.mxu0 %v3024
    %4007 = vmatprep.subr.mxu0 %v3029
    %4008 = vmatpush1.msra.mxu0 %v3028
    %4009 = vmatprep.subr.mxu0 %v3033
    %4010 = vmatpush1.msra.mxu0 %v3032
    %4011 = vmatprep.subr.mxu0 %v3037
    %4012 = vmatpush1.msra.mxu0 %v3036
    %4013 = vmatprep.subr.mxu0 %v3041
    %4014 = vmatpush1.msra.mxu0 %v3040
    %4015 = vmatprep.subr.mxu0 %v3045
    %4016 = vmatpush1.msra.mxu0 %v3044
    %4017 = vmatprep.subr.mxu0 %v3049
    %4018 = vmatpush1.msra.mxu0 %v3048
    %4019 = vmatprep.subr.mxu0 %v3053
    %4020 = vmatpush1.msra.mxu0 %v3052
    %4021 = vmatprep.subr.mxu0 0.0
    %4022 = vmatpush1.msra.mxu0 0.0
    %4023 = vmatprep.subr.mxu0 0.0
    %4024 = vmatpush1.msra.mxu0 0.0
    %4025 = vmatprep.subr.mxu0 0.0
    %4026 = vmatpush1.msra.mxu0 0.0
    %4027 = vmatprep.subr.mxu0 0.0
    %4028 = vmatpush1.msra.mxu0 0.0
    %4029 = vmatprep.subr.mxu0 0.0
    %4030 = vmatpush1.msra.mxu0 0.0
    %4031 = vmatprep.subr.mxu0 0.0
    %4032 = vmatpush1.msra.mxu0 0.0
    %4033 = vmatprep.subr.mxu0 0.0
    %4034 = vmatpush1.msra.mxu0 0.0
    %4035 = vmatprep.subr.mxu0 0.0
    %4036 = vmatpush1.msra.mxu0 0.0
    %4037 = vmatprep.subr.mxu0 0.0
    %4038 = vmatpush1.msra.mxu0 0.0
    %4039 = vmatprep.subr.mxu0 0.0
    %4040 = vmatpush1.msra.mxu0 0.0
    %4041 = vmatprep.subr.mxu0 0.0
    %4042 = vmatpush1.msra.mxu0 0.0
    %4043 = vmatprep.subr.mxu0 0.0
    %4044 = vmatpush1.msra.mxu0 0.0
    %4045 = vmatprep.subr.mxu0 0.0
    %4046 = vmatpush1.msra.mxu0 0.0
    %4047 = vmatprep.subr.mxu0 0.0
    %4048 = vmatpush1.msra.mxu0 0.0
    %4049 = vmatprep.subr.mxu0 0.0
    %4050 = vmatpush1.msra.mxu0 0.0
    %4051 = vmatprep.subr.mxu0 0.0
    %4052 = vmatpush1.msra.mxu0 0.0
    %4053 = vmatprep.mubr.f32.mxu0 0.0
    %4054 = vmatmul.mubr.f32.gmra.mrb[0].mxu0 %v3988
    %v4055 = vpop.f32.mrb[0].mxu0
    %v4056 = vadd.f32 0.0, %v4055
    %v4057 = vpop.f32.mrb[0].mxu0
    %v4058 = vadd.f32 0.0, %v4057
    %4059 = vdwg.mxu0
    %4060 = vmatprep.subr.mxu0 %v2995
    %4061 = vmatpush1.msra.mxu0 %v2994
    %4062 = vmatprep.subr.mxu0 %v2999
    %4063 = vmatpush1.msra.mxu0 %v2998
    %4064 = vmatprep.subr.mxu0 %v3003
    %4065 = vmatpush1.msra.mxu0 %v3002
    %4066 = vmatprep.subr.mxu0 %v3007
    %4067 = vmatpush1.msra.mxu0 %v3006
    %4068 = vmatprep.subr.mxu0 %v3011
    %4069 = vmatpush1.msra.mxu0 %v3010
    %4070 = vmatprep.subr.mxu0 %v3015
    %4071 = vmatpush1.msra.mxu0 %v3014
    %4072 = vmatprep.subr.mxu0 %v3019
    %4073 = vmatpush1.msra.mxu0 %v3018
    %4074 = vmatprep.subr.mxu0 %v3023
    %4075 = vmatpush1.msra.mxu0 %v3022
    %4076 = vmatprep.subr.mxu0 %v3027
    %4077 = vmatpush1.msra.mxu0 %v3026
    %4078 = vmatprep.subr.mxu0 %v3031
    %4079 = vmatpush1.msra.mxu0 %v3030
    %4080 = vmatprep.subr.mxu0 %v3035
    %4081 = vmatpush1.msra.mxu0 %v3034
    %4082 = vmatprep.subr.mxu0 %v3039
    %4083 = vmatpush1.msra.mxu0 %v3038
    %4084 = vmatprep.subr.mxu0 %v3043
    %4085 = vmatpush1.msra.mxu0 %v3042
    %4086 = vmatprep.subr.mxu0 %v3047
    %4087 = vmatpush1.msra.mxu0 %v3046
    %4088 = vmatprep.subr.mxu0 %v3051
    %4089 = vmatpush1.msra.mxu0 %v3050
    %4090 = vmatprep.subr.mxu0 %v3055
    %4091 = vmatpush1.msra.mxu0 %v3054
    %4092 = vmatprep.subr.mxu0 0.0
    %4093 = vmatpush1.msra.mxu0 0.0
    %4094 = vmatprep.subr.mxu0 0.0
    %4095 = vmatpush1.msra.mxu0 0.0
    %4096 = vmatprep.subr.mxu0 0.0
    %4097 = vmatpush1.msra.mxu0 0.0
    %4098 = vmatprep.subr.mxu0 0.0
    %4099 = vmatpush1.msra.mxu0 0.0
    %4100 = vmatprep.subr.mxu0 0.0
    %4101 = vmatpush1.msra.mxu0 0.0
    %4102 = vmatprep.subr.mxu0 0.0
    %4103 = vmatpush1.msra.mxu0 0.0
    %4104 = vmatprep.subr.mxu0 0.0
    %4105 = vmatpush1.msra.mxu0 0.0
    %4106 = vmatprep.subr.mxu0 0.0
    %4107 = vmatpush1.msra.mxu0 0.0
    %4108 = vmatprep.subr.mxu0 0.0
    %4109 = vmatpush1.msra.mxu0 0.0
    %4110 = vmatprep.subr.mxu0 0.0
    %4111 = vmatpush1.msra.mxu0 0.0
    %4112 = vmatprep.subr.mxu0 0.0
    %4113 = vmatpush1.msra.mxu0 0.0
    %4114 = vmatprep.subr.mxu0 0.0
    %4115 = vmatpush1.msra.mxu0 0.0
    %4116 = vmatprep.subr.mxu0 0.0
    %4117 = vmatpush1.msra.mxu0 0.0
    %4118 = vmatprep.subr.mxu0 0.0
    %4119 = vmatpush1.msra.mxu0 0.0
    %4120 = vmatprep.subr.mxu0 0.0
    %4121 = vmatpush1.msra.mxu0 0.0
    %4122 = vmatprep.subr.mxu0 0.0
    %4123 = vmatpush1.msra.mxu0 0.0
    %4124 = vmatprep.mubr.f32.mxu0 0.0
    %4125 = vmatmul.mubr.f32.gmra.mrb[0].mxu0 %v3988
    %v4126 = vpop.f32.mrb[0].mxu0
    %v4127 = vadd.f32 0.0, %v4126
    %v4128 = vpop.f32.mrb[0].mxu0
    %v4129 = vadd.f32 0.0, %v4128
    %4130 = vdwg.mxu0
    %v4131 = vadd.f32 %v3170, %v4056
    %v4132 = vadd.f32 %v3172, %v4058
    %v4133 = vadd.f32 %v3283, %v4127
    %v4134 = vadd.f32 %v3285, %v4129
    %v4135 = vxor.u32 %v4131, 2147483648
    %v4136 = vmul.f32 %v4135, 1.442695
    %v4137 = vpow.pop %v4136
    %v4138 = vadd.f32 %v4137, 1.0
    %v4139 = vrcp.pop %v4138
    %v4140 = vmul.f32 1.0, %v4139
    %v4141 = vxor.u32 %v4132, 2147483648
    %v4142 = vmul.f32 %v4141, 1.442695
    %v4143 = vpow.pop %v4142
    %v4144 = vadd.f32 %v4143, 1.0
    %v4145 = vrcp.pop %v4144
    %v4146 = vmul.f32 1.0, %v4145
    %v4147 = vtanh.pop %v4133
    %v4148 = vxor.u32 %v4134, 2147483648
    %v4149 = vmul.f32 %v4148, 1.442695
    %v4150 = vpow.pop %v4149
    %v4151 = vadd.f32 %v4150, 1.0
    %v4152 = vrcp.pop %v4151
    %v4153 = vmul.f32 1.0, %v4152
    %v4154 = vmul.f32 %v4146, %v3986
    %v4155 = vmul.f32 %v4140, %v4147
    %v4156 = vadd.f32 %v4154, %v4155
    %v4157 = vtanh.pop %v4156
    %v4158 = vmul.f32 %v4153, %v4157
    %4159 = vmatprep.subr.mxu0 %v2993
    %4160 = vmatpush1.msra.mxu0 %v2992
    %4161 = vmatprep.subr.mxu0 %v2997
    %4162 = vmatpush1.msra.mxu0 %v2996
    %4163 = vmatprep.subr.mxu0 %v3001
    %4164 = vmatpush1.msra.mxu0 %v3000
    %4165 = vmatprep.subr.mxu0 %v3005
    %4166 = vmatpush1.msra.mxu0 %v3004
    %4167 = vmatprep.subr.mxu0 %v3009
    %4168 = vmatpush1.msra.mxu0 %v3008
    %4169 = vmatprep.subr.mxu0 %v3013
    %4170 = vmatpush1.msra.mxu0 %v3012
    %4171 = vmatprep.subr.mxu0 %v3017
    %4172 = vmatpush1.msra.mxu0 %v3016
    %4173 = vmatprep.subr.mxu0 %v3021
    %4174 = vmatpush1.msra.mxu0 %v3020
    %4175 = vmatprep.subr.mxu0 %v3025
    %4176 = vmatpush1.msra.mxu0 %v3024
    %4177 = vmatprep.subr.mxu0 %v3029
    %4178 = vmatpush1.msra.mxu0 %v3028
    %4179 = vmatprep.subr.mxu0 %v3033
    %4180 = vmatpush1.msra.mxu0 %v3032
    %4181 = vmatprep.subr.mxu0 %v3037
    %4182 = vmatpush1.msra.mxu0 %v3036
    %4183 = vmatprep.subr.mxu0 %v3041
    %4184 = vmatpush1.msra.mxu0 %v3040
    %4185 = vmatprep.subr.mxu0 %v3045
    %4186 = vmatpush1.msra.mxu0 %v3044
    %4187 = vmatprep.subr.mxu0 %v3049
    %4188 = vmatpush1.msra.mxu0 %v3048
    %4189 = vmatprep.subr.mxu0 %v3053
    %4190 = vmatpush1.msra.mxu0 %v3052
    %4191 = vmatprep.subr.mxu0 0.0
    %4192 = vmatpush1.msra.mxu0 0.0
    %4193 = vmatprep.subr.mxu0 0.0
    %4194 = vmatpush1.msra.mxu0 0.0
    %4195 = vmatprep.subr.mxu0 0.0
    %4196 = vmatpush1.msra.mxu0 0.0
    %4197 = vmatprep.subr.mxu0 0.0
    %4198 = vmatpush1.msra.mxu0 0.0
    %4199 = vmatprep.subr.mxu0 0.0
    %4200 = vmatpush1.msra.mxu0 0.0
    %4201 = vmatprep.subr.mxu0 0.0
    %4202 = vmatpush1.msra.mxu0 0.0
    %4203 = vmatprep.subr.mxu0 0.0
    %4204 = vmatpush1.msra.mxu0 0.0
    %4205 = vmatprep.subr.mxu0 0.0
    %4206 = vmatpush1.msra.mxu0 0.0
    %4207 = vmatprep.subr.mxu0 0.0
    %4208 = vmatpush1.msra.mxu0 0.0
    %4209 = vmatprep.subr.mxu0 0.0
    %4210 = vmatpush1.msra.mxu0 0.0
    %4211 = vmatprep.subr.mxu0 0.0
    %4212 = vmatpush1.msra.mxu0 0.0
    %4213 = vmatprep.subr.mxu0 0.0
    %4214 = vmatpush1.msra.mxu0 0.0
    %4215 = vmatprep.subr.mxu0 0.0
    %4216 = vmatpush1.msra.mxu0 0.0
    %4217 = vmatprep.subr.mxu0 0.0
    %4218 = vmatpush1.msra.mxu0 0.0
    %4219 = vmatprep.subr.mxu0 0.0
    %4220 = vmatpush1.msra.mxu0 0.0
    %4221 = vmatprep.subr.mxu0 0.0
    %4222 = vmatpush1.msra.mxu0 0.0
    %4223 = vmatprep.mubr.f32.mxu0 0.0
    %4224 = vmatmul.mubr.f32.gmra.mrb[0].mxu0 %v4158
    %v4225 = vpop.f32.mrb[0].mxu0
    %v4226 = vadd.f32 0.0, %v4225
    %v4227 = vpop.f32.mrb[0].mxu0
    %v4228 = vadd.f32 0.0, %v4227
    %4229 = vdwg.mxu0
    %4230 = vmatprep.subr.mxu0 %v2995
    %4231 = vmatpush1.msra.mxu0 %v2994
    %4232 = vmatprep.subr.mxu0 %v2999
    %4233 = vmatpush1.msra.mxu0 %v2998
    %4234 = vmatprep.subr.mxu0 %v3003
    %4235 = vmatpush1.msra.mxu0 %v3002
    %4236 = vmatprep.subr.mxu0 %v3007
    %4237 = vmatpush1.msra.mxu0 %v3006
    %4238 = vmatprep.subr.mxu0 %v3011
    %4239 = vmatpush1.msra.mxu0 %v3010
    %4240 = vmatprep.subr.mxu0 %v3015
    %4241 = vmatpush1.msra.mxu0 %v3014
    %4242 = vmatprep.subr.mxu0 %v3019
    %4243 = vmatpush1.msra.mxu0 %v3018
    %4244 = vmatprep.subr.mxu0 %v3023
    %4245 = vmatpush1.msra.mxu0 %v3022
    %4246 = vmatprep.subr.mxu0 %v3027
    %4247 = vmatpush1.msra.mxu0 %v3026
    %4248 = vmatprep.subr.mxu0 %v3031
    %4249 = vmatpush1.msra.mxu0 %v3030
    %4250 = vmatprep.subr.mxu0 %v3035
    %4251 = vmatpush1.msra.mxu0 %v3034
    %4252 = vmatprep.subr.mxu0 %v3039
    %4253 = vmatpush1.msra.mxu0 %v3038
    %4254 = vmatprep.subr.mxu0 %v3043
    %4255 = vmatpush1.msra.mxu0 %v3042
    %4256 = vmatprep.subr.mxu0 %v3047
    %4257 = vmatpush1.msra.mxu0 %v3046
    %4258 = vmatprep.subr.mxu0 %v3051
    %4259 = vmatpush1.msra.mxu0 %v3050
    %4260 = vmatprep.subr.mxu0 %v3055
    %4261 = vmatpush1.msra.mxu0 %v3054
    %4262 = vmatprep.subr.mxu0 0.0
    %4263 = vmatpush1.msra.mxu0 0.0
    %4264 = vmatprep.subr.mxu0 0.0
    %4265 = vmatpush1.msra.mxu0 0.0
    %4266 = vmatprep.subr.mxu0 0.0
    %4267 = vmatpush1.msra.mxu0 0.0
    %4268 = vmatprep.subr.mxu0 0.0
    %4269 = vmatpush1.msra.mxu0 0.0
    %4270 = vmatprep.subr.mxu0 0.0
    %4271 = vmatpush1.msra.mxu0 0.0
    %4272 = vmatprep.subr.mxu0 0.0
    %4273 = vmatpush1.msra.mxu0 0.0
    %4274 = vmatprep.subr.mxu0 0.0
    %4275 = vmatpush1.msra.mxu0 0.0
    %4276 = vmatprep.subr.mxu0 0.0
    %4277 = vmatpush1.msra.mxu0 0.0
    %4278 = vmatprep.subr.mxu0 0.0
    %4279 = vmatpush1.msra.mxu0 0.0
    %4280 = vmatprep.subr.mxu0 0.0
    %4281 = vmatpush1.msra.mxu0 0.0
    %4282 = vmatprep.subr.mxu0 0.0
    %4283 = vmatpush1.msra.mxu0 0.0
    %4284 = vmatprep.subr.mxu0 0.0
    %4285 = vmatpush1.msra.mxu0 0.0
    %4286 = vmatprep.subr.mxu0 0.0
    %4287 = vmatpush1.msra.mxu0 0.0
    %4288 = vmatprep.subr.mxu0 0.0
    %4289 = vmatpush1.msra.mxu0 0.0
    %4290 = vmatprep.subr.mxu0 0.0
    %4291 = vmatpush1.msra.mxu0 0.0
    %4292 = vmatprep.subr.mxu0 0.0
    %4293 = vmatpush1.msra.mxu0 0.0
    %4294 = vmatprep.mubr.f32.mxu0 0.0
    %4295 = vmatmul.mubr.f32.gmra.mrb[0].mxu0 %v4158
    %v4296 = vpop.f32.mrb[0].mxu0
    %v4297 = vadd.f32 0.0, %v4296
    %v4298 = vpop.f32.mrb[0].mxu0
    %v4299 = vadd.f32 0.0, %v4298
    %4300 = vdwg.mxu0
    %v4301 = vadd.f32 %v3176, %v4226
    %v4302 = vadd.f32 %v3178, %v4228
    %v4303 = vadd.f32 %v3289, %v4297
    %v4304 = vadd.f32 %v3291, %v4299
    %v4305 = vxor.u32 %v4301, 2147483648
    %v4306 = vmul.f32 %v4305, 1.442695
    %v4307 = vpow.pop %v4306
    %v4308 = vadd.f32 %v4307, 1.0
    %v4309 = vrcp.pop %v4308
    %v4310 = vmul.f32 1.0, %v4309
    %v4311 = vxor.u32 %v4302, 2147483648
    %v4312 = vmul.f32 %v4311, 1.442695
    %v4313 = vpow.pop %v4312
    %v4314 = vadd.f32 %v4313, 1.0
    %v4315 = vrcp.pop %v4314
    %v4316 = vmul.f32 1.0, %v4315
    %v4317 = vtanh.pop %v4303
    %v4318 = vxor.u32 %v4304, 2147483648
    %v4319 = vmul.f32 %v4318, 1.442695
    %v4320 = vpow.pop %v4319
    %v4321 = vadd.f32 %v4320, 1.0
    %v4322 = vrcp.pop %v4321
    %v4323 = vmul.f32 1.0, %v4322
    %v4324 = vmul.f32 %v4316, %v4156
    %v4325 = vmul.f32 %v4310, %v4317
    %v4326 = vadd.f32 %v4324, %v4325
    %v4327 = vtanh.pop %v4326
    %v4328 = vmul.f32 %v4323, %v4327
    %4329 = vmatprep.subr.mxu0 %v2993
    %4330 = vmatpush1.msra.mxu0 %v2992
    %4331 = vmatprep.subr.mxu0 %v2997
    %4332 = vmatpush1.msra.mxu0 %v2996
    %4333 = vmatprep.subr.mxu0 %v3001
    %4334 = vmatpush1.msra.mxu0 %v3000
    %4335 = vmatprep.subr.mxu0 %v3005
    %4336 = vmatpush1.msra.mxu0 %v3004
    %4337 = vmatprep.subr.mxu0 %v3009
    %4338 = vmatpush1.msra.mxu0 %v3008
    %4339 = vmatprep.subr.mxu0 %v3013
    %4340 = vmatpush1.msra.mxu0 %v3012
    %4341 = vmatprep.subr.mxu0 %v3017
    %4342 = vmatpush1.msra.mxu0 %v3016
    %4343 = vmatprep.subr.mxu0 %v3021
    %4344 = vmatpush1.msra.mxu0 %v3020
    %4345 = vmatprep.subr.mxu0 %v3025
    %4346 = vmatpush1.msra.mxu0 %v3024
    %4347 = vmatprep.subr.mxu0 %v3029
    %4348 = vmatpush1.msra.mxu0 %v3028
    %4349 = vmatprep.subr.mxu0 %v3033
    %4350 = vmatpush1.msra.mxu0 %v3032
    %4351 = vmatprep.subr.mxu0 %v3037
    %4352 = vmatpush1.msra.mxu0 %v3036
    %4353 = vmatprep.subr.mxu0 %v3041
    %4354 = vmatpush1.msra.mxu0 %v3040
    %4355 = vmatprep.subr.mxu0 %v3045
    %4356 = vmatpush1.msra.mxu0 %v3044
    %4357 = vmatprep.subr.mxu0 %v3049
    %4358 = vmatpush1.msra.mxu0 %v3048
    %4359 = vmatprep.subr.mxu0 %v3053
    %4360 = vmatpush1.msra.mxu0 %v3052
    %4361 = vmatprep.subr.mxu0 0.0
    %4362 = vmatpush1.msra.mxu0 0.0
    %4363 = vmatprep.subr.mxu0 0.0
    %4364 = vmatpush1.msra.mxu0 0.0
    %4365 = vmatprep.subr.mxu0 0.0
    %4366 = vmatpush1.msra.mxu0 0.0
    %4367 = vmatprep.subr.mxu0 0.0
    %4368 = vmatpush1.msra.mxu0 0.0
    %4369 = vmatprep.subr.mxu0 0.0
    %4370 = vmatpush1.msra.mxu0 0.0
    %4371 = vmatprep.subr.mxu0 0.0
    %4372 = vmatpush1.msra.mxu0 0.0
    %4373 = vmatprep.subr.mxu0 0.0
    %4374 = vmatpush1.msra.mxu0 0.0
    %4375 = vmatprep.subr.mxu0 0.0
    %4376 = vmatpush1.msra.mxu0 0.0
    %4377 = vmatprep.subr.mxu0 0.0
    %4378 = vmatpush1.msra.mxu0 0.0
    %4379 = vmatprep.subr.mxu0 0.0
    %4380 = vmatpush1.msra.mxu0 0.0
    %4381 = vmatprep.subr.mxu0 0.0
    %4382 = vmatpush1.msra.mxu0 0.0
    %4383 = vmatprep.subr.mxu0 0.0
    %4384 = vmatpush1.msra.mxu0 0.0
    %4385 = vmatprep.subr.mxu0 0.0
    %4386 = vmatpush1.msra.mxu0 0.0
    %4387 = vmatprep.subr.mxu0 0.0
    %4388 = vmatpush1.msra.mxu0 0.0
    %4389 = vmatprep.subr.mxu0 0.0
    %4390 = vmatpush1.msra.mxu0 0.0
    %4391 = vmatprep.subr.mxu0 0.0
    %4392 = vmatpush1.msra.mxu0 0.0
    %4393 = vmatprep.mubr.f32.mxu0 0.0
    %4394 = vmatmul.mubr.f32.gmra.mrb[0].mxu0 %v4328
    %v4395 = vpop.f32.mrb[0].mxu0
    %v4396 = vadd.f32 0.0, %v4395
    %v4397 = vpop.f32.mrb[0].mxu0
    %v4398 = vadd.f32 0.0, %v4397
    %4399 = vdwg.mxu0
    %4400 = vmatprep.subr.mxu0 %v2995
    %4401 = vmatpush1.msra.mxu0 %v2994
    %4402 = vmatprep.subr.mxu0 %v2999
    %4403 = vmatpush1.msra.mxu0 %v2998
    %4404 = vmatprep.subr.mxu0 %v3003
    %4405 = vmatpush1.msra.mxu0 %v3002
    %4406 = vmatprep.subr.mxu0 %v3007
    %4407 = vmatpush1.msra.mxu0 %v3006
    %4408 = vmatprep.subr.mxu0 %v3011
    %4409 = vmatpush1.msra.mxu0 %v3010
    %4410 = vmatprep.subr.mxu0 %v3015
    %4411 = vmatpush1.msra.mxu0 %v3014
    %4412 = vmatprep.subr.mxu0 %v3019
    %4413 = vmatpush1.msra.mxu0 %v3018
    %4414 = vmatprep.subr.mxu0 %v3023
    %4415 = vmatpush1.msra.mxu0 %v3022
    %4416 = vmatprep.subr.mxu0 %v3027
    %4417 = vmatpush1.msra.mxu0 %v3026
    %4418 = vmatprep.subr.mxu0 %v3031
    %4419 = vmatpush1.msra.mxu0 %v3030
    %4420 = vmatprep.subr.mxu0 %v3035
    %4421 = vmatpush1.msra.mxu0 %v3034
    %4422 = vmatprep.subr.mxu0 %v3039
    %4423 = vmatpush1.msra.mxu0 %v3038
    %4424 = vmatprep.subr.mxu0 %v3043
    %4425 = vmatpush1.msra.mxu0 %v3042
    %4426 = vmatprep.subr.mxu0 %v3047
    %4427 = vmatpush1.msra.mxu0 %v3046
    %4428 = vmatprep.subr.mxu0 %v3051
    %4429 = vmatpush1.msra.mxu0 %v3050
    %4430 = vmatprep.subr.mxu0 %v3055
    %4431 = vmatpush1.msra.mxu0 %v3054
    %4432 = vmatprep.subr.mxu0 0.0
    %4433 = vmatpush1.msra.mxu0 0.0
    %4434 = vmatprep.subr.mxu0 0.0
    %4435 = vmatpush1.msra.mxu0 0.0
    %4436 = vmatprep.subr.mxu0 0.0
    %4437 = vmatpush1.msra.mxu0 0.0
    %4438 = vmatprep.subr.mxu0 0.0
    %4439 = vmatpush1.msra.mxu0 0.0
    %4440 = vmatprep.subr.mxu0 0.0
    %4441 = vmatpush1.msra.mxu0 0.0
    %4442 = vmatprep.subr.mxu0 0.0
    %4443 = vmatpush1.msra.mxu0 0.0
    %4444 = vmatprep.subr.mxu0 0.0
    %4445 = vmatpush1.msra.mxu0 0.0
    %4446 = vmatprep.subr.mxu0 0.0
    %4447 = vmatpush1.msra.mxu0 0.0
    %4448 = vmatprep.subr.mxu0 0.0
    %4449 = vmatpush1.msra.mxu0 0.0
    %4450 = vmatprep.subr.mxu0 0.0
    %4451 = vmatpush1.msra.mxu0 0.0
    %4452 = vmatprep.subr.mxu0 0.0
    %4453 = vmatpush1.msra.mxu0 0.0
    %4454 = vmatprep.subr.mxu0 0.0
    %4455 = vmatpush1.msra.mxu0 0.0
    %4456 = vmatprep.subr.mxu0 0.0
    %4457 = vmatpush1.msra.mxu0 0.0
    %4458 = vmatprep.subr.mxu0 0.0
    %4459 = vmatpush1.msra.mxu0 0.0
    %4460 = vmatprep.subr.mxu0 0.0
    %4461 = vmatpush1.msra.mxu0 0.0
    %4462 = vmatprep.subr.mxu0 0.0
    %4463 = vmatpush1.msra.mxu0 0.0
    %4464 = vmatprep.mubr.f32.mxu0 0.0
    %4465 = vmatmul.mubr.f32.gmra.mrb[0].mxu0 %v4328
    %v4466 = vpop.f32.mrb[0].mxu0
    %v4467 = vadd.f32 0.0, %v4466
    %v4468 = vpop.f32.mrb[0].mxu0
    %v4469 = vadd.f32 0.0, %v4468
    %4470 = vdwg.mxu0
    %v4471 = vadd.f32 %v3182, %v4396
    %v4472 = vadd.f32 %v3184, %v4398
    %v4473 = vadd.f32 %v3295, %v4467
    %v4474 = vadd.f32 %v3297, %v4469
    %v4475 = vxor.u32 %v4471, 2147483648
    %v4476 = vmul.f32 %v4475, 1.442695
    %v4477 = vpow.pop %v4476
    %v4478 = vadd.f32 %v4477, 1.0
    %v4479 = vrcp.pop %v4478
    %v4480 = vmul.f32 1.0, %v4479
    %v4481 = vxor.u32 %v4472, 2147483648
    %v4482 = vmul.f32 %v4481, 1.442695
    %v4483 = vpow.pop %v4482
    %v4484 = vadd.f32 %v4483, 1.0
    %v4485 = vrcp.pop %v4484
    %v4486 = vmul.f32 1.0, %v4485
    %v4487 = vtanh.pop %v4473
    %v4488 = vxor.u32 %v4474, 2147483648
    %v4489 = vmul.f32 %v4488, 1.442695
    %v4490 = vpow.pop %v4489
    %v4491 = vadd.f32 %v4490, 1.0
    %v4492 = vrcp.pop %v4491
    %v4493 = vmul.f32 1.0, %v4492
    %v4494 = vmul.f32 %v4486, %v4326
    %v4495 = vmul.f32 %v4480, %v4487
    %v4496 = vadd.f32 %v4494, %v4495
    %v4497 = vtanh.pop %v4496
    %v4498 = vmul.f32 %v4493, %v4497
    %4499 = vmatprep.subr.mxu0 %v2993
    %4500 = vmatpush1.msra.mxu0 %v2992
    %4501 = vmatprep.subr.mxu0 %v2997
    %4502 = vmatpush1.msra.mxu0 %v2996
    %4503 = vmatprep.subr.mxu0 %v3001
    %4504 = vmatpush1.msra.mxu0 %v3000
    %4505 = vmatprep.subr.mxu0 %v3005
    %4506 = vmatpush1.msra.mxu0 %v3004
    %4507 = vmatprep.subr.mxu0 %v3009
    %4508 = vmatpush1.msra.mxu0 %v3008
    %4509 = vmatprep.subr.mxu0 %v3013
    %4510 = vmatpush1.msra.mxu0 %v3012
    %4511 = vmatprep.subr.mxu0 %v3017
    %4512 = vmatpush1.msra.mxu0 %v3016
    %4513 = vmatprep.subr.mxu0 %v3021
    %4514 = vmatpush1.msra.mxu0 %v3020
    %4515 = vmatprep.subr.mxu0 %v3025
    %4516 = vmatpush1.msra.mxu0 %v3024
    %4517 = vmatprep.subr.mxu0 %v3029
    %4518 = vmatpush1.msra.mxu0 %v3028
    %4519 = vmatprep.subr.mxu0 %v3033
    %4520 = vmatpush1.msra.mxu0 %v3032
    %4521 = vmatprep.subr.mxu0 %v3037
    %4522 = vmatpush1.msra.mxu0 %v3036
    %4523 = vmatprep.subr.mxu0 %v3041
    %4524 = vmatpush1.msra.mxu0 %v3040
    %4525 = vmatprep.subr.mxu0 %v3045
    %4526 = vmatpush1.msra.mxu0 %v3044
    %4527 = vmatprep.subr.mxu0 %v3049
    %4528 = vmatpush1.msra.mxu0 %v3048
    %4529 = vmatprep.subr.mxu0 %v3053
    %4530 = vmatpush1.msra.mxu0 %v3052
    %4531 = vmatprep.subr.mxu0 0.0
    %4532 = vmatpush1.msra.mxu0 0.0
    %4533 = vmatprep.subr.mxu0 0.0
    %4534 = vmatpush1.msra.mxu0 0.0
    %4535 = vmatprep.subr.mxu0 0.0
    %4536 = vmatpush1.msra.mxu0 0.0
    %4537 = vmatprep.subr.mxu0 0.0
    %4538 = vmatpush1.msra.mxu0 0.0
    %4539 = vmatprep.subr.mxu0 0.0
    %4540 = vmatpush1.msra.mxu0 0.0
    %4541 = vmatprep.subr.mxu0 0.0
    %4542 = vmatpush1.msra.mxu0 0.0
    %4543 = vmatprep.subr.mxu0 0.0
    %4544 = vmatpush1.msra.mxu0 0.0
    %4545 = vmatprep.subr.mxu0 0.0
    %4546 = vmatpush1.msra.mxu0 0.0
    %4547 = vmatprep.subr.mxu0 0.0
    %4548 = vmatpush1.msra.mxu0 0.0
    %4549 = vmatprep.subr.mxu0 0.0
    %4550 = vmatpush1.msra.mxu0 0.0
    %4551 = vmatprep.subr.mxu0 0.0
    %4552 = vmatpush1.msra.mxu0 0.0
    %4553 = vmatprep.subr.mxu0 0.0
    %4554 = vmatpush1.msra.mxu0 0.0
    %4555 = vmatprep.subr.mxu0 0.0
    %4556 = vmatpush1.msra.mxu0 0.0
    %4557 = vmatprep.subr.mxu0 0.0
    %4558 = vmatpush1.msra.mxu0 0.0
    %4559 = vmatprep.subr.mxu0 0.0
    %4560 = vmatpush1.msra.mxu0 0.0
    %4561 = vmatprep.subr.mxu0 0.0
    %4562 = vmatpush1.msra.mxu0 0.0
    %4563 = vmatprep.mubr.f32.mxu0 0.0
    %4564 = vmatmul.mubr.f32.gmra.mrb[0].mxu0 %v4498
    %v4565 = vpop.f32.mrb[0].mxu0
    %v4566 = vadd.f32 0.0, %v4565
    %v4567 = vpop.f32.mrb[0].mxu0
    %v4568 = vadd.f32 0.0, %v4567
    %4569 = vdwg.mxu0
    %4570 = vmatprep.subr.mxu0 %v2995
    %4571 = vmatpush1.msra.mxu0 %v2994
    %4572 = vmatprep.subr.mxu0 %v2999
    %4573 = vmatpush1.msra.mxu0 %v2998
    %4574 = vmatprep.subr.mxu0 %v3003
    %4575 = vmatpush1.msra.mxu0 %v3002
    %4576 = vmatprep.subr.mxu0 %v3007
    %4577 = vmatpush1.msra.mxu0 %v3006
    %4578 = vmatprep.subr.mxu0 %v3011
    %4579 = vmatpush1.msra.mxu0 %v3010
    %4580 = vmatprep.subr.mxu0 %v3015
    %4581 = vmatpush1.msra.mxu0 %v3014
    %4582 = vmatprep.subr.mxu0 %v3019
    %4583 = vmatpush1.msra.mxu0 %v3018
    %4584 = vmatprep.subr.mxu0 %v3023
    %4585 = vmatpush1.msra.mxu0 %v3022
    %4586 = vmatprep.subr.mxu0 %v3027
    %4587 = vmatpush1.msra.mxu0 %v3026
    %4588 = vmatprep.subr.mxu0 %v3031
    %4589 = vmatpush1.msra.mxu0 %v3030
    %4590 = vmatprep.subr.mxu0 %v3035
    %4591 = vmatpush1.msra.mxu0 %v3034
    %4592 = vmatprep.subr.mxu0 %v3039
    %4593 = vmatpush1.msra.mxu0 %v3038
    %4594 = vmatprep.subr.mxu0 %v3043
    %4595 = vmatpush1.msra.mxu0 %v3042
    %4596 = vmatprep.subr.mxu0 %v3047
    %4597 = vmatpush1.msra.mxu0 %v3046
    %4598 = vmatprep.subr.mxu0 %v3051
    %4599 = vmatpush1.msra.mxu0 %v3050
    %4600 = vmatprep.subr.mxu0 %v3055
    %4601 = vmatpush1.msra.mxu0 %v3054
    %4602 = vmatprep.subr.mxu0 0.0
    %4603 = vmatpush1.msra.mxu0 0.0
    %4604 = vmatprep.subr.mxu0 0.0
    %4605 = vmatpush1.msra.mxu0 0.0
    %4606 = vmatprep.subr.mxu0 0.0
    %4607 = vmatpush1.msra.mxu0 0.0
    %4608 = vmatprep.subr.mxu0 0.0
    %4609 = vmatpush1.msra.mxu0 0.0
    %4610 = vmatprep.subr.mxu0 0.0
    %4611 = vmatpush1.msra.mxu0 0.0
    %4612 = vmatprep.subr.mxu0 0.0
    %4613 = vmatpush1.msra.mxu0 0.0
    %4614 = vmatprep.subr.mxu0 0.0
    %4615 = vmatpush1.msra.mxu0 0.0
    %4616 = vmatprep.subr.mxu0 0.0
    %4617 = vmatpush1.msra.mxu0 0.0
    %4618 = vmatprep.subr.mxu0 0.0
    %4619 = vmatpush1.msra.mxu0 0.0
    %4620 = vmatprep.subr.mxu0 0.0
    %4621 = vmatpush1.msra.mxu0 0.0
    %4622 = vmatprep.subr.mxu0 0.0
    %4623 = vmatpush1.msra.mxu0 0.0
    %4624 = vmatprep.subr.mxu0 0.0
    %4625 = vmatpush1.msra.mxu0 0.0
    %4626 = vmatprep.subr.mxu0 0.0
    %4627 = vmatpush1.msra.mxu0 0.0
    %4628 = vmatprep.subr.mxu0 0.0
    %4629 = vmatpush1.msra.mxu0 0.0
    %4630 = vmatprep.subr.mxu0 0.0
    %4631 = vmatpush1.msra.mxu0 0.0
    %4632 = vmatprep.subr.mxu0 0.0
    %4633 = vmatpush1.msra.mxu0 0.0
    %4634 = vmatprep.mubr.f32.mxu0 0.0
    %4635 = vmatmul.mubr.f32.gmra.mrb[0].mxu0 %v4498
    %v4636 = vpop.f32.mrb[0].mxu0
    %v4637 = vadd.f32 0.0, %v4636
    %v4638 = vpop.f32.mrb[0].mxu0
    %v4639 = vadd.f32 0.0, %v4638
    %4640 = vdwg.mxu0
    %v4641 = vadd.f32 %v3188, %v4566
    %v4642 = vadd.f32 %v3190, %v4568
    %v4643 = vadd.f32 %v3301, %v4637
    %v4644 = vadd.f32 %v3303, %v4639
    %v4645 = vxor.u32 %v4641, 2147483648
    %v4646 = vmul.f32 %v4645, 1.442695
    %v4647 = vpow.pop %v4646
    %v4648 = vadd.f32 %v4647, 1.0
    %v4649 = vrcp.pop %v4648
    %v4650 = vmul.f32 1.0, %v4649
    %v4651 = vxor.u32 %v4642, 2147483648
    %v4652 = vmul.f32 %v4651, 1.442695
    %v4653 = vpow.pop %v4652
    %v4654 = vadd.f32 %v4653, 1.0
    %v4655 = vrcp.pop %v4654
    %v4656 = vmul.f32 1.0, %v4655
    %v4657 = vtanh.pop %v4643
    %v4658 = vxor.u32 %v4644, 2147483648
    %v4659 = vmul.f32 %v4658, 1.442695
    %v4660 = vpow.pop %v4659
    %v4661 = vadd.f32 %v4660, 1.0
    %v4662 = vrcp.pop %v4661
    %v4663 = vmul.f32 1.0, %v4662
    %v4664 = vmul.f32 %v4656, %v4496
    %v4665 = vmul.f32 %v4650, %v4657
    %v4666 = vadd.f32 %v4664, %v4665
    %v4667 = vtanh.pop %v4666
    %v4668 = vmul.f32 %v4663, %v4667
    %s4669 = scalar_lea.vmem [#allocation6], 8
    %4670 = vst [vmem:[%s4669] sm:$0xff] %v4668
    %s4671 = scalar_lea.vmem [#allocation8], 8
    %4672 = vst [vmem:[%s4671] sm:$0xff] %v4666
    %v4674 = vrot.slane %v3648, 7
    %v4677 = vrot.slane %v3818, 6
    %v4680 = vrot.slane %v3988, 5
    %v4683 = vrot.slane %v4158, 4
    %v4686 = vrot.slane %v4328, 3
    %v4689 = vrot.slane %v4498, 2
    %v4692 = vrot.slane %v4668, 1
    %v4694 = vsel %vm164, %v3478, %v4674
    %v4695 = vsel %vm167, %v4694, %v4677
    %v4696 = vsel %vm170, %v4695, %v4680
    %v4697 = vsel %vm173, %v4696, %v4683
    %v4698 = vsel %vm176, %v4697, %v4686
    %v4699 = vsel %vm179, %v4698, %v4689
    %v4700 = vsel %vm182, %v4699, %v4692
    %v4702 = vrot.slane %v3478, 1
    %v4704 = vrot.slane %v3818, 7
    %v4706 = vrot.slane %v3988, 6
    %v4708 = vrot.slane %v4158, 5
    %v4710 = vrot.slane %v4328, 4
    %v4712 = vrot.slane %v4498, 3
    %v4714 = vrot.slane %v4668, 2
    %v4716 = vsel %vm164, %v4702, %v3648
    %v4717 = vsel %vm167, %v4716, %v4704
    %v4718 = vsel %vm170, %v4717, %v4706
    %v4719 = vsel %vm173, %v4718, %v4708
    %v4720 = vsel %vm176, %v4719, %v4710
    %v4721 = vsel %vm179, %v4720, %v4712
    %v4722 = vsel %vm182, %v4721, %v4714
    %v4723 = vrot.slane %v3478, 2
    %v4725 = vrot.slane %v3648, 1
    %v4727 = vrot.slane %v3988, 7
    %v4729 = vrot.slane %v4158, 6
    %v4731 = vrot.slane %v4328, 5
    %v4733 = vrot.slane %v4498, 4
    %v4735 = vrot.slane %v4668, 3
    %v4737 = vsel %vm164, %v4723, %v4725
    %v4738 = vsel %vm167, %v4737, %v3818
    %v4739 = vsel %vm170, %v4738, %v4727
    %v4740 = vsel %vm173, %v4739, %v4729
    %v4741 = vsel %vm176, %v4740, %v4731
    %v4742 = vsel %vm179, %v4741, %v4733
    %v4743 = vsel %vm182, %v4742, %v4735
    %v4744 = vrot.slane %v3478, 3
    %v4746 = vrot.slane %v3648, 2
    %v4748 = vrot.slane %v3818, 1
    %v4750 = vrot.slane %v4158, 7
    %v4752 = vrot.slane %v4328, 6
    %v4754 = vrot.slane %v4498, 5
    %v4756 = vrot.slane %v4668, 4
    %v4758 = vsel %vm164, %v4744, %v4746
    %v4759 = vsel %vm167, %v4758, %v4748
    %v4760 = vsel %vm170, %v4759, %v3988
    %v4761 = vsel %vm173, %v4760, %v4750
    %v4762 = vsel %vm176, %v4761, %v4752
    %v4763 = vsel %vm179, %v4762, %v4754
    %v4764 = vsel %vm182, %v4763, %v4756
    %v4765 = vrot.slane %v3478, 4
    %v4767 = vrot.slane %v3648, 3
    %v4769 = vrot.slane %v3818, 2
    %v4771 = vrot.slane %v3988, 1
    %v4773 = vrot.slane %v4328, 7
    %v4775 = vrot.slane %v4498, 6
    %v4777 = vrot.slane %v4668, 5
    %v4779 = vsel %vm164, %v4765, %v4767
    %v4780 = vsel %vm167, %v4779, %v4769
    %v4781 = vsel %vm170, %v4780, %v4771
    %v4782 = vsel %vm173, %v4781, %v4158
    %v4783 = vsel %vm176, %v4782, %v4773
    %v4784 = vsel %vm179, %v4783, %v4775
    %v4785 = vsel %vm182, %v4784, %v4777
    %v4786 = vrot.slane %v3478, 5
    %v4788 = vrot.slane %v3648, 4
    %v4790 = vrot.slane %v3818, 3
    %v4792 = vrot.slane %v3988, 2
    %v4794 = vrot.slane %v4158, 1
    %v4796 = vrot.slane %v4498, 7
    %v4798 = vrot.slane %v4668, 6
    %v4800 = vsel %vm164, %v4786, %v4788
    %v4801 = vsel %vm167, %v4800, %v4790
    %v4802 = vsel %vm170, %v4801, %v4792
    %v4803 = vsel %vm173, %v4802, %v4794
    %v4804 = vsel %vm176, %v4803, %v4328
    %v4805 = vsel %vm179, %v4804, %v4796
    %v4806 = vsel %vm182, %v4805, %v4798
    %v4807 = vrot.slane %v3478, 6
    %v4809 = vrot.slane %v3648, 5
    %v4811 = vrot.slane %v3818, 4
    %v4813 = vrot.slane %v3988, 3
    %v4815 = vrot.slane %v4158, 2
    %v4817 = vrot.slane %v4328, 1
    %v4819 = vrot.slane %v4668, 7
    %v4821 = vsel %vm164, %v4807, %v4809
    %v4822 = vsel %vm167, %v4821, %v4811
    %v4823 = vsel %vm170, %v4822, %v4813
    %v4824 = vsel %vm173, %v4823, %v4815
    %v4825 = vsel %vm176, %v4824, %v4817
    %v4826 = vsel %vm179, %v4825, %v4498
    %v4827 = vsel %vm182, %v4826, %v4819
    %v4828 = vrot.slane %v3478, 7
    %v4830 = vrot.slane %v3648, 6
    %v4832 = vrot.slane %v3818, 5
    %v4834 = vrot.slane %v3988, 4
    %v4836 = vrot.slane %v4158, 3
    %v4838 = vrot.slane %v4328, 2
    %v4840 = vrot.slane %v4498, 1
    %v4842 = vsel %vm164, %v4828, %v4830
    %v4843 = vsel %vm167, %v4842, %v4832
    %v4844 = vsel %vm170, %v4843, %v4834
    %v4845 = vsel %vm173, %v4844, %v4836
    %v4846 = vsel %vm176, %v4845, %v4838
    %v4847 = vsel %vm179, %v4846, %v4840
    %v4848 = vsel %vm182, %v4847, %v4668
    %v4849 = vld [vmem:[%s8] sm:$0xff]
    %v4850 = vld [vmem:[%s8 + $0x8] sm:$0xff]
    %v4851 = vld [vmem:[%s8 + $0x10] sm:$0xff]
    %v4852 = vld [vmem:[%s8 + $0x18] sm:$0xff]
    %v4853 = vld [vmem:[%s8 + $0x20] sm:$0xff]
    %v4854 = vld [vmem:[%s8 + $0x28] sm:$0xff]
    %v4855 = vld [vmem:[%s8 + $0x30] sm:$0xff]
    %v4856 = vld [vmem:[%s8 + $0x38] sm:$0xff]
    %v4857 = vld [vmem:[%s8 + $0x40] sm:$0xff]
    %v4858 = vld [vmem:[%s8 + $0x48] sm:$0xff]
    %v4859 = vld [vmem:[%s8 + $0x50] sm:$0xff]
    %v4860 = vld [vmem:[%s8 + $0x58] sm:$0xff]
    %v4861 = vld [vmem:[%s8 + $0x60] sm:$0xff]
    %v4862 = vld [vmem:[%s8 + $0x68] sm:$0xff]
    %v4863 = vld [vmem:[%s8 + $0x70] sm:$0xff]
    %v4864 = vld [vmem:[%s8 + $0x78] sm:$0xff]
    %v4865 = vld [vmem:[%s9] sm:$0x1]
    %v4867 = vlaneseq
    %v4868 = vshrl.u32 %v4867, 7
    %v4869 = vsub.s32 0, %v4868
    %v4870 = vrot.slane %v4865, %v4869
    %4872 = vmatprep.subr.mxu0 0.0
    %4873 = vmatpush1.msra.mxu0 %v4849
    %4874 = vmatprep.subr.mxu0 0.0
    %4875 = vmatpush1.msra.mxu0 %v4850
    %4876 = vmatprep.subr.mxu0 0.0
    %4877 = vmatpush1.msra.mxu0 %v4851
    %4878 = vmatprep.subr.mxu0 0.0
    %4879 = vmatpush1.msra.mxu0 %v4852
    %4880 = vmatprep.subr.mxu0 0.0
    %4881 = vmatpush1.msra.mxu0 %v4853
    %4882 = vmatprep.subr.mxu0 0.0
    %4883 = vmatpush1.msra.mxu0 %v4854
    %4884 = vmatprep.subr.mxu0 0.0
    %4885 = vmatpush1.msra.mxu0 %v4855
    %4886 = vmatprep.subr.mxu0 0.0
    %4887 = vmatpush1.msra.mxu0 %v4856
    %4888 = vmatprep.subr.mxu0 0.0
    %4889 = vmatpush1.msra.mxu0 %v4857
    %4890 = vmatprep.subr.mxu0 0.0
    %4891 = vmatpush1.msra.mxu0 %v4858
    %4892 = vmatprep.subr.mxu0 0.0
    %4893 = vmatpush1.msra.mxu0 %v4859
    %4894 = vmatprep.subr.mxu0 0.0
    %4895 = vmatpush1.msra.mxu0 %v4860
    %4896 = vmatprep.subr.mxu0 0.0
    %4897 = vmatpush1.msra.mxu0 %v4861
    %4898 = vmatprep.subr.mxu0 0.0
    %4899 = vmatpush1.msra.mxu0 %v4862
    %4900 = vmatprep.subr.mxu0 0.0
    %4901 = vmatpush1.msra.mxu0 %v4863
    %4902 = vmatprep.subr.mxu0 0.0
    %4903 = vmatpush1.msra.mxu0 %v4864
    %4904 = vmatprep.subr.mxu0 0.0
    %4905 = vmatpush1.msra.mxu0 0.0
    %4906 = vmatprep.subr.mxu0 0.0
    %4907 = vmatpush1.msra.mxu0 0.0
    %4908 = vmatprep.subr.mxu0 0.0
    %4909 = vmatpush1.msra.mxu0 0.0
    %4910 = vmatprep.subr.mxu0 0.0
    %4911 = vmatpush1.msra.mxu0 0.0
    %4912 = vmatprep.subr.mxu0 0.0
    %4913 = vmatpush1.msra.mxu0 0.0
    %4914 = vmatprep.subr.mxu0 0.0
    %4915 = vmatpush1.msra.mxu0 0.0
    %4916 = vmatprep.subr.mxu0 0.0
    %4917 = vmatpush1.msra.mxu0 0.0
    %4918 = vmatprep.subr.mxu0 0.0
    %4919 = vmatpush1.msra.mxu0 0.0
    %4920 = vmatprep.subr.mxu0 0.0
    %4921 = vmatpush1.msra.mxu0 0.0
    %4922 = vmatprep.subr.mxu0 0.0
    %4923 = vmatpush1.msra.mxu0 0.0
    %4924 = vmatprep.subr.mxu0 0.0
    %4925 = vmatpush1.msra.mxu0 0.0
    %4926 = vmatprep.subr.mxu0 0.0
    %4927 = vmatpush1.msra.mxu0 0.0
    %4928 = vmatprep.subr.mxu0 0.0
    %4929 = vmatpush1.msra.mxu0 0.0
    %4930 = vmatprep.subr.mxu0 0.0
    %4931 = vmatpush1.msra.mxu0 0.0
    %4932 = vmatprep.subr.mxu0 0.0
    %4933 = vmatpush1.msra.mxu0 0.0
    %4934 = vmatprep.subr.mxu0 0.0
    %4935 = vmatpush1.msra.mxu0 0.0
    %4936 = vmatprep.mubr.f32.mxu0 0.0
    %4937 = vmatmul.mubr.f32.gmra.mrb[0].mxu0 %v4700
    %v4938 = vpop.f32.mrb[0].mxu0
    %v4939 = vadd.f32 %v4870, %v4938
    %v4940 = vpop.f32.mrb[0].mxu0
    %4941 = vmatprep.mubr.f32.mxu0 0.0
    %4942 = vmatmul.mubr.f32.gmra.mrb[0].mxu0 %v4722
    %v4943 = vpop.f32.mrb[0].mxu0
    %v4944 = vadd.f32 %v4870, %v4943
    %v4945 = vpop.f32.mrb[0].mxu0
    %4946 = vmatprep.mubr.f32.mxu0 0.0
    %4947 = vmatmul.mubr.f32.gmra.mrb[0].mxu0 %v4743
    %v4948 = vpop.f32.mrb[0].mxu0
    %v4949 = vadd.f32 %v4870, %v4948
    %v4950 = vpop.f32.mrb[0].mxu0
    %4951 = vmatprep.mubr.f32.mxu0 0.0
    %4952 = vmatmul.mubr.f32.gmra.mrb[0].mxu0 %v4764
    %v4953 = vpop.f32.mrb[0].mxu0
    %v4954 = vadd.f32 %v4870, %v4953
    %v4955 = vpop.f32.mrb[0].mxu0
    %4956 = vmatprep.mubr.f32.mxu0 0.0
    %4957 = vmatmul.mubr.f32.gmra.mrb[0].mxu0 %v4785
    %v4958 = vpop.f32.mrb[0].mxu0
    %v4959 = vadd.f32 %v4870, %v4958
    %v4960 = vpop.f32.mrb[0].mxu0
    %4961 = vmatprep.mubr.f32.mxu0 0.0
    %4962 = vmatmul.mubr.f32.gmra.mrb[0].mxu0 %v4806
    %v4963 = vpop.f32.mrb[0].mxu0
    %v4964 = vadd.f32 %v4870, %v4963
    %v4965 = vpop.f32.mrb[0].mxu0
    %4966 = vmatprep.mubr.f32.mxu0 0.0
    %4967 = vmatmul.mubr.f32.gmra.mrb[0].mxu0 %v4827
    %v4968 = vpop.f32.mrb[0].mxu0
    %v4969 = vadd.f32 %v4870, %v4968
    %v4970 = vpop.f32.mrb[0].mxu0
    %4971 = vmatprep.mubr.f32.mxu0 0.0
    %4972 = vmatmul.mubr.f32.gmra.mrb[0].mxu0 %v4848
    %v4973 = vpop.f32.mrb[0].mxu0
    %v4974 = vadd.f32 %v4870, %v4973
    %v4975 = vpop.f32.mrb[0].mxu0
    %4976 = vdwg.mxu0
    %4977 = vst [vmem:[#allocation4] sm:$0xff] %v4939
    %4978 = vst [vmem:[#allocation4 + $0x8] sm:$0xff] %v4944
    %4979 = vst [vmem:[#allocation4 + $0x10] sm:$0xff] %v4949
    %4980 = vst [vmem:[#allocation4 + $0x18] sm:$0xff] %v4954
    %4981 = vst [vmem:[#allocation4 + $0x20] sm:$0xff] %v4959
    %4982 = vst [vmem:[#allocation4 + $0x28] sm:$0xff] %v4964
    %4983 = vst [vmem:[#allocation4 + $0x30] sm:$0xff] %v4969
    %4984 = vst [vmem:[#allocation4 + $0x38] sm:$0xff] %v4974
    // Predicated region
    $region38: #{word_lstm_forward.1} parent=1 // pred_check
      _
    $region39: #{word_lstm_forward.1} parent=1 // pred_check_branch
      %4986 = sbr.rel (0) target = $region41
    $region40: #{word_lstm_forward.1} parent=1 // pred_region
      %s4988 = ssub.s32 1024, 1024
      %4989 = vsyncadd [#allocation5], %s4988
      %s4990 = sshll.u32 [#allocation4], 4
      %s4991 = int_to_ptr.vmem [resolvable:$true] %s4990
      %4996 = dma.vmem_to_hbm [thread:$0]  %s4991, 1024, %s10, [#allocation5], 128, 128, 8
    $region41: #{word_lstm_forward.1} parent=1 // pred_fallthru
      _
    // Predicated region
    $region42: #{word_lstm_forward.1} parent=1 // pred_check
      _
    $region43: #{word_lstm_forward.1} parent=1 // pred_check_branch
      %4998 = sbr.rel (0) target = $region45
    $region44: #{word_lstm_forward.1} parent=1 // pred_region
      %s5000 = ssub.s32 256, 256
      %5001 = vsyncadd [#allocation7], %s5000
      %s5002 = sshll.u32 [#allocation6], 4
      %s5003 = int_to_ptr.vmem [resolvable:$true] %s5002
      %5008 = dma.vmem_to_hbm [thread:$0]  %s5003, 256, %s11, [#allocation7], 128, 128, 8
    $region45: #{word_lstm_forward.1} parent=1 // pred_fallthru
      _
    // Predicated region
    $region46: #{word_lstm_forward.1} parent=1 // pred_check
      _
    $region47: #{word_lstm_forward.1} parent=1 // pred_check_branch
      %5010 = sbr.rel (0) target = $region49
    $region48: #{word_lstm_forward.1} parent=1 // pred_region
      %s5012 = ssub.s32 256, 256
      %5013 = vsyncadd [#allocation7], %s5012
      %s5014 = sshll.u32 [#allocation8], 4
      %s5015 = int_to_ptr.vmem [resolvable:$true] %s5014
      %5020 = dma.vmem_to_hbm [thread:$0]  %s5015, 256, %s12, [#allocation7], 128, 128, 8
    $region49: #{word_lstm_forward.1} parent=1 // pred_fallthru
      _
    // Predicated region
    $region50: #{word_lstm_forward.1} parent=1 // pred_check
      _
    $region51: #{word_lstm_forward.1} parent=1 // pred_check_branch
      %5022 = sbr.rel (0) target = $region53
    $region52: #{word_lstm_forward.1} parent=1 // pred_region
      %5023 = dma.done [#allocation5], 1024
    $region53: #{word_lstm_forward.1} parent=1 // pred_fallthru
      _
    // Predicated region
    $region54: #{word_lstm_forward.1} parent=1 // pred_check
      _
    $region55: #{word_lstm_forward.1} parent=1 // pred_check_branch
      %5025 = sbr.rel (0) target = $region57
    $region56: #{word_lstm_forward.1} parent=1 // pred_region
      %5026 = dma.done [#allocation7], 256
    $region57: #{word_lstm_forward.1} parent=1 // pred_fallthru
      _
    // Predicated region
    $region58: #{word_lstm_forward.1} parent=1 // pred_check
      _
    $region59: #{word_lstm_forward.1} parent=1 // pred_check_branch
      %5028 = sbr.rel (0) target = $region61
    $region60: #{word_lstm_forward.1} parent=1 // pred_region
      %5029 = dma.done [#allocation7], 256
    $region61: #{word_lstm_forward.1} parent=1 // pred_fallthru
      _
    %5030 = vsyncpa [#allocation5], 1
    %5031 = vsyncpa [#allocation7], 1

</llo_original>
